<compile_context>
chip_gen: v7x
topology: tpu7x:2x2x1
jax: 0.10.0
libtpu: 0.0.40
codegen_flags: <defaults>
</compile_context>

<pallas_src>
import jax
import jax.numpy as jnp
from jax import lax
from jax.experimental import pallas as pl
from jax.experimental.pallas import tpu as pltpu

EPS = 1e-5
C = 128            # lane-padded channel width for every activation / weight
L_EMB = 100        # Conv1d length after the embedding (embedding_dim=100, fixed by module)
L_STEM = 50        # after stride-2 stem conv
L_POOL = 25        # after MaxPool1d(3, s=2, p=1)
L_L2 = 13          # after the stride-2 block in layer2


# ---------------------------------------------------------------------------
# In-kernel helpers
# ---------------------------------------------------------------------------

def _decim(m, n):
    """(m, n) 0/1 matrix with D[l, 2l] = 1: stride-2 row decimation as a matmul."""
    r = lax.broadcasted_iota(jnp.int32, (m, n), 0)
    c = lax.broadcasted_iota(jnp.int32, (m, n), 1)
    return (c == 2 * r).astype(jnp.float32)


def _conv3(pad_ref, L, w_ref):
    """Stride-1 K=3 conv: 3 shifted-slice bf16 matmuls from an (L+2, C) zero-padded buffer."""
    acc = jnp.dot(pad_ref[0:L, :].astype(jnp.bfloat16), w_ref[0],
                  preferred_element_type=jnp.float32)
    for k in (1, 2):
        acc = acc + jnp.dot(pad_ref[k:k + L, :].astype(jnp.bfloat16), w_ref[k],
                            preferred_element_type=jnp.float32)
    return acc


def _store_padded(pad_ref, L, act):
    """Write activation into rows [1, L+1) of an (L+2, C) buffer; keep pad rows zero."""
    pad_ref[0:1, :] = jnp.zeros((1, C), jnp.float32)
    pad_ref[L + 1:L + 2, :] = jnp.zeros((1, C), jnp.float32)
    pad_ref[1:L + 1, :] = act


def _basic_block(pad_ref, L, xin, w1_ref, s1_ref, w2_ref, s2_ref):
    """BasicBlock (stride 1, no downsample). Input activation already stored in pad_ref."""
    h = jnp.maximum(_conv3(pad_ref, L, w1_ref) + s1_ref[...], 0.0)
    _store_padded(pad_ref, L, h)
    y = jnp.maximum(_conv3(pad_ref, L, w2_ref) + s2_ref[...] + xin, 0.0)
    _store_padded(pad_ref, L, y)          # leave output in pad_ref for the next block
    return y


# ---------------------------------------------------------------------------
# The single fused kernel (one batch element per grid step)
# ---------------------------------------------------------------------------

def _resnet_kernel(x_ref,
                   w0_ref, s0_ref,
                   w11a_ref, s11a_ref, w11b_ref, s11b_ref,
                   w12a_ref, s12a_ref, w12b_ref, s12b_ref,
                   w21a_ref, s21a_ref, wds_ref, sds_ref, w21b_ref, s21b_ref,
                   w22a_ref, s22a_ref, w22b_ref, s22b_ref,
                   wfc_ref, bfc_ref,
                   out_ref,
                   acc_ref, mp_ref, p27_ref, p15_ref):
    # ---- stem: Conv1d(size_token -> 64, K=7, s=2, p=3) + BN + ReLU --------------
    # stride-1 conv over the pre-padded input, then decimate rows 0,2,... via matmul.
    acc_ref[...] = jnp.dot(x_ref[0:L_EMB, :], w0_ref[0],
                           preferred_element_type=jnp.float32)
    for k in range(1, 7):
        acc_ref[...] = acc_ref[...] + jnp.dot(
            x_ref[k:k + L_EMB, :], w0_ref[k], preferred_element_type=jnp.float32)
    y = jnp.dot(_decim(L_STEM, L_EMB), acc_ref[...],
                preferred_element_type=jnp.float32) + s0_ref[...]
    y = jnp.maximum(y, 0.0)                                            # (50, C)

    # ---- MaxPool1d(3, s=2, p=1): zero padding is exact because y >= 0 post-ReLU --
    mp_ref[0:1, :] = jnp.zeros((1, C), jnp.float32)
    mp_ref[L_STEM + 1:L_STEM + 2, :] = jnp.zeros((1, C), jnp.float32)
    mp_ref[1:L_STEM + 1, :] = y
    mfull = jnp.maximum(jnp.maximum(mp_ref[0:L_STEM, :], mp_ref[1:L_STEM + 1, :]),
                        mp_ref[2:L_STEM + 2, :])                       # (50, C)
    a = jnp.dot(_decim(L_POOL, L_STEM), mfull,
                preferred_element_type=jnp.float32)                    # (25, C)

    # ---- layer1: 2 x BasicBlock(64 -> 64, stride 1) ------------------------------
    _store_padded(p27_ref, L_POOL, a)
    x1 = _basic_block(p27_ref, L_POOL, a, w11a_ref, s11a_ref, w11b_ref, s11b_ref)
    x2 = _basic_block(p27_ref, L_POOL, x1, w12a_ref, s12a_ref, w12b_ref, s12b_ref)

    # ---- layer2 block 0: BasicBlock(64 -> 128, stride 2) + 1x1 s=2 downsample ----
    d13 = _decim(L_L2, L_POOL)
    full = _conv3(p27_ref, L_POOL, w21a_ref)                           # stride-1 (25, C)
    h = jnp.maximum(jnp.dot(d13, full, preferred_element_type=jnp.float32)
                    + s21a_ref[...], 0.0)                              # (13, C)
    ident = jnp.dot(
        jnp.dot(d13, x2, preferred_element_type=jnp.float32).astype(jnp.bfloat16),
        wds_ref[...], preferred_element_type=jnp.float32) + sds_ref[...]
    _store_padded(p15_ref, L_L2, h)
    x3 = jnp.maximum(_conv3(p15_ref, L_L2, w21b_ref) + s21b_ref[...] + ident, 0.0)
    _store_padded(p15_ref, L_L2, x3)

    # ---- layer2 block 1: BasicBlock(128 -> 128, stride 1) ------------------------
    x4 = _basic_block(p15_ref, L_L2, x3, w22a_ref, s22a_ref, w22b_ref, s22b_ref)

    # ---- head: AvgPool1d(13) + Dropout(eval: identity) + Flatten + Linear --------
    xm = jnp.mean(x4, axis=0, keepdims=True)                           # (1, C)
    out_ref[...] = jnp.dot(xm, wfc_ref[...],
                           preferred_element_type=jnp.float32) + bfc_ref[...]


# ---------------------------------------------------------------------------
# Trace-time parameter packing (BN folding, lane padding, bf16 cast)
# ---------------------------------------------------------------------------

def _fold_bn(w, gamma, beta, mean, var):
    scale = gamma * lax.rsqrt(var + EPS)
    return w * scale[:, None, None], beta - mean * scale


def _pack_conv(w, gamma, beta, mean, var):
    """PyTorch (Cout, Cin, K) conv + eval-BN -> (K, 128, 128) bf16 taps, (1, 128) f32 shift."""
    wf, shift = _fold_bn(w, gamma, beta, mean, var)
    cout, cin, _ = wf.shape
    wk = jnp.transpose(wf, (2, 1, 0))                         # (K, Cin, Cout): W_k[i, o]
    wk = jnp.pad(wk, ((0, 0), (0, C - cin), (0, C - cout))).astype(jnp.bfloat16)
    sh = jnp.pad(shift, (0, C - cout)).reshape(1, C).astype(jnp.float32)
    return wk, sh


def resnet_two_layer_forward(tokens, params):
    B = tokens.shape[0]
    num_classes = params["fc_w"].shape[0]

    # Embedding with max_norm; renorm only the gathered rows (forward-equivalent to PyTorch).
    # TODO(synk): PyTorch additionally writes the renormalized rows back into the table in-place.
    rows = params["emb"][tokens]                              # (B, size_token, 100)
    max_norm = params["max_norm"]
    norms = jnp.linalg.norm(rows, axis=-1, keepdims=True)
    rows = jnp.where(norms > max_norm, rows * (max_norm / (norms + 1e-7)), rows)

    size_token = rows.shape[1]
    x = jnp.transpose(rows, (0, 2, 1))                        # NLC: (B, 100, size_token)
    x = jnp.pad(x, ((0, 0), (3, 3), (0, C - size_token)))     # conv pad (3,3) + lane pad
    x = x.astype(jnp.bfloat16)                                # (B, 106, 128)

    w0, s0 = _pack_conv(params["conv1_w"], params["bn1_g"], params["bn1_b"],
                        params["bn1_rm"], params["bn1_rv"])

    def pack_block(p):
        a = _pack_conv(p["conv1_w"], p["bn1_g"], p["bn1_b"], p["bn1_rm"], p["bn1_rv"])
        b = _pack_conv(p["conv2_w"], p["bn2_g"], p["bn2_b"], p["bn2_rm"], p["bn2_rv"])
        return [*a, *b]

    l1b0 = pack_block(params["layer1"][0])
    l1b1 = pack_block(params["layer1"][1])
    l2b0 = pack_block(params["layer2"][0])
    l2b1 = pack_block(params["layer2"][1])
    p20 = params["layer2"][0]
    wds_k, sds = _pack_conv(p20["ds_w"], p20["ds_g"], p20["ds_b"],
                            p20["ds_rm"], p20["ds_rv"])
    wds = wds_k[0]                                            # K = 1 -> (128, 128)

    wfc = jnp.pad(params["fc_w"].T.astype(jnp.float32), ((0, 0), (0, C - num_classes)))
    bfc = jnp.pad(params["fc_b"].astype(jnp.float32), (0, C - num_classes)).reshape(1, C)

    weight_args = [w0, s0, *l1b0, *l1b1,
                   l2b0[0], l2b0[1], wds, sds, l2b0[2], l2b0[3],
                   *l2b1, wfc, bfc]

    def const_spec(a):
        if a.ndim == 3:
            return pl.BlockSpec(a.shape, lambda b: (0, 0, 0))
        return pl.BlockSpec(a.shape, lambda b: (0, 0))

    out = pl.pallas_call(
        _resnet_kernel,
        out_shape=jax.ShapeDtypeStruct((B, 1, C), jnp.float32),
        grid=(B,),
        in_specs=[pl.BlockSpec((None, L_EMB + 6, C), lambda b: (b, 0, 0))]
                 + [const_spec(a) for a in weight_args],
        out_specs=pl.BlockSpec((None, 1, C), lambda b: (b, 0, 0)),
        scratch_shapes=[
            pltpu.VMEM((L_EMB, C), jnp.float32),        # stem stride-1 accumulator
            pltpu.VMEM((L_STEM + 2, C), jnp.float32),   # padded maxpool input
            pltpu.VMEM((L_POOL + 2, C), jnp.float32),   # padded activations, L = 25
            pltpu.VMEM((L_L2 + 2, C), jnp.float32),     # padded activations, L = 13
        ],
        compiler_params=pltpu.CompilerParams(dimension_semantics=("parallel",)),
    )(x, *weight_args)

    return out[:, 0, :num_classes]


# ---------------------------------------------------------------------------
# Deterministic parameter init (shapes from the PyTorch __init__, resnet18)
# ---------------------------------------------------------------------------

def init_params(key, unique_words, size_token, num_classes=2):
    keys = iter(jax.random.split(key, 96))

    def nrm(shape, scale=0.05):
        return (scale * jax.random.normal(next(keys), shape)).astype(jnp.float32)

    def add_bn(p, prefix, c):
        p[prefix + "_g"] = 1.0 + nrm((c,), 0.1)
        p[prefix + "_b"] = nrm((c,), 0.1)
        p[prefix + "_rm"] = nrm((c,), 0.1)           # running mean
        p[prefix + "_rv"] = 1.0 + jnp.abs(nrm((c,), 0.2))   # running var (> 0)

    def make_block(cin, cout, downsample):
        p = {"conv1_w": nrm((cout, cin, 3)), "conv2_w": nrm((cout, cout, 3))}
        add_bn(p, "bn1", cout)
        add_bn(p, "bn2", cout)
        if downsample:
            p["ds_w"] = nrm((cout, cin, 1))
            add_bn(p, "ds", cout)
        return p

    params = {
        "max_norm": jnp.float32(size_token),
        "emb": nrm((unique_words, 100), 1.0),
        "conv1_w": nrm((64, size_token, 7)),
        "fc_w": nrm((num_classes, 128)),
        "fc_b": nrm((num_classes,)),
    }
    add_bn(params, "bn1", 64)
    params["layer1"] = [make_block(64, 64, False), make_block(64, 64, False)]
    params["layer2"] = [make_block(64, 128, True), make_block(128, 128, False)]
    return params


if __name__ == "__main__":
    B, unique_words, size_token, num_classes = 2, 50, 16, 2
    key = jax.random.PRNGKey(0)
    pkey, xkey = jax.random.split(key)
    params = init_params(pkey, unique_words, size_token, num_classes)
    tokens = jax.random.randint(xkey, (B, size_token), 0, unique_words, dtype=jnp.int32)

    fwd = jax.jit(resnet_two_layer_forward)
    out = fwd(tokens, params)
    jax.block_until_ready(out)
    assert out.shape == (B, num_classes) and out.dtype == jnp.float32
    print("KERNEL_OK")
</pallas_src>

<mosaic_0001>
module attributes {stable_mosaic.version = 11 : i64} {
  func.func @_resnet_kernel(%arg0: i32, %arg1: memref<1x106x128xbf16, #tpu.memory_space<vmem>>, %arg2: memref<7x128x128xbf16, #tpu.memory_space<vmem>>, %arg3: memref<1x128xf32, #tpu.memory_space<vmem>>, %arg4: memref<3x128x128xbf16, #tpu.memory_space<vmem>>, %arg5: memref<1x128xf32, #tpu.memory_space<vmem>>, %arg6: memref<3x128x128xbf16, #tpu.memory_space<vmem>>, %arg7: memref<1x128xf32, #tpu.memory_space<vmem>>, %arg8: memref<3x128x128xbf16, #tpu.memory_space<vmem>>, %arg9: memref<1x128xf32, #tpu.memory_space<vmem>>, %arg10: memref<3x128x128xbf16, #tpu.memory_space<vmem>>, %arg11: memref<1x128xf32, #tpu.memory_space<vmem>>, %arg12: memref<3x128x128xbf16, #tpu.memory_space<vmem>>, %arg13: memref<1x128xf32, #tpu.memory_space<vmem>>, %arg14: memref<128x128xbf16, #tpu.memory_space<vmem>>, %arg15: memref<1x128xf32, #tpu.memory_space<vmem>>, %arg16: memref<3x128x128xbf16, #tpu.memory_space<vmem>>, %arg17: memref<1x128xf32, #tpu.memory_space<vmem>>, %arg18: memref<3x128x128xbf16, #tpu.memory_space<vmem>>, %arg19: memref<1x128xf32, #tpu.memory_space<vmem>>, %arg20: memref<3x128x128xbf16, #tpu.memory_space<vmem>>, %arg21: memref<1x128xf32, #tpu.memory_space<vmem>>, %arg22: memref<128x128xf32, #tpu.memory_space<vmem>>, %arg23: memref<1x128xf32, #tpu.memory_space<vmem>>, %arg24: memref<1x1x128xf32, #tpu.memory_space<vmem>>, %arg25: memref<100x128xf32, #tpu.memory_space<vmem>>, %arg26: memref<52x128xf32, #tpu.memory_space<vmem>>, %arg27: memref<27x128xf32, #tpu.memory_space<vmem>>, %arg28: memref<15x128xf32, #tpu.memory_space<vmem>>) attributes {dimension_semantics = [#tpu.dimension_semantics<parallel>], iteration_bounds = array<i64: 2>, scalar_prefetch = 0 : i64, scratch_operands = 4 : i64, tpu.core_type = #tpu.core_type<tc>, window_params = [{transform_indices = @transform_0, window_bounds = array<i64: 1, 106, 128>}, {pipeline_mode = #tpu.pipeline_mode<synchronous>, transform_indices = @transform_1, window_bounds = array<i64: 7, 128, 128>}, {pipeline_mode = #tpu.pipeline_mode<synchronous>, transform_indices = @transform_2, window_bounds = array<i64: 1, 128>}, {pipeline_mode = #tpu.pipeline_mode<synchronous>, transform_indices = @transform_3, window_bounds = array<i64: 3, 128, 128>}, {pipeline_mode = #tpu.pipeline_mode<synchronous>, transform_indices = @transform_4, window_bounds = array<i64: 1, 128>}, {pipeline_mode = #tpu.pipeline_mode<synchronous>, transform_indices = @transform_5, window_bounds = array<i64: 3, 128, 128>}, {pipeline_mode = #tpu.pipeline_mode<synchronous>, transform_indices = @transform_6, window_bounds = array<i64: 1, 128>}, {pipeline_mode = #tpu.pipeline_mode<synchronous>, transform_indices = @transform_7, window_bounds = array<i64: 3, 128, 128>}, {pipeline_mode = #tpu.pipeline_mode<synchronous>, transform_indices = @transform_8, window_bounds = array<i64: 1, 128>}, {pipeline_mode = #tpu.pipeline_mode<synchronous>, transform_indices = @transform_9, window_bounds = array<i64: 3, 128, 128>}, {pipeline_mode = #tpu.pipeline_mode<synchronous>, transform_indices = @transform_10, window_bounds = array<i64: 1, 128>}, {pipeline_mode = #tpu.pipeline_mode<synchronous>, transform_indices = @transform_11, window_bounds = array<i64: 3, 128, 128>}, {pipeline_mode = #tpu.pipeline_mode<synchronous>, transform_indices = @transform_12, window_bounds = array<i64: 1, 128>}, {pipeline_mode = #tpu.pipeline_mode<synchronous>, transform_indices = @transform_13, window_bounds = array<i64: 128, 128>}, {pipeline_mode = #tpu.pipeline_mode<synchronous>, transform_indices = @transform_14, window_bounds = array<i64: 1, 128>}, {pipeline_mode = #tpu.pipeline_mode<synchronous>, transform_indices = @transform_15, window_bounds = array<i64: 3, 128, 128>}, {pipeline_mode = #tpu.pipeline_mode<synchronous>, transform_indices = @transform_16, window_bounds = array<i64: 1, 128>}, {pipeline_mode = #tpu.pipeline_mode<synchronous>, transform_indices = @transform_17, window_bounds = array<i64: 3, 128, 128>}, {pipeline_mode = #tpu.pipeline_mode<synchronous>, transform_indices = @transform_18, window_bounds = array<i64: 1, 128>}, {pipeline_mode = #tpu.pipeline_mode<synchronous>, transform_indices = @transform_19, window_bounds = array<i64: 3, 128, 128>}, {pipeline_mode = #tpu.pipeline_mode<synchronous>, transform_indices = @transform_20, window_bounds = array<i64: 1, 128>}, {pipeline_mode = #tpu.pipeline_mode<synchronous>, transform_indices = @transform_21, window_bounds = array<i64: 128, 128>}, {pipeline_mode = #tpu.pipeline_mode<synchronous>, transform_indices = @transform_22, window_bounds = array<i64: 1, 128>}, {transform_indices = @transform_23, window_bounds = array<i64: 1, 1, 128>}]} {
    %c0 = arith.constant 0 : index
    %c0_0 = arith.constant 0 : index
    %c0_1 = arith.constant 0 : index
    %0 = vector.load %arg1[%c0, %c0_0, %c0_1] : memref<1x106x128xbf16, #tpu.memory_space<vmem>>, vector<1x100x128xbf16>
    %1 = vector.shape_cast %0 : vector<1x100x128xbf16> to vector<100x128xbf16>
    %c0_2 = arith.constant 0 : index
    %c0_3 = arith.constant 0 : index
    %c0_4 = arith.constant 0 : index
    %2 = vector.load %arg2[%c0_2, %c0_3, %c0_4] : memref<7x128x128xbf16, #tpu.memory_space<vmem>>, vector<1x128x128xbf16>
    %3 = vector.shape_cast %2 : vector<1x128x128xbf16> to vector<128x128xbf16>
    %cst = arith.constant dense<0.000000e+00> : vector<100x128xf32>
    %4 = tpu.matmul %1, %3, %cst {dimension_numbers = #tpu.dot_dimension_numbers<[1], [0], [0], [1], [0, 0, 1, 1], [], []>} : vector<100x128xbf16>, vector<128x128xbf16>, vector<100x128xf32> -> vector<100x128xf32>
    %c0_5 = arith.constant 0 : index
    %c0_6 = arith.constant 0 : index
    %5 = vector.load %arg25[%c0_5, %c0_6] : memref<100x128xf32, #tpu.memory_space<vmem>>, vector<100x128xf32>
    tpu.vector_store %arg25[%c0_5, %c0_6], %4 {strides = array<i32>} : memref<100x128xf32, #tpu.memory_space<vmem>>, vector<100x128xf32>,
    %c0_7 = arith.constant 0 : index
    %c0_8 = arith.constant 0 : index
    %6 = vector.load %arg25[%c0_7, %c0_8] : memref<100x128xf32, #tpu.memory_space<vmem>>, vector<100x128xf32>
    %c0_9 = arith.constant 0 : index
    %c1 = arith.constant 1 : index
    %c0_10 = arith.constant 0 : index
    %7 = vector.load %arg1[%c0_9, %c1, %c0_10] : memref<1x106x128xbf16, #tpu.memory_space<vmem>>, vector<1x100x128xbf16>
    %8 = vector.shape_cast %7 : vector<1x100x128xbf16> to vector<100x128xbf16>
    %c1_11 = arith.constant 1 : index
    %c0_12 = arith.constant 0 : index
    %c0_13 = arith.constant 0 : index
    %9 = vector.load %arg2[%c1_11, %c0_12, %c0_13] : memref<7x128x128xbf16, #tpu.memory_space<vmem>>, vector<1x128x128xbf16>
    %10 = vector.shape_cast %9 : vector<1x128x128xbf16> to vector<128x128xbf16>
    %cst_14 = arith.constant dense<0.000000e+00> : vector<100x128xf32>
    %11 = tpu.matmul %8, %10, %cst_14 {dimension_numbers = #tpu.dot_dimension_numbers<[1], [0], [0], [1], [0, 0, 1, 1], [], []>} : vector<100x128xbf16>, vector<128x128xbf16>, vector<100x128xf32> -> vector<100x128xf32>
    %12 = arith.addf %6, %11 : vector<100x128xf32>
    %c0_15 = arith.constant 0 : index
    %c0_16 = arith.constant 0 : index
    %13 = vector.load %arg25[%c0_15, %c0_16] : memref<100x128xf32, #tpu.memory_space<vmem>>, vector<100x128xf32>
    tpu.vector_store %arg25[%c0_15, %c0_16], %12 {strides = array<i32>} : memref<100x128xf32, #tpu.memory_space<vmem>>, vector<100x128xf32>,
    %c0_17 = arith.constant 0 : index
    %c0_18 = arith.constant 0 : index
    %14 = vector.load %arg25[%c0_17, %c0_18] : memref<100x128xf32, #tpu.memory_space<vmem>>, vector<100x128xf32>
    %c0_19 = arith.constant 0 : index
    %c2 = arith.constant 2 : index
    %c0_20 = arith.constant 0 : index
    %15 = vector.load %arg1[%c0_19, %c2, %c0_20] : memref<1x106x128xbf16, #tpu.memory_space<vmem>>, vector<1x100x128xbf16>
    %16 = vector.shape_cast %15 : vector<1x100x128xbf16> to vector<100x128xbf16>
    %c2_21 = arith.constant 2 : index
    %c0_22 = arith.constant 0 : index
    %c0_23 = arith.constant 0 : index
    %17 = vector.load %arg2[%c2_21, %c0_22, %c0_23] : memref<7x128x128xbf16, #tpu.memory_space<vmem>>, vector<1x128x128xbf16>
    %18 = vector.shape_cast %17 : vector<1x128x128xbf16> to vector<128x128xbf16>
    %cst_24 = arith.constant dense<0.000000e+00> : vector<100x128xf32>
    %19 = tpu.matmul %16, %18, %cst_24 {dimension_numbers = #tpu.dot_dimension_numbers<[1], [0], [0], [1], [0, 0, 1, 1], [], []>} : vector<100x128xbf16>, vector<128x128xbf16>, vector<100x128xf32> -> vector<100x128xf32>
    %20 = arith.addf %14, %19 : vector<100x128xf32>
    %c0_25 = arith.constant 0 : index
    %c0_26 = arith.constant 0 : index
    %21 = vector.load %arg25[%c0_25, %c0_26] : memref<100x128xf32, #tpu.memory_space<vmem>>, vector<100x128xf32>
    tpu.vector_store %arg25[%c0_25, %c0_26], %20 {strides = array<i32>} : memref<100x128xf32, #tpu.memory_space<vmem>>, vector<100x128xf32>,
    %c0_27 = arith.constant 0 : index
    %c0_28 = arith.constant 0 : index
    %22 = vector.load %arg25[%c0_27, %c0_28] : memref<100x128xf32, #tpu.memory_space<vmem>>, vector<100x128xf32>
    %c0_29 = arith.constant 0 : index
    %c3 = arith.constant 3 : index
    %c0_30 = arith.constant 0 : index
    %23 = vector.load %arg1[%c0_29, %c3, %c0_30] : memref<1x106x128xbf16, #tpu.memory_space<vmem>>, vector<1x100x128xbf16>
    %24 = vector.shape_cast %23 : vector<1x100x128xbf16> to vector<100x128xbf16>
    %c3_31 = arith.constant 3 : index
    %c0_32 = arith.constant 0 : index
    %c0_33 = arith.constant 0 : index
    %25 = vector.load %arg2[%c3_31, %c0_32, %c0_33] : memref<7x128x128xbf16, #tpu.memory_space<vmem>>, vector<1x128x128xbf16>
    %26 = vector.shape_cast %25 : vector<1x128x128xbf16> to vector<128x128xbf16>
    %cst_34 = arith.constant dense<0.000000e+00> : vector<100x128xf32>
    %27 = tpu.matmul %24, %26, %cst_34 {dimension_numbers = #tpu.dot_dimension_numbers<[1], [0], [0], [1], [0, 0, 1, 1], [], []>} : vector<100x128xbf16>, vector<128x128xbf16>, vector<100x128xf32> -> vector<100x128xf32>
    %28 = arith.addf %22, %27 : vector<100x128xf32>
    %c0_35 = arith.constant 0 : index
    %c0_36 = arith.constant 0 : index
    %29 = vector.load %arg25[%c0_35, %c0_36] : memref<100x128xf32, #tpu.memory_space<vmem>>, vector<100x128xf32>
    tpu.vector_store %arg25[%c0_35, %c0_36], %28 {strides = array<i32>} : memref<100x128xf32, #tpu.memory_space<vmem>>, vector<100x128xf32>,
    %c0_37 = arith.constant 0 : index
    %c0_38 = arith.constant 0 : index
    %30 = vector.load %arg25[%c0_37, %c0_38] : memref<100x128xf32, #tpu.memory_space<vmem>>, vector<100x128xf32>
    %c0_39 = arith.constant 0 : index
    %c4 = arith.constant 4 : index
    %c0_40 = arith.constant 0 : index
    %31 = vector.load %arg1[%c0_39, %c4, %c0_40] : memref<1x106x128xbf16, #tpu.memory_space<vmem>>, vector<1x100x128xbf16>
    %32 = vector.shape_cast %31 : vector<1x100x128xbf16> to vector<100x128xbf16>
    %c4_41 = arith.constant 4 : index
    %c0_42 = arith.constant 0 : index
    %c0_43 = arith.constant 0 : index
    %33 = vector.load %arg2[%c4_41, %c0_42, %c0_43] : memref<7x128x128xbf16, #tpu.memory_space<vmem>>, vector<1x128x128xbf16>
    %34 = vector.shape_cast %33 : vector<1x128x128xbf16> to vector<128x128xbf16>
    %cst_44 = arith.constant dense<0.000000e+00> : vector<100x128xf32>
    %35 = tpu.matmul %32, %34, %cst_44 {dimension_numbers = #tpu.dot_dimension_numbers<[1], [0], [0], [1], [0, 0, 1, 1], [], []>} : vector<100x128xbf16>, vector<128x128xbf16>, vector<100x128xf32> -> vector<100x128xf32>
    %36 = arith.addf %30, %35 : vector<100x128xf32>
    %c0_45 = arith.constant 0 : index
    %c0_46 = arith.constant 0 : index
    %37 = vector.load %arg25[%c0_45, %c0_46] : memref<100x128xf32, #tpu.memory_space<vmem>>, vector<100x128xf32>
    tpu.vector_store %arg25[%c0_45, %c0_46], %36 {strides = array<i32>} : memref<100x128xf32, #tpu.memory_space<vmem>>, vector<100x128xf32>,
    %c0_47 = arith.constant 0 : index
    %c0_48 = arith.constant 0 : index
    %38 = vector.load %arg25[%c0_47, %c0_48] : memref<100x128xf32, #tpu.memory_space<vmem>>, vector<100x128xf32>
    %c0_49 = arith.constant 0 : index
    %c5 = arith.constant 5 : index
    %c0_50 = arith.constant 0 : index
    %39 = vector.load %arg1[%c0_49, %c5, %c0_50] : memref<1x106x128xbf16, #tpu.memory_space<vmem>>, vector<1x100x128xbf16>
    %40 = vector.shape_cast %39 : vector<1x100x128xbf16> to vector<100x128xbf16>
    %c5_51 = arith.constant 5 : index
    %c0_52 = arith.constant 0 : index
    %c0_53 = arith.constant 0 : index
    %41 = vector.load %arg2[%c5_51, %c0_52, %c0_53] : memref<7x128x128xbf16, #tpu.memory_space<vmem>>, vector<1x128x128xbf16>
    %42 = vector.shape_cast %41 : vector<1x128x128xbf16> to vector<128x128xbf16>
    %cst_54 = arith.constant dense<0.000000e+00> : vector<100x128xf32>
    %43 = tpu.matmul %40, %42, %cst_54 {dimension_numbers = #tpu.dot_dimension_numbers<[1], [0], [0], [1], [0, 0, 1, 1], [], []>} : vector<100x128xbf16>, vector<128x128xbf16>, vector<100x128xf32> -> vector<100x128xf32>
    %44 = arith.addf %38, %43 : vector<100x128xf32>
    %c0_55 = arith.constant 0 : index
    %c0_56 = arith.constant 0 : index
    %45 = vector.load %arg25[%c0_55, %c0_56] : memref<100x128xf32, #tpu.memory_space<vmem>>, vector<100x128xf32>
    tpu.vector_store %arg25[%c0_55, %c0_56], %44 {strides = array<i32>} : memref<100x128xf32, #tpu.memory_space<vmem>>, vector<100x128xf32>,
    %c0_57 = arith.constant 0 : index
    %c0_58 = arith.constant 0 : index
    %46 = vector.load %arg25[%c0_57, %c0_58] : memref<100x128xf32, #tpu.memory_space<vmem>>, vector<100x128xf32>
    %c0_59 = arith.constant 0 : index
    %c6 = arith.constant 6 : index
    %c0_60 = arith.constant 0 : index
    %47 = vector.load %arg1[%c0_59, %c6, %c0_60] : memref<1x106x128xbf16, #tpu.memory_space<vmem>>, vector<1x100x128xbf16>
    %48 = vector.shape_cast %47 : vector<1x100x128xbf16> to vector<100x128xbf16>
    %c6_61 = arith.constant 6 : index
    %c0_62 = arith.constant 0 : index
    %c0_63 = arith.constant 0 : index
    %49 = vector.load %arg2[%c6_61, %c0_62, %c0_63] : memref<7x128x128xbf16, #tpu.memory_space<vmem>>, vector<1x128x128xbf16>
    %50 = vector.shape_cast %49 : vector<1x128x128xbf16> to vector<128x128xbf16>
    %cst_64 = arith.constant dense<0.000000e+00> : vector<100x128xf32>
    %51 = tpu.matmul %48, %50, %cst_64 {dimension_numbers = #tpu.dot_dimension_numbers<[1], [0], [0], [1], [0, 0, 1, 1], [], []>} : vector<100x128xbf16>, vector<128x128xbf16>, vector<100x128xf32> -> vector<100x128xf32>
    %52 = arith.addf %46, %51 : vector<100x128xf32>
    %c0_65 = arith.constant 0 : index
    %c0_66 = arith.constant 0 : index
    %53 = vector.load %arg25[%c0_65, %c0_66] : memref<100x128xf32, #tpu.memory_space<vmem>>, vector<100x128xf32>
    tpu.vector_store %arg25[%c0_65, %c0_66], %52 {strides = array<i32>} : memref<100x128xf32, #tpu.memory_space<vmem>>, vector<100x128xf32>,
    %54 = tpu.iota {dimensions = array<i32: 0>} : vector<50x100xi32>
    %55 = tpu.iota {dimensions = array<i32: 1>} : vector<50x100xi32>
    %c2_i32 = arith.constant 2 : i32
    %56 = vector.broadcast %c2_i32 : i32 to vector<50x100xi32>
    %57 = arith.muli %56, %54 : vector<50x100xi32>
    %58 = arith.cmpi eq, %55, %57 : vector<50x100xi32>
    %59 = arith.extui %58 : vector<50x100xi1> to vector<50x100xi32>
    %60 = arith.sitofp %59 : vector<50x100xi32> to vector<50x100xf32>
    %c0_67 = arith.constant 0 : index
    %c0_68 = arith.constant 0 : index
    %61 = vector.load %arg25[%c0_67, %c0_68] : memref<100x128xf32, #tpu.memory_space<vmem>>, vector<100x128xf32>
    %cst_69 = arith.constant dense<0.000000e+00> : vector<50x128xf32>
    %62 = tpu.matmul %60, %61, %cst_69 {dimension_numbers = #tpu.dot_dimension_numbers<[1], [0], [0], [1], [0, 0, 1, 1], [], []>} : vector<50x100xf32>, vector<100x128xf32>, vector<50x128xf32> -> vector<50x128xf32>
    %c0_70 = arith.constant 0 : index
    %c0_71 = arith.constant 0 : index
    %63 = vector.load %arg3[%c0_70, %c0_71] : memref<1x128xf32, #tpu.memory_space<vmem>>, vector<1x128xf32>
    %64 = vector.broadcast %63 : vector<1x128xf32> to vector<50x128xf32>
    %65 = arith.addf %62, %64 : vector<50x128xf32>
    %cst_72 = arith.constant 0.000000e+00 : f32
    %66 = vector.broadcast %cst_72 : f32 to vector<50x128xf32>
    %67 = arith.maximumf %65, %66 : vector<50x128xf32>
    %cst_73 = arith.constant 0.000000e+00 : f32
    %68 = vector.broadcast %cst_73 : f32 to vector<1x128xf32>
    %c0_74 = arith.constant 0 : index
    %c0_75 = arith.constant 0 : index
    %69 = vector.load %arg26[%c0_74, %c0_75] : memref<52x128xf32, #tpu.memory_space<vmem>>, vector<1x128xf32>
    tpu.vector_store %arg26[%c0_74, %c0_75], %68 {strides = array<i32>} : memref<52x128xf32, #tpu.memory_space<vmem>>, vector<1x128xf32>,
    %cst_76 = arith.constant 0.000000e+00 : f32
    %70 = vector.broadcast %cst_76 : f32 to vector<1x128xf32>
    %c51 = arith.constant 51 : index
    %c0_77 = arith.constant 0 : index
    %71 = vector.load %arg26[%c51, %c0_77] : memref<52x128xf32, #tpu.memory_space<vmem>>, vector<1x128xf32>
    tpu.vector_store %arg26[%c51, %c0_77], %70 {strides = array<i32>} : memref<52x128xf32, #tpu.memory_space<vmem>>, vector<1x128xf32>,
    %c1_78 = arith.constant 1 : index
    %c0_79 = arith.constant 0 : index
    %72 = vector.load %arg26[%c1_78, %c0_79] : memref<52x128xf32, #tpu.memory_space<vmem>>, vector<50x128xf32>
    tpu.vector_store %arg26[%c1_78, %c0_79], %67 {strides = array<i32>} : memref<52x128xf32, #tpu.memory_space<vmem>>, vector<50x128xf32>,
    %c0_80 = arith.constant 0 : index
    %c0_81 = arith.constant 0 : index
    %73 = vector.load %arg26[%c0_80, %c0_81] : memref<52x128xf32, #tpu.memory_space<vmem>>, vector<50x128xf32>
    %c1_82 = arith.constant 1 : index
    %c0_83 = arith.constant 0 : index
    %74 = vector.load %arg26[%c1_82, %c0_83] : memref<52x128xf32, #tpu.memory_space<vmem>>, vector<50x128xf32>
    %75 = arith.maximumf %73, %74 : vector<50x128xf32>
    %c2_84 = arith.constant 2 : index
    %c0_85 = arith.constant 0 : index
    %76 = vector.load %arg26[%c2_84, %c0_85] : memref<52x128xf32, #tpu.memory_space<vmem>>, vector<50x128xf32>
    %77 = arith.maximumf %75, %76 : vector<50x128xf32>
    %78 = tpu.iota {dimensions = array<i32: 0>} : vector<25x50xi32>
    %79 = tpu.iota {dimensions = array<i32: 1>} : vector<25x50xi32>
    %c2_i32_86 = arith.constant 2 : i32
    %80 = vector.broadcast %c2_i32_86 : i32 to vector<25x50xi32>
    %81 = arith.muli %80, %78 : vector<25x50xi32>
    %82 = arith.cmpi eq, %79, %81 : vector<25x50xi32>
    %83 = arith.extui %82 : vector<25x50xi1> to vector<25x50xi32>
    %84 = arith.sitofp %83 : vector<25x50xi32> to vector<25x50xf32>
    %cst_87 = arith.constant dense<0.000000e+00> : vector<25x128xf32>
    %85 = tpu.matmul %84, %77, %cst_87 {dimension_numbers = #tpu.dot_dimension_numbers<[1], [0], [0], [1], [0, 0, 1, 1], [], []>} : vector<25x50xf32>, vector<50x128xf32>, vector<25x128xf32> -> vector<25x128xf32>
    %cst_88 = arith.constant 0.000000e+00 : f32
    %86 = vector.broadcast %cst_88 : f32 to vector<1x128xf32>
    %c0_89 = arith.constant 0 : index
    %c0_90 = arith.constant 0 : index
    %87 = vector.load %arg27[%c0_89, %c0_90] : memref<27x128xf32, #tpu.memory_space<vmem>>, vector<1x128xf32>
    tpu.vector_store %arg27[%c0_89, %c0_90], %86 {strides = array<i32>} : memref<27x128xf32, #tpu.memory_space<vmem>>, vector<1x128xf32>,
    %cst_91 = arith.constant 0.000000e+00 : f32
    %88 = vector.broadcast %cst_91 : f32 to vector<1x128xf32>
    %c26 = arith.constant 26 : index
    %c0_92 = arith.constant 0 : index
    %89 = vector.load %arg27[%c26, %c0_92] : memref<27x128xf32, #tpu.memory_space<vmem>>, vector<1x128xf32>
    tpu.vector_store %arg27[%c26, %c0_92], %88 {strides = array<i32>} : memref<27x128xf32, #tpu.memory_space<vmem>>, vector<1x128xf32>,
    %c1_93 = arith.constant 1 : index
    %c0_94 = arith.constant 0 : index
    %90 = vector.load %arg27[%c1_93, %c0_94] : memref<27x128xf32, #tpu.memory_space<vmem>>, vector<25x128xf32>
    tpu.vector_store %arg27[%c1_93, %c0_94], %85 {strides = array<i32>} : memref<27x128xf32, #tpu.memory_space<vmem>>, vector<25x128xf32>,
    %c0_95 = arith.constant 0 : index
    %c0_96 = arith.constant 0 : index
    %91 = vector.load %arg27[%c0_95, %c0_96] : memref<27x128xf32, #tpu.memory_space<vmem>>, vector<25x128xf32>
    %92 = arith.truncf %91 : vector<25x128xf32> to vector<25x128xbf16>
    %c0_97 = arith.constant 0 : index
    %c0_98 = arith.constant 0 : index
    %c0_99 = arith.constant 0 : index
    %93 = vector.load %arg4[%c0_97, %c0_98, %c0_99] : memref<3x128x128xbf16, #tpu.memory_space<vmem>>, vector<1x128x128xbf16>
    %94 = vector.shape_cast %93 : vector<1x128x128xbf16> to vector<128x128xbf16>
    %cst_100 = arith.constant dense<0.000000e+00> : vector<25x128xf32>
    %95 = tpu.matmul %92, %94, %cst_100 {dimension_numbers = #tpu.dot_dimension_numbers<[1], [0], [0], [1], [0, 0, 1, 1], [], []>} : vector<25x128xbf16>, vector<128x128xbf16>, vector<25x128xf32> -> vector<25x128xf32>
    %c1_101 = arith.constant 1 : index
    %c0_102 = arith.constant 0 : index
    %96 = vector.load %arg27[%c1_101, %c0_102] : memref<27x128xf32, #tpu.memory_space<vmem>>, vector<25x128xf32>
    %97 = arith.truncf %96 : vector<25x128xf32> to vector<25x128xbf16>
    %c1_103 = arith.constant 1 : index
    %c0_104 = arith.constant 0 : index
    %c0_105 = arith.constant 0 : index
    %98 = vector.load %arg4[%c1_103, %c0_104, %c0_105] : memref<3x128x128xbf16, #tpu.memory_space<vmem>>, vector<1x128x128xbf16>
    %99 = vector.shape_cast %98 : vector<1x128x128xbf16> to vector<128x128xbf16>
    %cst_106 = arith.constant dense<0.000000e+00> : vector<25x128xf32>
    %100 = tpu.matmul %97, %99, %cst_106 {dimension_numbers = #tpu.dot_dimension_numbers<[1], [0], [0], [1], [0, 0, 1, 1], [], []>} : vector<25x128xbf16>, vector<128x128xbf16>, vector<25x128xf32> -> vector<25x128xf32>
    %101 = arith.addf %95, %100 : vector<25x128xf32>
    %c2_107 = arith.constant 2 : index
    %c0_108 = arith.constant 0 : index
    %102 = vector.load %arg27[%c2_107, %c0_108] : memref<27x128xf32, #tpu.memory_space<vmem>>, vector<25x128xf32>
    %103 = arith.truncf %102 : vector<25x128xf32> to vector<25x128xbf16>
    %c2_109 = arith.constant 2 : index
    %c0_110 = arith.constant 0 : index
    %c0_111 = arith.constant 0 : index
    %104 = vector.load %arg4[%c2_109, %c0_110, %c0_111] : memref<3x128x128xbf16, #tpu.memory_space<vmem>>, vector<1x128x128xbf16>
    %105 = vector.shape_cast %104 : vector<1x128x128xbf16> to vector<128x128xbf16>
    %cst_112 = arith.constant dense<0.000000e+00> : vector<25x128xf32>
    %106 = tpu.matmul %103, %105, %cst_112 {dimension_numbers = #tpu.dot_dimension_numbers<[1], [0], [0], [1], [0, 0, 1, 1], [], []>} : vector<25x128xbf16>, vector<128x128xbf16>, vector<25x128xf32> -> vector<25x128xf32>
    %107 = arith.addf %101, %106 : vector<25x128xf32>
    %c0_113 = arith.constant 0 : index
    %c0_114 = arith.constant 0 : index
    %108 = vector.load %arg5[%c0_113, %c0_114] : memref<1x128xf32, #tpu.memory_space<vmem>>, vector<1x128xf32>
    %109 = vector.broadcast %108 : vector<1x128xf32> to vector<25x128xf32>
    %110 = arith.addf %107, %109 : vector<25x128xf32>
    %cst_115 = arith.constant 0.000000e+00 : f32
    %111 = vector.broadcast %cst_115 : f32 to vector<25x128xf32>
    %112 = arith.maximumf %110, %111 : vector<25x128xf32>
    %cst_116 = arith.constant 0.000000e+00 : f32
    %113 = vector.broadcast %cst_116 : f32 to vector<1x128xf32>
    %c0_117 = arith.constant 0 : index
    %c0_118 = arith.constant 0 : index
    %114 = vector.load %arg27[%c0_117, %c0_118] : memref<27x128xf32, #tpu.memory_space<vmem>>, vector<1x128xf32>
    tpu.vector_store %arg27[%c0_117, %c0_118], %113 {strides = array<i32>} : memref<27x128xf32, #tpu.memory_space<vmem>>, vector<1x128xf32>,
    %cst_119 = arith.constant 0.000000e+00 : f32
    %115 = vector.broadcast %cst_119 : f32 to vector<1x128xf32>
    %c26_120 = arith.constant 26 : index
    %c0_121 = arith.constant 0 : index
    %116 = vector.load %arg27[%c26_120, %c0_121] : memref<27x128xf32, #tpu.memory_space<vmem>>, vector<1x128xf32>
    tpu.vector_store %arg27[%c26_120, %c0_121], %115 {strides = array<i32>} : memref<27x128xf32, #tpu.memory_space<vmem>>, vector<1x128xf32>,
    %c1_122 = arith.constant 1 : index
    %c0_123 = arith.constant 0 : index
    %117 = vector.load %arg27[%c1_122, %c0_123] : memref<27x128xf32, #tpu.memory_space<vmem>>, vector<25x128xf32>
    tpu.vector_store %arg27[%c1_122, %c0_123], %112 {strides = array<i32>} : memref<27x128xf32, #tpu.memory_space<vmem>>, vector<25x128xf32>,
    %c0_124 = arith.constant 0 : index
    %c0_125 = arith.constant 0 : index
    %118 = vector.load %arg27[%c0_124, %c0_125] : memref<27x128xf32, #tpu.memory_space<vmem>>, vector<25x128xf32>
    %119 = arith.truncf %118 : vector<25x128xf32> to vector<25x128xbf16>
    %c0_126 = arith.constant 0 : index
    %c0_127 = arith.constant 0 : index
    %c0_128 = arith.constant 0 : index
    %120 = vector.load %arg6[%c0_126, %c0_127, %c0_128] : memref<3x128x128xbf16, #tpu.memory_space<vmem>>, vector<1x128x128xbf16>
    %121 = vector.shape_cast %120 : vector<1x128x128xbf16> to vector<128x128xbf16>
    %cst_129 = arith.constant dense<0.000000e+00> : vector<25x128xf32>
    %122 = tpu.matmul %119, %121, %cst_129 {dimension_numbers = #tpu.dot_dimension_numbers<[1], [0], [0], [1], [0, 0, 1, 1], [], []>} : vector<25x128xbf16>, vector<128x128xbf16>, vector<25x128xf32> -> vector<25x128xf32>
    %c1_130 = arith.constant 1 : index
    %c0_131 = arith.constant 0 : index
    %123 = vector.load %arg27[%c1_130, %c0_131] : memref<27x128xf32, #tpu.memory_space<vmem>>, vector<25x128xf32>
    %124 = arith.truncf %123 : vector<25x128xf32> to vector<25x128xbf16>
    %c1_132 = arith.constant 1 : index
    %c0_133 = arith.constant 0 : index
    %c0_134 = arith.constant 0 : index
    %125 = vector.load %arg6[%c1_132, %c0_133, %c0_134] : memref<3x128x128xbf16, #tpu.memory_space<vmem>>, vector<1x128x128xbf16>
    %126 = vector.shape_cast %125 : vector<1x128x128xbf16> to vector<128x128xbf16>
    %cst_135 = arith.constant dense<0.000000e+00> : vector<25x128xf32>
    %127 = tpu.matmul %124, %126, %cst_135 {dimension_numbers = #tpu.dot_dimension_numbers<[1], [0], [0], [1], [0, 0, 1, 1], [], []>} : vector<25x128xbf16>, vector<128x128xbf16>, vector<25x128xf32> -> vector<25x128xf32>
    %128 = arith.addf %122, %127 : vector<25x128xf32>
    %c2_136 = arith.constant 2 : index
    %c0_137 = arith.constant 0 : index
    %129 = vector.load %arg27[%c2_136, %c0_137] : memref<27x128xf32, #tpu.memory_space<vmem>>, vector<25x128xf32>
    %130 = arith.truncf %129 : vector<25x128xf32> to vector<25x128xbf16>
    %c2_138 = arith.constant 2 : index
    %c0_139 = arith.constant 0 : index
    %c0_140 = arith.constant 0 : index
    %131 = vector.load %arg6[%c2_138, %c0_139, %c0_140] : memref<3x128x128xbf16, #tpu.memory_space<vmem>>, vector<1x128x128xbf16>
    %132 = vector.shape_cast %131 : vector<1x128x128xbf16> to vector<128x128xbf16>
    %cst_141 = arith.constant dense<0.000000e+00> : vector<25x128xf32>
    %133 = tpu.matmul %130, %132, %cst_141 {dimension_numbers = #tpu.dot_dimension_numbers<[1], [0], [0], [1], [0, 0, 1, 1], [], []>} : vector<25x128xbf16>, vector<128x128xbf16>, vector<25x128xf32> -> vector<25x128xf32>
    %134 = arith.addf %128, %133 : vector<25x128xf32>
    %c0_142 = arith.constant 0 : index
    %c0_143 = arith.constant 0 : index
    %135 = vector.load %arg7[%c0_142, %c0_143] : memref<1x128xf32, #tpu.memory_space<vmem>>, vector<1x128xf32>
    %136 = vector.broadcast %135 : vector<1x128xf32> to vector<25x128xf32>
    %137 = arith.addf %134, %136 : vector<25x128xf32>
    %138 = arith.addf %137, %85 : vector<25x128xf32>
    %cst_144 = arith.constant 0.000000e+00 : f32
    %139 = vector.broadcast %cst_144 : f32 to vector<25x128xf32>
    %140 = arith.maximumf %138, %139 : vector<25x128xf32>
    %cst_145 = arith.constant 0.000000e+00 : f32
    %141 = vector.broadcast %cst_145 : f32 to vector<1x128xf32>
    %c0_146 = arith.constant 0 : index
    %c0_147 = arith.constant 0 : index
    %142 = vector.load %arg27[%c0_146, %c0_147] : memref<27x128xf32, #tpu.memory_space<vmem>>, vector<1x128xf32>
    tpu.vector_store %arg27[%c0_146, %c0_147], %141 {strides = array<i32>} : memref<27x128xf32, #tpu.memory_space<vmem>>, vector<1x128xf32>,
    %cst_148 = arith.constant 0.000000e+00 : f32
    %143 = vector.broadcast %cst_148 : f32 to vector<1x128xf32>
    %c26_149 = arith.constant 26 : index
    %c0_150 = arith.constant 0 : index
    %144 = vector.load %arg27[%c26_149, %c0_150] : memref<27x128xf32, #tpu.memory_space<vmem>>, vector<1x128xf32>
    tpu.vector_store %arg27[%c26_149, %c0_150], %143 {strides = array<i32>} : memref<27x128xf32, #tpu.memory_space<vmem>>, vector<1x128xf32>,
    %c1_151 = arith.constant 1 : index
    %c0_152 = arith.constant 0 : index
    %145 = vector.load %arg27[%c1_151, %c0_152] : memref<27x128xf32, #tpu.memory_space<vmem>>, vector<25x128xf32>
    tpu.vector_store %arg27[%c1_151, %c0_152], %140 {strides = array<i32>} : memref<27x128xf32, #tpu.memory_space<vmem>>, vector<25x128xf32>,
    %c0_153 = arith.constant 0 : index
    %c0_154 = arith.constant 0 : index
    %146 = vector.load %arg27[%c0_153, %c0_154] : memref<27x128xf32, #tpu.memory_space<vmem>>, vector<25x128xf32>
    %147 = arith.truncf %146 : vector<25x128xf32> to vector<25x128xbf16>
    %c0_155 = arith.constant 0 : index
    %c0_156 = arith.constant 0 : index
    %c0_157 = arith.constant 0 : index
    %148 = vector.load %arg8[%c0_155, %c0_156, %c0_157] : memref<3x128x128xbf16, #tpu.memory_space<vmem>>, vector<1x128x128xbf16>
    %149 = vector.shape_cast %148 : vector<1x128x128xbf16> to vector<128x128xbf16>
    %cst_158 = arith.constant dense<0.000000e+00> : vector<25x128xf32>
    %150 = tpu.matmul %147, %149, %cst_158 {dimension_numbers = #tpu.dot_dimension_numbers<[1], [0], [0], [1], [0, 0, 1, 1], [], []>} : vector<25x128xbf16>, vector<128x128xbf16>, vector<25x128xf32> -> vector<25x128xf32>
    %c1_159 = arith.constant 1 : index
    %c0_160 = arith.constant 0 : index
    %151 = vector.load %arg27[%c1_159, %c0_160] : memref<27x128xf32, #tpu.memory_space<vmem>>, vector<25x128xf32>
    %152 = arith.truncf %151 : vector<25x128xf32> to vector<25x128xbf16>
    %c1_161 = arith.constant 1 : index
    %c0_162 = arith.constant 0 : index
    %c0_163 = arith.constant 0 : index
    %153 = vector.load %arg8[%c1_161, %c0_162, %c0_163] : memref<3x128x128xbf16, #tpu.memory_space<vmem>>, vector<1x128x128xbf16>
    %154 = vector.shape_cast %153 : vector<1x128x128xbf16> to vector<128x128xbf16>
    %cst_164 = arith.constant dense<0.000000e+00> : vector<25x128xf32>
    %155 = tpu.matmul %152, %154, %cst_164 {dimension_numbers = #tpu.dot_dimension_numbers<[1], [0], [0], [1], [0, 0, 1, 1], [], []>} : vector<25x128xbf16>, vector<128x128xbf16>, vector<25x128xf32> -> vector<25x128xf32>
    %156 = arith.addf %150, %155 : vector<25x128xf32>
    %c2_165 = arith.constant 2 : index
    %c0_166 = arith.constant 0 : index
    %157 = vector.load %arg27[%c2_165, %c0_166] : memref<27x128xf32, #tpu.memory_space<vmem>>, vector<25x128xf32>
    %158 = arith.truncf %157 : vector<25x128xf32> to vector<25x128xbf16>
    %c2_167 = arith.constant 2 : index
    %c0_168 = arith.constant 0 : index
    %c0_169 = arith.constant 0 : index
    %159 = vector.load %arg8[%c2_167, %c0_168, %c0_169] : memref<3x128x128xbf16, #tpu.memory_space<vmem>>, vector<1x128x128xbf16>
    %160 = vector.shape_cast %159 : vector<1x128x128xbf16> to vector<128x128xbf16>
    %cst_170 = arith.constant dense<0.000000e+00> : vector<25x128xf32>
    %161 = tpu.matmul %158, %160, %cst_170 {dimension_numbers = #tpu.dot_dimension_numbers<[1], [0], [0], [1], [0, 0, 1, 1], [], []>} : vector<25x128xbf16>, vector<128x128xbf16>, vector<25x128xf32> -> vector<25x128xf32>
    %162 = arith.addf %156, %161 : vector<25x128xf32>
    %c0_171 = arith.constant 0 : index
    %c0_172 = arith.constant 0 : index
    %163 = vector.load %arg9[%c0_171, %c0_172] : memref<1x128xf32, #tpu.memory_space<vmem>>, vector<1x128xf32>
    %164 = vector.broadcast %163 : vector<1x128xf32> to vector<25x128xf32>
    %165 = arith.addf %162, %164 : vector<25x128xf32>
    %cst_173 = arith.constant 0.000000e+00 : f32
    %166 = vector.broadcast %cst_173 : f32 to vector<25x128xf32>
    %167 = arith.maximumf %165, %166 : vector<25x128xf32>
    %cst_174 = arith.constant 0.000000e+00 : f32
    %168 = vector.broadcast %cst_174 : f32 to vector<1x128xf32>
    %c0_175 = arith.constant 0 : index
    %c0_176 = arith.constant 0 : index
    %169 = vector.load %arg27[%c0_175, %c0_176] : memref<27x128xf32, #tpu.memory_space<vmem>>, vector<1x128xf32>
    tpu.vector_store %arg27[%c0_175, %c0_176], %168 {strides = array<i32>} : memref<27x128xf32, #tpu.memory_space<vmem>>, vector<1x128xf32>,
    %cst_177 = arith.constant 0.000000e+00 : f32
    %170 = vector.broadcast %cst_177 : f32 to vector<1x128xf32>
    %c26_178 = arith.constant 26 : index
    %c0_179 = arith.constant 0 : index
    %171 = vector.load %arg27[%c26_178, %c0_179] : memref<27x128xf32, #tpu.memory_space<vmem>>, vector<1x128xf32>
    tpu.vector_store %arg27[%c26_178, %c0_179], %170 {strides = array<i32>} : memref<27x128xf32, #tpu.memory_space<vmem>>, vector<1x128xf32>,
    %c1_180 = arith.constant 1 : index
    %c0_181 = arith.constant 0 : index
    %172 = vector.load %arg27[%c1_180, %c0_181] : memref<27x128xf32, #tpu.memory_space<vmem>>, vector<25x128xf32>
    tpu.vector_store %arg27[%c1_180, %c0_181], %167 {strides = array<i32>} : memref<27x128xf32, #tpu.memory_space<vmem>>, vector<25x128xf32>,
    %c0_182 = arith.constant 0 : index
    %c0_183 = arith.constant 0 : index
    %173 = vector.load %arg27[%c0_182, %c0_183] : memref<27x128xf32, #tpu.memory_space<vmem>>, vector<25x128xf32>
    %174 = arith.truncf %173 : vector<25x128xf32> to vector<25x128xbf16>
    %c0_184 = arith.constant 0 : index
    %c0_185 = arith.constant 0 : index
    %c0_186 = arith.constant 0 : index
    %175 = vector.load %arg10[%c0_184, %c0_185, %c0_186] : memref<3x128x128xbf16, #tpu.memory_space<vmem>>, vector<1x128x128xbf16>
    %176 = vector.shape_cast %175 : vector<1x128x128xbf16> to vector<128x128xbf16>
    %cst_187 = arith.constant dense<0.000000e+00> : vector<25x128xf32>
    %177 = tpu.matmul %174, %176, %cst_187 {dimension_numbers = #tpu.dot_dimension_numbers<[1], [0], [0], [1], [0, 0, 1, 1], [], []>} : vector<25x128xbf16>, vector<128x128xbf16>, vector<25x128xf32> -> vector<25x128xf32>
    %c1_188 = arith.constant 1 : index
    %c0_189 = arith.constant 0 : index
    %178 = vector.load %arg27[%c1_188, %c0_189] : memref<27x128xf32, #tpu.memory_space<vmem>>, vector<25x128xf32>
    %179 = arith.truncf %178 : vector<25x128xf32> to vector<25x128xbf16>
    %c1_190 = arith.constant 1 : index
    %c0_191 = arith.constant 0 : index
    %c0_192 = arith.constant 0 : index
    %180 = vector.load %arg10[%c1_190, %c0_191, %c0_192] : memref<3x128x128xbf16, #tpu.memory_space<vmem>>, vector<1x128x128xbf16>
    %181 = vector.shape_cast %180 : vector<1x128x128xbf16> to vector<128x128xbf16>
    %cst_193 = arith.constant dense<0.000000e+00> : vector<25x128xf32>
    %182 = tpu.matmul %179, %181, %cst_193 {dimension_numbers = #tpu.dot_dimension_numbers<[1], [0], [0], [1], [0, 0, 1, 1], [], []>} : vector<25x128xbf16>, vector<128x128xbf16>, vector<25x128xf32> -> vector<25x128xf32>
    %183 = arith.addf %177, %182 : vector<25x128xf32>
    %c2_194 = arith.constant 2 : index
    %c0_195 = arith.constant 0 : index
    %184 = vector.load %arg27[%c2_194, %c0_195] : memref<27x128xf32, #tpu.memory_space<vmem>>, vector<25x128xf32>
    %185 = arith.truncf %184 : vector<25x128xf32> to vector<25x128xbf16>
    %c2_196 = arith.constant 2 : index
    %c0_197 = arith.constant 0 : index
    %c0_198 = arith.constant 0 : index
    %186 = vector.load %arg10[%c2_196, %c0_197, %c0_198] : memref<3x128x128xbf16, #tpu.memory_space<vmem>>, vector<1x128x128xbf16>
    %187 = vector.shape_cast %186 : vector<1x128x128xbf16> to vector<128x128xbf16>
    %cst_199 = arith.constant dense<0.000000e+00> : vector<25x128xf32>
    %188 = tpu.matmul %185, %187, %cst_199 {dimension_numbers = #tpu.dot_dimension_numbers<[1], [0], [0], [1], [0, 0, 1, 1], [], []>} : vector<25x128xbf16>, vector<128x128xbf16>, vector<25x128xf32> -> vector<25x128xf32>
    %189 = arith.addf %183, %188 : vector<25x128xf32>
    %c0_200 = arith.constant 0 : index
    %c0_201 = arith.constant 0 : index
    %190 = vector.load %arg11[%c0_200, %c0_201] : memref<1x128xf32, #tpu.memory_space<vmem>>, vector<1x128xf32>
    %191 = vector.broadcast %190 : vector<1x128xf32> to vector<25x128xf32>
    %192 = arith.addf %189, %191 : vector<25x128xf32>
    %193 = arith.addf %192, %140 : vector<25x128xf32>
    %cst_202 = arith.constant 0.000000e+00 : f32
    %194 = vector.broadcast %cst_202 : f32 to vector<25x128xf32>
    %195 = arith.maximumf %193, %194 : vector<25x128xf32>
    %cst_203 = arith.constant 0.000000e+00 : f32
    %196 = vector.broadcast %cst_203 : f32 to vector<1x128xf32>
    %c0_204 = arith.constant 0 : index
    %c0_205 = arith.constant 0 : index
    %197 = vector.load %arg27[%c0_204, %c0_205] : memref<27x128xf32, #tpu.memory_space<vmem>>, vector<1x128xf32>
    tpu.vector_store %arg27[%c0_204, %c0_205], %196 {strides = array<i32>} : memref<27x128xf32, #tpu.memory_space<vmem>>, vector<1x128xf32>,
    %cst_206 = arith.constant 0.000000e+00 : f32
    %198 = vector.broadcast %cst_206 : f32 to vector<1x128xf32>
    %c26_207 = arith.constant 26 : index
    %c0_208 = arith.constant 0 : index
    %199 = vector.load %arg27[%c26_207, %c0_208] : memref<27x128xf32, #tpu.memory_space<vmem>>, vector<1x128xf32>
    tpu.vector_store %arg27[%c26_207, %c0_208], %198 {strides = array<i32>} : memref<27x128xf32, #tpu.memory_space<vmem>>, vector<1x128xf32>,
    %c1_209 = arith.constant 1 : index
    %c0_210 = arith.constant 0 : index
    %200 = vector.load %arg27[%c1_209, %c0_210] : memref<27x128xf32, #tpu.memory_space<vmem>>, vector<25x128xf32>
    tpu.vector_store %arg27[%c1_209, %c0_210], %195 {strides = array<i32>} : memref<27x128xf32, #tpu.memory_space<vmem>>, vector<25x128xf32>,
    %201 = tpu.iota {dimensions = array<i32: 0>} : vector<13x25xi32>
    %202 = tpu.iota {dimensions = array<i32: 1>} : vector<13x25xi32>
    %c2_i32_211 = arith.constant 2 : i32
    %203 = vector.broadcast %c2_i32_211 : i32 to vector<13x25xi32>
    %204 = arith.muli %203, %201 : vector<13x25xi32>
    %205 = arith.cmpi eq, %202, %204 : vector<13x25xi32>
    %206 = arith.extui %205 : vector<13x25xi1> to vector<13x25xi32>
    %207 = arith.sitofp %206 : vector<13x25xi32> to vector<13x25xf32>
    %c0_212 = arith.constant 0 : index
    %c0_213 = arith.constant 0 : index
    %208 = vector.load %arg27[%c0_212, %c0_213] : memref<27x128xf32, #tpu.memory_space<vmem>>, vector<25x128xf32>
    %209 = arith.truncf %208 : vector<25x128xf32> to vector<25x128xbf16>
    %c0_214 = arith.constant 0 : index
    %c0_215 = arith.constant 0 : index
    %c0_216 = arith.constant 0 : index
    %210 = vector.load %arg12[%c0_214, %c0_215, %c0_216] : memref<3x128x128xbf16, #tpu.memory_space<vmem>>, vector<1x128x128xbf16>
    %211 = vector.shape_cast %210 : vector<1x128x128xbf16> to vector<128x128xbf16>
    %cst_217 = arith.constant dense<0.000000e+00> : vector<25x128xf32>
    %212 = tpu.matmul %209, %211, %cst_217 {dimension_numbers = #tpu.dot_dimension_numbers<[1], [0], [0], [1], [0, 0, 1, 1], [], []>} : vector<25x128xbf16>, vector<128x128xbf16>, vector<25x128xf32> -> vector<25x128xf32>
    %c1_218 = arith.constant 1 : index
    %c0_219 = arith.constant 0 : index
    %213 = vector.load %arg27[%c1_218, %c0_219] : memref<27x128xf32, #tpu.memory_space<vmem>>, vector<25x128xf32>
    %214 = arith.truncf %213 : vector<25x128xf32> to vector<25x128xbf16>
    %c1_220 = arith.constant 1 : index
    %c0_221 = arith.constant 0 : index
    %c0_222 = arith.constant 0 : index
    %215 = vector.load %arg12[%c1_220, %c0_221, %c0_222] : memref<3x128x128xbf16, #tpu.memory_space<vmem>>, vector<1x128x128xbf16>
    %216 = vector.shape_cast %215 : vector<1x128x128xbf16> to vector<128x128xbf16>
    %cst_223 = arith.constant dense<0.000000e+00> : vector<25x128xf32>
    %217 = tpu.matmul %214, %216, %cst_223 {dimension_numbers = #tpu.dot_dimension_numbers<[1], [0], [0], [1], [0, 0, 1, 1], [], []>} : vector<25x128xbf16>, vector<128x128xbf16>, vector<25x128xf32> -> vector<25x128xf32>
    %218 = arith.addf %212, %217 : vector<25x128xf32>
    %c2_224 = arith.constant 2 : index
    %c0_225 = arith.constant 0 : index
    %219 = vector.load %arg27[%c2_224, %c0_225] : memref<27x128xf32, #tpu.memory_space<vmem>>, vector<25x128xf32>
    %220 = arith.truncf %219 : vector<25x128xf32> to vector<25x128xbf16>
    %c2_226 = arith.constant 2 : index
    %c0_227 = arith.constant 0 : index
    %c0_228 = arith.constant 0 : index
    %221 = vector.load %arg12[%c2_226, %c0_227, %c0_228] : memref<3x128x128xbf16, #tpu.memory_space<vmem>>, vector<1x128x128xbf16>
    %222 = vector.shape_cast %221 : vector<1x128x128xbf16> to vector<128x128xbf16>
    %cst_229 = arith.constant dense<0.000000e+00> : vector<25x128xf32>
    %223 = tpu.matmul %220, %222, %cst_229 {dimension_numbers = #tpu.dot_dimension_numbers<[1], [0], [0], [1], [0, 0, 1, 1], [], []>} : vector<25x128xbf16>, vector<128x128xbf16>, vector<25x128xf32> -> vector<25x128xf32>
    %224 = arith.addf %218, %223 : vector<25x128xf32>
    %cst_230 = arith.constant dense<0.000000e+00> : vector<13x128xf32>
    %225 = tpu.matmul %207, %224, %cst_230 {dimension_numbers = #tpu.dot_dimension_numbers<[1], [0], [0], [1], [0, 0, 1, 1], [], []>} : vector<13x25xf32>, vector<25x128xf32>, vector<13x128xf32> -> vector<13x128xf32>
    %c0_231 = arith.constant 0 : index
    %c0_232 = arith.constant 0 : index
    %226 = vector.load %arg13[%c0_231, %c0_232] : memref<1x128xf32, #tpu.memory_space<vmem>>, vector<1x128xf32>
    %227 = vector.broadcast %226 : vector<1x128xf32> to vector<13x128xf32>
    %228 = arith.addf %225, %227 : vector<13x128xf32>
    %cst_233 = arith.constant 0.000000e+00 : f32
    %229 = vector.broadcast %cst_233 : f32 to vector<13x128xf32>
    %230 = arith.maximumf %228, %229 : vector<13x128xf32>
    %cst_234 = arith.constant dense<0.000000e+00> : vector<13x128xf32>
    %231 = tpu.matmul %207, %195, %cst_234 {dimension_numbers = #tpu.dot_dimension_numbers<[1], [0], [0], [1], [0, 0, 1, 1], [], []>} : vector<13x25xf32>, vector<25x128xf32>, vector<13x128xf32> -> vector<13x128xf32>
    %232 = arith.truncf %231 : vector<13x128xf32> to vector<13x128xbf16>
    %c0_235 = arith.constant 0 : index
    %c0_236 = arith.constant 0 : index
    %233 = vector.load %arg14[%c0_235, %c0_236] : memref<128x128xbf16, #tpu.memory_space<vmem>>, vector<128x128xbf16>
    %cst_237 = arith.constant dense<0.000000e+00> : vector<13x128xf32>
    %234 = tpu.matmul %232, %233, %cst_237 {dimension_numbers = #tpu.dot_dimension_numbers<[1], [0], [0], [1], [0, 0, 1, 1], [], []>} : vector<13x128xbf16>, vector<128x128xbf16>, vector<13x128xf32> -> vector<13x128xf32>
    %c0_238 = arith.constant 0 : index
    %c0_239 = arith.constant 0 : index
    %235 = vector.load %arg15[%c0_238, %c0_239] : memref<1x128xf32, #tpu.memory_space<vmem>>, vector<1x128xf32>
    %236 = vector.broadcast %235 : vector<1x128xf32> to vector<13x128xf32>
    %237 = arith.addf %234, %236 : vector<13x128xf32>
    %cst_240 = arith.constant 0.000000e+00 : f32
    %238 = vector.broadcast %cst_240 : f32 to vector<1x128xf32>
    %c0_241 = arith.constant 0 : index
    %c0_242 = arith.constant 0 : index
    %239 = vector.load %arg28[%c0_241, %c0_242] : memref<15x128xf32, #tpu.memory_space<vmem>>, vector<1x128xf32>
    tpu.vector_store %arg28[%c0_241, %c0_242], %238 {strides = array<i32>} : memref<15x128xf32, #tpu.memory_space<vmem>>, vector<1x128xf32>,
    %cst_243 = arith.constant 0.000000e+00 : f32
    %240 = vector.broadcast %cst_243 : f32 to vector<1x128xf32>
    %c14 = arith.constant 14 : index
    %c0_244 = arith.constant 0 : index
    %241 = vector.load %arg28[%c14, %c0_244] : memref<15x128xf32, #tpu.memory_space<vmem>>, vector<1x128xf32>
    tpu.vector_store %arg28[%c14, %c0_244], %240 {strides = array<i32>} : memref<15x128xf32, #tpu.memory_space<vmem>>, vector<1x128xf32>,
    %c1_245 = arith.constant 1 : index
    %c0_246 = arith.constant 0 : index
    %242 = vector.load %arg28[%c1_245, %c0_246] : memref<15x128xf32, #tpu.memory_space<vmem>>, vector<13x128xf32>
    tpu.vector_store %arg28[%c1_245, %c0_246], %230 {strides = array<i32>} : memref<15x128xf32, #tpu.memory_space<vmem>>, vector<13x128xf32>,
    %c0_247 = arith.constant 0 : index
    %c0_248 = arith.constant 0 : index
    %243 = vector.load %arg28[%c0_247, %c0_248] : memref<15x128xf32, #tpu.memory_space<vmem>>, vector<13x128xf32>
    %244 = arith.truncf %243 : vector<13x128xf32> to vector<13x128xbf16>
    %c0_249 = arith.constant 0 : index
    %c0_250 = arith.constant 0 : index
    %c0_251 = arith.constant 0 : index
    %245 = vector.load %arg16[%c0_249, %c0_250, %c0_251] : memref<3x128x128xbf16, #tpu.memory_space<vmem>>, vector<1x128x128xbf16>
    %246 = vector.shape_cast %245 : vector<1x128x128xbf16> to vector<128x128xbf16>
    %cst_252 = arith.constant dense<0.000000e+00> : vector<13x128xf32>
    %247 = tpu.matmul %244, %246, %cst_252 {dimension_numbers = #tpu.dot_dimension_numbers<[1], [0], [0], [1], [0, 0, 1, 1], [], []>} : vector<13x128xbf16>, vector<128x128xbf16>, vector<13x128xf32> -> vector<13x128xf32>
    %c1_253 = arith.constant 1 : index
    %c0_254 = arith.constant 0 : index
    %248 = vector.load %arg28[%c1_253, %c0_254] : memref<15x128xf32, #tpu.memory_space<vmem>>, vector<13x128xf32>
    %249 = arith.truncf %248 : vector<13x128xf32> to vector<13x128xbf16>
    %c1_255 = arith.constant 1 : index
    %c0_256 = arith.constant 0 : index
    %c0_257 = arith.constant 0 : index
    %250 = vector.load %arg16[%c1_255, %c0_256, %c0_257] : memref<3x128x128xbf16, #tpu.memory_space<vmem>>, vector<1x128x128xbf16>
    %251 = vector.shape_cast %250 : vector<1x128x128xbf16> to vector<128x128xbf16>
    %cst_258 = arith.constant dense<0.000000e+00> : vector<13x128xf32>
    %252 = tpu.matmul %249, %251, %cst_258 {dimension_numbers = #tpu.dot_dimension_numbers<[1], [0], [0], [1], [0, 0, 1, 1], [], []>} : vector<13x128xbf16>, vector<128x128xbf16>, vector<13x128xf32> -> vector<13x128xf32>
    %253 = arith.addf %247, %252 : vector<13x128xf32>
    %c2_259 = arith.constant 2 : index
    %c0_260 = arith.constant 0 : index
    %254 = vector.load %arg28[%c2_259, %c0_260] : memref<15x128xf32, #tpu.memory_space<vmem>>, vector<13x128xf32>
    %255 = arith.truncf %254 : vector<13x128xf32> to vector<13x128xbf16>
    %c2_261 = arith.constant 2 : index
    %c0_262 = arith.constant 0 : index
    %c0_263 = arith.constant 0 : index
    %256 = vector.load %arg16[%c2_261, %c0_262, %c0_263] : memref<3x128x128xbf16, #tpu.memory_space<vmem>>, vector<1x128x128xbf16>
    %257 = vector.shape_cast %256 : vector<1x128x128xbf16> to vector<128x128xbf16>
    %cst_264 = arith.constant dense<0.000000e+00> : vector<13x128xf32>
    %258 = tpu.matmul %255, %257, %cst_264 {dimension_numbers = #tpu.dot_dimension_numbers<[1], [0], [0], [1], [0, 0, 1, 1], [], []>} : vector<13x128xbf16>, vector<128x128xbf16>, vector<13x128xf32> -> vector<13x128xf32>
    %259 = arith.addf %253, %258 : vector<13x128xf32>
    %c0_265 = arith.constant 0 : index
    %c0_266 = arith.constant 0 : index
    %260 = vector.load %arg17[%c0_265, %c0_266] : memref<1x128xf32, #tpu.memory_space<vmem>>, vector<1x128xf32>
    %261 = vector.broadcast %260 : vector<1x128xf32> to vector<13x128xf32>
    %262 = arith.addf %259, %261 : vector<13x128xf32>
    %263 = arith.addf %262, %237 : vector<13x128xf32>
    %cst_267 = arith.constant 0.000000e+00 : f32
    %264 = vector.broadcast %cst_267 : f32 to vector<13x128xf32>
    %265 = arith.maximumf %263, %264 : vector<13x128xf32>
    %cst_268 = arith.constant 0.000000e+00 : f32
    %266 = vector.broadcast %cst_268 : f32 to vector<1x128xf32>
    %c0_269 = arith.constant 0 : index
    %c0_270 = arith.constant 0 : index
    %267 = vector.load %arg28[%c0_269, %c0_270] : memref<15x128xf32, #tpu.memory_space<vmem>>, vector<1x128xf32>
    tpu.vector_store %arg28[%c0_269, %c0_270], %266 {strides = array<i32>} : memref<15x128xf32, #tpu.memory_space<vmem>>, vector<1x128xf32>,
    %cst_271 = arith.constant 0.000000e+00 : f32
    %268 = vector.broadcast %cst_271 : f32 to vector<1x128xf32>
    %c14_272 = arith.constant 14 : index
    %c0_273 = arith.constant 0 : index
    %269 = vector.load %arg28[%c14_272, %c0_273] : memref<15x128xf32, #tpu.memory_space<vmem>>, vector<1x128xf32>
    tpu.vector_store %arg28[%c14_272, %c0_273], %268 {strides = array<i32>} : memref<15x128xf32, #tpu.memory_space<vmem>>, vector<1x128xf32>,
    %c1_274 = arith.constant 1 : index
    %c0_275 = arith.constant 0 : index
    %270 = vector.load %arg28[%c1_274, %c0_275] : memref<15x128xf32, #tpu.memory_space<vmem>>, vector<13x128xf32>
    tpu.vector_store %arg28[%c1_274, %c0_275], %265 {strides = array<i32>} : memref<15x128xf32, #tpu.memory_space<vmem>>, vector<13x128xf32>,
    %c0_276 = arith.constant 0 : index
    %c0_277 = arith.constant 0 : index
    %271 = vector.load %arg28[%c0_276, %c0_277] : memref<15x128xf32, #tpu.memory_space<vmem>>, vector<13x128xf32>
    %272 = arith.truncf %271 : vector<13x128xf32> to vector<13x128xbf16>
    %c0_278 = arith.constant 0 : index
    %c0_279 = arith.constant 0 : index
    %c0_280 = arith.constant 0 : index
    %273 = vector.load %arg18[%c0_278, %c0_279, %c0_280] : memref<3x128x128xbf16, #tpu.memory_space<vmem>>, vector<1x128x128xbf16>
    %274 = vector.shape_cast %273 : vector<1x128x128xbf16> to vector<128x128xbf16>
    %cst_281 = arith.constant dense<0.000000e+00> : vector<13x128xf32>
    %275 = tpu.matmul %272, %274, %cst_281 {dimension_numbers = #tpu.dot_dimension_numbers<[1], [0], [0], [1], [0, 0, 1, 1], [], []>} : vector<13x128xbf16>, vector<128x128xbf16>, vector<13x128xf32> -> vector<13x128xf32>
    %c1_282 = arith.constant 1 : index
    %c0_283 = arith.constant 0 : index
    %276 = vector.load %arg28[%c1_282, %c0_283] : memref<15x128xf32, #tpu.memory_space<vmem>>, vector<13x128xf32>
    %277 = arith.truncf %276 : vector<13x128xf32> to vector<13x128xbf16>
    %c1_284 = arith.constant 1 : index
    %c0_285 = arith.constant 0 : index
    %c0_286 = arith.constant 0 : index
    %278 = vector.load %arg18[%c1_284, %c0_285, %c0_286] : memref<3x128x128xbf16, #tpu.memory_space<vmem>>, vector<1x128x128xbf16>
    %279 = vector.shape_cast %278 : vector<1x128x128xbf16> to vector<128x128xbf16>
    %cst_287 = arith.constant dense<0.000000e+00> : vector<13x128xf32>
    %280 = tpu.matmul %277, %279, %cst_287 {dimension_numbers = #tpu.dot_dimension_numbers<[1], [0], [0], [1], [0, 0, 1, 1], [], []>} : vector<13x128xbf16>, vector<128x128xbf16>, vector<13x128xf32> -> vector<13x128xf32>
    %281 = arith.addf %275, %280 : vector<13x128xf32>
    %c2_288 = arith.constant 2 : index
    %c0_289 = arith.constant 0 : index
    %282 = vector.load %arg28[%c2_288, %c0_289] : memref<15x128xf32, #tpu.memory_space<vmem>>, vector<13x128xf32>
    %283 = arith.truncf %282 : vector<13x128xf32> to vector<13x128xbf16>
    %c2_290 = arith.constant 2 : index
    %c0_291 = arith.constant 0 : index
    %c0_292 = arith.constant 0 : index
    %284 = vector.load %arg18[%c2_290, %c0_291, %c0_292] : memref<3x128x128xbf16, #tpu.memory_space<vmem>>, vector<1x128x128xbf16>
    %285 = vector.shape_cast %284 : vector<1x128x128xbf16> to vector<128x128xbf16>
    %cst_293 = arith.constant dense<0.000000e+00> : vector<13x128xf32>
    %286 = tpu.matmul %283, %285, %cst_293 {dimension_numbers = #tpu.dot_dimension_numbers<[1], [0], [0], [1], [0, 0, 1, 1], [], []>} : vector<13x128xbf16>, vector<128x128xbf16>, vector<13x128xf32> -> vector<13x128xf32>
    %287 = arith.addf %281, %286 : vector<13x128xf32>
    %c0_294 = arith.constant 0 : index
    %c0_295 = arith.constant 0 : index
    %288 = vector.load %arg19[%c0_294, %c0_295] : memref<1x128xf32, #tpu.memory_space<vmem>>, vector<1x128xf32>
    %289 = vector.broadcast %288 : vector<1x128xf32> to vector<13x128xf32>
    %290 = arith.addf %287, %289 : vector<13x128xf32>
    %cst_296 = arith.constant 0.000000e+00 : f32
    %291 = vector.broadcast %cst_296 : f32 to vector<13x128xf32>
    %292 = arith.maximumf %290, %291 : vector<13x128xf32>
    %cst_297 = arith.constant 0.000000e+00 : f32
    %293 = vector.broadcast %cst_297 : f32 to vector<1x128xf32>
    %c0_298 = arith.constant 0 : index
    %c0_299 = arith.constant 0 : index
    %294 = vector.load %arg28[%c0_298, %c0_299] : memref<15x128xf32, #tpu.memory_space<vmem>>, vector<1x128xf32>
    tpu.vector_store %arg28[%c0_298, %c0_299], %293 {strides = array<i32>} : memref<15x128xf32, #tpu.memory_space<vmem>>, vector<1x128xf32>,
    %cst_300 = arith.constant 0.000000e+00 : f32
    %295 = vector.broadcast %cst_300 : f32 to vector<1x128xf32>
    %c14_301 = arith.constant 14 : index
    %c0_302 = arith.constant 0 : index
    %296 = vector.load %arg28[%c14_301, %c0_302] : memref<15x128xf32, #tpu.memory_space<vmem>>, vector<1x128xf32>
    tpu.vector_store %arg28[%c14_301, %c0_302], %295 {strides = array<i32>} : memref<15x128xf32, #tpu.memory_space<vmem>>, vector<1x128xf32>,
    %c1_303 = arith.constant 1 : index
    %c0_304 = arith.constant 0 : index
    %297 = vector.load %arg28[%c1_303, %c0_304] : memref<15x128xf32, #tpu.memory_space<vmem>>, vector<13x128xf32>
    tpu.vector_store %arg28[%c1_303, %c0_304], %292 {strides = array<i32>} : memref<15x128xf32, #tpu.memory_space<vmem>>, vector<13x128xf32>,
    %c0_305 = arith.constant 0 : index
    %c0_306 = arith.constant 0 : index
    %298 = vector.load %arg28[%c0_305, %c0_306] : memref<15x128xf32, #tpu.memory_space<vmem>>, vector<13x128xf32>
    %299 = arith.truncf %298 : vector<13x128xf32> to vector<13x128xbf16>
    %c0_307 = arith.constant 0 : index
    %c0_308 = arith.constant 0 : index
    %c0_309 = arith.constant 0 : index
    %300 = vector.load %arg20[%c0_307, %c0_308, %c0_309] : memref<3x128x128xbf16, #tpu.memory_space<vmem>>, vector<1x128x128xbf16>
    %301 = vector.shape_cast %300 : vector<1x128x128xbf16> to vector<128x128xbf16>
    %cst_310 = arith.constant dense<0.000000e+00> : vector<13x128xf32>
    %302 = tpu.matmul %299, %301, %cst_310 {dimension_numbers = #tpu.dot_dimension_numbers<[1], [0], [0], [1], [0, 0, 1, 1], [], []>} : vector<13x128xbf16>, vector<128x128xbf16>, vector<13x128xf32> -> vector<13x128xf32>
    %c1_311 = arith.constant 1 : index
    %c0_312 = arith.constant 0 : index
    %303 = vector.load %arg28[%c1_311, %c0_312] : memref<15x128xf32, #tpu.memory_space<vmem>>, vector<13x128xf32>
    %304 = arith.truncf %303 : vector<13x128xf32> to vector<13x128xbf16>
    %c1_313 = arith.constant 1 : index
    %c0_314 = arith.constant 0 : index
    %c0_315 = arith.constant 0 : index
    %305 = vector.load %arg20[%c1_313, %c0_314, %c0_315] : memref<3x128x128xbf16, #tpu.memory_space<vmem>>, vector<1x128x128xbf16>
    %306 = vector.shape_cast %305 : vector<1x128x128xbf16> to vector<128x128xbf16>
    %cst_316 = arith.constant dense<0.000000e+00> : vector<13x128xf32>
    %307 = tpu.matmul %304, %306, %cst_316 {dimension_numbers = #tpu.dot_dimension_numbers<[1], [0], [0], [1], [0, 0, 1, 1], [], []>} : vector<13x128xbf16>, vector<128x128xbf16>, vector<13x128xf32> -> vector<13x128xf32>
    %308 = arith.addf %302, %307 : vector<13x128xf32>
    %c2_317 = arith.constant 2 : index
    %c0_318 = arith.constant 0 : index
    %309 = vector.load %arg28[%c2_317, %c0_318] : memref<15x128xf32, #tpu.memory_space<vmem>>, vector<13x128xf32>
    %310 = arith.truncf %309 : vector<13x128xf32> to vector<13x128xbf16>
    %c2_319 = arith.constant 2 : index
    %c0_320 = arith.constant 0 : index
    %c0_321 = arith.constant 0 : index
    %311 = vector.load %arg20[%c2_319, %c0_320, %c0_321] : memref<3x128x128xbf16, #tpu.memory_space<vmem>>, vector<1x128x128xbf16>
    %312 = vector.shape_cast %311 : vector<1x128x128xbf16> to vector<128x128xbf16>
    %cst_322 = arith.constant dense<0.000000e+00> : vector<13x128xf32>
    %313 = tpu.matmul %310, %312, %cst_322 {dimension_numbers = #tpu.dot_dimension_numbers<[1], [0], [0], [1], [0, 0, 1, 1], [], []>} : vector<13x128xbf16>, vector<128x128xbf16>, vector<13x128xf32> -> vector<13x128xf32>
    %314 = arith.addf %308, %313 : vector<13x128xf32>
    %c0_323 = arith.constant 0 : index
    %c0_324 = arith.constant 0 : index
    %315 = vector.load %arg21[%c0_323, %c0_324] : memref<1x128xf32, #tpu.memory_space<vmem>>, vector<1x128xf32>
    %316 = vector.broadcast %315 : vector<1x128xf32> to vector<13x128xf32>
    %317 = arith.addf %314, %316 : vector<13x128xf32>
    %318 = arith.addf %317, %265 : vector<13x128xf32>
    %cst_325 = arith.constant 0.000000e+00 : f32
    %319 = vector.broadcast %cst_325 : f32 to vector<13x128xf32>
    %320 = arith.maximumf %318, %319 : vector<13x128xf32>
    %cst_326 = arith.constant 0.000000e+00 : f32
    %321 = vector.broadcast %cst_326 : f32 to vector<1x128xf32>
    %c0_327 = arith.constant 0 : index
    %c0_328 = arith.constant 0 : index
    %322 = vector.load %arg28[%c0_327, %c0_328] : memref<15x128xf32, #tpu.memory_space<vmem>>, vector<1x128xf32>
    tpu.vector_store %arg28[%c0_327, %c0_328], %321 {strides = array<i32>} : memref<15x128xf32, #tpu.memory_space<vmem>>, vector<1x128xf32>,
    %cst_329 = arith.constant 0.000000e+00 : f32
    %323 = vector.broadcast %cst_329 : f32 to vector<1x128xf32>
    %c14_330 = arith.constant 14 : index
    %c0_331 = arith.constant 0 : index
    %324 = vector.load %arg28[%c14_330, %c0_331] : memref<15x128xf32, #tpu.memory_space<vmem>>, vector<1x128xf32>
    tpu.vector_store %arg28[%c14_330, %c0_331], %323 {strides = array<i32>} : memref<15x128xf32, #tpu.memory_space<vmem>>, vector<1x128xf32>,
    %c1_332 = arith.constant 1 : index
    %c0_333 = arith.constant 0 : index
    %325 = vector.load %arg28[%c1_332, %c0_333] : memref<15x128xf32, #tpu.memory_space<vmem>>, vector<13x128xf32>
    tpu.vector_store %arg28[%c1_332, %c0_333], %320 {strides = array<i32>} : memref<15x128xf32, #tpu.memory_space<vmem>>, vector<13x128xf32>,
    %cst_334 = arith.constant dense<0.000000e+00> : vector<128xf32>
    %326 = vector.multi_reduction <add>, %320, %cst_334 [0] : vector<13x128xf32> to vector<128xf32>
    %327 = vector.shape_cast %326 : vector<128xf32> to vector<1x128xf32>
    %cst_335 = arith.constant 1.300000e+01 : f32
    %328 = vector.broadcast %cst_335 : f32 to vector<1x128xf32>
    %329 = arith.divf %327, %328 : vector<1x128xf32>
    %c0_336 = arith.constant 0 : index
    %c0_337 = arith.constant 0 : index
    %330 = vector.load %arg22[%c0_336, %c0_337] : memref<128x128xf32, #tpu.memory_space<vmem>>, vector<128x128xf32>
    %cst_338 = arith.constant dense<0.000000e+00> : vector<1x128xf32>
    %331 = tpu.matmul %329, %330, %cst_338 {dimension_numbers = #tpu.dot_dimension_numbers<[1], [0], [0], [1], [0, 0, 1, 1], [], []>} : vector<1x128xf32>, vector<128x128xf32>, vector<1x128xf32> -> vector<1x128xf32>
    %c0_339 = arith.constant 0 : index
    %c0_340 = arith.constant 0 : index
    %332 = vector.load %arg23[%c0_339, %c0_340] : memref<1x128xf32, #tpu.memory_space<vmem>>, vector<1x128xf32>
    %333 = arith.addf %331, %332 : vector<1x128xf32>
    %c0_341 = arith.constant 0 : index
    %c0_342 = arith.constant 0 : index
    %c0_343 = arith.constant 0 : index
    %334 = vector.load %arg24[%c0_341, %c0_342, %c0_343] : memref<1x1x128xf32, #tpu.memory_space<vmem>>, vector<1x1x128xf32>
    %335 = vector.shape_cast %334 : vector<1x1x128xf32> to vector<1x128xf32>
    %336 = vector.shape_cast %333 : vector<1x128xf32> to vector<1x1x128xf32>
    tpu.vector_store %arg24[%c0_341, %c0_342, %c0_343], %336 {strides = array<i32>} : memref<1x1x128xf32, #tpu.memory_space<vmem>>, vector<1x1x128xf32>,
    return
  }
  func.func @transform_0(%arg0: i32) -> (i32, i32, i32) {
    %c0_i32 = arith.constant 0 : i32
    %c0_i32_0 = arith.constant 0 : i32
    %c0_i32_1 = arith.constant 0 : i32
    return %arg0, %c0_i32, %c0_i32_0 : i32, i32, i32
  }
  func.func @transform_1(%arg0: i32) -> (i32, i32, i32) {
    %c0_i32 = arith.constant 0 : i32
    %c0_i32_0 = arith.constant 0 : i32
    %c0_i32_1 = arith.constant 0 : i32
    %c0_i32_2 = arith.constant 0 : i32
    return %c0_i32, %c0_i32_0, %c0_i32_1 : i32, i32, i32
  }
  func.func @transform_2(%arg0: i32) -> (i32, i32) {
    %c0_i32 = arith.constant 0 : i32
    %c0_i32_0 = arith.constant 0 : i32
    %c0_i32_1 = arith.constant 0 : i32
    return %c0_i32, %c0_i32_0 : i32, i32
  }
  func.func @transform_3(%arg0: i32) -> (i32, i32, i32) {
    %c0_i32 = arith.constant 0 : i32
    %c0_i32_0 = arith.constant 0 : i32
    %c0_i32_1 = arith.constant 0 : i32
    %c0_i32_2 = arith.constant 0 : i32
    return %c0_i32, %c0_i32_0, %c0_i32_1 : i32, i32, i32
  }
  func.func @transform_4(%arg0: i32) -> (i32, i32) {
    %c0_i32 = arith.constant 0 : i32
    %c0_i32_0 = arith.constant 0 : i32
    %c0_i32_1 = arith.constant 0 : i32
    return %c0_i32, %c0_i32_0 : i32, i32
  }
  func.func @transform_5(%arg0: i32) -> (i32, i32, i32) {
    %c0_i32 = arith.constant 0 : i32
    %c0_i32_0 = arith.constant 0 : i32
    %c0_i32_1 = arith.constant 0 : i32
    %c0_i32_2 = arith.constant 0 : i32
    return %c0_i32, %c0_i32_0, %c0_i32_1 : i32, i32, i32
  }
  func.func @transform_6(%arg0: i32) -> (i32, i32) {
    %c0_i32 = arith.constant 0 : i32
    %c0_i32_0 = arith.constant 0 : i32
    %c0_i32_1 = arith.constant 0 : i32
    return %c0_i32, %c0_i32_0 : i32, i32
  }
  func.func @transform_7(%arg0: i32) -> (i32, i32, i32) {
    %c0_i32 = arith.constant 0 : i32
    %c0_i32_0 = arith.constant 0 : i32
    %c0_i32_1 = arith.constant 0 : i32
    %c0_i32_2 = arith.constant 0 : i32
    return %c0_i32, %c0_i32_0, %c0_i32_1 : i32, i32, i32
  }
  func.func @transform_8(%arg0: i32) -> (i32, i32) {
    %c0_i32 = arith.constant 0 : i32
    %c0_i32_0 = arith.constant 0 : i32
    %c0_i32_1 = arith.constant 0 : i32
    return %c0_i32, %c0_i32_0 : i32, i32
  }
  func.func @transform_9(%arg0: i32) -> (i32, i32, i32) {
    %c0_i32 = arith.constant 0 : i32
    %c0_i32_0 = arith.constant 0 : i32
    %c0_i32_1 = arith.constant 0 : i32
    %c0_i32_2 = arith.constant 0 : i32
    return %c0_i32, %c0_i32_0, %c0_i32_1 : i32, i32, i32
  }
  func.func @transform_10(%arg0: i32) -> (i32, i32) {
    %c0_i32 = arith.constant 0 : i32
    %c0_i32_0 = arith.constant 0 : i32
    %c0_i32_1 = arith.constant 0 : i32
    return %c0_i32, %c0_i32_0 : i32, i32
  }
  func.func @transform_11(%arg0: i32) -> (i32, i32, i32) {
    %c0_i32 = arith.constant 0 : i32
    %c0_i32_0 = arith.constant 0 : i32
    %c0_i32_1 = arith.constant 0 : i32
    %c0_i32_2 = arith.constant 0 : i32
    return %c0_i32, %c0_i32_0, %c0_i32_1 : i32, i32, i32
  }
  func.func @transform_12(%arg0: i32) -> (i32, i32) {
    %c0_i32 = arith.constant 0 : i32
    %c0_i32_0 = arith.constant 0 : i32
    %c0_i32_1 = arith.constant 0 : i32
    return %c0_i32, %c0_i32_0 : i32, i32
  }
  func.func @transform_13(%arg0: i32) -> (i32, i32) {
    %c0_i32 = arith.constant 0 : i32
    %c0_i32_0 = arith.constant 0 : i32
    %c0_i32_1 = arith.constant 0 : i32
    return %c0_i32, %c0_i32_0 : i32, i32
  }
  func.func @transform_14(%arg0: i32) -> (i32, i32) {
    %c0_i32 = arith.constant 0 : i32
    %c0_i32_0 = arith.constant 0 : i32
    %c0_i32_1 = arith.constant 0 : i32
    return %c0_i32, %c0_i32_0 : i32, i32
  }
  func.func @transform_15(%arg0: i32) -> (i32, i32, i32) {
    %c0_i32 = arith.constant 0 : i32
    %c0_i32_0 = arith.constant 0 : i32
    %c0_i32_1 = arith.constant 0 : i32
    %c0_i32_2 = arith.constant 0 : i32
    return %c0_i32, %c0_i32_0, %c0_i32_1 : i32, i32, i32
  }
  func.func @transform_16(%arg0: i32) -> (i32, i32) {
    %c0_i32 = arith.constant 0 : i32
    %c0_i32_0 = arith.constant 0 : i32
    %c0_i32_1 = arith.constant 0 : i32
    return %c0_i32, %c0_i32_0 : i32, i32
  }
  func.func @transform_17(%arg0: i32) -> (i32, i32, i32) {
    %c0_i32 = arith.constant 0 : i32
    %c0_i32_0 = arith.constant 0 : i32
    %c0_i32_1 = arith.constant 0 : i32
    %c0_i32_2 = arith.constant 0 : i32
    return %c0_i32, %c0_i32_0, %c0_i32_1 : i32, i32, i32
  }
  func.func @transform_18(%arg0: i32) -> (i32, i32) {
    %c0_i32 = arith.constant 0 : i32
    %c0_i32_0 = arith.constant 0 : i32
    %c0_i32_1 = arith.constant 0 : i32
    return %c0_i32, %c0_i32_0 : i32, i32
  }
  func.func @transform_19(%arg0: i32) -> (i32, i32, i32) {
    %c0_i32 = arith.constant 0 : i32
    %c0_i32_0 = arith.constant 0 : i32
    %c0_i32_1 = arith.constant 0 : i32
    %c0_i32_2 = arith.constant 0 : i32
    return %c0_i32, %c0_i32_0, %c0_i32_1 : i32, i32, i32
  }
  func.func @transform_20(%arg0: i32) -> (i32, i32) {
    %c0_i32 = arith.constant 0 : i32
    %c0_i32_0 = arith.constant 0 : i32
    %c0_i32_1 = arith.constant 0 : i32
    return %c0_i32, %c0_i32_0 : i32, i32
  }
  func.func @transform_21(%arg0: i32) -> (i32, i32) {
    %c0_i32 = arith.constant 0 : i32
    %c0_i32_0 = arith.constant 0 : i32
    %c0_i32_1 = arith.constant 0 : i32
    return %c0_i32, %c0_i32_0 : i32, i32
  }
  func.func @transform_22(%arg0: i32) -> (i32, i32) {
    %c0_i32 = arith.constant 0 : i32
    %c0_i32_0 = arith.constant 0 : i32
    %c0_i32_1 = arith.constant 0 : i32
    return %c0_i32, %c0_i32_0 : i32, i32
  }
  func.func @transform_23(%arg0: i32) -> (i32, i32, i32) {
    %c0_i32 = arith.constant 0 : i32
    %c0_i32_0 = arith.constant 0 : i32
    %c0_i32_1 = arith.constant 0 : i32
    return %arg0, %c0_i32, %c0_i32_0 : i32, i32, i32
  }
}

</mosaic_0001>

<llo_original>
// kernel: resnet_two_layer_forward.1
$region0: #{resnet_two_layer_forward.1}
  #allocation0 [shape = 'u32[]', space=smem, size = 0x4, offset = 0x4, fixed_abs, tag = 'smem constant byte address 0x4 - core index']
  #allocation1 [shape = 'u32[144,128]{1,0:T(1,128)}', space=vmem, size = 0x12000, scoped, tag = 'internal scratch']
  #allocation2 [shape = 'f32[100,128]{1,0:T(8,128)}', space=vmem, size = 0xd000, scoped, tag = 'scratch operand']
  #allocation3 [shape = 'f32[52,128]{1,0:T(8,128)}', space=vmem, size = 0x7000, scoped, tag = 'scratch operand']
  #allocation4 [shape = 'f32[27,128]{1,0:T(8,128)}', space=vmem, size = 0x4000, scoped, tag = 'scratch operand']
  #allocation5 [shape = 'f32[15,128]{1,0:T(8,128)}', space=vmem, size = 0x2000, scoped, tag = 'scratch operand']
  %s0 = inlined_call_operand.vmem [shape: bf16[2,106,128], index: 0, kind: input, shape index: {}]
  %s1 = inlined_call_operand.vmem [shape: bf16[7,128,128], index: 1, kind: input, shape index: {}]
  %s2 = inlined_call_operand.vmem [shape: f32[1,128], index: 2, kind: input, shape index: {}]
  %s3 = inlined_call_operand.vmem [shape: bf16[3,128,128], index: 3, kind: input, shape index: {}]
  %s4 = inlined_call_operand.vmem [shape: f32[1,128], index: 4, kind: input, shape index: {}]
  %s5 = inlined_call_operand.vmem [shape: bf16[3,128,128], index: 5, kind: input, shape index: {}]
  %s6 = inlined_call_operand.vmem [shape: f32[1,128], index: 6, kind: input, shape index: {}]
  %s7 = inlined_call_operand.vmem [shape: bf16[3,128,128], index: 7, kind: input, shape index: {}]
  %s8 = inlined_call_operand.vmem [shape: f32[1,128], index: 8, kind: input, shape index: {}]
  %s9 = inlined_call_operand.vmem [shape: bf16[3,128,128], index: 9, kind: input, shape index: {}]
  %s10 = inlined_call_operand.vmem [shape: f32[1,128], index: 10, kind: input, shape index: {}]
  %s11 = inlined_call_operand.vmem [shape: bf16[3,128,128], index: 11, kind: input, shape index: {}]
  %s12 = inlined_call_operand.vmem [shape: f32[1,128], index: 12, kind: input, shape index: {}]
  %s13 = inlined_call_operand.vmem [shape: bf16[128,128], index: 13, kind: input, shape index: {}]
  %s14 = inlined_call_operand.vmem [shape: f32[1,128], index: 14, kind: input, shape index: {}]
  %s15 = inlined_call_operand.vmem [shape: bf16[3,128,128], index: 15, kind: input, shape index: {}]
  %s16 = inlined_call_operand.vmem [shape: f32[1,128], index: 16, kind: input, shape index: {}]
  %s17 = inlined_call_operand.vmem [shape: bf16[3,128,128], index: 17, kind: input, shape index: {}]
  %s18 = inlined_call_operand.vmem [shape: f32[1,128], index: 18, kind: input, shape index: {}]
  %s19 = inlined_call_operand.vmem [shape: bf16[3,128,128], index: 19, kind: input, shape index: {}]
  %s20 = inlined_call_operand.vmem [shape: f32[1,128], index: 20, kind: input, shape index: {}]
  %s21 = inlined_call_operand.vmem [shape: f32[128,128], index: 21, kind: input, shape index: {}]
  %s22 = inlined_call_operand.vmem [shape: f32[1,128], index: 22, kind: input, shape index: {}]
  %s23 = inlined_call_operand.hbm [shape: f32[2,1,128], index: 23, kind: output, shape index: {}]
  %s24 = sld [smem:[#allocation0]]
  $region125: #{resnet_two_layer_forward.1} parent=0
    _
  %s26 = ssub.s32 1, %s24
  %s27 = scalar_select 0, %s26, %s24
  $region1: #{resnet_two_layer_forward.1} parent=0
    #allocation6 [shape = 'u8[1024]{0}', space=vmem, size = 0x400, scoped, tag = 'output window, operand 0']
    #allocation7 [shape = 's32[2]{0}', space=sflag, size = 0x8, scoped, tag = 'scoped memory for resnet_two_layer_forward.1']
    %28 = vsyncpa [#allocation7], 0
    %s29 = scalar_lea.sflag [#allocation7], 1
    %30 = vsyncpa %s29, 0
    loop: start=0, step=1, limit=4
    $region2: #{resnet_two_layer_forward.1} parent=1 // loop_pre_header
      _
    $region3: #{resnet_two_layer_forward.1} parent=1 // loop_header
      %s32 = sphi 0, %s36
      %p33 = scmp.ge.s32.totalorder %s32, 4
      %s42 = sphi 0, %s44
      %s45 = sphi 0, %s42
      %s46 = sphi 0, %s45
      %s62 = sphi 0, %s46
      %s66 = sphi 0, %s66
      %s68 = sphi 0, %s66
      %s69 = sphi 0, %s68
      %s83 = sphi 0, %s69
      %s87 = sphi 0, %s87
      %s89 = sphi 0, %s87
      %s90 = sphi 0, %s89
      %s104 = sphi 0, %s90
      %s108 = sphi 0, %s108
      %s110 = sphi 0, %s108
      %s111 = sphi 0, %s110
      %s125 = sphi 0, %s111
      %s129 = sphi 0, %s129
      %s131 = sphi 0, %s129
      %s132 = sphi 0, %s131
      %s146 = sphi 0, %s132
      %s150 = sphi 0, %s150
      %s152 = sphi 0, %s150
      %s153 = sphi 0, %s152
      %s167 = sphi 0, %s153
      %s171 = sphi 0, %s171
      %s173 = sphi 0, %s171
      %s174 = sphi 0, %s173
      %s188 = sphi 0, %s174
      %s192 = sphi 0, %s192
      %s194 = sphi 0, %s192
      %s195 = sphi 0, %s194
      %s209 = sphi 0, %s195
      %s213 = sphi 0, %s213
      %s215 = sphi 0, %s213
      %s216 = sphi 0, %s215
      %s230 = sphi 0, %s216
      %s234 = sphi 0, %s234
      %s236 = sphi 0, %s234
      %s237 = sphi 0, %s236
      %s251 = sphi 0, %s237
      %s255 = sphi 0, %s255
      %s257 = sphi 0, %s255
      %s258 = sphi 0, %s257
      %s272 = sphi 0, %s258
      %s276 = sphi 0, %s276
      %s278 = sphi 0, %s276
      %s279 = sphi 0, %s278
      %s293 = sphi 0, %s279
      %s297 = sphi 0, %s297
      %s299 = sphi 0, %s297
      %s300 = sphi 0, %s299
      %s314 = sphi 0, %s300
      %s318 = sphi 0, %s318
      %s320 = sphi 0, %s318
      %s321 = sphi 0, %s320
      %s335 = sphi 0, %s321
      %s339 = sphi 0, %s339
      %s341 = sphi 0, %s339
      %s342 = sphi 0, %s341
      %s356 = sphi 0, %s342
      %s360 = sphi 0, %s360
      %s362 = sphi 0, %s360
      %s363 = sphi 0, %s362
      %s377 = sphi 0, %s363
      %s381 = sphi 0, %s381
      %s383 = sphi 0, %s381
      %s384 = sphi 0, %s383
      %s398 = sphi 0, %s384
      %s402 = sphi 0, %s402
      %s404 = sphi 0, %s402
      %s405 = sphi 0, %s404
      %s419 = sphi 0, %s405
      %s423 = sphi 0, %s423
      %s425 = sphi 0, %s423
      %s426 = sphi 0, %s425
      %s440 = sphi 0, %s426
      %s444 = sphi 0, %s444
      %s446 = sphi 0, %s444
      %s447 = sphi 0, %s446
      %s461 = sphi 0, %s447
      %s465 = sphi 0, %s465
      %s467 = sphi 0, %s465
      %s468 = sphi 0, %s467
      %s482 = sphi 0, %s468
      %s486 = sphi 0, %s486
      %s488 = sphi 0, %s486
      %s489 = sphi 0, %s488
      %s503 = sphi 0, %s489
      %s507 = sphi 0, %s507
      %s509 = sphi 0, %s507
      %s510 = sphi 0, %s509
      %s524 = sphi 0, %s510
      %s530 = sphi 0, %s532
      %s533 = sphi 0, %s530
      %s534 = sphi 0, %s533
      %s550 = sphi 0, %s534
    $region4: #{resnet_two_layer_forward.1} parent=1 // loop_header_branch
      %35 = sbr.rel (%p33) target = $region8
    $region5: #{resnet_two_layer_forward.1} parent=1 // loop_body
      %s37 = ssub.s32 %s32, 1
      %s38 = ssub.s32 %s32, 2
      %s39 = sadd.s32 %s32, 1
      %s40 = ssub.s32 %s32, %s39
      %p41 = scmp.eq.s32.totalorder %s40, 0
      %s43 = sadd.s32 %s42, 1
      %s44 = scalar_select %p41, %s42, %s43
      %p47 = pneg %p41
      %p48 = scmp.eq.s32.totalorder %s32, 1
      %p49 = por %p47, %p48
      %p50 = scmp.ne.s32.totalorder %s42, %s45
      %p51 = scmp.eq.s32.totalorder %s32, 0
      %p52 = por %p50, %p51
      %p53 = scmp.ne.s32.totalorder %s42, %s45
      %p54 = scmp.eq.s32.totalorder %s37, 1
      %p55 = por %p53, %p54
      %p56 = scmp.ne.s32.totalorder %s45, %s46
      %p57 = scmp.eq.s32.totalorder %s37, 0
      %p58 = por %p56, %p57
      %p59 = scmp.ne.s32.totalorder %s45, %s46
      %p60 = scmp.eq.s32.totalorder %s38, 1
      %p61 = por %p59, %p60
      %p63 = scmp.ne.s32.totalorder %s46, %s62
      %p64 = scmp.eq.s32.totalorder %s38, 0
      %p65 = por %p63, %p64
      %s67 = sadd.s32 %s66, 1
      %p70 = scmp.eq.s32.totalorder %s32, 1
      %p71 = scmp.ne.s32.totalorder %s66, %s68
      %p72 = scmp.eq.s32.totalorder %s32, 0
      %p73 = por %p71, %p72
      %p74 = scmp.ne.s32.totalorder %s66, %s68
      %p75 = scmp.eq.s32.totalorder %s37, 1
      %p76 = por %p74, %p75
      %p77 = scmp.ne.s32.totalorder %s68, %s69
      %p78 = scmp.eq.s32.totalorder %s37, 0
      %p79 = por %p77, %p78
      %p80 = scmp.ne.s32.totalorder %s68, %s69
      %p81 = scmp.eq.s32.totalorder %s38, 1
      %p82 = por %p80, %p81
      %p84 = scmp.ne.s32.totalorder %s69, %s83
      %p85 = scmp.eq.s32.totalorder %s38, 0
      %p86 = por %p84, %p85
      %s88 = sadd.s32 %s87, 1
      %p91 = scmp.eq.s32.totalorder %s32, 1
      %p92 = scmp.ne.s32.totalorder %s87, %s89
      %p93 = scmp.eq.s32.totalorder %s32, 0
      %p94 = por %p92, %p93
      %p95 = scmp.ne.s32.totalorder %s87, %s89
      %p96 = scmp.eq.s32.totalorder %s37, 1
      %p97 = por %p95, %p96
      %p98 = scmp.ne.s32.totalorder %s89, %s90
      %p99 = scmp.eq.s32.totalorder %s37, 0
      %p100 = por %p98, %p99
      %p101 = scmp.ne.s32.totalorder %s89, %s90
      %p102 = scmp.eq.s32.totalorder %s38, 1
      %p103 = por %p101, %p102
      %p105 = scmp.ne.s32.totalorder %s90, %s104
      %p106 = scmp.eq.s32.totalorder %s38, 0
      %p107 = por %p105, %p106
      %s109 = sadd.s32 %s108, 1
      %p112 = scmp.eq.s32.totalorder %s32, 1
      %p113 = scmp.ne.s32.totalorder %s108, %s110
      %p114 = scmp.eq.s32.totalorder %s32, 0
      %p115 = por %p113, %p114
      %p116 = scmp.ne.s32.totalorder %s108, %s110
      %p117 = scmp.eq.s32.totalorder %s37, 1
      %p118 = por %p116, %p117
      %p119 = scmp.ne.s32.totalorder %s110, %s111
      %p120 = scmp.eq.s32.totalorder %s37, 0
      %p121 = por %p119, %p120
      %p122 = scmp.ne.s32.totalorder %s110, %s111
      %p123 = scmp.eq.s32.totalorder %s38, 1
      %p124 = por %p122, %p123
      %p126 = scmp.ne.s32.totalorder %s111, %s125
      %p127 = scmp.eq.s32.totalorder %s38, 0
      %p128 = por %p126, %p127
      %s130 = sadd.s32 %s129, 1
      %p133 = scmp.eq.s32.totalorder %s32, 1
      %p134 = scmp.ne.s32.totalorder %s129, %s131
      %p135 = scmp.eq.s32.totalorder %s32, 0
      %p136 = por %p134, %p135
      %p137 = scmp.ne.s32.totalorder %s129, %s131
      %p138 = scmp.eq.s32.totalorder %s37, 1
      %p139 = por %p137, %p138
      %p140 = scmp.ne.s32.totalorder %s131, %s132
      %p141 = scmp.eq.s32.totalorder %s37, 0
      %p142 = por %p140, %p141
      %p143 = scmp.ne.s32.totalorder %s131, %s132
      %p144 = scmp.eq.s32.totalorder %s38, 1
      %p145 = por %p143, %p144
      %p147 = scmp.ne.s32.totalorder %s132, %s146
      %p148 = scmp.eq.s32.totalorder %s38, 0
      %p149 = por %p147, %p148
      %s151 = sadd.s32 %s150, 1
      %p154 = scmp.eq.s32.totalorder %s32, 1
      %p155 = scmp.ne.s32.totalorder %s150, %s152
      %p156 = scmp.eq.s32.totalorder %s32, 0
      %p157 = por %p155, %p156
      %p158 = scmp.ne.s32.totalorder %s150, %s152
      %p159 = scmp.eq.s32.totalorder %s37, 1
      %p160 = por %p158, %p159
      %p161 = scmp.ne.s32.totalorder %s152, %s153
      %p162 = scmp.eq.s32.totalorder %s37, 0
      %p163 = por %p161, %p162
      %p164 = scmp.ne.s32.totalorder %s152, %s153
      %p165 = scmp.eq.s32.totalorder %s38, 1
      %p166 = por %p164, %p165
      %p168 = scmp.ne.s32.totalorder %s153, %s167
      %p169 = scmp.eq.s32.totalorder %s38, 0
      %p170 = por %p168, %p169
      %s172 = sadd.s32 %s171, 1
      %p175 = scmp.eq.s32.totalorder %s32, 1
      %p176 = scmp.ne.s32.totalorder %s171, %s173
      %p177 = scmp.eq.s32.totalorder %s32, 0
      %p178 = por %p176, %p177
      %p179 = scmp.ne.s32.totalorder %s171, %s173
      %p180 = scmp.eq.s32.totalorder %s37, 1
      %p181 = por %p179, %p180
      %p182 = scmp.ne.s32.totalorder %s173, %s174
      %p183 = scmp.eq.s32.totalorder %s37, 0
      %p184 = por %p182, %p183
      %p185 = scmp.ne.s32.totalorder %s173, %s174
      %p186 = scmp.eq.s32.totalorder %s38, 1
      %p187 = por %p185, %p186
      %p189 = scmp.ne.s32.totalorder %s174, %s188
      %p190 = scmp.eq.s32.totalorder %s38, 0
      %p191 = por %p189, %p190
      %s193 = sadd.s32 %s192, 1
      %p196 = scmp.eq.s32.totalorder %s32, 1
      %p197 = scmp.ne.s32.totalorder %s192, %s194
      %p198 = scmp.eq.s32.totalorder %s32, 0
      %p199 = por %p197, %p198
      %p200 = scmp.ne.s32.totalorder %s192, %s194
      %p201 = scmp.eq.s32.totalorder %s37, 1
      %p202 = por %p200, %p201
      %p203 = scmp.ne.s32.totalorder %s194, %s195
      %p204 = scmp.eq.s32.totalorder %s37, 0
      %p205 = por %p203, %p204
      %p206 = scmp.ne.s32.totalorder %s194, %s195
      %p207 = scmp.eq.s32.totalorder %s38, 1
      %p208 = por %p206, %p207
      %p210 = scmp.ne.s32.totalorder %s195, %s209
      %p211 = scmp.eq.s32.totalorder %s38, 0
      %p212 = por %p210, %p211
      %s214 = sadd.s32 %s213, 1
      %p217 = scmp.eq.s32.totalorder %s32, 1
      %p218 = scmp.ne.s32.totalorder %s213, %s215
      %p219 = scmp.eq.s32.totalorder %s32, 0
      %p220 = por %p218, %p219
      %p221 = scmp.ne.s32.totalorder %s213, %s215
      %p222 = scmp.eq.s32.totalorder %s37, 1
      %p223 = por %p221, %p222
      %p224 = scmp.ne.s32.totalorder %s215, %s216
      %p225 = scmp.eq.s32.totalorder %s37, 0
      %p226 = por %p224, %p225
      %p227 = scmp.ne.s32.totalorder %s215, %s216
      %p228 = scmp.eq.s32.totalorder %s38, 1
      %p229 = por %p227, %p228
      %p231 = scmp.ne.s32.totalorder %s216, %s230
      %p232 = scmp.eq.s32.totalorder %s38, 0
      %p233 = por %p231, %p232
      %s235 = sadd.s32 %s234, 1
      %p238 = scmp.eq.s32.totalorder %s32, 1
      %p239 = scmp.ne.s32.totalorder %s234, %s236
      %p240 = scmp.eq.s32.totalorder %s32, 0
      %p241 = por %p239, %p240
      %p242 = scmp.ne.s32.totalorder %s234, %s236
      %p243 = scmp.eq.s32.totalorder %s37, 1
      %p244 = por %p242, %p243
      %p245 = scmp.ne.s32.totalorder %s236, %s237
      %p246 = scmp.eq.s32.totalorder %s37, 0
      %p247 = por %p245, %p246
      %p248 = scmp.ne.s32.totalorder %s236, %s237
      %p249 = scmp.eq.s32.totalorder %s38, 1
      %p250 = por %p248, %p249
      %p252 = scmp.ne.s32.totalorder %s237, %s251
      %p253 = scmp.eq.s32.totalorder %s38, 0
      %p254 = por %p252, %p253
      %s256 = sadd.s32 %s255, 1
      %p259 = scmp.eq.s32.totalorder %s32, 1
      %p260 = scmp.ne.s32.totalorder %s255, %s257
      %p261 = scmp.eq.s32.totalorder %s32, 0
      %p262 = por %p260, %p261
      %p263 = scmp.ne.s32.totalorder %s255, %s257
      %p264 = scmp.eq.s32.totalorder %s37, 1
      %p265 = por %p263, %p264
      %p266 = scmp.ne.s32.totalorder %s257, %s258
      %p267 = scmp.eq.s32.totalorder %s37, 0
      %p268 = por %p266, %p267
      %p269 = scmp.ne.s32.totalorder %s257, %s258
      %p270 = scmp.eq.s32.totalorder %s38, 1
      %p271 = por %p269, %p270
      %p273 = scmp.ne.s32.totalorder %s258, %s272
      %p274 = scmp.eq.s32.totalorder %s38, 0
      %p275 = por %p273, %p274
      %s277 = sadd.s32 %s276, 1
      %p280 = scmp.eq.s32.totalorder %s32, 1
      %p281 = scmp.ne.s32.totalorder %s276, %s278
      %p282 = scmp.eq.s32.totalorder %s32, 0
      %p283 = por %p281, %p282
      %p284 = scmp.ne.s32.totalorder %s276, %s278
      %p285 = scmp.eq.s32.totalorder %s37, 1
      %p286 = por %p284, %p285
      %p287 = scmp.ne.s32.totalorder %s278, %s279
      %p288 = scmp.eq.s32.totalorder %s37, 0
      %p289 = por %p287, %p288
      %p290 = scmp.ne.s32.totalorder %s278, %s279
      %p291 = scmp.eq.s32.totalorder %s38, 1
      %p292 = por %p290, %p291
      %p294 = scmp.ne.s32.totalorder %s279, %s293
      %p295 = scmp.eq.s32.totalorder %s38, 0
      %p296 = por %p294, %p295
      %s298 = sadd.s32 %s297, 1
      %p301 = scmp.eq.s32.totalorder %s32, 1
      %p302 = scmp.ne.s32.totalorder %s297, %s299
      %p303 = scmp.eq.s32.totalorder %s32, 0
      %p304 = por %p302, %p303
      %p305 = scmp.ne.s32.totalorder %s297, %s299
      %p306 = scmp.eq.s32.totalorder %s37, 1
      %p307 = por %p305, %p306
      %p308 = scmp.ne.s32.totalorder %s299, %s300
      %p309 = scmp.eq.s32.totalorder %s37, 0
      %p310 = por %p308, %p309
      %p311 = scmp.ne.s32.totalorder %s299, %s300
      %p312 = scmp.eq.s32.totalorder %s38, 1
      %p313 = por %p311, %p312
      %p315 = scmp.ne.s32.totalorder %s300, %s314
      %p316 = scmp.eq.s32.totalorder %s38, 0
      %p317 = por %p315, %p316
      %s319 = sadd.s32 %s318, 1
      %p322 = scmp.eq.s32.totalorder %s32, 1
      %p323 = scmp.ne.s32.totalorder %s318, %s320
      %p324 = scmp.eq.s32.totalorder %s32, 0
      %p325 = por %p323, %p324
      %p326 = scmp.ne.s32.totalorder %s318, %s320
      %p327 = scmp.eq.s32.totalorder %s37, 1
      %p328 = por %p326, %p327
      %p329 = scmp.ne.s32.totalorder %s320, %s321
      %p330 = scmp.eq.s32.totalorder %s37, 0
      %p331 = por %p329, %p330
      %p332 = scmp.ne.s32.totalorder %s320, %s321
      %p333 = scmp.eq.s32.totalorder %s38, 1
      %p334 = por %p332, %p333
      %p336 = scmp.ne.s32.totalorder %s321, %s335
      %p337 = scmp.eq.s32.totalorder %s38, 0
      %p338 = por %p336, %p337
      %s340 = sadd.s32 %s339, 1
      %p343 = scmp.eq.s32.totalorder %s32, 1
      %p344 = scmp.ne.s32.totalorder %s339, %s341
      %p345 = scmp.eq.s32.totalorder %s32, 0
      %p346 = por %p344, %p345
      %p347 = scmp.ne.s32.totalorder %s339, %s341
      %p348 = scmp.eq.s32.totalorder %s37, 1
      %p349 = por %p347, %p348
      %p350 = scmp.ne.s32.totalorder %s341, %s342
      %p351 = scmp.eq.s32.totalorder %s37, 0
      %p352 = por %p350, %p351
      %p353 = scmp.ne.s32.totalorder %s341, %s342
      %p354 = scmp.eq.s32.totalorder %s38, 1
      %p355 = por %p353, %p354
      %p357 = scmp.ne.s32.totalorder %s342, %s356
      %p358 = scmp.eq.s32.totalorder %s38, 0
      %p359 = por %p357, %p358
      %s361 = sadd.s32 %s360, 1
      %p364 = scmp.eq.s32.totalorder %s32, 1
      %p365 = scmp.ne.s32.totalorder %s360, %s362
      %p366 = scmp.eq.s32.totalorder %s32, 0
      %p367 = por %p365, %p366
      %p368 = scmp.ne.s32.totalorder %s360, %s362
      %p369 = scmp.eq.s32.totalorder %s37, 1
      %p370 = por %p368, %p369
      %p371 = scmp.ne.s32.totalorder %s362, %s363
      %p372 = scmp.eq.s32.totalorder %s37, 0
      %p373 = por %p371, %p372
      %p374 = scmp.ne.s32.totalorder %s362, %s363
      %p375 = scmp.eq.s32.totalorder %s38, 1
      %p376 = por %p374, %p375
      %p378 = scmp.ne.s32.totalorder %s363, %s377
      %p379 = scmp.eq.s32.totalorder %s38, 0
      %p380 = por %p378, %p379
      %s382 = sadd.s32 %s381, 1
      %p385 = scmp.eq.s32.totalorder %s32, 1
      %p386 = scmp.ne.s32.totalorder %s381, %s383
      %p387 = scmp.eq.s32.totalorder %s32, 0
      %p388 = por %p386, %p387
      %p389 = scmp.ne.s32.totalorder %s381, %s383
      %p390 = scmp.eq.s32.totalorder %s37, 1
      %p391 = por %p389, %p390
      %p392 = scmp.ne.s32.totalorder %s383, %s384
      %p393 = scmp.eq.s32.totalorder %s37, 0
      %p394 = por %p392, %p393
      %p395 = scmp.ne.s32.totalorder %s383, %s384
      %p396 = scmp.eq.s32.totalorder %s38, 1
      %p397 = por %p395, %p396
      %p399 = scmp.ne.s32.totalorder %s384, %s398
      %p400 = scmp.eq.s32.totalorder %s38, 0
      %p401 = por %p399, %p400
      %s403 = sadd.s32 %s402, 1
      %p406 = scmp.eq.s32.totalorder %s32, 1
      %p407 = scmp.ne.s32.totalorder %s402, %s404
      %p408 = scmp.eq.s32.totalorder %s32, 0
      %p409 = por %p407, %p408
      %p410 = scmp.ne.s32.totalorder %s402, %s404
      %p411 = scmp.eq.s32.totalorder %s37, 1
      %p412 = por %p410, %p411
      %p413 = scmp.ne.s32.totalorder %s404, %s405
      %p414 = scmp.eq.s32.totalorder %s37, 0
      %p415 = por %p413, %p414
      %p416 = scmp.ne.s32.totalorder %s404, %s405
      %p417 = scmp.eq.s32.totalorder %s38, 1
      %p418 = por %p416, %p417
      %p420 = scmp.ne.s32.totalorder %s405, %s419
      %p421 = scmp.eq.s32.totalorder %s38, 0
      %p422 = por %p420, %p421
      %s424 = sadd.s32 %s423, 1
      %p427 = scmp.eq.s32.totalorder %s32, 1
      %p428 = scmp.ne.s32.totalorder %s423, %s425
      %p429 = scmp.eq.s32.totalorder %s32, 0
      %p430 = por %p428, %p429
      %p431 = scmp.ne.s32.totalorder %s423, %s425
      %p432 = scmp.eq.s32.totalorder %s37, 1
      %p433 = por %p431, %p432
      %p434 = scmp.ne.s32.totalorder %s425, %s426
      %p435 = scmp.eq.s32.totalorder %s37, 0
      %p436 = por %p434, %p435
      %p437 = scmp.ne.s32.totalorder %s425, %s426
      %p438 = scmp.eq.s32.totalorder %s38, 1
      %p439 = por %p437, %p438
      %p441 = scmp.ne.s32.totalorder %s426, %s440
      %p442 = scmp.eq.s32.totalorder %s38, 0
      %p443 = por %p441, %p442
      %s445 = sadd.s32 %s444, 1
      %p448 = scmp.eq.s32.totalorder %s32, 1
      %p449 = scmp.ne.s32.totalorder %s444, %s446
      %p450 = scmp.eq.s32.totalorder %s32, 0
      %p451 = por %p449, %p450
      %p452 = scmp.ne.s32.totalorder %s444, %s446
      %p453 = scmp.eq.s32.totalorder %s37, 1
      %p454 = por %p452, %p453
      %p455 = scmp.ne.s32.totalorder %s446, %s447
      %p456 = scmp.eq.s32.totalorder %s37, 0
      %p457 = por %p455, %p456
      %p458 = scmp.ne.s32.totalorder %s446, %s447
      %p459 = scmp.eq.s32.totalorder %s38, 1
      %p460 = por %p458, %p459
      %p462 = scmp.ne.s32.totalorder %s447, %s461
      %p463 = scmp.eq.s32.totalorder %s38, 0
      %p464 = por %p462, %p463
      %s466 = sadd.s32 %s465, 1
      %p469 = scmp.eq.s32.totalorder %s32, 1
      %p470 = scmp.ne.s32.totalorder %s465, %s467
      %p471 = scmp.eq.s32.totalorder %s32, 0
      %p472 = por %p470, %p471
      %p473 = scmp.ne.s32.totalorder %s465, %s467
      %p474 = scmp.eq.s32.totalorder %s37, 1
      %p475 = por %p473, %p474
      %p476 = scmp.ne.s32.totalorder %s467, %s468
      %p477 = scmp.eq.s32.totalorder %s37, 0
      %p478 = por %p476, %p477
      %p479 = scmp.ne.s32.totalorder %s467, %s468
      %p480 = scmp.eq.s32.totalorder %s38, 1
      %p481 = por %p479, %p480
      %p483 = scmp.ne.s32.totalorder %s468, %s482
      %p484 = scmp.eq.s32.totalorder %s38, 0
      %p485 = por %p483, %p484
      %s487 = sadd.s32 %s486, 1
      %p490 = scmp.eq.s32.totalorder %s32, 1
      %p491 = scmp.ne.s32.totalorder %s486, %s488
      %p492 = scmp.eq.s32.totalorder %s32, 0
      %p493 = por %p491, %p492
      %p494 = scmp.ne.s32.totalorder %s486, %s488
      %p495 = scmp.eq.s32.totalorder %s37, 1
      %p496 = por %p494, %p495
      %p497 = scmp.ne.s32.totalorder %s488, %s489
      %p498 = scmp.eq.s32.totalorder %s37, 0
      %p499 = por %p497, %p498
      %p500 = scmp.ne.s32.totalorder %s488, %s489
      %p501 = scmp.eq.s32.totalorder %s38, 1
      %p502 = por %p500, %p501
      %p504 = scmp.ne.s32.totalorder %s489, %s503
      %p505 = scmp.eq.s32.totalorder %s38, 0
      %p506 = por %p504, %p505
      %s508 = sadd.s32 %s507, 1
      %p511 = scmp.eq.s32.totalorder %s32, 1
      %p512 = scmp.ne.s32.totalorder %s507, %s509
      %p513 = scmp.eq.s32.totalorder %s32, 0
      %p514 = por %p512, %p513
      %p515 = scmp.ne.s32.totalorder %s507, %s509
      %p516 = scmp.eq.s32.totalorder %s37, 1
      %p517 = por %p515, %p516
      %p518 = scmp.ne.s32.totalorder %s509, %s510
      %p519 = scmp.eq.s32.totalorder %s37, 0
      %p520 = por %p518, %p519
      %p521 = scmp.ne.s32.totalorder %s509, %s510
      %p522 = scmp.eq.s32.totalorder %s38, 1
      %p523 = por %p521, %p522
      %p525 = scmp.ne.s32.totalorder %s510, %s524
      %p526 = scmp.eq.s32.totalorder %s38, 0
      %p527 = por %p525, %p526
      %s528 = ssub.s32 %s32, %s39
      %p529 = scmp.eq.s32.totalorder %s528, 0
      %s531 = sadd.s32 %s530, 1
      %s532 = scalar_select %p529, %s530, %s531
      %p535 = pneg %p529
      %p536 = scmp.eq.s32.totalorder %s32, 1
      %p537 = por %p535, %p536
      %p538 = scmp.ne.s32.totalorder %s530, %s533
      %p539 = scmp.eq.s32.totalorder %s32, 0
      %p540 = por %p538, %p539
      %p541 = scmp.ne.s32.totalorder %s530, %s533
      %p542 = scmp.eq.s32.totalorder %s37, 1
      %p543 = por %p541, %p542
      %p544 = scmp.ne.s32.totalorder %s533, %s534
      %p545 = scmp.eq.s32.totalorder %s37, 0
      %p546 = por %p544, %p545
      %p547 = scmp.ne.s32.totalorder %s533, %s534
      %p548 = scmp.eq.s32.totalorder %s38, 1
      %p549 = por %p547, %p548
      %p551 = scmp.ne.s32.totalorder %s534, %s550
      %p552 = scmp.eq.s32.totalorder %s38, 0
      %p553 = por %p551, %p552
      %p554 = scmp.le.s32.totalorder 1, %s32
      %p555 = scmp.lt.s32.totalorder %s32, 3
      %p556 = pnand %p554, %p555
      %p557 = pneg %p556
      // Predicated region
      $region9: #{resnet_two_layer_forward.1} parent=5 // pred_check
        _
      $region10: #{resnet_two_layer_forward.1} parent=5 // pred_check_branch
        %559 = sbr.rel (%p556) target = $region12
      $region11: #{resnet_two_layer_forward.1} parent=5 // pred_region
        %s560 = ssub.s32 %s32, 1
        // Predicated region
        $region13: #{resnet_two_layer_forward.1} parent=11 // pred_check
          %p561 = pneg %p79
        $region14: #{resnet_two_layer_forward.1} parent=11 // pred_check_branch
          %563 = sbr.rel (%p561) target = $region16
        $region15: #{resnet_two_layer_forward.1} parent=11 // pred_region
          _
        $region16: #{resnet_two_layer_forward.1} parent=11 // pred_fallthru
          _
        // Predicated region
        $region17: #{resnet_two_layer_forward.1} parent=11 // pred_check
          %p564 = pneg %p100
        $region18: #{resnet_two_layer_forward.1} parent=11 // pred_check_branch
          %566 = sbr.rel (%p564) target = $region20
        $region19: #{resnet_two_layer_forward.1} parent=11 // pred_region
          _
        $region20: #{resnet_two_layer_forward.1} parent=11 // pred_fallthru
          _
        // Predicated region
        $region21: #{resnet_two_layer_forward.1} parent=11 // pred_check
          %p567 = pneg %p121
        $region22: #{resnet_two_layer_forward.1} parent=11 // pred_check_branch
          %569 = sbr.rel (%p567) target = $region24
        $region23: #{resnet_two_layer_forward.1} parent=11 // pred_region
          _
        $region24: #{resnet_two_layer_forward.1} parent=11 // pred_fallthru
          _
        // Predicated region
        $region25: #{resnet_two_layer_forward.1} parent=11 // pred_check
          %p570 = pneg %p142
        $region26: #{resnet_two_layer_forward.1} parent=11 // pred_check_branch
          %572 = sbr.rel (%p570) target = $region28
        $region27: #{resnet_two_layer_forward.1} parent=11 // pred_region
          _
        $region28: #{resnet_two_layer_forward.1} parent=11 // pred_fallthru
          _
        // Predicated region
        $region29: #{resnet_two_layer_forward.1} parent=11 // pred_check
          %p573 = pneg %p163
        $region30: #{resnet_two_layer_forward.1} parent=11 // pred_check_branch
          %575 = sbr.rel (%p573) target = $region32
        $region31: #{resnet_two_layer_forward.1} parent=11 // pred_region
          _
        $region32: #{resnet_two_layer_forward.1} parent=11 // pred_fallthru
          _
        // Predicated region
        $region33: #{resnet_two_layer_forward.1} parent=11 // pred_check
          %p576 = pneg %p184
        $region34: #{resnet_two_layer_forward.1} parent=11 // pred_check_branch
          %578 = sbr.rel (%p576) target = $region36
        $region35: #{resnet_two_layer_forward.1} parent=11 // pred_region
          _
        $region36: #{resnet_two_layer_forward.1} parent=11 // pred_fallthru
          _
        // Predicated region
        $region37: #{resnet_two_layer_forward.1} parent=11 // pred_check
          %p579 = pneg %p205
        $region38: #{resnet_two_layer_forward.1} parent=11 // pred_check_branch
          %581 = sbr.rel (%p579) target = $region40
        $region39: #{resnet_two_layer_forward.1} parent=11 // pred_region
          _
        $region40: #{resnet_two_layer_forward.1} parent=11 // pred_fallthru
          _
        // Predicated region
        $region41: #{resnet_two_layer_forward.1} parent=11 // pred_check
          %p582 = pneg %p226
        $region42: #{resnet_two_layer_forward.1} parent=11 // pred_check_branch
          %584 = sbr.rel (%p582) target = $region44
        $region43: #{resnet_two_layer_forward.1} parent=11 // pred_region
          _
        $region44: #{resnet_two_layer_forward.1} parent=11 // pred_fallthru
          _
        // Predicated region
        $region45: #{resnet_two_layer_forward.1} parent=11 // pred_check
          %p585 = pneg %p247
        $region46: #{resnet_two_layer_forward.1} parent=11 // pred_check_branch
          %587 = sbr.rel (%p585) target = $region48
        $region47: #{resnet_two_layer_forward.1} parent=11 // pred_region
          _
        $region48: #{resnet_two_layer_forward.1} parent=11 // pred_fallthru
          _
        // Predicated region
        $region49: #{resnet_two_layer_forward.1} parent=11 // pred_check
          %p588 = pneg %p268
        $region50: #{resnet_two_layer_forward.1} parent=11 // pred_check_branch
          %590 = sbr.rel (%p588) target = $region52
        $region51: #{resnet_two_layer_forward.1} parent=11 // pred_region
          _
        $region52: #{resnet_two_layer_forward.1} parent=11 // pred_fallthru
          _
        // Predicated region
        $region53: #{resnet_two_layer_forward.1} parent=11 // pred_check
          %p591 = pneg %p289
        $region54: #{resnet_two_layer_forward.1} parent=11 // pred_check_branch
          %593 = sbr.rel (%p591) target = $region56
        $region55: #{resnet_two_layer_forward.1} parent=11 // pred_region
          _
        $region56: #{resnet_two_layer_forward.1} parent=11 // pred_fallthru
          _
        // Predicated region
        $region57: #{resnet_two_layer_forward.1} parent=11 // pred_check
          %p594 = pneg %p310
        $region58: #{resnet_two_layer_forward.1} parent=11 // pred_check_branch
          %596 = sbr.rel (%p594) target = $region60
        $region59: #{resnet_two_layer_forward.1} parent=11 // pred_region
          _
        $region60: #{resnet_two_layer_forward.1} parent=11 // pred_fallthru
          _
        // Predicated region
        $region61: #{resnet_two_layer_forward.1} parent=11 // pred_check
          %p597 = pneg %p331
        $region62: #{resnet_two_layer_forward.1} parent=11 // pred_check_branch
          %599 = sbr.rel (%p597) target = $region64
        $region63: #{resnet_two_layer_forward.1} parent=11 // pred_region
          _
        $region64: #{resnet_two_layer_forward.1} parent=11 // pred_fallthru
          _
        // Predicated region
        $region65: #{resnet_two_layer_forward.1} parent=11 // pred_check
          %p600 = pneg %p352
        $region66: #{resnet_two_layer_forward.1} parent=11 // pred_check_branch
          %602 = sbr.rel (%p600) target = $region68
        $region67: #{resnet_two_layer_forward.1} parent=11 // pred_region
          _
        $region68: #{resnet_two_layer_forward.1} parent=11 // pred_fallthru
          _
        // Predicated region
        $region69: #{resnet_two_layer_forward.1} parent=11 // pred_check
          %p603 = pneg %p373
        $region70: #{resnet_two_layer_forward.1} parent=11 // pred_check_branch
          %605 = sbr.rel (%p603) target = $region72
        $region71: #{resnet_two_layer_forward.1} parent=11 // pred_region
          _
        $region72: #{resnet_two_layer_forward.1} parent=11 // pred_fallthru
          _
        // Predicated region
        $region73: #{resnet_two_layer_forward.1} parent=11 // pred_check
          %p606 = pneg %p394
        $region74: #{resnet_two_layer_forward.1} parent=11 // pred_check_branch
          %608 = sbr.rel (%p606) target = $region76
        $region75: #{resnet_two_layer_forward.1} parent=11 // pred_region
          _
        $region76: #{resnet_two_layer_forward.1} parent=11 // pred_fallthru
          _
        // Predicated region
        $region77: #{resnet_two_layer_forward.1} parent=11 // pred_check
          %p609 = pneg %p415
        $region78: #{resnet_two_layer_forward.1} parent=11 // pred_check_branch
          %611 = sbr.rel (%p609) target = $region80
        $region79: #{resnet_two_layer_forward.1} parent=11 // pred_region
          _
        $region80: #{resnet_two_layer_forward.1} parent=11 // pred_fallthru
          _
        // Predicated region
        $region81: #{resnet_two_layer_forward.1} parent=11 // pred_check
          %p612 = pneg %p436
        $region82: #{resnet_two_layer_forward.1} parent=11 // pred_check_branch
          %614 = sbr.rel (%p612) target = $region84
        $region83: #{resnet_two_layer_forward.1} parent=11 // pred_region
          _
        $region84: #{resnet_two_layer_forward.1} parent=11 // pred_fallthru
          _
        // Predicated region
        $region85: #{resnet_two_layer_forward.1} parent=11 // pred_check
          %p615 = pneg %p457
        $region86: #{resnet_two_layer_forward.1} parent=11 // pred_check_branch
          %617 = sbr.rel (%p615) target = $region88
        $region87: #{resnet_two_layer_forward.1} parent=11 // pred_region
          _
        $region88: #{resnet_two_layer_forward.1} parent=11 // pred_fallthru
          _
        // Predicated region
        $region89: #{resnet_two_layer_forward.1} parent=11 // pred_check
          %p618 = pneg %p478
        $region90: #{resnet_two_layer_forward.1} parent=11 // pred_check_branch
          %620 = sbr.rel (%p618) target = $region92
        $region91: #{resnet_two_layer_forward.1} parent=11 // pred_region
          _
        $region92: #{resnet_two_layer_forward.1} parent=11 // pred_fallthru
          _
        // Predicated region
        $region93: #{resnet_two_layer_forward.1} parent=11 // pred_check
          %p621 = pneg %p499
        $region94: #{resnet_two_layer_forward.1} parent=11 // pred_check_branch
          %623 = sbr.rel (%p621) target = $region96
        $region95: #{resnet_two_layer_forward.1} parent=11 // pred_region
          _
        $region96: #{resnet_two_layer_forward.1} parent=11 // pred_fallthru
          _
        // Predicated region
        $region97: #{resnet_two_layer_forward.1} parent=11 // pred_check
          %p624 = pneg %p520
        $region98: #{resnet_two_layer_forward.1} parent=11 // pred_check_branch
          %626 = sbr.rel (%p624) target = $region100
        $region99: #{resnet_two_layer_forward.1} parent=11 // pred_region
          _
        $region100: #{resnet_two_layer_forward.1} parent=11 // pred_fallthru
          _
      $region12: #{resnet_two_layer_forward.1} parent=5 // pred_fallthru
        _
      %p627 = scmp.lt.s32.totalorder %s32, 2
      // Predicated region
      $region101: #{resnet_two_layer_forward.1} parent=5 // pred_check
        %p628 = pneg %p627
      $region102: #{resnet_two_layer_forward.1} parent=5 // pred_check_branch
        %630 = sbr.rel (%p628) target = $region104
      $region103: #{resnet_two_layer_forward.1} parent=5 // pred_region
        // Predicated region
        $region105: #{resnet_two_layer_forward.1} parent=103 // pred_check
          %p631 = pneg %p52
        $region106: #{resnet_two_layer_forward.1} parent=103 // pred_check_branch
          %633 = sbr.rel (%p631) target = $region108
        $region107: #{resnet_two_layer_forward.1} parent=103 // pred_region
          %p634 = scmp.lt.s32.totalorder %s32, 1
          %s635 = scalar_select %p634, %s32, 1
          %s636 = smul.addr %s635, 14
          %s637 = smul.addr %s636, 4
          %s638 = scalar_lea.vmem %s0, %s637
        $region108: #{resnet_two_layer_forward.1} parent=103 // pred_fallthru
          _
      $region104: #{resnet_two_layer_forward.1} parent=5 // pred_fallthru
        _
      %p639 = scmp.le.s32.totalorder 1, %s32
      %p640 = scmp.lt.s32.totalorder %s32, 3
      %p641 = pnand %p639, %p640
      %p642 = pneg %p641
      // Predicated region
      $region109: #{resnet_two_layer_forward.1} parent=5 // pred_check
        _
      $region110: #{resnet_two_layer_forward.1} parent=5 // pred_check_branch
        %644 = sbr.rel (%p641) target = $region112
      $region111: #{resnet_two_layer_forward.1} parent=5 // pred_region
        %s645 = ssub.s32 %s32, 1
        %p646 = scmp.lt.s32.totalorder %s37, 1
        %s647 = scalar_select %p646, %s37, 1
        %s648 = smul.addr %s647, 14
        %s649 = smul.addr %s648, 4
        %s650 = scalar_lea.vmem %s0, %s649
        %p651 = pneg %p58
        %p652 = pneg %p55
        %p653 = pneg %p79
        %p654 = pneg %p76
        %p655 = pneg %p100
        %p656 = pneg %p97
        %p657 = pneg %p121
        %p658 = pneg %p118
        %p659 = pneg %p142
        %p660 = pneg %p139
        %p661 = pneg %p163
        %p662 = pneg %p160
        %p663 = pneg %p184
        %p664 = pneg %p181
        %p665 = pneg %p205
        %p666 = pneg %p202
        %p667 = pneg %p226
        %p668 = pneg %p223
        %p669 = pneg %p247
        %p670 = pneg %p244
        %p671 = pneg %p268
        %p672 = pneg %p265
        %p673 = pneg %p289
        %p674 = pneg %p286
        %p675 = pneg %p310
        %p676 = pneg %p307
        %p677 = pneg %p331
        %p678 = pneg %p328
        %p679 = pneg %p352
        %p680 = pneg %p349
        %p681 = pneg %p373
        %p682 = pneg %p370
        %p683 = pneg %p394
        %p684 = pneg %p391
        %p685 = pneg %p415
        %p686 = pneg %p412
        %p687 = pneg %p436
        %p688 = pneg %p433
        %p689 = pneg %p457
        %p690 = pneg %p454
        %p691 = pneg %p478
        %p692 = pneg %p475
        %p693 = pneg %p499
        %p694 = pneg %p496
        %p695 = pneg %p520
        %p696 = pneg %p517
        %p697 = pneg %p546
        %p698 = pneg %p543
        %s699 = sand.u32 %s533, 1
        %s700 = scalar_lea.sflag [#allocation7], %s699
        %s701 = sand.u32 %s533, 1
        %s702 = scalar_lea.vmem [#allocation6], %s701
        %p703 = scmp.lt.s32.totalorder %s37, 1
        %s704 = scalar_select %p703, %s37, 1
        %s705 = smul.addr %s704, 14
        %s706 = smul.addr %s705, 4
        %s707 = scalar_lea.vmem %s0, %s706
        %v709 = vld [vmem:[%s707] sm:$0xf]
        %v710 = vld [vmem:[%s707 + $0x4] sm:$0xf]
        %v711 = vld [vmem:[%s707 + $0x8] sm:$0xf]
        %v712 = vld [vmem:[%s707 + $0xc] sm:$0xf]
        %v713 = vld [vmem:[%s707 + $0x10] sm:$0xf]
        %v714 = vld [vmem:[%s707 + $0x14] sm:$0xf]
        %v715 = vld [vmem:[%s707 + $0x18] sm:$0xf]
        %v716 = vld [vmem:[%s707 + $0x1c] sm:$0xf]
        %v717 = vld [vmem:[%s707 + $0x20] sm:$0xf]
        %v718 = vld [vmem:[%s707 + $0x24] sm:$0xf]
        %v719 = vld [vmem:[%s707 + $0x28] sm:$0xf]
        %v720 = vld [vmem:[%s707 + $0x2c] sm:$0xf]
        %v721 = vld [vmem:[%s707 + $0x30] sm:$0x3]
        %v722 = vld [vmem:[%s1] sm:$0xf]
        %v723 = vld [vmem:[%s1 + $0x4] sm:$0xf]
        %v724 = vld [vmem:[%s1 + $0x8] sm:$0xf]
        %v725 = vld [vmem:[%s1 + $0xc] sm:$0xf]
        %v726 = vld [vmem:[%s1 + $0x10] sm:$0xf]
        %v727 = vld [vmem:[%s1 + $0x14] sm:$0xf]
        %v728 = vld [vmem:[%s1 + $0x18] sm:$0xf]
        %v729 = vld [vmem:[%s1 + $0x1c] sm:$0xf]
        %v730 = vld [vmem:[%s1 + $0x20] sm:$0xf]
        %v731 = vld [vmem:[%s1 + $0x24] sm:$0xf]
        %v732 = vld [vmem:[%s1 + $0x28] sm:$0xf]
        %v733 = vld [vmem:[%s1 + $0x2c] sm:$0xf]
        %v734 = vld [vmem:[%s1 + $0x30] sm:$0xf]
        %v735 = vld [vmem:[%s1 + $0x34] sm:$0xf]
        %v736 = vld [vmem:[%s1 + $0x38] sm:$0xf]
        %v737 = vld [vmem:[%s1 + $0x3c] sm:$0xf]
        %v751 = vunpack.c.l.b16 %v709
        %v752 = vunpack.c.l.b16 %v710
        %v753 = vunpack.c.l.b16 %v711
        %v754 = vunpack.c.l.b16 %v712
        %v755 = vunpack.c.l.b16 %v713
        %v756 = vunpack.c.l.b16 %v714
        %v757 = vunpack.c.l.b16 %v715
        %v758 = vunpack.c.l.b16 %v716
        %v759 = vunpack.c.l.b16 %v717
        %v760 = vunpack.c.l.b16 %v718
        %v761 = vunpack.c.l.b16 %v719
        %v762 = vunpack.c.l.b16 %v720
        %v763 = vunpack.c.l.b16 %v721
        %v764 = vpack.c.b16 %v752, %v751
        %v765 = vpack.c.b16 %v754, %v753
        %v766 = vpack.c.b16 %v756, %v755
        %v767 = vpack.c.b16 %v758, %v757
        %v768 = vpack.c.b16 %v760, %v759
        %v769 = vpack.c.b16 %v762, %v761
        %v770 = vpack.c.b16 %v763, %v763
        %v794 = vunpack.c.l.b16 %v722
        %v795 = vunpack.c.l.b16 %v723
        %v796 = vunpack.c.l.b16 %v724
        %v797 = vunpack.c.l.b16 %v725
        %v798 = vunpack.c.l.b16 %v726
        %v799 = vunpack.c.l.b16 %v727
        %v800 = vunpack.c.l.b16 %v728
        %v801 = vunpack.c.l.b16 %v729
        %v802 = vunpack.c.l.b16 %v730
        %v803 = vunpack.c.l.b16 %v731
        %v804 = vunpack.c.l.b16 %v732
        %v805 = vunpack.c.l.b16 %v733
        %v806 = vunpack.c.l.b16 %v734
        %v807 = vunpack.c.l.b16 %v735
        %v808 = vunpack.c.l.b16 %v736
        %v809 = vunpack.c.l.b16 %v737
        %v810 = vpack.c.b16 %v795, %v794
        %v811 = vpack.c.b16 %v797, %v796
        %v812 = vpack.c.b16 %v799, %v798
        %v813 = vpack.c.b16 %v801, %v800
        %v814 = vpack.c.b16 %v803, %v802
        %v815 = vpack.c.b16 %v805, %v804
        %v816 = vpack.c.b16 %v807, %v806
        %v817 = vpack.c.b16 %v809, %v808
        %826 = vmatprep.subr.bf16.mxu0 0
        %827 = vmatpush1.bf16.msra.mxu0 %v810
        %828 = vmatprep.subr.bf16.mxu0 0
        %829 = vmatpush1.bf16.msra.mxu0 %v811
        %830 = vmatprep.subr.bf16.mxu0 0
        %831 = vmatpush1.bf16.msra.mxu0 %v812
        %832 = vmatprep.subr.bf16.mxu0 0
        %833 = vmatpush1.bf16.msra.mxu0 %v813
        %834 = vmatprep.subr.bf16.mxu0 0
        %835 = vmatpush1.bf16.msra.mxu0 %v814
        %836 = vmatprep.subr.bf16.mxu0 0
        %837 = vmatpush1.bf16.msra.mxu0 %v815
        %838 = vmatprep.subr.bf16.mxu0 0
        %839 = vmatpush1.bf16.msra.mxu0 %v816
        %840 = vmatprep.subr.bf16.mxu0 0
        %841 = vmatpush1.bf16.msra.mxu0 %v817
        %842 = vmatprep.subr.bf16.mxu0 0
        %843 = vmatpush1.bf16.msra.mxu0 0
        %844 = vmatprep.subr.bf16.mxu0 0
        %845 = vmatpush1.bf16.msra.mxu0 0
        %846 = vmatprep.subr.bf16.mxu0 0
        %847 = vmatpush1.bf16.msra.mxu0 0
        %848 = vmatprep.subr.bf16.mxu0 0
        %849 = vmatpush1.bf16.msra.mxu0 0
        %850 = vmatprep.subr.bf16.mxu0 0
        %851 = vmatpush1.bf16.msra.mxu0 0
        %852 = vmatprep.subr.bf16.mxu0 0
        %853 = vmatpush1.bf16.msra.mxu0 0
        %854 = vmatprep.subr.bf16.mxu0 0
        %855 = vmatpush1.bf16.msra.mxu0 0
        %856 = vmatprep.subr.bf16.mxu0 0
        %857 = vmatpush1.bf16.msra.mxu0 0
        %858 = vmatprep.mubr.bf16.mxu0 0
        %859 = vmatmul.mubr.bf16.gmra.mrb[0].mxu0 %v764
        %v860 = vpop.f32.mrb[0].mxu0
        %v861 = vadd.f32 0.0, %v860
        %v862 = vpop.f32.mrb[0].mxu0
        %v863 = vpop.f32.mrb[0].mxu0
        %v864 = vadd.f32 0.0, %v863
        %v865 = vpop.f32.mrb[0].mxu0
        %866 = vmatprep.mubr.bf16.mxu0 0
        %867 = vmatmul.mubr.bf16.gmra.mrb[0].mxu0 %v765
        %v868 = vpop.f32.mrb[0].mxu0
        %v869 = vadd.f32 0.0, %v868
        %v870 = vpop.f32.mrb[0].mxu0
        %v871 = vpop.f32.mrb[0].mxu0
        %v872 = vadd.f32 0.0, %v871
        %v873 = vpop.f32.mrb[0].mxu0
        %874 = vmatprep.mubr.bf16.mxu0 0
        %875 = vmatmul.mubr.bf16.gmra.mrb[0].mxu0 %v766
        %v876 = vpop.f32.mrb[0].mxu0
        %v877 = vadd.f32 0.0, %v876
        %v878 = vpop.f32.mrb[0].mxu0
        %v879 = vpop.f32.mrb[0].mxu0
        %v880 = vadd.f32 0.0, %v879
        %v881 = vpop.f32.mrb[0].mxu0
        %882 = vmatprep.mubr.bf16.mxu0 0
        %883 = vmatmul.mubr.bf16.gmra.mrb[0].mxu0 %v767
        %v884 = vpop.f32.mrb[0].mxu0
        %v885 = vadd.f32 0.0, %v884
        %v886 = vpop.f32.mrb[0].mxu0
        %v887 = vpop.f32.mrb[0].mxu0
        %v888 = vadd.f32 0.0, %v887
        %v889 = vpop.f32.mrb[0].mxu0
        %890 = vmatprep.mubr.bf16.mxu0 0
        %891 = vmatmul.mubr.bf16.gmra.mrb[0].mxu0 %v768
        %v892 = vpop.f32.mrb[0].mxu0
        %v893 = vadd.f32 0.0, %v892
        %v894 = vpop.f32.mrb[0].mxu0
        %v895 = vpop.f32.mrb[0].mxu0
        %v896 = vadd.f32 0.0, %v895
        %v897 = vpop.f32.mrb[0].mxu0
        %898 = vmatprep.mubr.bf16.mxu0 0
        %899 = vmatmul.mubr.bf16.gmra.mrb[0].mxu0 %v769
        %v900 = vpop.f32.mrb[0].mxu0
        %v901 = vadd.f32 0.0, %v900
        %v902 = vpop.f32.mrb[0].mxu0
        %v903 = vpop.f32.mrb[0].mxu0
        %v904 = vadd.f32 0.0, %v903
        %v905 = vpop.f32.mrb[0].mxu0
        %906 = vmatprep.mubr.bf16.mxu0 0
        %907 = vmatmul.mubr.bf16.gmra.mrb[0].mxu0 %v770
        %v908 = vpop.f32.mrb[0].mxu0
        %v909 = vadd.f32 0.0, %v908
        %v910 = vpop.f32.mrb[0].mxu0
        %v911 = vpop.f32.mrb[0].mxu0
        %v912 = vpop.f32.mrb[0].mxu0
        %913 = vdwg.mxu0
        %914 = vst [vmem:[#allocation2] sm:$0xff] %v861
        %915 = vst [vmem:[#allocation2 + $0x8] sm:$0xff] %v864
        %916 = vst [vmem:[#allocation2 + $0x10] sm:$0xff] %v869
        %917 = vst [vmem:[#allocation2 + $0x18] sm:$0xff] %v872
        %918 = vst [vmem:[#allocation2 + $0x20] sm:$0xff] %v877
        %919 = vst [vmem:[#allocation2 + $0x28] sm:$0xff] %v880
        %920 = vst [vmem:[#allocation2 + $0x30] sm:$0xff] %v885
        %921 = vst [vmem:[#allocation2 + $0x38] sm:$0xff] %v888
        %922 = vst [vmem:[#allocation2 + $0x40] sm:$0xff] %v893
        %923 = vst [vmem:[#allocation2 + $0x48] sm:$0xff] %v896
        %924 = vst [vmem:[#allocation2 + $0x50] sm:$0xff] %v901
        %925 = vst [vmem:[#allocation2 + $0x58] sm:$0xff] %v904
        %926 = vst [vmem:[#allocation2 + $0x60] sm:$0xf] %v909
        %v927 = vld [vmem:[#allocation2] sm:$0xff]
        %v928 = vld [vmem:[#allocation2 + $0x8] sm:$0xff]
        %v929 = vld [vmem:[#allocation2 + $0x10] sm:$0xff]
        %v930 = vld [vmem:[#allocation2 + $0x18] sm:$0xff]
        %v931 = vld [vmem:[#allocation2 + $0x20] sm:$0xff]
        %v932 = vld [vmem:[#allocation2 + $0x28] sm:$0xff]
        %v933 = vld [vmem:[#allocation2 + $0x30] sm:$0xff]
        %v934 = vld [vmem:[#allocation2 + $0x38] sm:$0xff]
        %v935 = vld [vmem:[#allocation2 + $0x40] sm:$0xff]
        %v936 = vld [vmem:[#allocation2 + $0x48] sm:$0xff]
        %v937 = vld [vmem:[#allocation2 + $0x50] sm:$0xff]
        %v938 = vld [vmem:[#allocation2 + $0x58] sm:$0xff]
        %v939 = vld [vmem:[#allocation2 + $0x60] sm:$0xf]
        %v940 = vld [vmem:[%s707] sm:$0xf]
        %v941 = vld [vmem:[%s707 + $0x4] sm:$0xf]
        %v942 = vld [vmem:[%s707 + $0x8] sm:$0xf]
        %v943 = vld [vmem:[%s707 + $0xc] sm:$0xf]
        %v944 = vld [vmem:[%s707 + $0x10] sm:$0xf]
        %v945 = vld [vmem:[%s707 + $0x14] sm:$0xf]
        %v946 = vld [vmem:[%s707 + $0x18] sm:$0xf]
        %v947 = vld [vmem:[%s707 + $0x1c] sm:$0xf]
        %v948 = vld [vmem:[%s707 + $0x20] sm:$0xf]
        %v949 = vld [vmem:[%s707 + $0x24] sm:$0xf]
        %v950 = vld [vmem:[%s707 + $0x28] sm:$0xf]
        %v951 = vld [vmem:[%s707 + $0x2c] sm:$0xf]
        %v952 = vld [vmem:[%s707 + $0x30] sm:$0x7]
        %s953 = scalar_lea.vmem %s1, 64
        %v954 = vld [vmem:[%s953] sm:$0xf]
        %v955 = vld [vmem:[%s953 + $0x4] sm:$0xf]
        %v956 = vld [vmem:[%s953 + $0x8] sm:$0xf]
        %v957 = vld [vmem:[%s953 + $0xc] sm:$0xf]
        %v958 = vld [vmem:[%s953 + $0x10] sm:$0xf]
        %v959 = vld [vmem:[%s953 + $0x14] sm:$0xf]
        %v960 = vld [vmem:[%s953 + $0x18] sm:$0xf]
        %v961 = vld [vmem:[%s953 + $0x1c] sm:$0xf]
        %v962 = vld [vmem:[%s953 + $0x20] sm:$0xf]
        %v963 = vld [vmem:[%s953 + $0x24] sm:$0xf]
        %v964 = vld [vmem:[%s953 + $0x28] sm:$0xf]
        %v965 = vld [vmem:[%s953 + $0x2c] sm:$0xf]
        %v966 = vld [vmem:[%s953 + $0x30] sm:$0xf]
        %v967 = vld [vmem:[%s953 + $0x34] sm:$0xf]
        %v968 = vld [vmem:[%s953 + $0x38] sm:$0xf]
        %v969 = vld [vmem:[%s953 + $0x3c] sm:$0xf]
        %v983 = vunpack.c.l.b16 %v940
        %v984 = vunpack.c.l.b16 %v941
        %v985 = vunpack.c.l.b16 %v942
        %v986 = vunpack.c.l.b16 %v943
        %v987 = vunpack.c.l.b16 %v944
        %v988 = vunpack.c.l.b16 %v945
        %v989 = vunpack.c.l.b16 %v946
        %v990 = vunpack.c.l.b16 %v947
        %v991 = vunpack.c.l.b16 %v948
        %v992 = vunpack.c.l.b16 %v949
        %v993 = vunpack.c.l.b16 %v950
        %v994 = vunpack.c.l.b16 %v951
        %v995 = vunpack.c.l.b16 %v952
        %v996 = vpack.c.b16 %v984, %v983
        %v997 = vpack.c.b16 %v986, %v985
        %v998 = vpack.c.b16 %v988, %v987
        %v999 = vpack.c.b16 %v990, %v989
        %v1000 = vpack.c.b16 %v992, %v991
        %v1001 = vpack.c.b16 %v994, %v993
        %v1002 = vpack.c.b16 %v995, %v995
        %vm1003 = vsmask.f32 7424
        %v1005 = vshrl.u32 %v996, 16
        %v1007 = vshll.u32 %v996, 16
        %v1009 = vrot.slane %v1007, 1
        %v1010 = vor.u32 %v1005, %v1009
        %v1012 = vshll.u32 %v997, 16
        %v1014 = vrot.slane %v1012, 1
        %v1015 = vsel %vm1003, %v1010, %v1014
        %v1016 = vshrl.u32 %v997, 16
        %v1018 = vor.u32 %v1016, %v1014
        %v1020 = vshll.u32 %v998, 16
        %v1022 = vrot.slane %v1020, 1
        %v1023 = vsel %vm1003, %v1018, %v1022
        %v1024 = vshrl.u32 %v998, 16
        %v1026 = vor.u32 %v1024, %v1022
        %v1028 = vshll.u32 %v999, 16
        %v1030 = vrot.slane %v1028, 1
        %v1031 = vsel %vm1003, %v1026, %v1030
        %v1032 = vshrl.u32 %v999, 16
        %v1034 = vor.u32 %v1032, %v1030
        %v1036 = vshll.u32 %v1000, 16
        %v1038 = vrot.slane %v1036, 1
        %v1039 = vsel %vm1003, %v1034, %v1038
        %v1040 = vshrl.u32 %v1000, 16
        %v1042 = vor.u32 %v1040, %v1038
        %v1044 = vshll.u32 %v1001, 16
        %v1046 = vrot.slane %v1044, 1
        %v1047 = vsel %vm1003, %v1042, %v1046
        %v1048 = vshrl.u32 %v1001, 16
        %v1050 = vor.u32 %v1048, %v1046
        %v1052 = vshll.u32 %v1002, 16
        %v1054 = vrot.slane %v1052, 1
        %v1055 = vsel %vm1003, %v1050, %v1054
        %v1056 = vshrl.u32 %v1002, 16
        %v1058 = vor.u32 %v1056, %v1054
        %v1082 = vunpack.c.l.b16 %v954
        %v1083 = vunpack.c.l.b16 %v955
        %v1084 = vunpack.c.l.b16 %v956
        %v1085 = vunpack.c.l.b16 %v957
        %v1086 = vunpack.c.l.b16 %v958
        %v1087 = vunpack.c.l.b16 %v959
        %v1088 = vunpack.c.l.b16 %v960
        %v1089 = vunpack.c.l.b16 %v961
        %v1090 = vunpack.c.l.b16 %v962
        %v1091 = vunpack.c.l.b16 %v963
        %v1092 = vunpack.c.l.b16 %v964
        %v1093 = vunpack.c.l.b16 %v965
        %v1094 = vunpack.c.l.b16 %v966
        %v1095 = vunpack.c.l.b16 %v967
        %v1096 = vunpack.c.l.b16 %v968
        %v1097 = vunpack.c.l.b16 %v969
        %v1098 = vpack.c.b16 %v1083, %v1082
        %v1099 = vpack.c.b16 %v1085, %v1084
        %v1100 = vpack.c.b16 %v1087, %v1086
        %v1101 = vpack.c.b16 %v1089, %v1088
        %v1102 = vpack.c.b16 %v1091, %v1090
        %v1103 = vpack.c.b16 %v1093, %v1092
        %v1104 = vpack.c.b16 %v1095, %v1094
        %v1105 = vpack.c.b16 %v1097, %v1096
        %1114 = vmatprep.subr.bf16.mxu0 0
        %1115 = vmatpush1.bf16.msra.mxu0 %v1098
        %1116 = vmatprep.subr.bf16.mxu0 0
        %1117 = vmatpush1.bf16.msra.mxu0 %v1099
        %1118 = vmatprep.subr.bf16.mxu0 0
        %1119 = vmatpush1.bf16.msra.mxu0 %v1100
        %1120 = vmatprep.subr.bf16.mxu0 0
        %1121 = vmatpush1.bf16.msra.mxu0 %v1101
        %1122 = vmatprep.subr.bf16.mxu0 0
        %1123 = vmatpush1.bf16.msra.mxu0 %v1102
        %1124 = vmatprep.subr.bf16.mxu0 0
        %1125 = vmatpush1.bf16.msra.mxu0 %v1103
        %1126 = vmatprep.subr.bf16.mxu0 0
        %1127 = vmatpush1.bf16.msra.mxu0 %v1104
        %1128 = vmatprep.subr.bf16.mxu0 0
        %1129 = vmatpush1.bf16.msra.mxu0 %v1105
        %1130 = vmatprep.subr.bf16.mxu0 0
        %1131 = vmatpush1.bf16.msra.mxu0 0
        %1132 = vmatprep.subr.bf16.mxu0 0
        %1133 = vmatpush1.bf16.msra.mxu0 0
        %1134 = vmatprep.subr.bf16.mxu0 0
        %1135 = vmatpush1.bf16.msra.mxu0 0
        %1136 = vmatprep.subr.bf16.mxu0 0
        %1137 = vmatpush1.bf16.msra.mxu0 0
        %1138 = vmatprep.subr.bf16.mxu0 0
        %1139 = vmatpush1.bf16.msra.mxu0 0
        %1140 = vmatprep.subr.bf16.mxu0 0
        %1141 = vmatpush1.bf16.msra.mxu0 0
        %1142 = vmatprep.subr.bf16.mxu0 0
        %1143 = vmatpush1.bf16.msra.mxu0 0
        %1144 = vmatprep.subr.bf16.mxu0 0
        %1145 = vmatpush1.bf16.msra.mxu0 0
        %1146 = vmatprep.mubr.bf16.mxu0 0
        %1147 = vmatmul.mubr.bf16.gmra.mrb[0].mxu0 %v1015
        %v1148 = vpop.f32.mrb[0].mxu0
        %v1149 = vadd.f32 0.0, %v1148
        %v1150 = vpop.f32.mrb[0].mxu0
        %v1151 = vpop.f32.mrb[0].mxu0
        %v1152 = vadd.f32 0.0, %v1151
        %v1153 = vpop.f32.mrb[0].mxu0
        %1154 = vmatprep.mubr.bf16.mxu0 0
        %1155 = vmatmul.mubr.bf16.gmra.mrb[0].mxu0 %v1023
        %v1156 = vpop.f32.mrb[0].mxu0
        %v1157 = vadd.f32 0.0, %v1156
        %v1158 = vpop.f32.mrb[0].mxu0
        %v1159 = vpop.f32.mrb[0].mxu0
        %v1160 = vadd.f32 0.0, %v1159
        %v1161 = vpop.f32.mrb[0].mxu0
        %1162 = vmatprep.mubr.bf16.mxu0 0
        %1163 = vmatmul.mubr.bf16.gmra.mrb[0].mxu0 %v1031
        %v1164 = vpop.f32.mrb[0].mxu0
        %v1165 = vadd.f32 0.0, %v1164
        %v1166 = vpop.f32.mrb[0].mxu0
        %v1167 = vpop.f32.mrb[0].mxu0
        %v1168 = vadd.f32 0.0, %v1167
        %v1169 = vpop.f32.mrb[0].mxu0
        %1170 = vmatprep.mubr.bf16.mxu0 0
        %1171 = vmatmul.mubr.bf16.gmra.mrb[0].mxu0 %v1039
        %v1172 = vpop.f32.mrb[0].mxu0
        %v1173 = vadd.f32 0.0, %v1172
        %v1174 = vpop.f32.mrb[0].mxu0
        %v1175 = vpop.f32.mrb[0].mxu0
        %v1176 = vadd.f32 0.0, %v1175
        %v1177 = vpop.f32.mrb[0].mxu0
        %1178 = vmatprep.mubr.bf16.mxu0 0
        %1179 = vmatmul.mubr.bf16.gmra.mrb[0].mxu0 %v1047
        %v1180 = vpop.f32.mrb[0].mxu0
        %v1181 = vadd.f32 0.0, %v1180
        %v1182 = vpop.f32.mrb[0].mxu0
        %v1183 = vpop.f32.mrb[0].mxu0
        %v1184 = vadd.f32 0.0, %v1183
        %v1185 = vpop.f32.mrb[0].mxu0
        %1186 = vmatprep.mubr.bf16.mxu0 0
        %1187 = vmatmul.mubr.bf16.gmra.mrb[0].mxu0 %v1055
        %v1188 = vpop.f32.mrb[0].mxu0
        %v1189 = vadd.f32 0.0, %v1188
        %v1190 = vpop.f32.mrb[0].mxu0
        %v1191 = vpop.f32.mrb[0].mxu0
        %v1192 = vadd.f32 0.0, %v1191
        %v1193 = vpop.f32.mrb[0].mxu0
        %1194 = vmatprep.mubr.bf16.mxu0 0
        %1195 = vmatmul.mubr.bf16.gmra.mrb[0].mxu0 %v1058
        %v1196 = vpop.f32.mrb[0].mxu0
        %v1197 = vadd.f32 0.0, %v1196
        %v1198 = vpop.f32.mrb[0].mxu0
        %v1199 = vpop.f32.mrb[0].mxu0
        %v1200 = vpop.f32.mrb[0].mxu0
        %1201 = vdwg.mxu0
        %v1202 = vadd.f32 %v927, %v1149
        %v1203 = vadd.f32 %v928, %v1152
        %v1204 = vadd.f32 %v929, %v1157
        %v1205 = vadd.f32 %v930, %v1160
        %v1206 = vadd.f32 %v931, %v1165
        %v1207 = vadd.f32 %v932, %v1168
        %v1208 = vadd.f32 %v933, %v1173
        %v1209 = vadd.f32 %v934, %v1176
        %v1210 = vadd.f32 %v935, %v1181
        %v1211 = vadd.f32 %v936, %v1184
        %v1212 = vadd.f32 %v937, %v1189
        %v1213 = vadd.f32 %v938, %v1192
        %v1214 = vadd.f32 %v939, %v1197
        %1215 = vst [vmem:[#allocation2] sm:$0xff] %v1202
        %1216 = vst [vmem:[#allocation2 + $0x8] sm:$0xff] %v1203
        %1217 = vst [vmem:[#allocation2 + $0x10] sm:$0xff] %v1204
        %1218 = vst [vmem:[#allocation2 + $0x18] sm:$0xff] %v1205
        %1219 = vst [vmem:[#allocation2 + $0x20] sm:$0xff] %v1206
        %1220 = vst [vmem:[#allocation2 + $0x28] sm:$0xff] %v1207
        %1221 = vst [vmem:[#allocation2 + $0x30] sm:$0xff] %v1208
        %1222 = vst [vmem:[#allocation2 + $0x38] sm:$0xff] %v1209
        %1223 = vst [vmem:[#allocation2 + $0x40] sm:$0xff] %v1210
        %1224 = vst [vmem:[#allocation2 + $0x48] sm:$0xff] %v1211
        %1225 = vst [vmem:[#allocation2 + $0x50] sm:$0xff] %v1212
        %1226 = vst [vmem:[#allocation2 + $0x58] sm:$0xff] %v1213
        %1227 = vst [vmem:[#allocation2 + $0x60] sm:$0xf] %v1214
        %v1228 = vld [vmem:[#allocation2] sm:$0xff]
        %v1229 = vld [vmem:[#allocation2 + $0x8] sm:$0xff]
        %v1230 = vld [vmem:[#allocation2 + $0x10] sm:$0xff]
        %v1231 = vld [vmem:[#allocation2 + $0x18] sm:$0xff]
        %v1232 = vld [vmem:[#allocation2 + $0x20] sm:$0xff]
        %v1233 = vld [vmem:[#allocation2 + $0x28] sm:$0xff]
        %v1234 = vld [vmem:[#allocation2 + $0x30] sm:$0xff]
        %v1235 = vld [vmem:[#allocation2 + $0x38] sm:$0xff]
        %v1236 = vld [vmem:[#allocation2 + $0x40] sm:$0xff]
        %v1237 = vld [vmem:[#allocation2 + $0x48] sm:$0xff]
        %v1238 = vld [vmem:[#allocation2 + $0x50] sm:$0xff]
        %v1239 = vld [vmem:[#allocation2 + $0x58] sm:$0xff]
        %v1240 = vld [vmem:[#allocation2 + $0x60] sm:$0xf]
        %v1241 = vld [vmem:[%s707] sm:$0xe]
        %v1242 = vld [vmem:[%s707 + $0x4] sm:$0xf]
        %v1243 = vld [vmem:[%s707 + $0x8] sm:$0xf]
        %v1244 = vld [vmem:[%s707 + $0xc] sm:$0xf]
        %v1245 = vld [vmem:[%s707 + $0x10] sm:$0xf]
        %v1246 = vld [vmem:[%s707 + $0x14] sm:$0xf]
        %v1247 = vld [vmem:[%s707 + $0x18] sm:$0xf]
        %v1248 = vld [vmem:[%s707 + $0x1c] sm:$0xf]
        %v1249 = vld [vmem:[%s707 + $0x20] sm:$0xf]
        %v1250 = vld [vmem:[%s707 + $0x24] sm:$0xf]
        %v1251 = vld [vmem:[%s707 + $0x28] sm:$0xf]
        %v1252 = vld [vmem:[%s707 + $0x2c] sm:$0xf]
        %v1253 = vld [vmem:[%s707 + $0x30] sm:$0x7]
        %s1254 = scalar_lea.vmem %s1, 128
        %v1255 = vld [vmem:[%s1254] sm:$0xf]
        %v1256 = vld [vmem:[%s1254 + $0x4] sm:$0xf]
        %v1257 = vld [vmem:[%s1254 + $0x8] sm:$0xf]
        %v1258 = vld [vmem:[%s1254 + $0xc] sm:$0xf]
        %v1259 = vld [vmem:[%s1254 + $0x10] sm:$0xf]
        %v1260 = vld [vmem:[%s1254 + $0x14] sm:$0xf]
        %v1261 = vld [vmem:[%s1254 + $0x18] sm:$0xf]
        %v1262 = vld [vmem:[%s1254 + $0x1c] sm:$0xf]
        %v1263 = vld [vmem:[%s1254 + $0x20] sm:$0xf]
        %v1264 = vld [vmem:[%s1254 + $0x24] sm:$0xf]
        %v1265 = vld [vmem:[%s1254 + $0x28] sm:$0xf]
        %v1266 = vld [vmem:[%s1254 + $0x2c] sm:$0xf]
        %v1267 = vld [vmem:[%s1254 + $0x30] sm:$0xf]
        %v1268 = vld [vmem:[%s1254 + $0x34] sm:$0xf]
        %v1269 = vld [vmem:[%s1254 + $0x38] sm:$0xf]
        %v1270 = vld [vmem:[%s1254 + $0x3c] sm:$0xf]
        %v1284 = vunpack.c.l.b16 %v1241
        %v1285 = vunpack.c.l.b16 %v1242
        %v1286 = vunpack.c.l.b16 %v1243
        %v1287 = vunpack.c.l.b16 %v1244
        %v1288 = vunpack.c.l.b16 %v1245
        %v1289 = vunpack.c.l.b16 %v1246
        %v1290 = vunpack.c.l.b16 %v1247
        %v1291 = vunpack.c.l.b16 %v1248
        %v1292 = vunpack.c.l.b16 %v1249
        %v1293 = vunpack.c.l.b16 %v1250
        %v1294 = vunpack.c.l.b16 %v1251
        %v1295 = vunpack.c.l.b16 %v1252
        %v1296 = vunpack.c.l.b16 %v1253
        %v1297 = vpack.c.b16 %v1285, %v1284
        %v1298 = vpack.c.b16 %v1287, %v1286
        %v1299 = vpack.c.b16 %v1289, %v1288
        %v1300 = vpack.c.b16 %v1291, %v1290
        %v1301 = vpack.c.b16 %v1293, %v1292
        %v1302 = vpack.c.b16 %v1295, %v1294
        %v1303 = vpack.c.b16 %v1296, %v1296
        %vm1304 = vcmask 1046528
        %v1305 = vrot.slane %v1297, 1
        %v1306 = vrot.slane %v1298, 1
        %v1307 = vsel %vm1304, %v1305, %v1306
        %v1308 = vrot.slane %v1299, 1
        %v1309 = vsel %vm1304, %v1306, %v1308
        %v1310 = vrot.slane %v1300, 1
        %v1311 = vsel %vm1304, %v1308, %v1310
        %v1312 = vrot.slane %v1301, 1
        %v1313 = vsel %vm1304, %v1310, %v1312
        %v1314 = vrot.slane %v1302, 1
        %v1315 = vsel %vm1304, %v1312, %v1314
        %v1316 = vrot.slane %v1303, 1
        %v1317 = vsel %vm1304, %v1314, %v1316
        %v1341 = vunpack.c.l.b16 %v1255
        %v1342 = vunpack.c.l.b16 %v1256
        %v1343 = vunpack.c.l.b16 %v1257
        %v1344 = vunpack.c.l.b16 %v1258
        %v1345 = vunpack.c.l.b16 %v1259
        %v1346 = vunpack.c.l.b16 %v1260
        %v1347 = vunpack.c.l.b16 %v1261
        %v1348 = vunpack.c.l.b16 %v1262
        %v1349 = vunpack.c.l.b16 %v1263
        %v1350 = vunpack.c.l.b16 %v1264
        %v1351 = vunpack.c.l.b16 %v1265
        %v1352 = vunpack.c.l.b16 %v1266
        %v1353 = vunpack.c.l.b16 %v1267
        %v1354 = vunpack.c.l.b16 %v1268
        %v1355 = vunpack.c.l.b16 %v1269
        %v1356 = vunpack.c.l.b16 %v1270
        %v1357 = vpack.c.b16 %v1342, %v1341
        %v1358 = vpack.c.b16 %v1344, %v1343
        %v1359 = vpack.c.b16 %v1346, %v1345
        %v1360 = vpack.c.b16 %v1348, %v1347
        %v1361 = vpack.c.b16 %v1350, %v1349
        %v1362 = vpack.c.b16 %v1352, %v1351
        %v1363 = vpack.c.b16 %v1354, %v1353
        %v1364 = vpack.c.b16 %v1356, %v1355
        %1373 = vmatprep.subr.bf16.mxu0 0
        %1374 = vmatpush1.bf16.msra.mxu0 %v1357
        %1375 = vmatprep.subr.bf16.mxu0 0
        %1376 = vmatpush1.bf16.msra.mxu0 %v1358
        %1377 = vmatprep.subr.bf16.mxu0 0
        %1378 = vmatpush1.bf16.msra.mxu0 %v1359
        %1379 = vmatprep.subr.bf16.mxu0 0
        %1380 = vmatpush1.bf16.msra.mxu0 %v1360
        %1381 = vmatprep.subr.bf16.mxu0 0
        %1382 = vmatpush1.bf16.msra.mxu0 %v1361
        %1383 = vmatprep.subr.bf16.mxu0 0
        %1384 = vmatpush1.bf16.msra.mxu0 %v1362
        %1385 = vmatprep.subr.bf16.mxu0 0
        %1386 = vmatpush1.bf16.msra.mxu0 %v1363
        %1387 = vmatprep.subr.bf16.mxu0 0
        %1388 = vmatpush1.bf16.msra.mxu0 %v1364
        %1389 = vmatprep.subr.bf16.mxu0 0
        %1390 = vmatpush1.bf16.msra.mxu0 0
        %1391 = vmatprep.subr.bf16.mxu0 0
        %1392 = vmatpush1.bf16.msra.mxu0 0
        %1393 = vmatprep.subr.bf16.mxu0 0
        %1394 = vmatpush1.bf16.msra.mxu0 0
        %1395 = vmatprep.subr.bf16.mxu0 0
        %1396 = vmatpush1.bf16.msra.mxu0 0
        %1397 = vmatprep.subr.bf16.mxu0 0
        %1398 = vmatpush1.bf16.msra.mxu0 0
        %1399 = vmatprep.subr.bf16.mxu0 0
        %1400 = vmatpush1.bf16.msra.mxu0 0
        %1401 = vmatprep.subr.bf16.mxu0 0
        %1402 = vmatpush1.bf16.msra.mxu0 0
        %1403 = vmatprep.subr.bf16.mxu0 0
        %1404 = vmatpush1.bf16.msra.mxu0 0
        %1405 = vmatprep.mubr.bf16.mxu0 0
        %1406 = vmatmul.mubr.bf16.gmra.mrb[0].mxu0 %v1307
        %v1407 = vpop.f32.mrb[0].mxu0
        %v1408 = vadd.f32 0.0, %v1407
        %v1409 = vpop.f32.mrb[0].mxu0
        %v1410 = vpop.f32.mrb[0].mxu0
        %v1411 = vadd.f32 0.0, %v1410
        %v1412 = vpop.f32.mrb[0].mxu0
        %1413 = vmatprep.mubr.bf16.mxu0 0
        %1414 = vmatmul.mubr.bf16.gmra.mrb[0].mxu0 %v1309
        %v1415 = vpop.f32.mrb[0].mxu0
        %v1416 = vadd.f32 0.0, %v1415
        %v1417 = vpop.f32.mrb[0].mxu0
        %v1418 = vpop.f32.mrb[0].mxu0
        %v1419 = vadd.f32 0.0, %v1418
        %v1420 = vpop.f32.mrb[0].mxu0
        %1421 = vmatprep.mubr.bf16.mxu0 0
        %1422 = vmatmul.mubr.bf16.gmra.mrb[0].mxu0 %v1311
        %v1423 = vpop.f32.mrb[0].mxu0
        %v1424 = vadd.f32 0.0, %v1423
        %v1425 = vpop.f32.mrb[0].mxu0
        %v1426 = vpop.f32.mrb[0].mxu0
        %v1427 = vadd.f32 0.0, %v1426
        %v1428 = vpop.f32.mrb[0].mxu0
        %1429 = vmatprep.mubr.bf16.mxu0 0
        %1430 = vmatmul.mubr.bf16.gmra.mrb[0].mxu0 %v1313
        %v1431 = vpop.f32.mrb[0].mxu0
        %v1432 = vadd.f32 0.0, %v1431
        %v1433 = vpop.f32.mrb[0].mxu0
        %v1434 = vpop.f32.mrb[0].mxu0
        %v1435 = vadd.f32 0.0, %v1434
        %v1436 = vpop.f32.mrb[0].mxu0
        %1437 = vmatprep.mubr.bf16.mxu0 0
        %1438 = vmatmul.mubr.bf16.gmra.mrb[0].mxu0 %v1315
        %v1439 = vpop.f32.mrb[0].mxu0
        %v1440 = vadd.f32 0.0, %v1439
        %v1441 = vpop.f32.mrb[0].mxu0
        %v1442 = vpop.f32.mrb[0].mxu0
        %v1443 = vadd.f32 0.0, %v1442
        %v1444 = vpop.f32.mrb[0].mxu0
        %1445 = vmatprep.mubr.bf16.mxu0 0
        %1446 = vmatmul.mubr.bf16.gmra.mrb[0].mxu0 %v1317
        %v1447 = vpop.f32.mrb[0].mxu0
        %v1448 = vadd.f32 0.0, %v1447
        %v1449 = vpop.f32.mrb[0].mxu0
        %v1450 = vpop.f32.mrb[0].mxu0
        %v1451 = vadd.f32 0.0, %v1450
        %v1452 = vpop.f32.mrb[0].mxu0
        %1453 = vmatprep.mubr.bf16.mxu0 0
        %1454 = vmatmul.mubr.bf16.gmra.mrb[0].mxu0 %v1316
        %v1455 = vpop.f32.mrb[0].mxu0
        %v1456 = vadd.f32 0.0, %v1455
        %v1457 = vpop.f32.mrb[0].mxu0
        %v1458 = vpop.f32.mrb[0].mxu0
        %v1459 = vpop.f32.mrb[0].mxu0
        %1460 = vdwg.mxu0
        %v1461 = vadd.f32 %v1228, %v1408
        %v1462 = vadd.f32 %v1229, %v1411
        %v1463 = vadd.f32 %v1230, %v1416
        %v1464 = vadd.f32 %v1231, %v1419
        %v1465 = vadd.f32 %v1232, %v1424
        %v1466 = vadd.f32 %v1233, %v1427
        %v1467 = vadd.f32 %v1234, %v1432
        %v1468 = vadd.f32 %v1235, %v1435
        %v1469 = vadd.f32 %v1236, %v1440
        %v1470 = vadd.f32 %v1237, %v1443
        %v1471 = vadd.f32 %v1238, %v1448
        %v1472 = vadd.f32 %v1239, %v1451
        %v1473 = vadd.f32 %v1240, %v1456
        %1474 = vst [vmem:[#allocation2] sm:$0xff] %v1461
        %1475 = vst [vmem:[#allocation2 + $0x8] sm:$0xff] %v1462
        %1476 = vst [vmem:[#allocation2 + $0x10] sm:$0xff] %v1463
        %1477 = vst [vmem:[#allocation2 + $0x18] sm:$0xff] %v1464
        %1478 = vst [vmem:[#allocation2 + $0x20] sm:$0xff] %v1465
        %1479 = vst [vmem:[#allocation2 + $0x28] sm:$0xff] %v1466
        %1480 = vst [vmem:[#allocation2 + $0x30] sm:$0xff] %v1467
        %1481 = vst [vmem:[#allocation2 + $0x38] sm:$0xff] %v1468
        %1482 = vst [vmem:[#allocation2 + $0x40] sm:$0xff] %v1469
        %1483 = vst [vmem:[#allocation2 + $0x48] sm:$0xff] %v1470
        %1484 = vst [vmem:[#allocation2 + $0x50] sm:$0xff] %v1471
        %1485 = vst [vmem:[#allocation2 + $0x58] sm:$0xff] %v1472
        %1486 = vst [vmem:[#allocation2 + $0x60] sm:$0xf] %v1473
        %v1487 = vld [vmem:[#allocation2] sm:$0xff]
        %v1488 = vld [vmem:[#allocation2 + $0x8] sm:$0xff]
        %v1489 = vld [vmem:[#allocation2 + $0x10] sm:$0xff]
        %v1490 = vld [vmem:[#allocation2 + $0x18] sm:$0xff]
        %v1491 = vld [vmem:[#allocation2 + $0x20] sm:$0xff]
        %v1492 = vld [vmem:[#allocation2 + $0x28] sm:$0xff]
        %v1493 = vld [vmem:[#allocation2 + $0x30] sm:$0xff]
        %v1494 = vld [vmem:[#allocation2 + $0x38] sm:$0xff]
        %v1495 = vld [vmem:[#allocation2 + $0x40] sm:$0xff]
        %v1496 = vld [vmem:[#allocation2 + $0x48] sm:$0xff]
        %v1497 = vld [vmem:[#allocation2 + $0x50] sm:$0xff]
        %v1498 = vld [vmem:[#allocation2 + $0x58] sm:$0xff]
        %v1499 = vld [vmem:[#allocation2 + $0x60] sm:$0xf]
        %v1500 = vld [vmem:[%s707] sm:$0xe]
        %v1501 = vld [vmem:[%s707 + $0x4] sm:$0xf]
        %v1502 = vld [vmem:[%s707 + $0x8] sm:$0xf]
        %v1503 = vld [vmem:[%s707 + $0xc] sm:$0xf]
        %v1504 = vld [vmem:[%s707 + $0x10] sm:$0xf]
        %v1505 = vld [vmem:[%s707 + $0x14] sm:$0xf]
        %v1506 = vld [vmem:[%s707 + $0x18] sm:$0xf]
        %v1507 = vld [vmem:[%s707 + $0x1c] sm:$0xf]
        %v1508 = vld [vmem:[%s707 + $0x20] sm:$0xf]
        %v1509 = vld [vmem:[%s707 + $0x24] sm:$0xf]
        %v1510 = vld [vmem:[%s707 + $0x28] sm:$0xf]
        %v1511 = vld [vmem:[%s707 + $0x2c] sm:$0xf]
        %v1512 = vld [vmem:[%s707 + $0x30] sm:$0xf]
        %s1513 = scalar_lea.vmem %s1, 192
        %v1514 = vld [vmem:[%s1513] sm:$0xf]
        %v1515 = vld [vmem:[%s1513 + $0x4] sm:$0xf]
        %v1516 = vld [vmem:[%s1513 + $0x8] sm:$0xf]
        %v1517 = vld [vmem:[%s1513 + $0xc] sm:$0xf]
        %v1518 = vld [vmem:[%s1513 + $0x10] sm:$0xf]
        %v1519 = vld [vmem:[%s1513 + $0x14] sm:$0xf]
        %v1520 = vld [vmem:[%s1513 + $0x18] sm:$0xf]
        %v1521 = vld [vmem:[%s1513 + $0x1c] sm:$0xf]
        %v1522 = vld [vmem:[%s1513 + $0x20] sm:$0xf]
        %v1523 = vld [vmem:[%s1513 + $0x24] sm:$0xf]
        %v1524 = vld [vmem:[%s1513 + $0x28] sm:$0xf]
        %v1525 = vld [vmem:[%s1513 + $0x2c] sm:$0xf]
        %v1526 = vld [vmem:[%s1513 + $0x30] sm:$0xf]
        %v1527 = vld [vmem:[%s1513 + $0x34] sm:$0xf]
        %v1528 = vld [vmem:[%s1513 + $0x38] sm:$0xf]
        %v1529 = vld [vmem:[%s1513 + $0x3c] sm:$0xf]
        %v1543 = vunpack.c.l.b16 %v1500
        %v1544 = vunpack.c.l.b16 %v1501
        %v1545 = vunpack.c.l.b16 %v1502
        %v1546 = vunpack.c.l.b16 %v1503
        %v1547 = vunpack.c.l.b16 %v1504
        %v1548 = vunpack.c.l.b16 %v1505
        %v1549 = vunpack.c.l.b16 %v1506
        %v1550 = vunpack.c.l.b16 %v1507
        %v1551 = vunpack.c.l.b16 %v1508
        %v1552 = vunpack.c.l.b16 %v1509
        %v1553 = vunpack.c.l.b16 %v1510
        %v1554 = vunpack.c.l.b16 %v1511
        %v1555 = vunpack.c.l.b16 %v1512
        %v1556 = vpack.c.b16 %v1544, %v1543
        %v1557 = vpack.c.b16 %v1546, %v1545
        %v1558 = vpack.c.b16 %v1548, %v1547
        %v1559 = vpack.c.b16 %v1550, %v1549
        %v1560 = vpack.c.b16 %v1552, %v1551
        %v1561 = vpack.c.b16 %v1554, %v1553
        %v1562 = vpack.c.b16 %v1555, %v1555
        %vm1563 = vsmask.f32 6400
        %v1565 = vshrl.u32 %v1556, 16
        %v1567 = vrot.slane %v1565, 1
        %v1568 = vshll.u32 %v1556, 16
        %v1570 = vrot.slane %v1568, 2
        %v1571 = vor.u32 %v1567, %v1570
        %v1573 = vshrl.u32 %v1557, 16
        %v1575 = vrot.slane %v1573, 1
        %v1576 = vshll.u32 %v1557, 16
        %v1578 = vrot.slane %v1576, 2
        %v1579 = vor.u32 %v1575, %v1578
        %v1580 = vsel %vm1563, %v1571, %v1579
        %v1582 = vshrl.u32 %v1558, 16
        %v1584 = vrot.slane %v1582, 1
        %v1585 = vshll.u32 %v1558, 16
        %v1587 = vrot.slane %v1585, 2
        %v1588 = vor.u32 %v1584, %v1587
        %v1589 = vsel %vm1563, %v1579, %v1588
        %v1591 = vshrl.u32 %v1559, 16
        %v1593 = vrot.slane %v1591, 1
        %v1594 = vshll.u32 %v1559, 16
        %v1596 = vrot.slane %v1594, 2
        %v1597 = vor.u32 %v1593, %v1596
        %v1598 = vsel %vm1563, %v1588, %v1597
        %v1600 = vshrl.u32 %v1560, 16
        %v1602 = vrot.slane %v1600, 1
        %v1603 = vshll.u32 %v1560, 16
        %v1605 = vrot.slane %v1603, 2
        %v1606 = vor.u32 %v1602, %v1605
        %v1607 = vsel %vm1563, %v1597, %v1606
        %v1609 = vshrl.u32 %v1561, 16
        %v1611 = vrot.slane %v1609, 1
        %v1612 = vshll.u32 %v1561, 16
        %v1614 = vrot.slane %v1612, 2
        %v1615 = vor.u32 %v1611, %v1614
        %v1616 = vsel %vm1563, %v1606, %v1615
        %v1618 = vshrl.u32 %v1562, 16
        %v1620 = vrot.slane %v1618, 1
        %v1621 = vshll.u32 %v1562, 16
        %v1623 = vrot.slane %v1621, 2
        %v1624 = vor.u32 %v1620, %v1623
        %v1625 = vsel %vm1563, %v1615, %v1624
        %v1649 = vunpack.c.l.b16 %v1514
        %v1650 = vunpack.c.l.b16 %v1515
        %v1651 = vunpack.c.l.b16 %v1516
        %v1652 = vunpack.c.l.b16 %v1517
        %v1653 = vunpack.c.l.b16 %v1518
        %v1654 = vunpack.c.l.b16 %v1519
        %v1655 = vunpack.c.l.b16 %v1520
        %v1656 = vunpack.c.l.b16 %v1521
        %v1657 = vunpack.c.l.b16 %v1522
        %v1658 = vunpack.c.l.b16 %v1523
        %v1659 = vunpack.c.l.b16 %v1524
        %v1660 = vunpack.c.l.b16 %v1525
        %v1661 = vunpack.c.l.b16 %v1526
        %v1662 = vunpack.c.l.b16 %v1527
        %v1663 = vunpack.c.l.b16 %v1528
        %v1664 = vunpack.c.l.b16 %v1529
        %v1665 = vpack.c.b16 %v1650, %v1649
        %v1666 = vpack.c.b16 %v1652, %v1651
        %v1667 = vpack.c.b16 %v1654, %v1653
        %v1668 = vpack.c.b16 %v1656, %v1655
        %v1669 = vpack.c.b16 %v1658, %v1657
        %v1670 = vpack.c.b16 %v1660, %v1659
        %v1671 = vpack.c.b16 %v1662, %v1661
        %v1672 = vpack.c.b16 %v1664, %v1663
        %1681 = vmatprep.subr.bf16.mxu0 0
        %1682 = vmatpush1.bf16.msra.mxu0 %v1665
        %1683 = vmatprep.subr.bf16.mxu0 0
        %1684 = vmatpush1.bf16.msra.mxu0 %v1666
        %1685 = vmatprep.subr.bf16.mxu0 0
        %1686 = vmatpush1.bf16.msra.mxu0 %v1667
        %1687 = vmatprep.subr.bf16.mxu0 0
        %1688 = vmatpush1.bf16.msra.mxu0 %v1668
        %1689 = vmatprep.subr.bf16.mxu0 0
        %1690 = vmatpush1.bf16.msra.mxu0 %v1669
        %1691 = vmatprep.subr.bf16.mxu0 0
        %1692 = vmatpush1.bf16.msra.mxu0 %v1670
        %1693 = vmatprep.subr.bf16.mxu0 0
        %1694 = vmatpush1.bf16.msra.mxu0 %v1671
        %1695 = vmatprep.subr.bf16.mxu0 0
        %1696 = vmatpush1.bf16.msra.mxu0 %v1672
        %1697 = vmatprep.subr.bf16.mxu0 0
        %1698 = vmatpush1.bf16.msra.mxu0 0
        %1699 = vmatprep.subr.bf16.mxu0 0
        %1700 = vmatpush1.bf16.msra.mxu0 0
        %1701 = vmatprep.subr.bf16.mxu0 0
        %1702 = vmatpush1.bf16.msra.mxu0 0
        %1703 = vmatprep.subr.bf16.mxu0 0
        %1704 = vmatpush1.bf16.msra.mxu0 0
        %1705 = vmatprep.subr.bf16.mxu0 0
        %1706 = vmatpush1.bf16.msra.mxu0 0
        %1707 = vmatprep.subr.bf16.mxu0 0
        %1708 = vmatpush1.bf16.msra.mxu0 0
        %1709 = vmatprep.subr.bf16.mxu0 0
        %1710 = vmatpush1.bf16.msra.mxu0 0
        %1711 = vmatprep.subr.bf16.mxu0 0
        %1712 = vmatpush1.bf16.msra.mxu0 0
        %1713 = vmatprep.mubr.bf16.mxu0 0
        %1714 = vmatmul.mubr.bf16.gmra.mrb[0].mxu0 %v1580
        %v1715 = vpop.f32.mrb[0].mxu0
        %v1716 = vadd.f32 0.0, %v1715
        %v1717 = vpop.f32.mrb[0].mxu0
        %v1718 = vpop.f32.mrb[0].mxu0
        %v1719 = vadd.f32 0.0, %v1718
        %v1720 = vpop.f32.mrb[0].mxu0
        %1721 = vmatprep.mubr.bf16.mxu0 0
        %1722 = vmatmul.mubr.bf16.gmra.mrb[0].mxu0 %v1589
        %v1723 = vpop.f32.mrb[0].mxu0
        %v1724 = vadd.f32 0.0, %v1723
        %v1725 = vpop.f32.mrb[0].mxu0
        %v1726 = vpop.f32.mrb[0].mxu0
        %v1727 = vadd.f32 0.0, %v1726
        %v1728 = vpop.f32.mrb[0].mxu0
        %1729 = vmatprep.mubr.bf16.mxu0 0
        %1730 = vmatmul.mubr.bf16.gmra.mrb[0].mxu0 %v1598
        %v1731 = vpop.f32.mrb[0].mxu0
        %v1732 = vadd.f32 0.0, %v1731
        %v1733 = vpop.f32.mrb[0].mxu0
        %v1734 = vpop.f32.mrb[0].mxu0
        %v1735 = vadd.f32 0.0, %v1734
        %v1736 = vpop.f32.mrb[0].mxu0
        %1737 = vmatprep.mubr.bf16.mxu0 0
        %1738 = vmatmul.mubr.bf16.gmra.mrb[0].mxu0 %v1607
        %v1739 = vpop.f32.mrb[0].mxu0
        %v1740 = vadd.f32 0.0, %v1739
        %v1741 = vpop.f32.mrb[0].mxu0
        %v1742 = vpop.f32.mrb[0].mxu0
        %v1743 = vadd.f32 0.0, %v1742
        %v1744 = vpop.f32.mrb[0].mxu0
        %1745 = vmatprep.mubr.bf16.mxu0 0
        %1746 = vmatmul.mubr.bf16.gmra.mrb[0].mxu0 %v1616
        %v1747 = vpop.f32.mrb[0].mxu0
        %v1748 = vadd.f32 0.0, %v1747
        %v1749 = vpop.f32.mrb[0].mxu0
        %v1750 = vpop.f32.mrb[0].mxu0
        %v1751 = vadd.f32 0.0, %v1750
        %v1752 = vpop.f32.mrb[0].mxu0
        %1753 = vmatprep.mubr.bf16.mxu0 0
        %1754 = vmatmul.mubr.bf16.gmra.mrb[0].mxu0 %v1625
        %v1755 = vpop.f32.mrb[0].mxu0
        %v1756 = vadd.f32 0.0, %v1755
        %v1757 = vpop.f32.mrb[0].mxu0
        %v1758 = vpop.f32.mrb[0].mxu0
        %v1759 = vadd.f32 0.0, %v1758
        %v1760 = vpop.f32.mrb[0].mxu0
        %1761 = vmatprep.mubr.bf16.mxu0 0
        %1762 = vmatmul.mubr.bf16.gmra.mrb[0].mxu0 %v1624
        %v1763 = vpop.f32.mrb[0].mxu0
        %v1764 = vadd.f32 0.0, %v1763
        %v1765 = vpop.f32.mrb[0].mxu0
        %v1766 = vpop.f32.mrb[0].mxu0
        %v1767 = vpop.f32.mrb[0].mxu0
        %1768 = vdwg.mxu0
        %v1769 = vadd.f32 %v1487, %v1716
        %v1770 = vadd.f32 %v1488, %v1719
        %v1771 = vadd.f32 %v1489, %v1724
        %v1772 = vadd.f32 %v1490, %v1727
        %v1773 = vadd.f32 %v1491, %v1732
        %v1774 = vadd.f32 %v1492, %v1735
        %v1775 = vadd.f32 %v1493, %v1740
        %v1776 = vadd.f32 %v1494, %v1743
        %v1777 = vadd.f32 %v1495, %v1748
        %v1778 = vadd.f32 %v1496, %v1751
        %v1779 = vadd.f32 %v1497, %v1756
        %v1780 = vadd.f32 %v1498, %v1759
        %v1781 = vadd.f32 %v1499, %v1764
        %1782 = vst [vmem:[#allocation2] sm:$0xff] %v1769
        %1783 = vst [vmem:[#allocation2 + $0x8] sm:$0xff] %v1770
        %1784 = vst [vmem:[#allocation2 + $0x10] sm:$0xff] %v1771
        %1785 = vst [vmem:[#allocation2 + $0x18] sm:$0xff] %v1772
        %1786 = vst [vmem:[#allocation2 + $0x20] sm:$0xff] %v1773
        %1787 = vst [vmem:[#allocation2 + $0x28] sm:$0xff] %v1774
        %1788 = vst [vmem:[#allocation2 + $0x30] sm:$0xff] %v1775
        %1789 = vst [vmem:[#allocation2 + $0x38] sm:$0xff] %v1776
        %1790 = vst [vmem:[#allocation2 + $0x40] sm:$0xff] %v1777
        %1791 = vst [vmem:[#allocation2 + $0x48] sm:$0xff] %v1778
        %1792 = vst [vmem:[#allocation2 + $0x50] sm:$0xff] %v1779
        %1793 = vst [vmem:[#allocation2 + $0x58] sm:$0xff] %v1780
        %1794 = vst [vmem:[#allocation2 + $0x60] sm:$0xf] %v1781
        %v1795 = vld [vmem:[#allocation2] sm:$0xff]
        %v1796 = vld [vmem:[#allocation2 + $0x8] sm:$0xff]
        %v1797 = vld [vmem:[#allocation2 + $0x10] sm:$0xff]
        %v1798 = vld [vmem:[#allocation2 + $0x18] sm:$0xff]
        %v1799 = vld [vmem:[#allocation2 + $0x20] sm:$0xff]
        %v1800 = vld [vmem:[#allocation2 + $0x28] sm:$0xff]
        %v1801 = vld [vmem:[#allocation2 + $0x30] sm:$0xff]
        %v1802 = vld [vmem:[#allocation2 + $0x38] sm:$0xff]
        %v1803 = vld [vmem:[#allocation2 + $0x40] sm:$0xff]
        %v1804 = vld [vmem:[#allocation2 + $0x48] sm:$0xff]
        %v1805 = vld [vmem:[#allocation2 + $0x50] sm:$0xff]
        %v1806 = vld [vmem:[#allocation2 + $0x58] sm:$0xff]
        %v1807 = vld [vmem:[#allocation2 + $0x60] sm:$0xf]
        %v1808 = vld [vmem:[%s707] sm:$0xc]
        %v1809 = vld [vmem:[%s707 + $0x4] sm:$0xf]
        %v1810 = vld [vmem:[%s707 + $0x8] sm:$0xf]
        %v1811 = vld [vmem:[%s707 + $0xc] sm:$0xf]
        %v1812 = vld [vmem:[%s707 + $0x10] sm:$0xf]
        %v1813 = vld [vmem:[%s707 + $0x14] sm:$0xf]
        %v1814 = vld [vmem:[%s707 + $0x18] sm:$0xf]
        %v1815 = vld [vmem:[%s707 + $0x1c] sm:$0xf]
        %v1816 = vld [vmem:[%s707 + $0x20] sm:$0xf]
        %v1817 = vld [vmem:[%s707 + $0x24] sm:$0xf]
        %v1818 = vld [vmem:[%s707 + $0x28] sm:$0xf]
        %v1819 = vld [vmem:[%s707 + $0x2c] sm:$0xf]
        %v1820 = vld [vmem:[%s707 + $0x30] sm:$0xf]
        %s1821 = scalar_lea.vmem %s1, 256
        %v1822 = vld [vmem:[%s1821] sm:$0xf]
        %v1823 = vld [vmem:[%s1821 + $0x4] sm:$0xf]
        %v1824 = vld [vmem:[%s1821 + $0x8] sm:$0xf]
        %v1825 = vld [vmem:[%s1821 + $0xc] sm:$0xf]
        %v1826 = vld [vmem:[%s1821 + $0x10] sm:$0xf]
        %v1827 = vld [vmem:[%s1821 + $0x14] sm:$0xf]
        %v1828 = vld [vmem:[%s1821 + $0x18] sm:$0xf]
        %v1829 = vld [vmem:[%s1821 + $0x1c] sm:$0xf]
        %v1830 = vld [vmem:[%s1821 + $0x20] sm:$0xf]
        %v1831 = vld [vmem:[%s1821 + $0x24] sm:$0xf]
        %v1832 = vld [vmem:[%s1821 + $0x28] sm:$0xf]
        %v1833 = vld [vmem:[%s1821 + $0x2c] sm:$0xf]
        %v1834 = vld [vmem:[%s1821 + $0x30] sm:$0xf]
        %v1835 = vld [vmem:[%s1821 + $0x34] sm:$0xf]
        %v1836 = vld [vmem:[%s1821 + $0x38] sm:$0xf]
        %v1837 = vld [vmem:[%s1821 + $0x3c] sm:$0xf]
        %v1851 = vunpack.c.l.b16 %v1808
        %v1852 = vunpack.c.l.b16 %v1809
        %v1853 = vunpack.c.l.b16 %v1810
        %v1854 = vunpack.c.l.b16 %v1811
        %v1855 = vunpack.c.l.b16 %v1812
        %v1856 = vunpack.c.l.b16 %v1813
        %v1857 = vunpack.c.l.b16 %v1814
        %v1858 = vunpack.c.l.b16 %v1815
        %v1859 = vunpack.c.l.b16 %v1816
        %v1860 = vunpack.c.l.b16 %v1817
        %v1861 = vunpack.c.l.b16 %v1818
        %v1862 = vunpack.c.l.b16 %v1819
        %v1863 = vunpack.c.l.b16 %v1820
        %v1864 = vpack.c.b16 %v1852, %v1851
        %v1865 = vpack.c.b16 %v1854, %v1853
        %v1866 = vpack.c.b16 %v1856, %v1855
        %v1867 = vpack.c.b16 %v1858, %v1857
        %v1868 = vpack.c.b16 %v1860, %v1859
        %v1869 = vpack.c.b16 %v1862, %v1861
        %v1870 = vpack.c.b16 %v1863, %v1863
        %vm1871 = vcmask 1045504
        %v1872 = vrot.slane %v1864, 2
        %v1873 = vrot.slane %v1865, 2
        %v1874 = vsel %vm1871, %v1872, %v1873
        %v1875 = vrot.slane %v1866, 2
        %v1876 = vsel %vm1871, %v1873, %v1875
        %v1877 = vrot.slane %v1867, 2
        %v1878 = vsel %vm1871, %v1875, %v1877
        %v1879 = vrot.slane %v1868, 2
        %v1880 = vsel %vm1871, %v1877, %v1879
        %v1881 = vrot.slane %v1869, 2
        %v1882 = vsel %vm1871, %v1879, %v1881
        %v1883 = vrot.slane %v1870, 2
        %v1884 = vsel %vm1871, %v1881, %v1883
        %v1908 = vunpack.c.l.b16 %v1822
        %v1909 = vunpack.c.l.b16 %v1823
        %v1910 = vunpack.c.l.b16 %v1824
        %v1911 = vunpack.c.l.b16 %v1825
        %v1912 = vunpack.c.l.b16 %v1826
        %v1913 = vunpack.c.l.b16 %v1827
        %v1914 = vunpack.c.l.b16 %v1828
        %v1915 = vunpack.c.l.b16 %v1829
        %v1916 = vunpack.c.l.b16 %v1830
        %v1917 = vunpack.c.l.b16 %v1831
        %v1918 = vunpack.c.l.b16 %v1832
        %v1919 = vunpack.c.l.b16 %v1833
        %v1920 = vunpack.c.l.b16 %v1834
        %v1921 = vunpack.c.l.b16 %v1835
        %v1922 = vunpack.c.l.b16 %v1836
        %v1923 = vunpack.c.l.b16 %v1837
        %v1924 = vpack.c.b16 %v1909, %v1908
        %v1925 = vpack.c.b16 %v1911, %v1910
        %v1926 = vpack.c.b16 %v1913, %v1912
        %v1927 = vpack.c.b16 %v1915, %v1914
        %v1928 = vpack.c.b16 %v1917, %v1916
        %v1929 = vpack.c.b16 %v1919, %v1918
        %v1930 = vpack.c.b16 %v1921, %v1920
        %v1931 = vpack.c.b16 %v1923, %v1922
        %1940 = vmatprep.subr.bf16.mxu0 0
        %1941 = vmatpush1.bf16.msra.mxu0 %v1924
        %1942 = vmatprep.subr.bf16.mxu0 0
        %1943 = vmatpush1.bf16.msra.mxu0 %v1925
        %1944 = vmatprep.subr.bf16.mxu0 0
        %1945 = vmatpush1.bf16.msra.mxu0 %v1926
        %1946 = vmatprep.subr.bf16.mxu0 0
        %1947 = vmatpush1.bf16.msra.mxu0 %v1927
        %1948 = vmatprep.subr.bf16.mxu0 0
        %1949 = vmatpush1.bf16.msra.mxu0 %v1928
        %1950 = vmatprep.subr.bf16.mxu0 0
        %1951 = vmatpush1.bf16.msra.mxu0 %v1929
        %1952 = vmatprep.subr.bf16.mxu0 0
        %1953 = vmatpush1.bf16.msra.mxu0 %v1930
        %1954 = vmatprep.subr.bf16.mxu0 0
        %1955 = vmatpush1.bf16.msra.mxu0 %v1931
        %1956 = vmatprep.subr.bf16.mxu0 0
        %1957 = vmatpush1.bf16.msra.mxu0 0
        %1958 = vmatprep.subr.bf16.mxu0 0
        %1959 = vmatpush1.bf16.msra.mxu0 0
        %1960 = vmatprep.subr.bf16.mxu0 0
        %1961 = vmatpush1.bf16.msra.mxu0 0
        %1962 = vmatprep.subr.bf16.mxu0 0
        %1963 = vmatpush1.bf16.msra.mxu0 0
        %1964 = vmatprep.subr.bf16.mxu0 0
        %1965 = vmatpush1.bf16.msra.mxu0 0
        %1966 = vmatprep.subr.bf16.mxu0 0
        %1967 = vmatpush1.bf16.msra.mxu0 0
        %1968 = vmatprep.subr.bf16.mxu0 0
        %1969 = vmatpush1.bf16.msra.mxu0 0
        %1970 = vmatprep.subr.bf16.mxu0 0
        %1971 = vmatpush1.bf16.msra.mxu0 0
        %1972 = vmatprep.mubr.bf16.mxu0 0
        %1973 = vmatmul.mubr.bf16.gmra.mrb[0].mxu0 %v1874
        %v1974 = vpop.f32.mrb[0].mxu0
        %v1975 = vadd.f32 0.0, %v1974
        %v1976 = vpop.f32.mrb[0].mxu0
        %v1977 = vpop.f32.mrb[0].mxu0
        %v1978 = vadd.f32 0.0, %v1977
        %v1979 = vpop.f32.mrb[0].mxu0
        %1980 = vmatprep.mubr.bf16.mxu0 0
        %1981 = vmatmul.mubr.bf16.gmra.mrb[0].mxu0 %v1876
        %v1982 = vpop.f32.mrb[0].mxu0
        %v1983 = vadd.f32 0.0, %v1982
        %v1984 = vpop.f32.mrb[0].mxu0
        %v1985 = vpop.f32.mrb[0].mxu0
        %v1986 = vadd.f32 0.0, %v1985
        %v1987 = vpop.f32.mrb[0].mxu0
        %1988 = vmatprep.mubr.bf16.mxu0 0
        %1989 = vmatmul.mubr.bf16.gmra.mrb[0].mxu0 %v1878
        %v1990 = vpop.f32.mrb[0].mxu0
        %v1991 = vadd.f32 0.0, %v1990
        %v1992 = vpop.f32.mrb[0].mxu0
        %v1993 = vpop.f32.mrb[0].mxu0
        %v1994 = vadd.f32 0.0, %v1993
        %v1995 = vpop.f32.mrb[0].mxu0
        %1996 = vmatprep.mubr.bf16.mxu0 0
        %1997 = vmatmul.mubr.bf16.gmra.mrb[0].mxu0 %v1880
        %v1998 = vpop.f32.mrb[0].mxu0
        %v1999 = vadd.f32 0.0, %v1998
        %v2000 = vpop.f32.mrb[0].mxu0
        %v2001 = vpop.f32.mrb[0].mxu0
        %v2002 = vadd.f32 0.0, %v2001
        %v2003 = vpop.f32.mrb[0].mxu0
        %2004 = vmatprep.mubr.bf16.mxu0 0
        %2005 = vmatmul.mubr.bf16.gmra.mrb[0].mxu0 %v1882
        %v2006 = vpop.f32.mrb[0].mxu0
        %v2007 = vadd.f32 0.0, %v2006
        %v2008 = vpop.f32.mrb[0].mxu0
        %v2009 = vpop.f32.mrb[0].mxu0
        %v2010 = vadd.f32 0.0, %v2009
        %v2011 = vpop.f32.mrb[0].mxu0
        %2012 = vmatprep.mubr.bf16.mxu0 0
        %2013 = vmatmul.mubr.bf16.gmra.mrb[0].mxu0 %v1884
        %v2014 = vpop.f32.mrb[0].mxu0
        %v2015 = vadd.f32 0.0, %v2014
        %v2016 = vpop.f32.mrb[0].mxu0
        %v2017 = vpop.f32.mrb[0].mxu0
        %v2018 = vadd.f32 0.0, %v2017
        %v2019 = vpop.f32.mrb[0].mxu0
        %2020 = vmatprep.mubr.bf16.mxu0 0
        %2021 = vmatmul.mubr.bf16.gmra.mrb[0].mxu0 %v1883
        %v2022 = vpop.f32.mrb[0].mxu0
        %v2023 = vadd.f32 0.0, %v2022
        %v2024 = vpop.f32.mrb[0].mxu0
        %v2025 = vpop.f32.mrb[0].mxu0
        %v2026 = vpop.f32.mrb[0].mxu0
        %2027 = vdwg.mxu0
        %v2028 = vadd.f32 %v1795, %v1975
        %v2029 = vadd.f32 %v1796, %v1978
        %v2030 = vadd.f32 %v1797, %v1983
        %v2031 = vadd.f32 %v1798, %v1986
        %v2032 = vadd.f32 %v1799, %v1991
        %v2033 = vadd.f32 %v1800, %v1994
        %v2034 = vadd.f32 %v1801, %v1999
        %v2035 = vadd.f32 %v1802, %v2002
        %v2036 = vadd.f32 %v1803, %v2007
        %v2037 = vadd.f32 %v1804, %v2010
        %v2038 = vadd.f32 %v1805, %v2015
        %v2039 = vadd.f32 %v1806, %v2018
        %v2040 = vadd.f32 %v1807, %v2023
        %2041 = vst [vmem:[#allocation2] sm:$0xff] %v2028
        %2042 = vst [vmem:[#allocation2 + $0x8] sm:$0xff] %v2029
        %2043 = vst [vmem:[#allocation2 + $0x10] sm:$0xff] %v2030
        %2044 = vst [vmem:[#allocation2 + $0x18] sm:$0xff] %v2031
        %2045 = vst [vmem:[#allocation2 + $0x20] sm:$0xff] %v2032
        %2046 = vst [vmem:[#allocation2 + $0x28] sm:$0xff] %v2033
        %2047 = vst [vmem:[#allocation2 + $0x30] sm:$0xff] %v2034
        %2048 = vst [vmem:[#allocation2 + $0x38] sm:$0xff] %v2035
        %2049 = vst [vmem:[#allocation2 + $0x40] sm:$0xff] %v2036
        %2050 = vst [vmem:[#allocation2 + $0x48] sm:$0xff] %v2037
        %2051 = vst [vmem:[#allocation2 + $0x50] sm:$0xff] %v2038
        %2052 = vst [vmem:[#allocation2 + $0x58] sm:$0xff] %v2039
        %2053 = vst [vmem:[#allocation2 + $0x60] sm:$0xf] %v2040
        %v2054 = vld [vmem:[#allocation2] sm:$0xff]
        %v2055 = vld [vmem:[#allocation2 + $0x8] sm:$0xff]
        %v2056 = vld [vmem:[#allocation2 + $0x10] sm:$0xff]
        %v2057 = vld [vmem:[#allocation2 + $0x18] sm:$0xff]
        %v2058 = vld [vmem:[#allocation2 + $0x20] sm:$0xff]
        %v2059 = vld [vmem:[#allocation2 + $0x28] sm:$0xff]
        %v2060 = vld [vmem:[#allocation2 + $0x30] sm:$0xff]
        %v2061 = vld [vmem:[#allocation2 + $0x38] sm:$0xff]
        %v2062 = vld [vmem:[#allocation2 + $0x40] sm:$0xff]
        %v2063 = vld [vmem:[#allocation2 + $0x48] sm:$0xff]
        %v2064 = vld [vmem:[#allocation2 + $0x50] sm:$0xff]
        %v2065 = vld [vmem:[#allocation2 + $0x58] sm:$0xff]
        %v2066 = vld [vmem:[#allocation2 + $0x60] sm:$0xf]
        %v2067 = vld [vmem:[%s707] sm:$0xc]
        %v2068 = vld [vmem:[%s707 + $0x4] sm:$0xf]
        %v2069 = vld [vmem:[%s707 + $0x8] sm:$0xf]
        %v2070 = vld [vmem:[%s707 + $0xc] sm:$0xf]
        %v2071 = vld [vmem:[%s707 + $0x10] sm:$0xf]
        %v2072 = vld [vmem:[%s707 + $0x14] sm:$0xf]
        %v2073 = vld [vmem:[%s707 + $0x18] sm:$0xf]
        %v2074 = vld [vmem:[%s707 + $0x1c] sm:$0xf]
        %v2075 = vld [vmem:[%s707 + $0x20] sm:$0xf]
        %v2076 = vld [vmem:[%s707 + $0x24] sm:$0xf]
        %v2077 = vld [vmem:[%s707 + $0x28] sm:$0xf]
        %v2078 = vld [vmem:[%s707 + $0x2c] sm:$0xf]
        %v2079 = vld [vmem:[%s707 + $0x30] sm:$0xf]
        %v2080 = vld [vmem:[%s707 + $0x34] sm:$0x1]
        %s2081 = scalar_lea.vmem %s1, 320
        %v2082 = vld [vmem:[%s2081] sm:$0xf]
        %v2083 = vld [vmem:[%s2081 + $0x4] sm:$0xf]
        %v2084 = vld [vmem:[%s2081 + $0x8] sm:$0xf]
        %v2085 = vld [vmem:[%s2081 + $0xc] sm:$0xf]
        %v2086 = vld [vmem:[%s2081 + $0x10] sm:$0xf]
        %v2087 = vld [vmem:[%s2081 + $0x14] sm:$0xf]
        %v2088 = vld [vmem:[%s2081 + $0x18] sm:$0xf]
        %v2089 = vld [vmem:[%s2081 + $0x1c] sm:$0xf]
        %v2090 = vld [vmem:[%s2081 + $0x20] sm:$0xf]
        %v2091 = vld [vmem:[%s2081 + $0x24] sm:$0xf]
        %v2092 = vld [vmem:[%s2081 + $0x28] sm:$0xf]
        %v2093 = vld [vmem:[%s2081 + $0x2c] sm:$0xf]
        %v2094 = vld [vmem:[%s2081 + $0x30] sm:$0xf]
        %v2095 = vld [vmem:[%s2081 + $0x34] sm:$0xf]
        %v2096 = vld [vmem:[%s2081 + $0x38] sm:$0xf]
        %v2097 = vld [vmem:[%s2081 + $0x3c] sm:$0xf]
        %v2112 = vunpack.c.l.b16 %v2067
        %v2113 = vunpack.c.l.b16 %v2068
        %v2114 = vunpack.c.l.b16 %v2069
        %v2115 = vunpack.c.l.b16 %v2070
        %v2116 = vunpack.c.l.b16 %v2071
        %v2117 = vunpack.c.l.b16 %v2072
        %v2118 = vunpack.c.l.b16 %v2073
        %v2119 = vunpack.c.l.b16 %v2074
        %v2120 = vunpack.c.l.b16 %v2075
        %v2121 = vunpack.c.l.b16 %v2076
        %v2122 = vunpack.c.l.b16 %v2077
        %v2123 = vunpack.c.l.b16 %v2078
        %v2124 = vunpack.c.l.b16 %v2079
        %v2125 = vunpack.c.l.b16 %v2080
        %v2126 = vpack.c.b16 %v2113, %v2112
        %v2127 = vpack.c.b16 %v2115, %v2114
        %v2128 = vpack.c.b16 %v2117, %v2116
        %v2129 = vpack.c.b16 %v2119, %v2118
        %v2130 = vpack.c.b16 %v2121, %v2120
        %v2131 = vpack.c.b16 %v2123, %v2122
        %v2132 = vpack.c.b16 %v2125, %v2124
        %vm2133 = vsmask.f32 5376
        %v2135 = vshrl.u32 %v2126, 16
        %v2137 = vrot.slane %v2135, 2
        %v2138 = vshll.u32 %v2126, 16
        %v2140 = vrot.slane %v2138, 3
        %v2141 = vor.u32 %v2137, %v2140
        %v2143 = vshrl.u32 %v2127, 16
        %v2145 = vrot.slane %v2143, 2
        %v2146 = vshll.u32 %v2127, 16
        %v2148 = vrot.slane %v2146, 3
        %v2149 = vor.u32 %v2145, %v2148
        %v2150 = vsel %vm2133, %v2141, %v2149
        %v2152 = vshrl.u32 %v2128, 16
        %v2154 = vrot.slane %v2152, 2
        %v2155 = vshll.u32 %v2128, 16
        %v2157 = vrot.slane %v2155, 3
        %v2158 = vor.u32 %v2154, %v2157
        %v2159 = vsel %vm2133, %v2149, %v2158
        %v2161 = vshrl.u32 %v2129, 16
        %v2163 = vrot.slane %v2161, 2
        %v2164 = vshll.u32 %v2129, 16
        %v2166 = vrot.slane %v2164, 3
        %v2167 = vor.u32 %v2163, %v2166
        %v2168 = vsel %vm2133, %v2158, %v2167
        %v2170 = vshrl.u32 %v2130, 16
        %v2172 = vrot.slane %v2170, 2
        %v2173 = vshll.u32 %v2130, 16
        %v2175 = vrot.slane %v2173, 3
        %v2176 = vor.u32 %v2172, %v2175
        %v2177 = vsel %vm2133, %v2167, %v2176
        %v2179 = vshrl.u32 %v2131, 16
        %v2181 = vrot.slane %v2179, 2
        %v2182 = vshll.u32 %v2131, 16
        %v2184 = vrot.slane %v2182, 3
        %v2185 = vor.u32 %v2181, %v2184
        %v2186 = vsel %vm2133, %v2176, %v2185
        %v2188 = vshrl.u32 %v2132, 16
        %v2190 = vrot.slane %v2188, 2
        %v2191 = vshll.u32 %v2132, 16
        %v2193 = vrot.slane %v2191, 3
        %v2194 = vor.u32 %v2190, %v2193
        %v2195 = vsel %vm2133, %v2185, %v2194
        %v2219 = vunpack.c.l.b16 %v2082
        %v2220 = vunpack.c.l.b16 %v2083
        %v2221 = vunpack.c.l.b16 %v2084
        %v2222 = vunpack.c.l.b16 %v2085
        %v2223 = vunpack.c.l.b16 %v2086
        %v2224 = vunpack.c.l.b16 %v2087
        %v2225 = vunpack.c.l.b16 %v2088
        %v2226 = vunpack.c.l.b16 %v2089
        %v2227 = vunpack.c.l.b16 %v2090
        %v2228 = vunpack.c.l.b16 %v2091
        %v2229 = vunpack.c.l.b16 %v2092
        %v2230 = vunpack.c.l.b16 %v2093
        %v2231 = vunpack.c.l.b16 %v2094
        %v2232 = vunpack.c.l.b16 %v2095
        %v2233 = vunpack.c.l.b16 %v2096
        %v2234 = vunpack.c.l.b16 %v2097
        %v2235 = vpack.c.b16 %v2220, %v2219
        %v2236 = vpack.c.b16 %v2222, %v2221
        %v2237 = vpack.c.b16 %v2224, %v2223
        %v2238 = vpack.c.b16 %v2226, %v2225
        %v2239 = vpack.c.b16 %v2228, %v2227
        %v2240 = vpack.c.b16 %v2230, %v2229
        %v2241 = vpack.c.b16 %v2232, %v2231
        %v2242 = vpack.c.b16 %v2234, %v2233
        %2251 = vmatprep.subr.bf16.mxu0 0
        %2252 = vmatpush1.bf16.msra.mxu0 %v2235
        %2253 = vmatprep.subr.bf16.mxu0 0
        %2254 = vmatpush1.bf16.msra.mxu0 %v2236
        %2255 = vmatprep.subr.bf16.mxu0 0
        %2256 = vmatpush1.bf16.msra.mxu0 %v2237
        %2257 = vmatprep.subr.bf16.mxu0 0
        %2258 = vmatpush1.bf16.msra.mxu0 %v2238
        %2259 = vmatprep.subr.bf16.mxu0 0
        %2260 = vmatpush1.bf16.msra.mxu0 %v2239
        %2261 = vmatprep.subr.bf16.mxu0 0
        %2262 = vmatpush1.bf16.msra.mxu0 %v2240
        %2263 = vmatprep.subr.bf16.mxu0 0
        %2264 = vmatpush1.bf16.msra.mxu0 %v2241
        %2265 = vmatprep.subr.bf16.mxu0 0
        %2266 = vmatpush1.bf16.msra.mxu0 %v2242
        %2267 = vmatprep.subr.bf16.mxu0 0
        %2268 = vmatpush1.bf16.msra.mxu0 0
        %2269 = vmatprep.subr.bf16.mxu0 0
        %2270 = vmatpush1.bf16.msra.mxu0 0
        %2271 = vmatprep.subr.bf16.mxu0 0
        %2272 = vmatpush1.bf16.msra.mxu0 0
        %2273 = vmatprep.subr.bf16.mxu0 0
        %2274 = vmatpush1.bf16.msra.mxu0 0
        %2275 = vmatprep.subr.bf16.mxu0 0
        %2276 = vmatpush1.bf16.msra.mxu0 0
        %2277 = vmatprep.subr.bf16.mxu0 0
        %2278 = vmatpush1.bf16.msra.mxu0 0
        %2279 = vmatprep.subr.bf16.mxu0 0
        %2280 = vmatpush1.bf16.msra.mxu0 0
        %2281 = vmatprep.subr.bf16.mxu0 0
        %2282 = vmatpush1.bf16.msra.mxu0 0
        %2283 = vmatprep.mubr.bf16.mxu0 0
        %2284 = vmatmul.mubr.bf16.gmra.mrb[0].mxu0 %v2150
        %v2285 = vpop.f32.mrb[0].mxu0
        %v2286 = vadd.f32 0.0, %v2285
        %v2287 = vpop.f32.mrb[0].mxu0
        %v2288 = vpop.f32.mrb[0].mxu0
        %v2289 = vadd.f32 0.0, %v2288
        %v2290 = vpop.f32.mrb[0].mxu0
        %2291 = vmatprep.mubr.bf16.mxu0 0
        %2292 = vmatmul.mubr.bf16.gmra.mrb[0].mxu0 %v2159
        %v2293 = vpop.f32.mrb[0].mxu0
        %v2294 = vadd.f32 0.0, %v2293
        %v2295 = vpop.f32.mrb[0].mxu0
        %v2296 = vpop.f32.mrb[0].mxu0
        %v2297 = vadd.f32 0.0, %v2296
        %v2298 = vpop.f32.mrb[0].mxu0
        %2299 = vmatprep.mubr.bf16.mxu0 0
        %2300 = vmatmul.mubr.bf16.gmra.mrb[0].mxu0 %v2168
        %v2301 = vpop.f32.mrb[0].mxu0
        %v2302 = vadd.f32 0.0, %v2301
        %v2303 = vpop.f32.mrb[0].mxu0
        %v2304 = vpop.f32.mrb[0].mxu0
        %v2305 = vadd.f32 0.0, %v2304
        %v2306 = vpop.f32.mrb[0].mxu0
        %2307 = vmatprep.mubr.bf16.mxu0 0
        %2308 = vmatmul.mubr.bf16.gmra.mrb[0].mxu0 %v2177
        %v2309 = vpop.f32.mrb[0].mxu0
        %v2310 = vadd.f32 0.0, %v2309
        %v2311 = vpop.f32.mrb[0].mxu0
        %v2312 = vpop.f32.mrb[0].mxu0
        %v2313 = vadd.f32 0.0, %v2312
        %v2314 = vpop.f32.mrb[0].mxu0
        %2315 = vmatprep.mubr.bf16.mxu0 0
        %2316 = vmatmul.mubr.bf16.gmra.mrb[0].mxu0 %v2186
        %v2317 = vpop.f32.mrb[0].mxu0
        %v2318 = vadd.f32 0.0, %v2317
        %v2319 = vpop.f32.mrb[0].mxu0
        %v2320 = vpop.f32.mrb[0].mxu0
        %v2321 = vadd.f32 0.0, %v2320
        %v2322 = vpop.f32.mrb[0].mxu0
        %2323 = vmatprep.mubr.bf16.mxu0 0
        %2324 = vmatmul.mubr.bf16.gmra.mrb[0].mxu0 %v2195
        %v2325 = vpop.f32.mrb[0].mxu0
        %v2326 = vadd.f32 0.0, %v2325
        %v2327 = vpop.f32.mrb[0].mxu0
        %v2328 = vpop.f32.mrb[0].mxu0
        %v2329 = vadd.f32 0.0, %v2328
        %v2330 = vpop.f32.mrb[0].mxu0
        %2331 = vmatprep.mubr.bf16.mxu0 0
        %2332 = vmatmul.mubr.bf16.gmra.mrb[0].mxu0 %v2194
        %v2333 = vpop.f32.mrb[0].mxu0
        %v2334 = vadd.f32 0.0, %v2333
        %v2335 = vpop.f32.mrb[0].mxu0
        %v2336 = vpop.f32.mrb[0].mxu0
        %v2337 = vpop.f32.mrb[0].mxu0
        %2338 = vdwg.mxu0
        %v2339 = vadd.f32 %v2054, %v2286
        %v2340 = vadd.f32 %v2055, %v2289
        %v2341 = vadd.f32 %v2056, %v2294
        %v2342 = vadd.f32 %v2057, %v2297
        %v2343 = vadd.f32 %v2058, %v2302
        %v2344 = vadd.f32 %v2059, %v2305
        %v2345 = vadd.f32 %v2060, %v2310
        %v2346 = vadd.f32 %v2061, %v2313
        %v2347 = vadd.f32 %v2062, %v2318
        %v2348 = vadd.f32 %v2063, %v2321
        %v2349 = vadd.f32 %v2064, %v2326
        %v2350 = vadd.f32 %v2065, %v2329
        %v2351 = vadd.f32 %v2066, %v2334
        %2352 = vst [vmem:[#allocation2] sm:$0xff] %v2339
        %2353 = vst [vmem:[#allocation2 + $0x8] sm:$0xff] %v2340
        %2354 = vst [vmem:[#allocation2 + $0x10] sm:$0xff] %v2341
        %2355 = vst [vmem:[#allocation2 + $0x18] sm:$0xff] %v2342
        %2356 = vst [vmem:[#allocation2 + $0x20] sm:$0xff] %v2343
        %2357 = vst [vmem:[#allocation2 + $0x28] sm:$0xff] %v2344
        %2358 = vst [vmem:[#allocation2 + $0x30] sm:$0xff] %v2345
        %2359 = vst [vmem:[#allocation2 + $0x38] sm:$0xff] %v2346
        %2360 = vst [vmem:[#allocation2 + $0x40] sm:$0xff] %v2347
        %2361 = vst [vmem:[#allocation2 + $0x48] sm:$0xff] %v2348
        %2362 = vst [vmem:[#allocation2 + $0x50] sm:$0xff] %v2349
        %2363 = vst [vmem:[#allocation2 + $0x58] sm:$0xff] %v2350
        %2364 = vst [vmem:[#allocation2 + $0x60] sm:$0xf] %v2351
        %v2365 = vld [vmem:[#allocation2] sm:$0xff]
        %v2366 = vld [vmem:[#allocation2 + $0x8] sm:$0xff]
        %v2367 = vld [vmem:[#allocation2 + $0x10] sm:$0xff]
        %v2368 = vld [vmem:[#allocation2 + $0x18] sm:$0xff]
        %v2369 = vld [vmem:[#allocation2 + $0x20] sm:$0xff]
        %v2370 = vld [vmem:[#allocation2 + $0x28] sm:$0xff]
        %v2371 = vld [vmem:[#allocation2 + $0x30] sm:$0xff]
        %v2372 = vld [vmem:[#allocation2 + $0x38] sm:$0xff]
        %v2373 = vld [vmem:[#allocation2 + $0x40] sm:$0xff]
        %v2374 = vld [vmem:[#allocation2 + $0x48] sm:$0xff]
        %v2375 = vld [vmem:[#allocation2 + $0x50] sm:$0xff]
        %v2376 = vld [vmem:[#allocation2 + $0x58] sm:$0xff]
        %v2377 = vld [vmem:[#allocation2 + $0x60] sm:$0xf]
        %v2378 = vld [vmem:[%s707] sm:$0x8]
        %v2379 = vld [vmem:[%s707 + $0x4] sm:$0xf]
        %v2380 = vld [vmem:[%s707 + $0x8] sm:$0xf]
        %v2381 = vld [vmem:[%s707 + $0xc] sm:$0xf]
        %v2382 = vld [vmem:[%s707 + $0x10] sm:$0xf]
        %v2383 = vld [vmem:[%s707 + $0x14] sm:$0xf]
        %v2384 = vld [vmem:[%s707 + $0x18] sm:$0xf]
        %v2385 = vld [vmem:[%s707 + $0x1c] sm:$0xf]
        %v2386 = vld [vmem:[%s707 + $0x20] sm:$0xf]
        %v2387 = vld [vmem:[%s707 + $0x24] sm:$0xf]
        %v2388 = vld [vmem:[%s707 + $0x28] sm:$0xf]
        %v2389 = vld [vmem:[%s707 + $0x2c] sm:$0xf]
        %v2390 = vld [vmem:[%s707 + $0x30] sm:$0xf]
        %v2391 = vld [vmem:[%s707 + $0x34] sm:$0x1]
        %s2392 = scalar_lea.vmem %s1, 384
        %v2393 = vld [vmem:[%s2392] sm:$0xf]
        %v2394 = vld [vmem:[%s2392 + $0x4] sm:$0xf]
        %v2395 = vld [vmem:[%s2392 + $0x8] sm:$0xf]
        %v2396 = vld [vmem:[%s2392 + $0xc] sm:$0xf]
        %v2397 = vld [vmem:[%s2392 + $0x10] sm:$0xf]
        %v2398 = vld [vmem:[%s2392 + $0x14] sm:$0xf]
        %v2399 = vld [vmem:[%s2392 + $0x18] sm:$0xf]
        %v2400 = vld [vmem:[%s2392 + $0x1c] sm:$0xf]
        %v2401 = vld [vmem:[%s2392 + $0x20] sm:$0xf]
        %v2402 = vld [vmem:[%s2392 + $0x24] sm:$0xf]
        %v2403 = vld [vmem:[%s2392 + $0x28] sm:$0xf]
        %v2404 = vld [vmem:[%s2392 + $0x2c] sm:$0xf]
        %v2405 = vld [vmem:[%s2392 + $0x30] sm:$0xf]
        %v2406 = vld [vmem:[%s2392 + $0x34] sm:$0xf]
        %v2407 = vld [vmem:[%s2392 + $0x38] sm:$0xf]
        %v2408 = vld [vmem:[%s2392 + $0x3c] sm:$0xf]
        %v2423 = vunpack.c.l.b16 %v2378
        %v2424 = vunpack.c.l.b16 %v2379
        %v2425 = vunpack.c.l.b16 %v2380
        %v2426 = vunpack.c.l.b16 %v2381
        %v2427 = vunpack.c.l.b16 %v2382
        %v2428 = vunpack.c.l.b16 %v2383
        %v2429 = vunpack.c.l.b16 %v2384
        %v2430 = vunpack.c.l.b16 %v2385
        %v2431 = vunpack.c.l.b16 %v2386
        %v2432 = vunpack.c.l.b16 %v2387
        %v2433 = vunpack.c.l.b16 %v2388
        %v2434 = vunpack.c.l.b16 %v2389
        %v2435 = vunpack.c.l.b16 %v2390
        %v2436 = vunpack.c.l.b16 %v2391
        %v2437 = vpack.c.b16 %v2424, %v2423
        %v2438 = vpack.c.b16 %v2426, %v2425
        %v2439 = vpack.c.b16 %v2428, %v2427
        %v2440 = vpack.c.b16 %v2430, %v2429
        %v2441 = vpack.c.b16 %v2432, %v2431
        %v2442 = vpack.c.b16 %v2434, %v2433
        %v2443 = vpack.c.b16 %v2436, %v2435
        %vm2444 = vcmask 1044480
        %v2445 = vrot.slane %v2437, 3
        %v2446 = vrot.slane %v2438, 3
        %v2447 = vsel %vm2444, %v2445, %v2446
        %v2448 = vrot.slane %v2439, 3
        %v2449 = vsel %vm2444, %v2446, %v2448
        %v2450 = vrot.slane %v2440, 3
        %v2451 = vsel %vm2444, %v2448, %v2450
        %v2452 = vrot.slane %v2441, 3
        %v2453 = vsel %vm2444, %v2450, %v2452
        %v2454 = vrot.slane %v2442, 3
        %v2455 = vsel %vm2444, %v2452, %v2454
        %v2456 = vrot.slane %v2443, 3
        %v2457 = vsel %vm2444, %v2454, %v2456
        %v2481 = vunpack.c.l.b16 %v2393
        %v2482 = vunpack.c.l.b16 %v2394
        %v2483 = vunpack.c.l.b16 %v2395
        %v2484 = vunpack.c.l.b16 %v2396
        %v2485 = vunpack.c.l.b16 %v2397
        %v2486 = vunpack.c.l.b16 %v2398
        %v2487 = vunpack.c.l.b16 %v2399
        %v2488 = vunpack.c.l.b16 %v2400
        %v2489 = vunpack.c.l.b16 %v2401
        %v2490 = vunpack.c.l.b16 %v2402
        %v2491 = vunpack.c.l.b16 %v2403
        %v2492 = vunpack.c.l.b16 %v2404
        %v2493 = vunpack.c.l.b16 %v2405
        %v2494 = vunpack.c.l.b16 %v2406
        %v2495 = vunpack.c.l.b16 %v2407
        %v2496 = vunpack.c.l.b16 %v2408
        %v2497 = vpack.c.b16 %v2482, %v2481
        %v2498 = vpack.c.b16 %v2484, %v2483
        %v2499 = vpack.c.b16 %v2486, %v2485
        %v2500 = vpack.c.b16 %v2488, %v2487
        %v2501 = vpack.c.b16 %v2490, %v2489
        %v2502 = vpack.c.b16 %v2492, %v2491
        %v2503 = vpack.c.b16 %v2494, %v2493
        %v2504 = vpack.c.b16 %v2496, %v2495
        %2513 = vmatprep.subr.bf16.mxu0 0
        %2514 = vmatpush1.bf16.msra.mxu0 %v2497
        %2515 = vmatprep.subr.bf16.mxu0 0
        %2516 = vmatpush1.bf16.msra.mxu0 %v2498
        %2517 = vmatprep.subr.bf16.mxu0 0
        %2518 = vmatpush1.bf16.msra.mxu0 %v2499
        %2519 = vmatprep.subr.bf16.mxu0 0
        %2520 = vmatpush1.bf16.msra.mxu0 %v2500
        %2521 = vmatprep.subr.bf16.mxu0 0
        %2522 = vmatpush1.bf16.msra.mxu0 %v2501
        %2523 = vmatprep.subr.bf16.mxu0 0
        %2524 = vmatpush1.bf16.msra.mxu0 %v2502
        %2525 = vmatprep.subr.bf16.mxu0 0
        %2526 = vmatpush1.bf16.msra.mxu0 %v2503
        %2527 = vmatprep.subr.bf16.mxu0 0
        %2528 = vmatpush1.bf16.msra.mxu0 %v2504
        %2529 = vmatprep.subr.bf16.mxu0 0
        %2530 = vmatpush1.bf16.msra.mxu0 0
        %2531 = vmatprep.subr.bf16.mxu0 0
        %2532 = vmatpush1.bf16.msra.mxu0 0
        %2533 = vmatprep.subr.bf16.mxu0 0
        %2534 = vmatpush1.bf16.msra.mxu0 0
        %2535 = vmatprep.subr.bf16.mxu0 0
        %2536 = vmatpush1.bf16.msra.mxu0 0
        %2537 = vmatprep.subr.bf16.mxu0 0
        %2538 = vmatpush1.bf16.msra.mxu0 0
        %2539 = vmatprep.subr.bf16.mxu0 0
        %2540 = vmatpush1.bf16.msra.mxu0 0
        %2541 = vmatprep.subr.bf16.mxu0 0
        %2542 = vmatpush1.bf16.msra.mxu0 0
        %2543 = vmatprep.subr.bf16.mxu0 0
        %2544 = vmatpush1.bf16.msra.mxu0 0
        %2545 = vmatprep.mubr.bf16.mxu0 0
        %2546 = vmatmul.mubr.bf16.gmra.mrb[0].mxu0 %v2447
        %v2547 = vpop.f32.mrb[0].mxu0
        %v2548 = vadd.f32 0.0, %v2547
        %v2549 = vpop.f32.mrb[0].mxu0
        %v2550 = vpop.f32.mrb[0].mxu0
        %v2551 = vadd.f32 0.0, %v2550
        %v2552 = vpop.f32.mrb[0].mxu0
        %2553 = vmatprep.mubr.bf16.mxu0 0
        %2554 = vmatmul.mubr.bf16.gmra.mrb[0].mxu0 %v2449
        %v2555 = vpop.f32.mrb[0].mxu0
        %v2556 = vadd.f32 0.0, %v2555
        %v2557 = vpop.f32.mrb[0].mxu0
        %v2558 = vpop.f32.mrb[0].mxu0
        %v2559 = vadd.f32 0.0, %v2558
        %v2560 = vpop.f32.mrb[0].mxu0
        %2561 = vmatprep.mubr.bf16.mxu0 0
        %2562 = vmatmul.mubr.bf16.gmra.mrb[0].mxu0 %v2451
        %v2563 = vpop.f32.mrb[0].mxu0
        %v2564 = vadd.f32 0.0, %v2563
        %v2565 = vpop.f32.mrb[0].mxu0
        %v2566 = vpop.f32.mrb[0].mxu0
        %v2567 = vadd.f32 0.0, %v2566
        %v2568 = vpop.f32.mrb[0].mxu0
        %2569 = vmatprep.mubr.bf16.mxu0 0
        %2570 = vmatmul.mubr.bf16.gmra.mrb[0].mxu0 %v2453
        %v2571 = vpop.f32.mrb[0].mxu0
        %v2572 = vadd.f32 0.0, %v2571
        %v2573 = vpop.f32.mrb[0].mxu0
        %v2574 = vpop.f32.mrb[0].mxu0
        %v2575 = vadd.f32 0.0, %v2574
        %v2576 = vpop.f32.mrb[0].mxu0
        %2577 = vmatprep.mubr.bf16.mxu0 0
        %2578 = vmatmul.mubr.bf16.gmra.mrb[0].mxu0 %v2455
        %v2579 = vpop.f32.mrb[0].mxu0
        %v2580 = vadd.f32 0.0, %v2579
        %v2581 = vpop.f32.mrb[0].mxu0
        %v2582 = vpop.f32.mrb[0].mxu0
        %v2583 = vadd.f32 0.0, %v2582
        %v2584 = vpop.f32.mrb[0].mxu0
        %2585 = vmatprep.mubr.bf16.mxu0 0
        %2586 = vmatmul.mubr.bf16.gmra.mrb[0].mxu0 %v2457
        %v2587 = vpop.f32.mrb[0].mxu0
        %v2588 = vadd.f32 0.0, %v2587
        %v2589 = vpop.f32.mrb[0].mxu0
        %v2590 = vpop.f32.mrb[0].mxu0
        %v2591 = vadd.f32 0.0, %v2590
        %v2592 = vpop.f32.mrb[0].mxu0
        %2593 = vmatprep.mubr.bf16.mxu0 0
        %2594 = vmatmul.mubr.bf16.gmra.mrb[0].mxu0 %v2456
        %v2595 = vpop.f32.mrb[0].mxu0
        %v2596 = vadd.f32 0.0, %v2595
        %v2597 = vpop.f32.mrb[0].mxu0
        %v2598 = vpop.f32.mrb[0].mxu0
        %v2599 = vpop.f32.mrb[0].mxu0
        %2600 = vdwg.mxu0
        %v2601 = vadd.f32 %v2365, %v2548
        %v2602 = vadd.f32 %v2366, %v2551
        %v2603 = vadd.f32 %v2367, %v2556
        %v2604 = vadd.f32 %v2368, %v2559
        %v2605 = vadd.f32 %v2369, %v2564
        %v2606 = vadd.f32 %v2370, %v2567
        %v2607 = vadd.f32 %v2371, %v2572
        %v2608 = vadd.f32 %v2372, %v2575
        %v2609 = vadd.f32 %v2373, %v2580
        %v2610 = vadd.f32 %v2374, %v2583
        %v2611 = vadd.f32 %v2375, %v2588
        %v2612 = vadd.f32 %v2376, %v2591
        %v2613 = vadd.f32 %v2377, %v2596
        %2614 = vst [vmem:[#allocation2] sm:$0xff] %v2601
        %2615 = vst [vmem:[#allocation2 + $0x8] sm:$0xff] %v2602
        %2616 = vst [vmem:[#allocation2 + $0x10] sm:$0xff] %v2603
        %2617 = vst [vmem:[#allocation2 + $0x18] sm:$0xff] %v2604
        %2618 = vst [vmem:[#allocation2 + $0x20] sm:$0xff] %v2605
        %2619 = vst [vmem:[#allocation2 + $0x28] sm:$0xff] %v2606
        %2620 = vst [vmem:[#allocation2 + $0x30] sm:$0xff] %v2607
        %2621 = vst [vmem:[#allocation2 + $0x38] sm:$0xff] %v2608
        %2622 = vst [vmem:[#allocation2 + $0x40] sm:$0xff] %v2609
        %2623 = vst [vmem:[#allocation2 + $0x48] sm:$0xff] %v2610
        %2624 = vst [vmem:[#allocation2 + $0x50] sm:$0xff] %v2611
        %2625 = vst [vmem:[#allocation2 + $0x58] sm:$0xff] %v2612
        %2626 = vst [vmem:[#allocation2 + $0x60] sm:$0xf] %v2613
        %v2627 = vlaneseq
        %v2628 = vshrl.u32 %v2627, 7
        %v2629 = vadd.s32 %v2628, 8
        %v2630 = vadd.s32 %v2628, 16
        %v2631 = vadd.s32 %v2628, 24
        %v2632 = vadd.s32 %v2628, 32
        %v2633 = vadd.s32 %v2628, 40
        %v2634 = vadd.s32 %v2628, 48
        %v2635 = vlaneseq
        %v2636 = vand.u32 %v2635, 127
        %v2637 = vmul.u32 %v2628, 2
        %v2638 = vmul.u32 %v2629, 2
        %v2639 = vmul.u32 %v2630, 2
        %v2640 = vmul.u32 %v2631, 2
        %v2641 = vmul.u32 %v2632, 2
        %v2642 = vmul.u32 %v2633, 2
        %v2643 = vmul.u32 %v2634, 2
        %vm2644 = vcmp.eq.s32.totalorder %v2636, %v2637
        %vm2645 = vcmp.eq.s32.totalorder %v2636, %v2638
        %vm2646 = vcmp.eq.s32.totalorder %v2636, %v2639
        %vm2647 = vcmp.eq.s32.totalorder %v2636, %v2640
        %vm2648 = vcmp.eq.s32.totalorder %v2636, %v2641
        %vm2649 = vcmp.eq.s32.totalorder %v2636, %v2642
        %vm2650 = vcmp.eq.s32.totalorder %v2636, %v2643
        %v2651 = vsel %vm2644, 1, 0
        %v2652 = vsel %vm2645, 1, 0
        %v2653 = vsel %vm2646, 1, 0
        %v2654 = vsel %vm2647, 1, 0
        %v2655 = vsel %vm2648, 1, 0
        %v2656 = vsel %vm2649, 1, 0
        %v2657 = vsel %vm2650, 1, 0
        %v2658 = vcvt.s32.f32 %v2651
        %v2659 = vcvt.s32.f32 %v2652
        %v2660 = vcvt.s32.f32 %v2653
        %v2661 = vcvt.s32.f32 %v2654
        %v2662 = vcvt.s32.f32 %v2655
        %v2663 = vcvt.s32.f32 %v2656
        %v2664 = vcvt.s32.f32 %v2657
        %v2665 = vld [vmem:[#allocation2] sm:$0xff]
        %v2666 = vld [vmem:[#allocation2 + $0x8] sm:$0xff]
        %v2667 = vld [vmem:[#allocation2 + $0x10] sm:$0xff]
        %v2668 = vld [vmem:[#allocation2 + $0x18] sm:$0xff]
        %v2669 = vld [vmem:[#allocation2 + $0x20] sm:$0xff]
        %v2670 = vld [vmem:[#allocation2 + $0x28] sm:$0xff]
        %v2671 = vld [vmem:[#allocation2 + $0x30] sm:$0xff]
        %v2672 = vld [vmem:[#allocation2 + $0x38] sm:$0xff]
        %v2673 = vld [vmem:[#allocation2 + $0x40] sm:$0xff]
        %v2674 = vld [vmem:[#allocation2 + $0x48] sm:$0xff]
        %v2675 = vld [vmem:[#allocation2 + $0x50] sm:$0xff]
        %v2676 = vld [vmem:[#allocation2 + $0x58] sm:$0xff]
        %v2677 = vld [vmem:[#allocation2 + $0x60] sm:$0xf]
        %v2678 = vld [vmem:[%s2] sm:$0x1]
        %v2680 = vlaneseq
        %v2681 = vshrl.u32 %v2680, 7
        %v2682 = vsub.s32 0, %v2681
        %v2683 = vrot.slane %v2678, %v2682
        %vm2685 = vcmask 818176
        %v2687 = vsel %vm2685, %v2658, 0
        %v2690 = vsel %vm2685, %v2659, 0
        %v2693 = vsel %vm2685, %v2660, 0
        %v2696 = vsel %vm2685, %v2661, 0
        %v2699 = vsel %vm2685, %v2662, 0
        %v2702 = vsel %vm2685, %v2663, 0
        %v2705 = vsel %vm2685, %v2664, 0
        %vm2707 = vcmask 1043456
        %v2709 = vsel %vm2707, %v2677, 0
        %2711 = vmatprep.subr.mxu0 0.0
        %2712 = vmatpush1.msra.mxu0 %v2665
        %2713 = vmatprep.subr.mxu0 0.0
        %2714 = vmatpush1.msra.mxu0 %v2666
        %2715 = vmatprep.subr.mxu0 0.0
        %2716 = vmatpush1.msra.mxu0 %v2667
        %2717 = vmatprep.subr.mxu0 0.0
        %2718 = vmatpush1.msra.mxu0 %v2668
        %2719 = vmatprep.subr.mxu0 0.0
        %2720 = vmatpush1.msra.mxu0 %v2669
        %2721 = vmatprep.subr.mxu0 0.0
        %2722 = vmatpush1.msra.mxu0 %v2670
        %2723 = vmatprep.subr.mxu0 0.0
        %2724 = vmatpush1.msra.mxu0 %v2671
        %2725 = vmatprep.subr.mxu0 0.0
        %2726 = vmatpush1.msra.mxu0 %v2672
        %2727 = vmatprep.subr.mxu0 0.0
        %2728 = vmatpush1.msra.mxu0 %v2673
        %2729 = vmatprep.subr.mxu0 0.0
        %2730 = vmatpush1.msra.mxu0 %v2674
        %2731 = vmatprep.subr.mxu0 0.0
        %2732 = vmatpush1.msra.mxu0 %v2675
        %2733 = vmatprep.subr.mxu0 0.0
        %2734 = vmatpush1.msra.mxu0 %v2676
        %2735 = vmatprep.subr.mxu0 0.0
        %2736 = vmatpush1.msra.mxu0 %v2709
        %2737 = vmatprep.subr.mxu0 0.0
        %2738 = vmatpush1.msra.mxu0 0.0
        %2739 = vmatprep.subr.mxu0 0.0
        %2740 = vmatpush1.msra.mxu0 0.0
        %2741 = vmatprep.subr.mxu0 0.0
        %2742 = vmatpush1.msra.mxu0 0.0
        %2743 = vmatprep.subr.mxu0 0.0
        %2744 = vmatpush1.msra.mxu0 0.0
        %2745 = vmatprep.subr.mxu0 0.0
        %2746 = vmatpush1.msra.mxu0 0.0
        %2747 = vmatprep.subr.mxu0 0.0
        %2748 = vmatpush1.msra.mxu0 0.0
        %2749 = vmatprep.subr.mxu0 0.0
        %2750 = vmatpush1.msra.mxu0 0.0
        %2751 = vmatprep.subr.mxu0 0.0
        %2752 = vmatpush1.msra.mxu0 0.0
        %2753 = vmatprep.subr.mxu0 0.0
        %2754 = vmatpush1.msra.mxu0 0.0
        %2755 = vmatprep.subr.mxu0 0.0
        %2756 = vmatpush1.msra.mxu0 0.0
        %2757 = vmatprep.subr.mxu0 0.0
        %2758 = vmatpush1.msra.mxu0 0.0
        %2759 = vmatprep.subr.mxu0 0.0
        %2760 = vmatpush1.msra.mxu0 0.0
        %2761 = vmatprep.subr.mxu0 0.0
        %2762 = vmatpush1.msra.mxu0 0.0
        %2763 = vmatprep.subr.mxu0 0.0
        %2764 = vmatpush1.msra.mxu0 0.0
        %2765 = vmatprep.subr.mxu0 0.0
        %2766 = vmatpush1.msra.mxu0 0.0
        %2767 = vmatprep.subr.mxu0 0.0
        %2768 = vmatpush1.msra.mxu0 0.0
        %2769 = vmatprep.subr.mxu0 0.0
        %2770 = vmatpush1.msra.mxu0 0.0
        %2771 = vmatprep.subr.mxu0 0.0
        %2772 = vmatpush1.msra.mxu0 0.0
        %2773 = vmatprep.subr.mxu0 0.0
        %2774 = vmatpush1.msra.mxu0 0.0
        %2775 = vmatprep.mubr.f32.mxu0 0.0
        %2776 = vmatmul.mubr.f32.gmra.mrb[0].mxu0 %v2687
        %v2777 = vpop.f32.mrb[0].mxu0
        %v2778 = vadd.f32 %v2683, %v2777
        %v2779 = vpop.f32.mrb[0].mxu0
        %2780 = vmatprep.mubr.f32.mxu0 0.0
        %2781 = vmatmul.mubr.f32.gmra.mrb[0].mxu0 %v2690
        %v2782 = vpop.f32.mrb[0].mxu0
        %v2783 = vadd.f32 %v2683, %v2782
        %v2784 = vpop.f32.mrb[0].mxu0
        %2785 = vmatprep.mubr.f32.mxu0 0.0
        %2786 = vmatmul.mubr.f32.gmra.mrb[0].mxu0 %v2693
        %v2787 = vpop.f32.mrb[0].mxu0
        %v2788 = vadd.f32 %v2683, %v2787
        %v2789 = vpop.f32.mrb[0].mxu0
        %2790 = vmatprep.mubr.f32.mxu0 0.0
        %2791 = vmatmul.mubr.f32.gmra.mrb[0].mxu0 %v2696
        %v2792 = vpop.f32.mrb[0].mxu0
        %v2793 = vadd.f32 %v2683, %v2792
        %v2794 = vpop.f32.mrb[0].mxu0
        %2795 = vmatprep.mubr.f32.mxu0 0.0
        %2796 = vmatmul.mubr.f32.gmra.mrb[0].mxu0 %v2699
        %v2797 = vpop.f32.mrb[0].mxu0
        %v2798 = vadd.f32 %v2683, %v2797
        %v2799 = vpop.f32.mrb[0].mxu0
        %2800 = vmatprep.mubr.f32.mxu0 0.0
        %2801 = vmatmul.mubr.f32.gmra.mrb[0].mxu0 %v2702
        %v2802 = vpop.f32.mrb[0].mxu0
        %v2803 = vadd.f32 %v2683, %v2802
        %v2804 = vpop.f32.mrb[0].mxu0
        %2805 = vmatprep.mubr.f32.mxu0 0.0
        %2806 = vmatmul.mubr.f32.gmra.mrb[0].mxu0 %v2705
        %v2807 = vpop.f32.mrb[0].mxu0
        %v2808 = vadd.f32 %v2683, %v2807
        %v2809 = vpop.f32.mrb[0].mxu0
        %2810 = vdwg.mxu0
        %v2811 = vmax.f32 %v2778, 0.0
        %v2812 = vmax.f32 %v2783, 0.0
        %v2813 = vmax.f32 %v2788, 0.0
        %v2814 = vmax.f32 %v2793, 0.0
        %v2815 = vmax.f32 %v2798, 0.0
        %v2816 = vmax.f32 %v2803, 0.0
        %v2817 = vmax.f32 %v2808, 0.0
        %2818 = vst [vmem:[#allocation3] sm:$0x1] 0.0
        %2819 = vst [vmem:[#allocation3 + $0x33] sm:$0x1] 0.0
        %2820 = vst [vmem:[#allocation3 + $0x1] sm:$0xff] %v2811
        %2821 = vst [vmem:[#allocation3 + $0x9] sm:$0xff] %v2812
        %2822 = vst [vmem:[#allocation3 + $0x11] sm:$0xff] %v2813
        %2823 = vst [vmem:[#allocation3 + $0x19] sm:$0xff] %v2814
        %2824 = vst [vmem:[#allocation3 + $0x21] sm:$0xff] %v2815
        %2825 = vst [vmem:[#allocation3 + $0x29] sm:$0xff] %v2816
        %2826 = vst [vmem:[#allocation3 + $0x31] sm:$0x3] %v2817
        %v2827 = vld [vmem:[#allocation3] sm:$0xff]
        %v2828 = vld [vmem:[#allocation3 + $0x8] sm:$0xff]
        %v2829 = vld [vmem:[#allocation3 + $0x10] sm:$0xff]
        %v2830 = vld [vmem:[#allocation3 + $0x18] sm:$0xff]
        %v2831 = vld [vmem:[#allocation3 + $0x20] sm:$0xff]
        %v2832 = vld [vmem:[#allocation3 + $0x28] sm:$0xff]
        %v2833 = vld [vmem:[#allocation3 + $0x30] sm:$0x3]
        %v2834 = vld [vmem:[#allocation3 + $0x1] sm:$0xff]
        %v2835 = vld [vmem:[#allocation3 + $0x9] sm:$0xff]
        %v2836 = vld [vmem:[#allocation3 + $0x11] sm:$0xff]
        %v2837 = vld [vmem:[#allocation3 + $0x19] sm:$0xff]
        %v2838 = vld [vmem:[#allocation3 + $0x21] sm:$0xff]
        %v2839 = vld [vmem:[#allocation3 + $0x29] sm:$0xff]
        %v2840 = vld [vmem:[#allocation3 + $0x31] sm:$0x3]
        %v2841 = vmax.f32 %v2827, %v2834
        %v2842 = vmax.f32 %v2828, %v2835
        %v2843 = vmax.f32 %v2829, %v2836
        %v2844 = vmax.f32 %v2830, %v2837
        %v2845 = vmax.f32 %v2831, %v2838
        %v2846 = vmax.f32 %v2832, %v2839
        %v2847 = vmax.f32 %v2833, %v2840
        %v2848 = vld [vmem:[#allocation3 + $0x2] sm:$0xff]
        %v2849 = vld [vmem:[#allocation3 + $0xa] sm:$0xff]
        %v2850 = vld [vmem:[#allocation3 + $0x12] sm:$0xff]
        %v2851 = vld [vmem:[#allocation3 + $0x1a] sm:$0xff]
        %v2852 = vld [vmem:[#allocation3 + $0x22] sm:$0xff]
        %v2853 = vld [vmem:[#allocation3 + $0x2a] sm:$0xff]
        %v2854 = vld [vmem:[#allocation3 + $0x32] sm:$0x3]
        %v2855 = vmax.f32 %v2841, %v2848
        %v2856 = vmax.f32 %v2842, %v2849
        %v2857 = vmax.f32 %v2843, %v2850
        %v2858 = vmax.f32 %v2844, %v2851
        %v2859 = vmax.f32 %v2845, %v2852
        %v2860 = vmax.f32 %v2846, %v2853
        %v2861 = vmax.f32 %v2847, %v2854
        %vm2862 = vcmask 408576
        %v2863 = vsel %vm2862, %v2658, 0
        %v2865 = vsel %vm2862, %v2659, 0
        %v2867 = vsel %vm2862, %v2660, 0
        %v2869 = vsel %vm2862, %v2661, 0
        %vm2871 = vcmask 1041408
        %v2873 = vsel %vm2871, %v2861, 0
        %2875 = vmatprep.subr.mxu0 0.0
        %2876 = vmatpush1.msra.mxu0 %v2855
        %2877 = vmatprep.subr.mxu0 0.0
        %2878 = vmatpush1.msra.mxu0 %v2856
        %2879 = vmatprep.subr.mxu0 0.0
        %2880 = vmatpush1.msra.mxu0 %v2857
        %2881 = vmatprep.subr.mxu0 0.0
        %2882 = vmatpush1.msra.mxu0 %v2858
        %2883 = vmatprep.subr.mxu0 0.0
        %2884 = vmatpush1.msra.mxu0 %v2859
        %2885 = vmatprep.subr.mxu0 0.0
        %2886 = vmatpush1.msra.mxu0 %v2860
        %2887 = vmatprep.subr.mxu0 0.0
        %2888 = vmatpush1.msra.mxu0 %v2873
        %2889 = vmatprep.subr.mxu0 0.0
        %2890 = vmatpush1.msra.mxu0 0.0
        %2891 = vmatprep.subr.mxu0 0.0
        %2892 = vmatpush1.msra.mxu0 0.0
        %2893 = vmatprep.subr.mxu0 0.0
        %2894 = vmatpush1.msra.mxu0 0.0
        %2895 = vmatprep.subr.mxu0 0.0
        %2896 = vmatpush1.msra.mxu0 0.0
        %2897 = vmatprep.subr.mxu0 0.0
        %2898 = vmatpush1.msra.mxu0 0.0
        %2899 = vmatprep.subr.mxu0 0.0
        %2900 = vmatpush1.msra.mxu0 0.0
        %2901 = vmatprep.subr.mxu0 0.0
        %2902 = vmatpush1.msra.mxu0 0.0
        %2903 = vmatprep.subr.mxu0 0.0
        %2904 = vmatpush1.msra.mxu0 0.0
        %2905 = vmatprep.subr.mxu0 0.0
        %2906 = vmatpush1.msra.mxu0 0.0
        %2907 = vmatprep.subr.mxu0 0.0
        %2908 = vmatpush1.msra.mxu0 0.0
        %2909 = vmatprep.subr.mxu0 0.0
        %2910 = vmatpush1.msra.mxu0 0.0
        %2911 = vmatprep.subr.mxu0 0.0
        %2912 = vmatpush1.msra.mxu0 0.0
        %2913 = vmatprep.subr.mxu0 0.0
        %2914 = vmatpush1.msra.mxu0 0.0
        %2915 = vmatprep.subr.mxu0 0.0
        %2916 = vmatpush1.msra.mxu0 0.0
        %2917 = vmatprep.subr.mxu0 0.0
        %2918 = vmatpush1.msra.mxu0 0.0
        %2919 = vmatprep.subr.mxu0 0.0
        %2920 = vmatpush1.msra.mxu0 0.0
        %2921 = vmatprep.subr.mxu0 0.0
        %2922 = vmatpush1.msra.mxu0 0.0
        %2923 = vmatprep.subr.mxu0 0.0
        %2924 = vmatpush1.msra.mxu0 0.0
        %2925 = vmatprep.subr.mxu0 0.0
        %2926 = vmatpush1.msra.mxu0 0.0
        %2927 = vmatprep.subr.mxu0 0.0
        %2928 = vmatpush1.msra.mxu0 0.0
        %2929 = vmatprep.subr.mxu0 0.0
        %2930 = vmatpush1.msra.mxu0 0.0
        %2931 = vmatprep.subr.mxu0 0.0
        %2932 = vmatpush1.msra.mxu0 0.0
        %2933 = vmatprep.subr.mxu0 0.0
        %2934 = vmatpush1.msra.mxu0 0.0
        %2935 = vmatprep.subr.mxu0 0.0
        %2936 = vmatpush1.msra.mxu0 0.0
        %2937 = vmatprep.subr.mxu0 0.0
        %2938 = vmatpush1.msra.mxu0 0.0
        %2939 = vmatprep.mubr.f32.mxu0 0.0
        %2940 = vmatmul.mubr.f32.gmra.mrb[0].mxu0 %v2863
        %v2941 = vpop.f32.mrb[0].mxu0
        %v2942 = vadd.f32 0.0, %v2941
        %v2943 = vpop.f32.mrb[0].mxu0
        %2944 = vmatprep.mubr.f32.mxu0 0.0
        %2945 = vmatmul.mubr.f32.gmra.mrb[0].mxu0 %v2865
        %v2946 = vpop.f32.mrb[0].mxu0
        %v2947 = vadd.f32 0.0, %v2946
        %v2948 = vpop.f32.mrb[0].mxu0
        %2949 = vmatprep.mubr.f32.mxu0 0.0
        %2950 = vmatmul.mubr.f32.gmra.mrb[0].mxu0 %v2867
        %v2951 = vpop.f32.mrb[0].mxu0
        %v2952 = vadd.f32 0.0, %v2951
        %v2953 = vpop.f32.mrb[0].mxu0
        %2954 = vmatprep.mubr.f32.mxu0 0.0
        %2955 = vmatmul.mubr.f32.gmra.mrb[0].mxu0 %v2869
        %v2956 = vpop.f32.mrb[0].mxu0
        %v2957 = vadd.f32 0.0, %v2956
        %v2958 = vpop.f32.mrb[0].mxu0
        %2959 = vdwg.mxu0
        %2960 = vst [vmem:[#allocation4] sm:$0x1] 0.0
        %2961 = vst [vmem:[#allocation4 + $0x1a] sm:$0x1] 0.0
        %2962 = vst [vmem:[#allocation4 + $0x1] sm:$0xff] %v2942
        %2963 = vst [vmem:[#allocation4 + $0x9] sm:$0xff] %v2947
        %2964 = vst [vmem:[#allocation4 + $0x11] sm:$0xff] %v2952
        %2965 = vst [vmem:[#allocation4 + $0x19] sm:$0x1] %v2957
        %v2966 = vld [vmem:[#allocation4] sm:$0xff]
        %v2967 = vld [vmem:[#allocation4 + $0x8] sm:$0xff]
        %v2968 = vld [vmem:[#allocation4 + $0x10] sm:$0xff]
        %v2969 = vld [vmem:[#allocation4 + $0x18] sm:$0x1]
        %v2970 = vpack.c.bf16 %v2967, %v2966
        %v2971 = vpack.c.bf16 %v2969, %v2968
        %v2972 = vld [vmem:[%s3] sm:$0xf]
        %v2973 = vld [vmem:[%s3 + $0x4] sm:$0xf]
        %v2974 = vld [vmem:[%s3 + $0x8] sm:$0xf]
        %v2975 = vld [vmem:[%s3 + $0xc] sm:$0xf]
        %v2976 = vld [vmem:[%s3 + $0x10] sm:$0xf]
        %v2977 = vld [vmem:[%s3 + $0x14] sm:$0xf]
        %v2978 = vld [vmem:[%s3 + $0x18] sm:$0xf]
        %v2979 = vld [vmem:[%s3 + $0x1c] sm:$0xf]
        %v2980 = vld [vmem:[%s3 + $0x20] sm:$0xf]
        %v2981 = vld [vmem:[%s3 + $0x24] sm:$0xf]
        %v2982 = vld [vmem:[%s3 + $0x28] sm:$0xf]
        %v2983 = vld [vmem:[%s3 + $0x2c] sm:$0xf]
        %v2984 = vld [vmem:[%s3 + $0x30] sm:$0xf]
        %v2985 = vld [vmem:[%s3 + $0x34] sm:$0xf]
        %v2986 = vld [vmem:[%s3 + $0x38] sm:$0xf]
        %v2987 = vld [vmem:[%s3 + $0x3c] sm:$0xf]
        %v2988 = vld [vmem:[#allocation4 + $0x1] sm:$0xff]
        %v2989 = vld [vmem:[#allocation4 + $0x9] sm:$0xff]
        %v2990 = vld [vmem:[#allocation4 + $0x11] sm:$0xff]
        %v2991 = vld [vmem:[#allocation4 + $0x19] sm:$0x1]
        %v2992 = vpack.c.bf16 %v2989, %v2988
        %v2993 = vpack.c.bf16 %v2991, %v2990
        %s2994 = scalar_lea.vmem %s3, 64
        %v2995 = vld [vmem:[%s2994] sm:$0xf]
        %v2996 = vld [vmem:[%s2994 + $0x4] sm:$0xf]
        %v2997 = vld [vmem:[%s2994 + $0x8] sm:$0xf]
        %v2998 = vld [vmem:[%s2994 + $0xc] sm:$0xf]
        %v2999 = vld [vmem:[%s2994 + $0x10] sm:$0xf]
        %v3000 = vld [vmem:[%s2994 + $0x14] sm:$0xf]
        %v3001 = vld [vmem:[%s2994 + $0x18] sm:$0xf]
        %v3002 = vld [vmem:[%s2994 + $0x1c] sm:$0xf]
        %v3003 = vld [vmem:[%s2994 + $0x20] sm:$0xf]
        %v3004 = vld [vmem:[%s2994 + $0x24] sm:$0xf]
        %v3005 = vld [vmem:[%s2994 + $0x28] sm:$0xf]
        %v3006 = vld [vmem:[%s2994 + $0x2c] sm:$0xf]
        %v3007 = vld [vmem:[%s2994 + $0x30] sm:$0xf]
        %v3008 = vld [vmem:[%s2994 + $0x34] sm:$0xf]
        %v3009 = vld [vmem:[%s2994 + $0x38] sm:$0xf]
        %v3010 = vld [vmem:[%s2994 + $0x3c] sm:$0xf]
        %v3027 = vunpack.c.l.b16 %v2995
        %v3028 = vunpack.c.l.b16 %v2996
        %v3029 = vunpack.c.l.b16 %v2997
        %v3030 = vunpack.c.l.b16 %v2998
        %v3031 = vunpack.c.l.b16 %v2999
        %v3032 = vunpack.c.l.b16 %v3000
        %v3033 = vunpack.c.l.b16 %v3001
        %v3034 = vunpack.c.l.b16 %v3002
        %v3035 = vunpack.c.l.b16 %v3003
        %v3036 = vunpack.c.l.b16 %v3004
        %v3037 = vunpack.c.l.b16 %v3005
        %v3038 = vunpack.c.l.b16 %v3006
        %v3039 = vunpack.c.l.b16 %v3007
        %v3040 = vunpack.c.l.b16 %v3008
        %v3041 = vunpack.c.l.b16 %v3009
        %v3042 = vunpack.c.l.b16 %v3010
        %v3043 = vpack.c.b16 %v3028, %v3027
        %v3044 = vpack.c.b16 %v3030, %v3029
        %v3045 = vpack.c.b16 %v3032, %v3031
        %v3046 = vpack.c.b16 %v3034, %v3033
        %v3047 = vpack.c.b16 %v3036, %v3035
        %v3048 = vpack.c.b16 %v3038, %v3037
        %v3049 = vpack.c.b16 %v3040, %v3039
        %v3050 = vpack.c.b16 %v3042, %v3041
        %3059 = vmatprep.subr.bf16.mxu0 0
        %3060 = vmatpush1.bf16.msra.mxu0 %v3043
        %3061 = vmatprep.subr.bf16.mxu0 0
        %3062 = vmatpush1.bf16.msra.mxu0 %v3044
        %3063 = vmatprep.subr.bf16.mxu0 0
        %3064 = vmatpush1.bf16.msra.mxu0 %v3045
        %3065 = vmatprep.subr.bf16.mxu0 0
        %3066 = vmatpush1.bf16.msra.mxu0 %v3046
        %3067 = vmatprep.subr.bf16.mxu0 0
        %3068 = vmatpush1.bf16.msra.mxu0 %v3047
        %3069 = vmatprep.subr.bf16.mxu0 0
        %3070 = vmatpush1.bf16.msra.mxu0 %v3048
        %3071 = vmatprep.subr.bf16.mxu0 0
        %3072 = vmatpush1.bf16.msra.mxu0 %v3049
        %3073 = vmatprep.subr.bf16.mxu0 0
        %3074 = vmatpush1.bf16.msra.mxu0 %v3050
        %3075 = vmatprep.subr.bf16.mxu0 0
        %3076 = vmatpush1.bf16.msra.mxu0 0
        %3077 = vmatprep.subr.bf16.mxu0 0
        %3078 = vmatpush1.bf16.msra.mxu0 0
        %3079 = vmatprep.subr.bf16.mxu0 0
        %3080 = vmatpush1.bf16.msra.mxu0 0
        %3081 = vmatprep.subr.bf16.mxu0 0
        %3082 = vmatpush1.bf16.msra.mxu0 0
        %3083 = vmatprep.subr.bf16.mxu0 0
        %3084 = vmatpush1.bf16.msra.mxu0 0
        %3085 = vmatprep.subr.bf16.mxu0 0
        %3086 = vmatpush1.bf16.msra.mxu0 0
        %3087 = vmatprep.subr.bf16.mxu0 0
        %3088 = vmatpush1.bf16.msra.mxu0 0
        %3089 = vmatprep.subr.bf16.mxu0 0
        %3090 = vmatpush1.bf16.msra.mxu0 0
        %3091 = vmatprep.mubr.bf16.mxu0 0
        %3092 = vmatmul.mubr.bf16.gmra.mrb[0].mxu0 %v2992
        %v3093 = vpop.f32.mrb[0].mxu0
        %v3094 = vadd.f32 0.0, %v3093
        %v3095 = vpop.f32.mrb[0].mxu0
        %v3096 = vpop.f32.mrb[0].mxu0
        %v3097 = vadd.f32 0.0, %v3096
        %v3098 = vpop.f32.mrb[0].mxu0
        %3099 = vmatprep.mubr.bf16.mxu0 0
        %3100 = vmatmul.mubr.bf16.gmra.mrb[0].mxu0 %v2993
        %v3101 = vpop.f32.mrb[0].mxu0
        %v3102 = vadd.f32 0.0, %v3101
        %v3103 = vpop.f32.mrb[0].mxu0
        %v3104 = vpop.f32.mrb[0].mxu0
        %v3105 = vadd.f32 0.0, %v3104
        %v3106 = vpop.f32.mrb[0].mxu0
        %3107 = vdwg.mxu0
        %v3124 = vunpack.c.l.b16 %v2972
        %v3125 = vunpack.c.l.b16 %v2973
        %v3126 = vunpack.c.l.b16 %v2974
        %v3127 = vunpack.c.l.b16 %v2975
        %v3128 = vunpack.c.l.b16 %v2976
        %v3129 = vunpack.c.l.b16 %v2977
        %v3130 = vunpack.c.l.b16 %v2978
        %v3131 = vunpack.c.l.b16 %v2979
        %v3132 = vunpack.c.l.b16 %v2980
        %v3133 = vunpack.c.l.b16 %v2981
        %v3134 = vunpack.c.l.b16 %v2982
        %v3135 = vunpack.c.l.b16 %v2983
        %v3136 = vunpack.c.l.b16 %v2984
        %v3137 = vunpack.c.l.b16 %v2985
        %v3138 = vunpack.c.l.b16 %v2986
        %v3139 = vunpack.c.l.b16 %v2987
        %v3140 = vpack.c.b16 %v3125, %v3124
        %v3141 = vpack.c.b16 %v3127, %v3126
        %v3142 = vpack.c.b16 %v3129, %v3128
        %v3143 = vpack.c.b16 %v3131, %v3130
        %v3144 = vpack.c.b16 %v3133, %v3132
        %v3145 = vpack.c.b16 %v3135, %v3134
        %v3146 = vpack.c.b16 %v3137, %v3136
        %v3147 = vpack.c.b16 %v3139, %v3138
        %3156 = vmatprep.subr.bf16.mxu0 0
        %3157 = vmatpush1.bf16.msra.mxu0 %v3140
        %3158 = vmatprep.subr.bf16.mxu0 0
        %3159 = vmatpush1.bf16.msra.mxu0 %v3141
        %3160 = vmatprep.subr.bf16.mxu0 0
        %3161 = vmatpush1.bf16.msra.mxu0 %v3142
        %3162 = vmatprep.subr.bf16.mxu0 0
        %3163 = vmatpush1.bf16.msra.mxu0 %v3143
        %3164 = vmatprep.subr.bf16.mxu0 0
        %3165 = vmatpush1.bf16.msra.mxu0 %v3144
        %3166 = vmatprep.subr.bf16.mxu0 0
        %3167 = vmatpush1.bf16.msra.mxu0 %v3145
        %3168 = vmatprep.subr.bf16.mxu0 0
        %3169 = vmatpush1.bf16.msra.mxu0 %v3146
        %3170 = vmatprep.subr.bf16.mxu0 0
        %3171 = vmatpush1.bf16.msra.mxu0 %v3147
        %3172 = vmatprep.subr.bf16.mxu0 0
        %3173 = vmatpush1.bf16.msra.mxu0 0
        %3174 = vmatprep.subr.bf16.mxu0 0
        %3175 = vmatpush1.bf16.msra.mxu0 0
        %3176 = vmatprep.subr.bf16.mxu0 0
        %3177 = vmatpush1.bf16.msra.mxu0 0
        %3178 = vmatprep.subr.bf16.mxu0 0
        %3179 = vmatpush1.bf16.msra.mxu0 0
        %3180 = vmatprep.subr.bf16.mxu0 0
        %3181 = vmatpush1.bf16.msra.mxu0 0
        %3182 = vmatprep.subr.bf16.mxu0 0
        %3183 = vmatpush1.bf16.msra.mxu0 0
        %3184 = vmatprep.subr.bf16.mxu0 0
        %3185 = vmatpush1.bf16.msra.mxu0 0
        %3186 = vmatprep.subr.bf16.mxu0 0
        %3187 = vmatpush1.bf16.msra.mxu0 0
        %3188 = vmatprep.mubr.bf16.mxu0 0
        %3189 = vmatmul.mubr.bf16.gmra.mrb[0].mxu0 %v2970
        %v3190 = vpop.f32.mrb[0].mxu0
        %v3191 = vadd.f32 %v3094, %v3190
        %v3192 = vpop.f32.mrb[0].mxu0
        %v3193 = vpop.f32.mrb[0].mxu0
        %v3194 = vadd.f32 %v3097, %v3193
        %v3195 = vpop.f32.mrb[0].mxu0
        %3196 = vmatprep.mubr.bf16.mxu0 0
        %3197 = vmatmul.mubr.bf16.gmra.mrb[0].mxu0 %v2971
        %v3198 = vpop.f32.mrb[0].mxu0
        %v3199 = vadd.f32 %v3102, %v3198
        %v3200 = vpop.f32.mrb[0].mxu0
        %v3201 = vpop.f32.mrb[0].mxu0
        %v3202 = vadd.f32 %v3105, %v3201
        %v3203 = vpop.f32.mrb[0].mxu0
        %3204 = vdwg.mxu0
        %v3205 = vld [vmem:[#allocation4 + $0x2] sm:$0xff]
        %v3206 = vld [vmem:[#allocation4 + $0xa] sm:$0xff]
        %v3207 = vld [vmem:[#allocation4 + $0x12] sm:$0xff]
        %v3208 = vld [vmem:[#allocation4 + $0x1a] sm:$0x1]
        %v3209 = vpack.c.bf16 %v3206, %v3205
        %v3210 = vpack.c.bf16 %v3208, %v3207
        %s3211 = scalar_lea.vmem %s3, 128
        %v3212 = vld [vmem:[%s3211] sm:$0xf]
        %v3213 = vld [vmem:[%s3211 + $0x4] sm:$0xf]
        %v3214 = vld [vmem:[%s3211 + $0x8] sm:$0xf]
        %v3215 = vld [vmem:[%s3211 + $0xc] sm:$0xf]
        %v3216 = vld [vmem:[%s3211 + $0x10] sm:$0xf]
        %v3217 = vld [vmem:[%s3211 + $0x14] sm:$0xf]
        %v3218 = vld [vmem:[%s3211 + $0x18] sm:$0xf]
        %v3219 = vld [vmem:[%s3211 + $0x1c] sm:$0xf]
        %v3220 = vld [vmem:[%s3211 + $0x20] sm:$0xf]
        %v3221 = vld [vmem:[%s3211 + $0x24] sm:$0xf]
        %v3222 = vld [vmem:[%s3211 + $0x28] sm:$0xf]
        %v3223 = vld [vmem:[%s3211 + $0x2c] sm:$0xf]
        %v3224 = vld [vmem:[%s3211 + $0x30] sm:$0xf]
        %v3225 = vld [vmem:[%s3211 + $0x34] sm:$0xf]
        %v3226 = vld [vmem:[%s3211 + $0x38] sm:$0xf]
        %v3227 = vld [vmem:[%s3211 + $0x3c] sm:$0xf]
        %v3244 = vunpack.c.l.b16 %v3212
        %v3245 = vunpack.c.l.b16 %v3213
        %v3246 = vunpack.c.l.b16 %v3214
        %v3247 = vunpack.c.l.b16 %v3215
        %v3248 = vunpack.c.l.b16 %v3216
        %v3249 = vunpack.c.l.b16 %v3217
        %v3250 = vunpack.c.l.b16 %v3218
        %v3251 = vunpack.c.l.b16 %v3219
        %v3252 = vunpack.c.l.b16 %v3220
        %v3253 = vunpack.c.l.b16 %v3221
        %v3254 = vunpack.c.l.b16 %v3222
        %v3255 = vunpack.c.l.b16 %v3223
        %v3256 = vunpack.c.l.b16 %v3224
        %v3257 = vunpack.c.l.b16 %v3225
        %v3258 = vunpack.c.l.b16 %v3226
        %v3259 = vunpack.c.l.b16 %v3227
        %v3260 = vpack.c.b16 %v3245, %v3244
        %v3261 = vpack.c.b16 %v3247, %v3246
        %v3262 = vpack.c.b16 %v3249, %v3248
        %v3263 = vpack.c.b16 %v3251, %v3250
        %v3264 = vpack.c.b16 %v3253, %v3252
        %v3265 = vpack.c.b16 %v3255, %v3254
        %v3266 = vpack.c.b16 %v3257, %v3256
        %v3267 = vpack.c.b16 %v3259, %v3258
        %3276 = vmatprep.subr.bf16.mxu0 0
        %3277 = vmatpush1.bf16.msra.mxu0 %v3260
        %3278 = vmatprep.subr.bf16.mxu0 0
        %3279 = vmatpush1.bf16.msra.mxu0 %v3261
        %3280 = vmatprep.subr.bf16.mxu0 0
        %3281 = vmatpush1.bf16.msra.mxu0 %v3262
        %3282 = vmatprep.subr.bf16.mxu0 0
        %3283 = vmatpush1.bf16.msra.mxu0 %v3263
        %3284 = vmatprep.subr.bf16.mxu0 0
        %3285 = vmatpush1.bf16.msra.mxu0 %v3264
        %3286 = vmatprep.subr.bf16.mxu0 0
        %3287 = vmatpush1.bf16.msra.mxu0 %v3265
        %3288 = vmatprep.subr.bf16.mxu0 0
        %3289 = vmatpush1.bf16.msra.mxu0 %v3266
        %3290 = vmatprep.subr.bf16.mxu0 0
        %3291 = vmatpush1.bf16.msra.mxu0 %v3267
        %3292 = vmatprep.subr.bf16.mxu0 0
        %3293 = vmatpush1.bf16.msra.mxu0 0
        %3294 = vmatprep.subr.bf16.mxu0 0
        %3295 = vmatpush1.bf16.msra.mxu0 0
        %3296 = vmatprep.subr.bf16.mxu0 0
        %3297 = vmatpush1.bf16.msra.mxu0 0
        %3298 = vmatprep.subr.bf16.mxu0 0
        %3299 = vmatpush1.bf16.msra.mxu0 0
        %3300 = vmatprep.subr.bf16.mxu0 0
        %3301 = vmatpush1.bf16.msra.mxu0 0
        %3302 = vmatprep.subr.bf16.mxu0 0
        %3303 = vmatpush1.bf16.msra.mxu0 0
        %3304 = vmatprep.subr.bf16.mxu0 0
        %3305 = vmatpush1.bf16.msra.mxu0 0
        %3306 = vmatprep.subr.bf16.mxu0 0
        %3307 = vmatpush1.bf16.msra.mxu0 0
        %3308 = vmatprep.mubr.bf16.mxu0 0
        %3309 = vmatmul.mubr.bf16.gmra.mrb[0].mxu0 %v3209
        %v3310 = vpop.f32.mrb[0].mxu0
        %v3311 = vadd.f32 0.0, %v3310
        %v3312 = vpop.f32.mrb[0].mxu0
        %v3313 = vpop.f32.mrb[0].mxu0
        %v3314 = vadd.f32 0.0, %v3313
        %v3315 = vpop.f32.mrb[0].mxu0
        %3316 = vmatprep.mubr.bf16.mxu0 0
        %3317 = vmatmul.mubr.bf16.gmra.mrb[0].mxu0 %v3210
        %v3318 = vpop.f32.mrb[0].mxu0
        %v3319 = vadd.f32 0.0, %v3318
        %v3320 = vpop.f32.mrb[0].mxu0
        %v3321 = vpop.f32.mrb[0].mxu0
        %v3322 = vadd.f32 0.0, %v3321
        %v3323 = vpop.f32.mrb[0].mxu0
        %3324 = vdwg.mxu0
        %v3325 = vadd.f32 %v3191, %v3311
        %v3326 = vadd.f32 %v3194, %v3314
        %v3327 = vadd.f32 %v3199, %v3319
        %v3328 = vadd.f32 %v3202, %v3322
        %v3329 = vld [vmem:[%s4] sm:$0x1]
        %v3331 = vlaneseq
        %v3332 = vshrl.u32 %v3331, 7
        %v3333 = vsub.s32 0, %v3332
        %v3334 = vrot.slane %v3329, %v3333
        %v3336 = vadd.f32 %v3325, %v3334
        %v3337 = vadd.f32 %v3326, %v3334
        %v3338 = vadd.f32 %v3327, %v3334
        %v3339 = vadd.f32 %v3328, %v3334
        %v3340 = vmax.f32 %v3336, 0.0
        %v3341 = vmax.f32 %v3337, 0.0
        %v3342 = vmax.f32 %v3338, 0.0
        %v3343 = vmax.f32 %v3339, 0.0
        %3344 = vst [vmem:[#allocation4] sm:$0x1] 0.0
        %3345 = vst [vmem:[#allocation4 + $0x1a] sm:$0x1] 0.0
        %3346 = vst [vmem:[#allocation4 + $0x1] sm:$0xff] %v3340
        %3347 = vst [vmem:[#allocation4 + $0x9] sm:$0xff] %v3341
        %3348 = vst [vmem:[#allocation4 + $0x11] sm:$0xff] %v3342
        %3349 = vst [vmem:[#allocation4 + $0x19] sm:$0x1] %v3343
        %v3350 = vld [vmem:[#allocation4] sm:$0xff]
        %v3351 = vld [vmem:[#allocation4 + $0x8] sm:$0xff]
        %v3352 = vld [vmem:[#allocation4 + $0x10] sm:$0xff]
        %v3353 = vld [vmem:[#allocation4 + $0x18] sm:$0x1]
        %v3354 = vpack.c.bf16 %v3351, %v3350
        %v3355 = vpack.c.bf16 %v3353, %v3352
        %v3356 = vld [vmem:[%s5] sm:$0xf]
        %v3357 = vld [vmem:[%s5 + $0x4] sm:$0xf]
        %v3358 = vld [vmem:[%s5 + $0x8] sm:$0xf]
        %v3359 = vld [vmem:[%s5 + $0xc] sm:$0xf]
        %v3360 = vld [vmem:[%s5 + $0x10] sm:$0xf]
        %v3361 = vld [vmem:[%s5 + $0x14] sm:$0xf]
        %v3362 = vld [vmem:[%s5 + $0x18] sm:$0xf]
        %v3363 = vld [vmem:[%s5 + $0x1c] sm:$0xf]
        %v3364 = vld [vmem:[%s5 + $0x20] sm:$0xf]
        %v3365 = vld [vmem:[%s5 + $0x24] sm:$0xf]
        %v3366 = vld [vmem:[%s5 + $0x28] sm:$0xf]
        %v3367 = vld [vmem:[%s5 + $0x2c] sm:$0xf]
        %v3368 = vld [vmem:[%s5 + $0x30] sm:$0xf]
        %v3369 = vld [vmem:[%s5 + $0x34] sm:$0xf]
        %v3370 = vld [vmem:[%s5 + $0x38] sm:$0xf]
        %v3371 = vld [vmem:[%s5 + $0x3c] sm:$0xf]
        %v3372 = vld [vmem:[#allocation4 + $0x1] sm:$0xff]
        %v3373 = vld [vmem:[#allocation4 + $0x9] sm:$0xff]
        %v3374 = vld [vmem:[#allocation4 + $0x11] sm:$0xff]
        %v3375 = vld [vmem:[#allocation4 + $0x19] sm:$0x1]
        %v3376 = vpack.c.bf16 %v3373, %v3372
        %v3377 = vpack.c.bf16 %v3375, %v3374
        %s3378 = scalar_lea.vmem %s5, 64
        %v3379 = vld [vmem:[%s3378] sm:$0xf]
        %v3380 = vld [vmem:[%s3378 + $0x4] sm:$0xf]
        %v3381 = vld [vmem:[%s3378 + $0x8] sm:$0xf]
        %v3382 = vld [vmem:[%s3378 + $0xc] sm:$0xf]
        %v3383 = vld [vmem:[%s3378 + $0x10] sm:$0xf]
        %v3384 = vld [vmem:[%s3378 + $0x14] sm:$0xf]
        %v3385 = vld [vmem:[%s3378 + $0x18] sm:$0xf]
        %v3386 = vld [vmem:[%s3378 + $0x1c] sm:$0xf]
        %v3387 = vld [vmem:[%s3378 + $0x20] sm:$0xf]
        %v3388 = vld [vmem:[%s3378 + $0x24] sm:$0xf]
        %v3389 = vld [vmem:[%s3378 + $0x28] sm:$0xf]
        %v3390 = vld [vmem:[%s3378 + $0x2c] sm:$0xf]
        %v3391 = vld [vmem:[%s3378 + $0x30] sm:$0xf]
        %v3392 = vld [vmem:[%s3378 + $0x34] sm:$0xf]
        %v3393 = vld [vmem:[%s3378 + $0x38] sm:$0xf]
        %v3394 = vld [vmem:[%s3378 + $0x3c] sm:$0xf]
        %v3411 = vunpack.c.l.b16 %v3379
        %v3412 = vunpack.c.l.b16 %v3380
        %v3413 = vunpack.c.l.b16 %v3381
        %v3414 = vunpack.c.l.b16 %v3382
        %v3415 = vunpack.c.l.b16 %v3383
        %v3416 = vunpack.c.l.b16 %v3384
        %v3417 = vunpack.c.l.b16 %v3385
        %v3418 = vunpack.c.l.b16 %v3386
        %v3419 = vunpack.c.l.b16 %v3387
        %v3420 = vunpack.c.l.b16 %v3388
        %v3421 = vunpack.c.l.b16 %v3389
        %v3422 = vunpack.c.l.b16 %v3390
        %v3423 = vunpack.c.l.b16 %v3391
        %v3424 = vunpack.c.l.b16 %v3392
        %v3425 = vunpack.c.l.b16 %v3393
        %v3426 = vunpack.c.l.b16 %v3394
        %v3427 = vpack.c.b16 %v3412, %v3411
        %v3428 = vpack.c.b16 %v3414, %v3413
        %v3429 = vpack.c.b16 %v3416, %v3415
        %v3430 = vpack.c.b16 %v3418, %v3417
        %v3431 = vpack.c.b16 %v3420, %v3419
        %v3432 = vpack.c.b16 %v3422, %v3421
        %v3433 = vpack.c.b16 %v3424, %v3423
        %v3434 = vpack.c.b16 %v3426, %v3425
        %3443 = vmatprep.subr.bf16.mxu0 0
        %3444 = vmatpush1.bf16.msra.mxu0 %v3427
        %3445 = vmatprep.subr.bf16.mxu0 0
        %3446 = vmatpush1.bf16.msra.mxu0 %v3428
        %3447 = vmatprep.subr.bf16.mxu0 0
        %3448 = vmatpush1.bf16.msra.mxu0 %v3429
        %3449 = vmatprep.subr.bf16.mxu0 0
        %3450 = vmatpush1.bf16.msra.mxu0 %v3430
        %3451 = vmatprep.subr.bf16.mxu0 0
        %3452 = vmatpush1.bf16.msra.mxu0 %v3431
        %3453 = vmatprep.subr.bf16.mxu0 0
        %3454 = vmatpush1.bf16.msra.mxu0 %v3432
        %3455 = vmatprep.subr.bf16.mxu0 0
        %3456 = vmatpush1.bf16.msra.mxu0 %v3433
        %3457 = vmatprep.subr.bf16.mxu0 0
        %3458 = vmatpush1.bf16.msra.mxu0 %v3434
        %3459 = vmatprep.subr.bf16.mxu0 0
        %3460 = vmatpush1.bf16.msra.mxu0 0
        %3461 = vmatprep.subr.bf16.mxu0 0
        %3462 = vmatpush1.bf16.msra.mxu0 0
        %3463 = vmatprep.subr.bf16.mxu0 0
        %3464 = vmatpush1.bf16.msra.mxu0 0
        %3465 = vmatprep.subr.bf16.mxu0 0
        %3466 = vmatpush1.bf16.msra.mxu0 0
        %3467 = vmatprep.subr.bf16.mxu0 0
        %3468 = vmatpush1.bf16.msra.mxu0 0
        %3469 = vmatprep.subr.bf16.mxu0 0
        %3470 = vmatpush1.bf16.msra.mxu0 0
        %3471 = vmatprep.subr.bf16.mxu0 0
        %3472 = vmatpush1.bf16.msra.mxu0 0
        %3473 = vmatprep.subr.bf16.mxu0 0
        %3474 = vmatpush1.bf16.msra.mxu0 0
        %3475 = vmatprep.mubr.bf16.mxu0 0
        %3476 = vmatmul.mubr.bf16.gmra.mrb[0].mxu0 %v3376
        %v3477 = vpop.f32.mrb[0].mxu0
        %v3478 = vadd.f32 0.0, %v3477
        %v3479 = vpop.f32.mrb[0].mxu0
        %v3480 = vpop.f32.mrb[0].mxu0
        %v3481 = vadd.f32 0.0, %v3480
        %v3482 = vpop.f32.mrb[0].mxu0
        %3483 = vmatprep.mubr.bf16.mxu0 0
        %3484 = vmatmul.mubr.bf16.gmra.mrb[0].mxu0 %v3377
        %v3485 = vpop.f32.mrb[0].mxu0
        %v3486 = vadd.f32 0.0, %v3485
        %v3487 = vpop.f32.mrb[0].mxu0
        %v3488 = vpop.f32.mrb[0].mxu0
        %v3489 = vadd.f32 0.0, %v3488
        %v3490 = vpop.f32.mrb[0].mxu0
        %3491 = vdwg.mxu0
        %v3508 = vunpack.c.l.b16 %v3356
        %v3509 = vunpack.c.l.b16 %v3357
        %v3510 = vunpack.c.l.b16 %v3358
        %v3511 = vunpack.c.l.b16 %v3359
        %v3512 = vunpack.c.l.b16 %v3360
        %v3513 = vunpack.c.l.b16 %v3361
        %v3514 = vunpack.c.l.b16 %v3362
        %v3515 = vunpack.c.l.b16 %v3363
        %v3516 = vunpack.c.l.b16 %v3364
        %v3517 = vunpack.c.l.b16 %v3365
        %v3518 = vunpack.c.l.b16 %v3366
        %v3519 = vunpack.c.l.b16 %v3367
        %v3520 = vunpack.c.l.b16 %v3368
        %v3521 = vunpack.c.l.b16 %v3369
        %v3522 = vunpack.c.l.b16 %v3370
        %v3523 = vunpack.c.l.b16 %v3371
        %v3524 = vpack.c.b16 %v3509, %v3508
        %v3525 = vpack.c.b16 %v3511, %v3510
        %v3526 = vpack.c.b16 %v3513, %v3512
        %v3527 = vpack.c.b16 %v3515, %v3514
        %v3528 = vpack.c.b16 %v3517, %v3516
        %v3529 = vpack.c.b16 %v3519, %v3518
        %v3530 = vpack.c.b16 %v3521, %v3520
        %v3531 = vpack.c.b16 %v3523, %v3522
        %3540 = vmatprep.subr.bf16.mxu0 0
        %3541 = vmatpush1.bf16.msra.mxu0 %v3524
        %3542 = vmatprep.subr.bf16.mxu0 0
        %3543 = vmatpush1.bf16.msra.mxu0 %v3525
        %3544 = vmatprep.subr.bf16.mxu0 0
        %3545 = vmatpush1.bf16.msra.mxu0 %v3526
        %3546 = vmatprep.subr.bf16.mxu0 0
        %3547 = vmatpush1.bf16.msra.mxu0 %v3527
        %3548 = vmatprep.subr.bf16.mxu0 0
        %3549 = vmatpush1.bf16.msra.mxu0 %v3528
        %3550 = vmatprep.subr.bf16.mxu0 0
        %3551 = vmatpush1.bf16.msra.mxu0 %v3529
        %3552 = vmatprep.subr.bf16.mxu0 0
        %3553 = vmatpush1.bf16.msra.mxu0 %v3530
        %3554 = vmatprep.subr.bf16.mxu0 0
        %3555 = vmatpush1.bf16.msra.mxu0 %v3531
        %3556 = vmatprep.subr.bf16.mxu0 0
        %3557 = vmatpush1.bf16.msra.mxu0 0
        %3558 = vmatprep.subr.bf16.mxu0 0
        %3559 = vmatpush1.bf16.msra.mxu0 0
        %3560 = vmatprep.subr.bf16.mxu0 0
        %3561 = vmatpush1.bf16.msra.mxu0 0
        %3562 = vmatprep.subr.bf16.mxu0 0
        %3563 = vmatpush1.bf16.msra.mxu0 0
        %3564 = vmatprep.subr.bf16.mxu0 0
        %3565 = vmatpush1.bf16.msra.mxu0 0
        %3566 = vmatprep.subr.bf16.mxu0 0
        %3567 = vmatpush1.bf16.msra.mxu0 0
        %3568 = vmatprep.subr.bf16.mxu0 0
        %3569 = vmatpush1.bf16.msra.mxu0 0
        %3570 = vmatprep.subr.bf16.mxu0 0
        %3571 = vmatpush1.bf16.msra.mxu0 0
        %3572 = vmatprep.mubr.bf16.mxu0 0
        %3573 = vmatmul.mubr.bf16.gmra.mrb[0].mxu0 %v3354
        %v3574 = vpop.f32.mrb[0].mxu0
        %v3575 = vadd.f32 %v3478, %v3574
        %v3576 = vpop.f32.mrb[0].mxu0
        %v3577 = vpop.f32.mrb[0].mxu0
        %v3578 = vadd.f32 %v3481, %v3577
        %v3579 = vpop.f32.mrb[0].mxu0
        %3580 = vmatprep.mubr.bf16.mxu0 0
        %3581 = vmatmul.mubr.bf16.gmra.mrb[0].mxu0 %v3355
        %v3582 = vpop.f32.mrb[0].mxu0
        %v3583 = vadd.f32 %v3486, %v3582
        %v3584 = vpop.f32.mrb[0].mxu0
        %v3585 = vpop.f32.mrb[0].mxu0
        %v3586 = vadd.f32 %v3489, %v3585
        %v3587 = vpop.f32.mrb[0].mxu0
        %3588 = vdwg.mxu0
        %v3589 = vld [vmem:[#allocation4 + $0x2] sm:$0xff]
        %v3590 = vld [vmem:[#allocation4 + $0xa] sm:$0xff]
        %v3591 = vld [vmem:[#allocation4 + $0x12] sm:$0xff]
        %v3592 = vld [vmem:[#allocation4 + $0x1a] sm:$0x1]
        %v3593 = vpack.c.bf16 %v3590, %v3589
        %v3594 = vpack.c.bf16 %v3592, %v3591
        %s3595 = scalar_lea.vmem %s5, 128
        %v3596 = vld [vmem:[%s3595] sm:$0xf]
        %v3597 = vld [vmem:[%s3595 + $0x4] sm:$0xf]
        %v3598 = vld [vmem:[%s3595 + $0x8] sm:$0xf]
        %v3599 = vld [vmem:[%s3595 + $0xc] sm:$0xf]
        %v3600 = vld [vmem:[%s3595 + $0x10] sm:$0xf]
        %v3601 = vld [vmem:[%s3595 + $0x14] sm:$0xf]
        %v3602 = vld [vmem:[%s3595 + $0x18] sm:$0xf]
        %v3603 = vld [vmem:[%s3595 + $0x1c] sm:$0xf]
        %v3604 = vld [vmem:[%s3595 + $0x20] sm:$0xf]
        %v3605 = vld [vmem:[%s3595 + $0x24] sm:$0xf]
        %v3606 = vld [vmem:[%s3595 + $0x28] sm:$0xf]
        %v3607 = vld [vmem:[%s3595 + $0x2c] sm:$0xf]
        %v3608 = vld [vmem:[%s3595 + $0x30] sm:$0xf]
        %v3609 = vld [vmem:[%s3595 + $0x34] sm:$0xf]
        %v3610 = vld [vmem:[%s3595 + $0x38] sm:$0xf]
        %v3611 = vld [vmem:[%s3595 + $0x3c] sm:$0xf]
        %v3628 = vunpack.c.l.b16 %v3596
        %v3629 = vunpack.c.l.b16 %v3597
        %v3630 = vunpack.c.l.b16 %v3598
        %v3631 = vunpack.c.l.b16 %v3599
        %v3632 = vunpack.c.l.b16 %v3600
        %v3633 = vunpack.c.l.b16 %v3601
        %v3634 = vunpack.c.l.b16 %v3602
        %v3635 = vunpack.c.l.b16 %v3603
        %v3636 = vunpack.c.l.b16 %v3604
        %v3637 = vunpack.c.l.b16 %v3605
        %v3638 = vunpack.c.l.b16 %v3606
        %v3639 = vunpack.c.l.b16 %v3607
        %v3640 = vunpack.c.l.b16 %v3608
        %v3641 = vunpack.c.l.b16 %v3609
        %v3642 = vunpack.c.l.b16 %v3610
        %v3643 = vunpack.c.l.b16 %v3611
        %v3644 = vpack.c.b16 %v3629, %v3628
        %v3645 = vpack.c.b16 %v3631, %v3630
        %v3646 = vpack.c.b16 %v3633, %v3632
        %v3647 = vpack.c.b16 %v3635, %v3634
        %v3648 = vpack.c.b16 %v3637, %v3636
        %v3649 = vpack.c.b16 %v3639, %v3638
        %v3650 = vpack.c.b16 %v3641, %v3640
        %v3651 = vpack.c.b16 %v3643, %v3642
        %3660 = vmatprep.subr.bf16.mxu0 0
        %3661 = vmatpush1.bf16.msra.mxu0 %v3644
        %3662 = vmatprep.subr.bf16.mxu0 0
        %3663 = vmatpush1.bf16.msra.mxu0 %v3645
        %3664 = vmatprep.subr.bf16.mxu0 0
        %3665 = vmatpush1.bf16.msra.mxu0 %v3646
        %3666 = vmatprep.subr.bf16.mxu0 0
        %3667 = vmatpush1.bf16.msra.mxu0 %v3647
        %3668 = vmatprep.subr.bf16.mxu0 0
        %3669 = vmatpush1.bf16.msra.mxu0 %v3648
        %3670 = vmatprep.subr.bf16.mxu0 0
        %3671 = vmatpush1.bf16.msra.mxu0 %v3649
        %3672 = vmatprep.subr.bf16.mxu0 0
        %3673 = vmatpush1.bf16.msra.mxu0 %v3650
        %3674 = vmatprep.subr.bf16.mxu0 0
        %3675 = vmatpush1.bf16.msra.mxu0 %v3651
        %3676 = vmatprep.subr.bf16.mxu0 0
        %3677 = vmatpush1.bf16.msra.mxu0 0
        %3678 = vmatprep.subr.bf16.mxu0 0
        %3679 = vmatpush1.bf16.msra.mxu0 0
        %3680 = vmatprep.subr.bf16.mxu0 0
        %3681 = vmatpush1.bf16.msra.mxu0 0
        %3682 = vmatprep.subr.bf16.mxu0 0
        %3683 = vmatpush1.bf16.msra.mxu0 0
        %3684 = vmatprep.subr.bf16.mxu0 0
        %3685 = vmatpush1.bf16.msra.mxu0 0
        %3686 = vmatprep.subr.bf16.mxu0 0
        %3687 = vmatpush1.bf16.msra.mxu0 0
        %3688 = vmatprep.subr.bf16.mxu0 0
        %3689 = vmatpush1.bf16.msra.mxu0 0
        %3690 = vmatprep.subr.bf16.mxu0 0
        %3691 = vmatpush1.bf16.msra.mxu0 0
        %3692 = vmatprep.mubr.bf16.mxu0 0
        %3693 = vmatmul.mubr.bf16.gmra.mrb[0].mxu0 %v3593
        %v3694 = vpop.f32.mrb[0].mxu0
        %v3695 = vadd.f32 0.0, %v3694
        %v3696 = vpop.f32.mrb[0].mxu0
        %v3697 = vpop.f32.mrb[0].mxu0
        %v3698 = vadd.f32 0.0, %v3697
        %v3699 = vpop.f32.mrb[0].mxu0
        %3700 = vmatprep.mubr.bf16.mxu0 0
        %3701 = vmatmul.mubr.bf16.gmra.mrb[0].mxu0 %v3594
        %v3702 = vpop.f32.mrb[0].mxu0
        %v3703 = vadd.f32 0.0, %v3702
        %v3704 = vpop.f32.mrb[0].mxu0
        %v3705 = vpop.f32.mrb[0].mxu0
        %v3706 = vadd.f32 0.0, %v3705
        %v3707 = vpop.f32.mrb[0].mxu0
        %3708 = vdwg.mxu0
        %v3709 = vadd.f32 %v3575, %v3695
        %v3710 = vadd.f32 %v3578, %v3698
        %v3711 = vadd.f32 %v3583, %v3703
        %v3712 = vadd.f32 %v3586, %v3706
        %v3713 = vld [vmem:[%s6] sm:$0x1]
        %v3715 = vlaneseq
        %v3716 = vshrl.u32 %v3715, 7
        %v3717 = vsub.s32 0, %v3716
        %v3718 = vrot.slane %v3713, %v3717
        %v3720 = vadd.f32 %v3709, %v3718
        %v3721 = vadd.f32 %v3710, %v3718
        %v3722 = vadd.f32 %v3711, %v3718
        %v3723 = vadd.f32 %v3712, %v3718
        %v3724 = vadd.f32 %v3720, %v2942
        %v3725 = vadd.f32 %v3721, %v2947
        %v3726 = vadd.f32 %v3722, %v2952
        %v3727 = vadd.f32 %v3723, %v2957
        %v3728 = vmax.f32 %v3724, 0.0
        %v3729 = vmax.f32 %v3725, 0.0
        %v3730 = vmax.f32 %v3726, 0.0
        %v3731 = vmax.f32 %v3727, 0.0
        %3732 = vst [vmem:[#allocation4] sm:$0x1] 0.0
        %3733 = vst [vmem:[#allocation4 + $0x1a] sm:$0x1] 0.0
        %3734 = vst [vmem:[#allocation4 + $0x1] sm:$0xff] %v3728
        %3735 = vst [vmem:[#allocation4 + $0x9] sm:$0xff] %v3729
        %3736 = vst [vmem:[#allocation4 + $0x11] sm:$0xff] %v3730
        %3737 = vst [vmem:[#allocation4 + $0x19] sm:$0x1] %v3731
        %v3738 = vld [vmem:[#allocation4] sm:$0xff]
        %v3739 = vld [vmem:[#allocation4 + $0x8] sm:$0xff]
        %v3740 = vld [vmem:[#allocation4 + $0x10] sm:$0xff]
        %v3741 = vld [vmem:[#allocation4 + $0x18] sm:$0x1]
        %v3742 = vpack.c.bf16 %v3739, %v3738
        %v3743 = vpack.c.bf16 %v3741, %v3740
        %v3744 = vld [vmem:[%s7] sm:$0xf]
        %v3745 = vld [vmem:[%s7 + $0x4] sm:$0xf]
        %v3746 = vld [vmem:[%s7 + $0x8] sm:$0xf]
        %v3747 = vld [vmem:[%s7 + $0xc] sm:$0xf]
        %v3748 = vld [vmem:[%s7 + $0x10] sm:$0xf]
        %v3749 = vld [vmem:[%s7 + $0x14] sm:$0xf]
        %v3750 = vld [vmem:[%s7 + $0x18] sm:$0xf]
        %v3751 = vld [vmem:[%s7 + $0x1c] sm:$0xf]
        %v3752 = vld [vmem:[%s7 + $0x20] sm:$0xf]
        %v3753 = vld [vmem:[%s7 + $0x24] sm:$0xf]
        %v3754 = vld [vmem:[%s7 + $0x28] sm:$0xf]
        %v3755 = vld [vmem:[%s7 + $0x2c] sm:$0xf]
        %v3756 = vld [vmem:[%s7 + $0x30] sm:$0xf]
        %v3757 = vld [vmem:[%s7 + $0x34] sm:$0xf]
        %v3758 = vld [vmem:[%s7 + $0x38] sm:$0xf]
        %v3759 = vld [vmem:[%s7 + $0x3c] sm:$0xf]
        %v3760 = vld [vmem:[#allocation4 + $0x1] sm:$0xff]
        %v3761 = vld [vmem:[#allocation4 + $0x9] sm:$0xff]
        %v3762 = vld [vmem:[#allocation4 + $0x11] sm:$0xff]
        %v3763 = vld [vmem:[#allocation4 + $0x19] sm:$0x1]
        %v3764 = vpack.c.bf16 %v3761, %v3760
        %v3765 = vpack.c.bf16 %v3763, %v3762
        %s3766 = scalar_lea.vmem %s7, 64
        %v3767 = vld [vmem:[%s3766] sm:$0xf]
        %v3768 = vld [vmem:[%s3766 + $0x4] sm:$0xf]
        %v3769 = vld [vmem:[%s3766 + $0x8] sm:$0xf]
        %v3770 = vld [vmem:[%s3766 + $0xc] sm:$0xf]
        %v3771 = vld [vmem:[%s3766 + $0x10] sm:$0xf]
        %v3772 = vld [vmem:[%s3766 + $0x14] sm:$0xf]
        %v3773 = vld [vmem:[%s3766 + $0x18] sm:$0xf]
        %v3774 = vld [vmem:[%s3766 + $0x1c] sm:$0xf]
        %v3775 = vld [vmem:[%s3766 + $0x20] sm:$0xf]
        %v3776 = vld [vmem:[%s3766 + $0x24] sm:$0xf]
        %v3777 = vld [vmem:[%s3766 + $0x28] sm:$0xf]
        %v3778 = vld [vmem:[%s3766 + $0x2c] sm:$0xf]
        %v3779 = vld [vmem:[%s3766 + $0x30] sm:$0xf]
        %v3780 = vld [vmem:[%s3766 + $0x34] sm:$0xf]
        %v3781 = vld [vmem:[%s3766 + $0x38] sm:$0xf]
        %v3782 = vld [vmem:[%s3766 + $0x3c] sm:$0xf]
        %v3799 = vunpack.c.l.b16 %v3767
        %v3800 = vunpack.c.l.b16 %v3768
        %v3801 = vunpack.c.l.b16 %v3769
        %v3802 = vunpack.c.l.b16 %v3770
        %v3803 = vunpack.c.l.b16 %v3771
        %v3804 = vunpack.c.l.b16 %v3772
        %v3805 = vunpack.c.l.b16 %v3773
        %v3806 = vunpack.c.l.b16 %v3774
        %v3807 = vunpack.c.l.b16 %v3775
        %v3808 = vunpack.c.l.b16 %v3776
        %v3809 = vunpack.c.l.b16 %v3777
        %v3810 = vunpack.c.l.b16 %v3778
        %v3811 = vunpack.c.l.b16 %v3779
        %v3812 = vunpack.c.l.b16 %v3780
        %v3813 = vunpack.c.l.b16 %v3781
        %v3814 = vunpack.c.l.b16 %v3782
        %v3815 = vpack.c.b16 %v3800, %v3799
        %v3816 = vpack.c.b16 %v3802, %v3801
        %v3817 = vpack.c.b16 %v3804, %v3803
        %v3818 = vpack.c.b16 %v3806, %v3805
        %v3819 = vpack.c.b16 %v3808, %v3807
        %v3820 = vpack.c.b16 %v3810, %v3809
        %v3821 = vpack.c.b16 %v3812, %v3811
        %v3822 = vpack.c.b16 %v3814, %v3813
        %3831 = vmatprep.subr.bf16.mxu0 0
        %3832 = vmatpush1.bf16.msra.mxu0 %v3815
        %3833 = vmatprep.subr.bf16.mxu0 0
        %3834 = vmatpush1.bf16.msra.mxu0 %v3816
        %3835 = vmatprep.subr.bf16.mxu0 0
        %3836 = vmatpush1.bf16.msra.mxu0 %v3817
        %3837 = vmatprep.subr.bf16.mxu0 0
        %3838 = vmatpush1.bf16.msra.mxu0 %v3818
        %3839 = vmatprep.subr.bf16.mxu0 0
        %3840 = vmatpush1.bf16.msra.mxu0 %v3819
        %3841 = vmatprep.subr.bf16.mxu0 0
        %3842 = vmatpush1.bf16.msra.mxu0 %v3820
        %3843 = vmatprep.subr.bf16.mxu0 0
        %3844 = vmatpush1.bf16.msra.mxu0 %v3821
        %3845 = vmatprep.subr.bf16.mxu0 0
        %3846 = vmatpush1.bf16.msra.mxu0 %v3822
        %3847 = vmatprep.subr.bf16.mxu0 0
        %3848 = vmatpush1.bf16.msra.mxu0 0
        %3849 = vmatprep.subr.bf16.mxu0 0
        %3850 = vmatpush1.bf16.msra.mxu0 0
        %3851 = vmatprep.subr.bf16.mxu0 0
        %3852 = vmatpush1.bf16.msra.mxu0 0
        %3853 = vmatprep.subr.bf16.mxu0 0
        %3854 = vmatpush1.bf16.msra.mxu0 0
        %3855 = vmatprep.subr.bf16.mxu0 0
        %3856 = vmatpush1.bf16.msra.mxu0 0
        %3857 = vmatprep.subr.bf16.mxu0 0
        %3858 = vmatpush1.bf16.msra.mxu0 0
        %3859 = vmatprep.subr.bf16.mxu0 0
        %3860 = vmatpush1.bf16.msra.mxu0 0
        %3861 = vmatprep.subr.bf16.mxu0 0
        %3862 = vmatpush1.bf16.msra.mxu0 0
        %3863 = vmatprep.mubr.bf16.mxu0 0
        %3864 = vmatmul.mubr.bf16.gmra.mrb[0].mxu0 %v3764
        %v3865 = vpop.f32.mrb[0].mxu0
        %v3866 = vadd.f32 0.0, %v3865
        %v3867 = vpop.f32.mrb[0].mxu0
        %v3868 = vpop.f32.mrb[0].mxu0
        %v3869 = vadd.f32 0.0, %v3868
        %v3870 = vpop.f32.mrb[0].mxu0
        %3871 = vmatprep.mubr.bf16.mxu0 0
        %3872 = vmatmul.mubr.bf16.gmra.mrb[0].mxu0 %v3765
        %v3873 = vpop.f32.mrb[0].mxu0
        %v3874 = vadd.f32 0.0, %v3873
        %v3875 = vpop.f32.mrb[0].mxu0
        %v3876 = vpop.f32.mrb[0].mxu0
        %v3877 = vadd.f32 0.0, %v3876
        %v3878 = vpop.f32.mrb[0].mxu0
        %3879 = vdwg.mxu0
        %v3896 = vunpack.c.l.b16 %v3744
        %v3897 = vunpack.c.l.b16 %v3745
        %v3898 = vunpack.c.l.b16 %v3746
        %v3899 = vunpack.c.l.b16 %v3747
        %v3900 = vunpack.c.l.b16 %v3748
        %v3901 = vunpack.c.l.b16 %v3749
        %v3902 = vunpack.c.l.b16 %v3750
        %v3903 = vunpack.c.l.b16 %v3751
        %v3904 = vunpack.c.l.b16 %v3752
        %v3905 = vunpack.c.l.b16 %v3753
        %v3906 = vunpack.c.l.b16 %v3754
        %v3907 = vunpack.c.l.b16 %v3755
        %v3908 = vunpack.c.l.b16 %v3756
        %v3909 = vunpack.c.l.b16 %v3757
        %v3910 = vunpack.c.l.b16 %v3758
        %v3911 = vunpack.c.l.b16 %v3759
        %v3912 = vpack.c.b16 %v3897, %v3896
        %v3913 = vpack.c.b16 %v3899, %v3898
        %v3914 = vpack.c.b16 %v3901, %v3900
        %v3915 = vpack.c.b16 %v3903, %v3902
        %v3916 = vpack.c.b16 %v3905, %v3904
        %v3917 = vpack.c.b16 %v3907, %v3906
        %v3918 = vpack.c.b16 %v3909, %v3908
        %v3919 = vpack.c.b16 %v3911, %v3910
        %3928 = vmatprep.subr.bf16.mxu0 0
        %3929 = vmatpush1.bf16.msra.mxu0 %v3912
        %3930 = vmatprep.subr.bf16.mxu0 0
        %3931 = vmatpush1.bf16.msra.mxu0 %v3913
        %3932 = vmatprep.subr.bf16.mxu0 0
        %3933 = vmatpush1.bf16.msra.mxu0 %v3914
        %3934 = vmatprep.subr.bf16.mxu0 0
        %3935 = vmatpush1.bf16.msra.mxu0 %v3915
        %3936 = vmatprep.subr.bf16.mxu0 0
        %3937 = vmatpush1.bf16.msra.mxu0 %v3916
        %3938 = vmatprep.subr.bf16.mxu0 0
        %3939 = vmatpush1.bf16.msra.mxu0 %v3917
        %3940 = vmatprep.subr.bf16.mxu0 0
        %3941 = vmatpush1.bf16.msra.mxu0 %v3918
        %3942 = vmatprep.subr.bf16.mxu0 0
        %3943 = vmatpush1.bf16.msra.mxu0 %v3919
        %3944 = vmatprep.subr.bf16.mxu0 0
        %3945 = vmatpush1.bf16.msra.mxu0 0
        %3946 = vmatprep.subr.bf16.mxu0 0
        %3947 = vmatpush1.bf16.msra.mxu0 0
        %3948 = vmatprep.subr.bf16.mxu0 0
        %3949 = vmatpush1.bf16.msra.mxu0 0
        %3950 = vmatprep.subr.bf16.mxu0 0
        %3951 = vmatpush1.bf16.msra.mxu0 0
        %3952 = vmatprep.subr.bf16.mxu0 0
        %3953 = vmatpush1.bf16.msra.mxu0 0
        %3954 = vmatprep.subr.bf16.mxu0 0
        %3955 = vmatpush1.bf16.msra.mxu0 0
        %3956 = vmatprep.subr.bf16.mxu0 0
        %3957 = vmatpush1.bf16.msra.mxu0 0
        %3958 = vmatprep.subr.bf16.mxu0 0
        %3959 = vmatpush1.bf16.msra.mxu0 0
        %3960 = vmatprep.mubr.bf16.mxu0 0
        %3961 = vmatmul.mubr.bf16.gmra.mrb[0].mxu0 %v3742
        %v3962 = vpop.f32.mrb[0].mxu0
        %v3963 = vadd.f32 %v3866, %v3962
        %v3964 = vpop.f32.mrb[0].mxu0
        %v3965 = vpop.f32.mrb[0].mxu0
        %v3966 = vadd.f32 %v3869, %v3965
        %v3967 = vpop.f32.mrb[0].mxu0
        %3968 = vmatprep.mubr.bf16.mxu0 0
        %3969 = vmatmul.mubr.bf16.gmra.mrb[0].mxu0 %v3743
        %v3970 = vpop.f32.mrb[0].mxu0
        %v3971 = vadd.f32 %v3874, %v3970
        %v3972 = vpop.f32.mrb[0].mxu0
        %v3973 = vpop.f32.mrb[0].mxu0
        %v3974 = vadd.f32 %v3877, %v3973
        %v3975 = vpop.f32.mrb[0].mxu0
        %3976 = vdwg.mxu0
        %v3977 = vld [vmem:[#allocation4 + $0x2] sm:$0xff]
        %v3978 = vld [vmem:[#allocation4 + $0xa] sm:$0xff]
        %v3979 = vld [vmem:[#allocation4 + $0x12] sm:$0xff]
        %v3980 = vld [vmem:[#allocation4 + $0x1a] sm:$0x1]
        %v3981 = vpack.c.bf16 %v3978, %v3977
        %v3982 = vpack.c.bf16 %v3980, %v3979
        %s3983 = scalar_lea.vmem %s7, 128
        %v3984 = vld [vmem:[%s3983] sm:$0xf]
        %v3985 = vld [vmem:[%s3983 + $0x4] sm:$0xf]
        %v3986 = vld [vmem:[%s3983 + $0x8] sm:$0xf]
        %v3987 = vld [vmem:[%s3983 + $0xc] sm:$0xf]
        %v3988 = vld [vmem:[%s3983 + $0x10] sm:$0xf]
        %v3989 = vld [vmem:[%s3983 + $0x14] sm:$0xf]
        %v3990 = vld [vmem:[%s3983 + $0x18] sm:$0xf]
        %v3991 = vld [vmem:[%s3983 + $0x1c] sm:$0xf]
        %v3992 = vld [vmem:[%s3983 + $0x20] sm:$0xf]
        %v3993 = vld [vmem:[%s3983 + $0x24] sm:$0xf]
        %v3994 = vld [vmem:[%s3983 + $0x28] sm:$0xf]
        %v3995 = vld [vmem:[%s3983 + $0x2c] sm:$0xf]
        %v3996 = vld [vmem:[%s3983 + $0x30] sm:$0xf]
        %v3997 = vld [vmem:[%s3983 + $0x34] sm:$0xf]
        %v3998 = vld [vmem:[%s3983 + $0x38] sm:$0xf]
        %v3999 = vld [vmem:[%s3983 + $0x3c] sm:$0xf]
        %v4016 = vunpack.c.l.b16 %v3984
        %v4017 = vunpack.c.l.b16 %v3985
        %v4018 = vunpack.c.l.b16 %v3986
        %v4019 = vunpack.c.l.b16 %v3987
        %v4020 = vunpack.c.l.b16 %v3988
        %v4021 = vunpack.c.l.b16 %v3989
        %v4022 = vunpack.c.l.b16 %v3990
        %v4023 = vunpack.c.l.b16 %v3991
        %v4024 = vunpack.c.l.b16 %v3992
        %v4025 = vunpack.c.l.b16 %v3993
        %v4026 = vunpack.c.l.b16 %v3994
        %v4027 = vunpack.c.l.b16 %v3995
        %v4028 = vunpack.c.l.b16 %v3996
        %v4029 = vunpack.c.l.b16 %v3997
        %v4030 = vunpack.c.l.b16 %v3998
        %v4031 = vunpack.c.l.b16 %v3999
        %v4032 = vpack.c.b16 %v4017, %v4016
        %v4033 = vpack.c.b16 %v4019, %v4018
        %v4034 = vpack.c.b16 %v4021, %v4020
        %v4035 = vpack.c.b16 %v4023, %v4022
        %v4036 = vpack.c.b16 %v4025, %v4024
        %v4037 = vpack.c.b16 %v4027, %v4026
        %v4038 = vpack.c.b16 %v4029, %v4028
        %v4039 = vpack.c.b16 %v4031, %v4030
        %4048 = vmatprep.subr.bf16.mxu0 0
        %4049 = vmatpush1.bf16.msra.mxu0 %v4032
        %4050 = vmatprep.subr.bf16.mxu0 0
        %4051 = vmatpush1.bf16.msra.mxu0 %v4033
        %4052 = vmatprep.subr.bf16.mxu0 0
        %4053 = vmatpush1.bf16.msra.mxu0 %v4034
        %4054 = vmatprep.subr.bf16.mxu0 0
        %4055 = vmatpush1.bf16.msra.mxu0 %v4035
        %4056 = vmatprep.subr.bf16.mxu0 0
        %4057 = vmatpush1.bf16.msra.mxu0 %v4036
        %4058 = vmatprep.subr.bf16.mxu0 0
        %4059 = vmatpush1.bf16.msra.mxu0 %v4037
        %4060 = vmatprep.subr.bf16.mxu0 0
        %4061 = vmatpush1.bf16.msra.mxu0 %v4038
        %4062 = vmatprep.subr.bf16.mxu0 0
        %4063 = vmatpush1.bf16.msra.mxu0 %v4039
        %4064 = vmatprep.subr.bf16.mxu0 0
        %4065 = vmatpush1.bf16.msra.mxu0 0
        %4066 = vmatprep.subr.bf16.mxu0 0
        %4067 = vmatpush1.bf16.msra.mxu0 0
        %4068 = vmatprep.subr.bf16.mxu0 0
        %4069 = vmatpush1.bf16.msra.mxu0 0
        %4070 = vmatprep.subr.bf16.mxu0 0
        %4071 = vmatpush1.bf16.msra.mxu0 0
        %4072 = vmatprep.subr.bf16.mxu0 0
        %4073 = vmatpush1.bf16.msra.mxu0 0
        %4074 = vmatprep.subr.bf16.mxu0 0
        %4075 = vmatpush1.bf16.msra.mxu0 0
        %4076 = vmatprep.subr.bf16.mxu0 0
        %4077 = vmatpush1.bf16.msra.mxu0 0
        %4078 = vmatprep.subr.bf16.mxu0 0
        %4079 = vmatpush1.bf16.msra.mxu0 0
        %4080 = vmatprep.mubr.bf16.mxu0 0
        %4081 = vmatmul.mubr.bf16.gmra.mrb[0].mxu0 %v3981
        %v4082 = vpop.f32.mrb[0].mxu0
        %v4083 = vadd.f32 0.0, %v4082
        %v4084 = vpop.f32.mrb[0].mxu0
        %v4085 = vpop.f32.mrb[0].mxu0
        %v4086 = vadd.f32 0.0, %v4085
        %v4087 = vpop.f32.mrb[0].mxu0
        %4088 = vmatprep.mubr.bf16.mxu0 0
        %4089 = vmatmul.mubr.bf16.gmra.mrb[0].mxu0 %v3982
        %v4090 = vpop.f32.mrb[0].mxu0
        %v4091 = vadd.f32 0.0, %v4090
        %v4092 = vpop.f32.mrb[0].mxu0
        %v4093 = vpop.f32.mrb[0].mxu0
        %v4094 = vadd.f32 0.0, %v4093
        %v4095 = vpop.f32.mrb[0].mxu0
        %4096 = vdwg.mxu0
        %v4097 = vadd.f32 %v3963, %v4083
        %v4098 = vadd.f32 %v3966, %v4086
        %v4099 = vadd.f32 %v3971, %v4091
        %v4100 = vadd.f32 %v3974, %v4094
        %v4101 = vld [vmem:[%s8] sm:$0x1]
        %v4103 = vlaneseq
        %v4104 = vshrl.u32 %v4103, 7
        %v4105 = vsub.s32 0, %v4104
        %v4106 = vrot.slane %v4101, %v4105
        %v4108 = vadd.f32 %v4097, %v4106
        %v4109 = vadd.f32 %v4098, %v4106
        %v4110 = vadd.f32 %v4099, %v4106
        %v4111 = vadd.f32 %v4100, %v4106
        %v4112 = vmax.f32 %v4108, 0.0
        %v4113 = vmax.f32 %v4109, 0.0
        %v4114 = vmax.f32 %v4110, 0.0
        %v4115 = vmax.f32 %v4111, 0.0
        %4116 = vst [vmem:[#allocation4] sm:$0x1] 0.0
        %4117 = vst [vmem:[#allocation4 + $0x1a] sm:$0x1] 0.0
        %4118 = vst [vmem:[#allocation4 + $0x1] sm:$0xff] %v4112
        %4119 = vst [vmem:[#allocation4 + $0x9] sm:$0xff] %v4113
        %4120 = vst [vmem:[#allocation4 + $0x11] sm:$0xff] %v4114
        %4121 = vst [vmem:[#allocation4 + $0x19] sm:$0x1] %v4115
        %v4122 = vld [vmem:[#allocation4] sm:$0xff]
        %v4123 = vld [vmem:[#allocation4 + $0x8] sm:$0xff]
        %v4124 = vld [vmem:[#allocation4 + $0x10] sm:$0xff]
        %v4125 = vld [vmem:[#allocation4 + $0x18] sm:$0x1]
        %v4126 = vpack.c.bf16 %v4123, %v4122
        %v4127 = vpack.c.bf16 %v4125, %v4124
        %v4128 = vld [vmem:[%s9] sm:$0xf]
        %v4129 = vld [vmem:[%s9 + $0x4] sm:$0xf]
        %v4130 = vld [vmem:[%s9 + $0x8] sm:$0xf]
        %v4131 = vld [vmem:[%s9 + $0xc] sm:$0xf]
        %v4132 = vld [vmem:[%s9 + $0x10] sm:$0xf]
        %v4133 = vld [vmem:[%s9 + $0x14] sm:$0xf]
        %v4134 = vld [vmem:[%s9 + $0x18] sm:$0xf]
        %v4135 = vld [vmem:[%s9 + $0x1c] sm:$0xf]
        %v4136 = vld [vmem:[%s9 + $0x20] sm:$0xf]
        %v4137 = vld [vmem:[%s9 + $0x24] sm:$0xf]
        %v4138 = vld [vmem:[%s9 + $0x28] sm:$0xf]
        %v4139 = vld [vmem:[%s9 + $0x2c] sm:$0xf]
        %v4140 = vld [vmem:[%s9 + $0x30] sm:$0xf]
        %v4141 = vld [vmem:[%s9 + $0x34] sm:$0xf]
        %v4142 = vld [vmem:[%s9 + $0x38] sm:$0xf]
        %v4143 = vld [vmem:[%s9 + $0x3c] sm:$0xf]
        %v4144 = vld [vmem:[#allocation4 + $0x1] sm:$0xff]
        %v4145 = vld [vmem:[#allocation4 + $0x9] sm:$0xff]
        %v4146 = vld [vmem:[#allocation4 + $0x11] sm:$0xff]
        %v4147 = vld [vmem:[#allocation4 + $0x19] sm:$0x1]
        %v4148 = vpack.c.bf16 %v4145, %v4144
        %v4149 = vpack.c.bf16 %v4147, %v4146
        %s4150 = scalar_lea.vmem %s9, 64
        %v4151 = vld [vmem:[%s4150] sm:$0xf]
        %v4152 = vld [vmem:[%s4150 + $0x4] sm:$0xf]
        %v4153 = vld [vmem:[%s4150 + $0x8] sm:$0xf]
        %v4154 = vld [vmem:[%s4150 + $0xc] sm:$0xf]
        %v4155 = vld [vmem:[%s4150 + $0x10] sm:$0xf]
        %v4156 = vld [vmem:[%s4150 + $0x14] sm:$0xf]
        %v4157 = vld [vmem:[%s4150 + $0x18] sm:$0xf]
        %v4158 = vld [vmem:[%s4150 + $0x1c] sm:$0xf]
        %v4159 = vld [vmem:[%s4150 + $0x20] sm:$0xf]
        %v4160 = vld [vmem:[%s4150 + $0x24] sm:$0xf]
        %v4161 = vld [vmem:[%s4150 + $0x28] sm:$0xf]
        %v4162 = vld [vmem:[%s4150 + $0x2c] sm:$0xf]
        %v4163 = vld [vmem:[%s4150 + $0x30] sm:$0xf]
        %v4164 = vld [vmem:[%s4150 + $0x34] sm:$0xf]
        %v4165 = vld [vmem:[%s4150 + $0x38] sm:$0xf]
        %v4166 = vld [vmem:[%s4150 + $0x3c] sm:$0xf]
        %v4183 = vunpack.c.l.b16 %v4151
        %v4184 = vunpack.c.l.b16 %v4152
        %v4185 = vunpack.c.l.b16 %v4153
        %v4186 = vunpack.c.l.b16 %v4154
        %v4187 = vunpack.c.l.b16 %v4155
        %v4188 = vunpack.c.l.b16 %v4156
        %v4189 = vunpack.c.l.b16 %v4157
        %v4190 = vunpack.c.l.b16 %v4158
        %v4191 = vunpack.c.l.b16 %v4159
        %v4192 = vunpack.c.l.b16 %v4160
        %v4193 = vunpack.c.l.b16 %v4161
        %v4194 = vunpack.c.l.b16 %v4162
        %v4195 = vunpack.c.l.b16 %v4163
        %v4196 = vunpack.c.l.b16 %v4164
        %v4197 = vunpack.c.l.b16 %v4165
        %v4198 = vunpack.c.l.b16 %v4166
        %v4199 = vpack.c.b16 %v4184, %v4183
        %v4200 = vpack.c.b16 %v4186, %v4185
        %v4201 = vpack.c.b16 %v4188, %v4187
        %v4202 = vpack.c.b16 %v4190, %v4189
        %v4203 = vpack.c.b16 %v4192, %v4191
        %v4204 = vpack.c.b16 %v4194, %v4193
        %v4205 = vpack.c.b16 %v4196, %v4195
        %v4206 = vpack.c.b16 %v4198, %v4197
        %4215 = vmatprep.subr.bf16.mxu0 0
        %4216 = vmatpush1.bf16.msra.mxu0 %v4199
        %4217 = vmatprep.subr.bf16.mxu0 0
        %4218 = vmatpush1.bf16.msra.mxu0 %v4200
        %4219 = vmatprep.subr.bf16.mxu0 0
        %4220 = vmatpush1.bf16.msra.mxu0 %v4201
        %4221 = vmatprep.subr.bf16.mxu0 0
        %4222 = vmatpush1.bf16.msra.mxu0 %v4202
        %4223 = vmatprep.subr.bf16.mxu0 0
        %4224 = vmatpush1.bf16.msra.mxu0 %v4203
        %4225 = vmatprep.subr.bf16.mxu0 0
        %4226 = vmatpush1.bf16.msra.mxu0 %v4204
        %4227 = vmatprep.subr.bf16.mxu0 0
        %4228 = vmatpush1.bf16.msra.mxu0 %v4205
        %4229 = vmatprep.subr.bf16.mxu0 0
        %4230 = vmatpush1.bf16.msra.mxu0 %v4206
        %4231 = vmatprep.subr.bf16.mxu0 0
        %4232 = vmatpush1.bf16.msra.mxu0 0
        %4233 = vmatprep.subr.bf16.mxu0 0
        %4234 = vmatpush1.bf16.msra.mxu0 0
        %4235 = vmatprep.subr.bf16.mxu0 0
        %4236 = vmatpush1.bf16.msra.mxu0 0
        %4237 = vmatprep.subr.bf16.mxu0 0
        %4238 = vmatpush1.bf16.msra.mxu0 0
        %4239 = vmatprep.subr.bf16.mxu0 0
        %4240 = vmatpush1.bf16.msra.mxu0 0
        %4241 = vmatprep.subr.bf16.mxu0 0
        %4242 = vmatpush1.bf16.msra.mxu0 0
        %4243 = vmatprep.subr.bf16.mxu0 0
        %4244 = vmatpush1.bf16.msra.mxu0 0
        %4245 = vmatprep.subr.bf16.mxu0 0
        %4246 = vmatpush1.bf16.msra.mxu0 0
        %4247 = vmatprep.mubr.bf16.mxu0 0
        %4248 = vmatmul.mubr.bf16.gmra.mrb[0].mxu0 %v4148
        %v4249 = vpop.f32.mrb[0].mxu0
        %v4250 = vadd.f32 0.0, %v4249
        %v4251 = vpop.f32.mrb[0].mxu0
        %v4252 = vpop.f32.mrb[0].mxu0
        %v4253 = vadd.f32 0.0, %v4252
        %v4254 = vpop.f32.mrb[0].mxu0
        %4255 = vmatprep.mubr.bf16.mxu0 0
        %4256 = vmatmul.mubr.bf16.gmra.mrb[0].mxu0 %v4149
        %v4257 = vpop.f32.mrb[0].mxu0
        %v4258 = vadd.f32 0.0, %v4257
        %v4259 = vpop.f32.mrb[0].mxu0
        %v4260 = vpop.f32.mrb[0].mxu0
        %v4261 = vadd.f32 0.0, %v4260
        %v4262 = vpop.f32.mrb[0].mxu0
        %4263 = vdwg.mxu0
        %v4280 = vunpack.c.l.b16 %v4128
        %v4281 = vunpack.c.l.b16 %v4129
        %v4282 = vunpack.c.l.b16 %v4130
        %v4283 = vunpack.c.l.b16 %v4131
        %v4284 = vunpack.c.l.b16 %v4132
        %v4285 = vunpack.c.l.b16 %v4133
        %v4286 = vunpack.c.l.b16 %v4134
        %v4287 = vunpack.c.l.b16 %v4135
        %v4288 = vunpack.c.l.b16 %v4136
        %v4289 = vunpack.c.l.b16 %v4137
        %v4290 = vunpack.c.l.b16 %v4138
        %v4291 = vunpack.c.l.b16 %v4139
        %v4292 = vunpack.c.l.b16 %v4140
        %v4293 = vunpack.c.l.b16 %v4141
        %v4294 = vunpack.c.l.b16 %v4142
        %v4295 = vunpack.c.l.b16 %v4143
        %v4296 = vpack.c.b16 %v4281, %v4280
        %v4297 = vpack.c.b16 %v4283, %v4282
        %v4298 = vpack.c.b16 %v4285, %v4284
        %v4299 = vpack.c.b16 %v4287, %v4286
        %v4300 = vpack.c.b16 %v4289, %v4288
        %v4301 = vpack.c.b16 %v4291, %v4290
        %v4302 = vpack.c.b16 %v4293, %v4292
        %v4303 = vpack.c.b16 %v4295, %v4294
        %4312 = vmatprep.subr.bf16.mxu0 0
        %4313 = vmatpush1.bf16.msra.mxu0 %v4296
        %4314 = vmatprep.subr.bf16.mxu0 0
        %4315 = vmatpush1.bf16.msra.mxu0 %v4297
        %4316 = vmatprep.subr.bf16.mxu0 0
        %4317 = vmatpush1.bf16.msra.mxu0 %v4298
        %4318 = vmatprep.subr.bf16.mxu0 0
        %4319 = vmatpush1.bf16.msra.mxu0 %v4299
        %4320 = vmatprep.subr.bf16.mxu0 0
        %4321 = vmatpush1.bf16.msra.mxu0 %v4300
        %4322 = vmatprep.subr.bf16.mxu0 0
        %4323 = vmatpush1.bf16.msra.mxu0 %v4301
        %4324 = vmatprep.subr.bf16.mxu0 0
        %4325 = vmatpush1.bf16.msra.mxu0 %v4302
        %4326 = vmatprep.subr.bf16.mxu0 0
        %4327 = vmatpush1.bf16.msra.mxu0 %v4303
        %4328 = vmatprep.subr.bf16.mxu0 0
        %4329 = vmatpush1.bf16.msra.mxu0 0
        %4330 = vmatprep.subr.bf16.mxu0 0
        %4331 = vmatpush1.bf16.msra.mxu0 0
        %4332 = vmatprep.subr.bf16.mxu0 0
        %4333 = vmatpush1.bf16.msra.mxu0 0
        %4334 = vmatprep.subr.bf16.mxu0 0
        %4335 = vmatpush1.bf16.msra.mxu0 0
        %4336 = vmatprep.subr.bf16.mxu0 0
        %4337 = vmatpush1.bf16.msra.mxu0 0
        %4338 = vmatprep.subr.bf16.mxu0 0
        %4339 = vmatpush1.bf16.msra.mxu0 0
        %4340 = vmatprep.subr.bf16.mxu0 0
        %4341 = vmatpush1.bf16.msra.mxu0 0
        %4342 = vmatprep.subr.bf16.mxu0 0
        %4343 = vmatpush1.bf16.msra.mxu0 0
        %4344 = vmatprep.mubr.bf16.mxu0 0
        %4345 = vmatmul.mubr.bf16.gmra.mrb[0].mxu0 %v4126
        %v4346 = vpop.f32.mrb[0].mxu0
        %v4347 = vadd.f32 %v4250, %v4346
        %v4348 = vpop.f32.mrb[0].mxu0
        %v4349 = vpop.f32.mrb[0].mxu0
        %v4350 = vadd.f32 %v4253, %v4349
        %v4351 = vpop.f32.mrb[0].mxu0
        %4352 = vmatprep.mubr.bf16.mxu0 0
        %4353 = vmatmul.mubr.bf16.gmra.mrb[0].mxu0 %v4127
        %v4354 = vpop.f32.mrb[0].mxu0
        %v4355 = vadd.f32 %v4258, %v4354
        %v4356 = vpop.f32.mrb[0].mxu0
        %v4357 = vpop.f32.mrb[0].mxu0
        %v4358 = vadd.f32 %v4261, %v4357
        %v4359 = vpop.f32.mrb[0].mxu0
        %4360 = vdwg.mxu0
        %v4361 = vld [vmem:[#allocation4 + $0x2] sm:$0xff]
        %v4362 = vld [vmem:[#allocation4 + $0xa] sm:$0xff]
        %v4363 = vld [vmem:[#allocation4 + $0x12] sm:$0xff]
        %v4364 = vld [vmem:[#allocation4 + $0x1a] sm:$0x1]
        %v4365 = vpack.c.bf16 %v4362, %v4361
        %v4366 = vpack.c.bf16 %v4364, %v4363
        %s4367 = scalar_lea.vmem %s9, 128
        %v4368 = vld [vmem:[%s4367] sm:$0xf]
        %v4369 = vld [vmem:[%s4367 + $0x4] sm:$0xf]
        %v4370 = vld [vmem:[%s4367 + $0x8] sm:$0xf]
        %v4371 = vld [vmem:[%s4367 + $0xc] sm:$0xf]
        %v4372 = vld [vmem:[%s4367 + $0x10] sm:$0xf]
        %v4373 = vld [vmem:[%s4367 + $0x14] sm:$0xf]
        %v4374 = vld [vmem:[%s4367 + $0x18] sm:$0xf]
        %v4375 = vld [vmem:[%s4367 + $0x1c] sm:$0xf]
        %v4376 = vld [vmem:[%s4367 + $0x20] sm:$0xf]
        %v4377 = vld [vmem:[%s4367 + $0x24] sm:$0xf]
        %v4378 = vld [vmem:[%s4367 + $0x28] sm:$0xf]
        %v4379 = vld [vmem:[%s4367 + $0x2c] sm:$0xf]
        %v4380 = vld [vmem:[%s4367 + $0x30] sm:$0xf]
        %v4381 = vld [vmem:[%s4367 + $0x34] sm:$0xf]
        %v4382 = vld [vmem:[%s4367 + $0x38] sm:$0xf]
        %v4383 = vld [vmem:[%s4367 + $0x3c] sm:$0xf]
        %v4400 = vunpack.c.l.b16 %v4368
        %v4401 = vunpack.c.l.b16 %v4369
        %v4402 = vunpack.c.l.b16 %v4370
        %v4403 = vunpack.c.l.b16 %v4371
        %v4404 = vunpack.c.l.b16 %v4372
        %v4405 = vunpack.c.l.b16 %v4373
        %v4406 = vunpack.c.l.b16 %v4374
        %v4407 = vunpack.c.l.b16 %v4375
        %v4408 = vunpack.c.l.b16 %v4376
        %v4409 = vunpack.c.l.b16 %v4377
        %v4410 = vunpack.c.l.b16 %v4378
        %v4411 = vunpack.c.l.b16 %v4379
        %v4412 = vunpack.c.l.b16 %v4380
        %v4413 = vunpack.c.l.b16 %v4381
        %v4414 = vunpack.c.l.b16 %v4382
        %v4415 = vunpack.c.l.b16 %v4383
        %v4416 = vpack.c.b16 %v4401, %v4400
        %v4417 = vpack.c.b16 %v4403, %v4402
        %v4418 = vpack.c.b16 %v4405, %v4404
        %v4419 = vpack.c.b16 %v4407, %v4406
        %v4420 = vpack.c.b16 %v4409, %v4408
        %v4421 = vpack.c.b16 %v4411, %v4410
        %v4422 = vpack.c.b16 %v4413, %v4412
        %v4423 = vpack.c.b16 %v4415, %v4414
        %4432 = vmatprep.subr.bf16.mxu0 0
        %4433 = vmatpush1.bf16.msra.mxu0 %v4416
        %4434 = vmatprep.subr.bf16.mxu0 0
        %4435 = vmatpush1.bf16.msra.mxu0 %v4417
        %4436 = vmatprep.subr.bf16.mxu0 0
        %4437 = vmatpush1.bf16.msra.mxu0 %v4418
        %4438 = vmatprep.subr.bf16.mxu0 0
        %4439 = vmatpush1.bf16.msra.mxu0 %v4419
        %4440 = vmatprep.subr.bf16.mxu0 0
        %4441 = vmatpush1.bf16.msra.mxu0 %v4420
        %4442 = vmatprep.subr.bf16.mxu0 0
        %4443 = vmatpush1.bf16.msra.mxu0 %v4421
        %4444 = vmatprep.subr.bf16.mxu0 0
        %4445 = vmatpush1.bf16.msra.mxu0 %v4422
        %4446 = vmatprep.subr.bf16.mxu0 0
        %4447 = vmatpush1.bf16.msra.mxu0 %v4423
        %4448 = vmatprep.subr.bf16.mxu0 0
        %4449 = vmatpush1.bf16.msra.mxu0 0
        %4450 = vmatprep.subr.bf16.mxu0 0
        %4451 = vmatpush1.bf16.msra.mxu0 0
        %4452 = vmatprep.subr.bf16.mxu0 0
        %4453 = vmatpush1.bf16.msra.mxu0 0
        %4454 = vmatprep.subr.bf16.mxu0 0
        %4455 = vmatpush1.bf16.msra.mxu0 0
        %4456 = vmatprep.subr.bf16.mxu0 0
        %4457 = vmatpush1.bf16.msra.mxu0 0
        %4458 = vmatprep.subr.bf16.mxu0 0
        %4459 = vmatpush1.bf16.msra.mxu0 0
        %4460 = vmatprep.subr.bf16.mxu0 0
        %4461 = vmatpush1.bf16.msra.mxu0 0
        %4462 = vmatprep.subr.bf16.mxu0 0
        %4463 = vmatpush1.bf16.msra.mxu0 0
        %4464 = vmatprep.mubr.bf16.mxu0 0
        %4465 = vmatmul.mubr.bf16.gmra.mrb[0].mxu0 %v4365
        %v4466 = vpop.f32.mrb[0].mxu0
        %v4467 = vadd.f32 0.0, %v4466
        %v4468 = vpop.f32.mrb[0].mxu0
        %v4469 = vpop.f32.mrb[0].mxu0
        %v4470 = vadd.f32 0.0, %v4469
        %v4471 = vpop.f32.mrb[0].mxu0
        %4472 = vmatprep.mubr.bf16.mxu0 0
        %4473 = vmatmul.mubr.bf16.gmra.mrb[0].mxu0 %v4366
        %v4474 = vpop.f32.mrb[0].mxu0
        %v4475 = vadd.f32 0.0, %v4474
        %v4476 = vpop.f32.mrb[0].mxu0
        %v4477 = vpop.f32.mrb[0].mxu0
        %v4478 = vadd.f32 0.0, %v4477
        %v4479 = vpop.f32.mrb[0].mxu0
        %4480 = vdwg.mxu0
        %v4481 = vadd.f32 %v4347, %v4467
        %v4482 = vadd.f32 %v4350, %v4470
        %v4483 = vadd.f32 %v4355, %v4475
        %v4484 = vadd.f32 %v4358, %v4478
        %v4485 = vld [vmem:[%s10] sm:$0x1]
        %v4487 = vlaneseq
        %v4488 = vshrl.u32 %v4487, 7
        %v4489 = vsub.s32 0, %v4488
        %v4490 = vrot.slane %v4485, %v4489
        %v4492 = vadd.f32 %v4481, %v4490
        %v4493 = vadd.f32 %v4482, %v4490
        %v4494 = vadd.f32 %v4483, %v4490
        %v4495 = vadd.f32 %v4484, %v4490
        %v4496 = vadd.f32 %v4492, %v3728
        %v4497 = vadd.f32 %v4493, %v3729
        %v4498 = vadd.f32 %v4494, %v3730
        %v4499 = vadd.f32 %v4495, %v3731
        %v4500 = vmax.f32 %v4496, 0.0
        %v4501 = vmax.f32 %v4497, 0.0
        %v4502 = vmax.f32 %v4498, 0.0
        %v4503 = vmax.f32 %v4499, 0.0
        %4504 = vst [vmem:[#allocation4] sm:$0x1] 0.0
        %4505 = vst [vmem:[#allocation4 + $0x1a] sm:$0x1] 0.0
        %4506 = vst [vmem:[#allocation4 + $0x1] sm:$0xff] %v4500
        %4507 = vst [vmem:[#allocation4 + $0x9] sm:$0xff] %v4501
        %4508 = vst [vmem:[#allocation4 + $0x11] sm:$0xff] %v4502
        %4509 = vst [vmem:[#allocation4 + $0x19] sm:$0x1] %v4503
        %v4510 = vld [vmem:[#allocation4] sm:$0xff]
        %v4511 = vld [vmem:[#allocation4 + $0x8] sm:$0xff]
        %v4512 = vld [vmem:[#allocation4 + $0x10] sm:$0xff]
        %v4513 = vld [vmem:[#allocation4 + $0x18] sm:$0x1]
        %v4514 = vpack.c.bf16 %v4511, %v4510
        %v4515 = vpack.c.bf16 %v4513, %v4512
        %v4516 = vld [vmem:[%s11] sm:$0xf]
        %v4517 = vld [vmem:[%s11 + $0x4] sm:$0xf]
        %v4518 = vld [vmem:[%s11 + $0x8] sm:$0xf]
        %v4519 = vld [vmem:[%s11 + $0xc] sm:$0xf]
        %v4520 = vld [vmem:[%s11 + $0x10] sm:$0xf]
        %v4521 = vld [vmem:[%s11 + $0x14] sm:$0xf]
        %v4522 = vld [vmem:[%s11 + $0x18] sm:$0xf]
        %v4523 = vld [vmem:[%s11 + $0x1c] sm:$0xf]
        %v4524 = vld [vmem:[%s11 + $0x20] sm:$0xf]
        %v4525 = vld [vmem:[%s11 + $0x24] sm:$0xf]
        %v4526 = vld [vmem:[%s11 + $0x28] sm:$0xf]
        %v4527 = vld [vmem:[%s11 + $0x2c] sm:$0xf]
        %v4528 = vld [vmem:[%s11 + $0x30] sm:$0xf]
        %v4529 = vld [vmem:[%s11 + $0x34] sm:$0xf]
        %v4530 = vld [vmem:[%s11 + $0x38] sm:$0xf]
        %v4531 = vld [vmem:[%s11 + $0x3c] sm:$0xf]
        %v4532 = vld [vmem:[#allocation4 + $0x1] sm:$0xff]
        %v4533 = vld [vmem:[#allocation4 + $0x9] sm:$0xff]
        %v4534 = vld [vmem:[#allocation4 + $0x11] sm:$0xff]
        %v4535 = vld [vmem:[#allocation4 + $0x19] sm:$0x1]
        %v4536 = vpack.c.bf16 %v4533, %v4532
        %v4537 = vpack.c.bf16 %v4535, %v4534
        %s4538 = scalar_lea.vmem %s11, 64
        %v4539 = vld [vmem:[%s4538] sm:$0xf]
        %v4540 = vld [vmem:[%s4538 + $0x4] sm:$0xf]
        %v4541 = vld [vmem:[%s4538 + $0x8] sm:$0xf]
        %v4542 = vld [vmem:[%s4538 + $0xc] sm:$0xf]
        %v4543 = vld [vmem:[%s4538 + $0x10] sm:$0xf]
        %v4544 = vld [vmem:[%s4538 + $0x14] sm:$0xf]
        %v4545 = vld [vmem:[%s4538 + $0x18] sm:$0xf]
        %v4546 = vld [vmem:[%s4538 + $0x1c] sm:$0xf]
        %v4547 = vld [vmem:[%s4538 + $0x20] sm:$0xf]
        %v4548 = vld [vmem:[%s4538 + $0x24] sm:$0xf]
        %v4549 = vld [vmem:[%s4538 + $0x28] sm:$0xf]
        %v4550 = vld [vmem:[%s4538 + $0x2c] sm:$0xf]
        %v4551 = vld [vmem:[%s4538 + $0x30] sm:$0xf]
        %v4552 = vld [vmem:[%s4538 + $0x34] sm:$0xf]
        %v4553 = vld [vmem:[%s4538 + $0x38] sm:$0xf]
        %v4554 = vld [vmem:[%s4538 + $0x3c] sm:$0xf]
        %v4571 = vunpack.c.l.b16 %v4539
        %v4572 = vunpack.c.l.b16 %v4540
        %v4573 = vunpack.c.l.b16 %v4541
        %v4574 = vunpack.c.l.b16 %v4542
        %v4575 = vunpack.c.l.b16 %v4543
        %v4576 = vunpack.c.l.b16 %v4544
        %v4577 = vunpack.c.l.b16 %v4545
        %v4578 = vunpack.c.l.b16 %v4546
        %v4579 = vunpack.c.l.b16 %v4547
        %v4580 = vunpack.c.l.b16 %v4548
        %v4581 = vunpack.c.l.b16 %v4549
        %v4582 = vunpack.c.l.b16 %v4550
        %v4583 = vunpack.c.l.b16 %v4551
        %v4584 = vunpack.c.l.b16 %v4552
        %v4585 = vunpack.c.l.b16 %v4553
        %v4586 = vunpack.c.l.b16 %v4554
        %v4587 = vpack.c.b16 %v4572, %v4571
        %v4588 = vpack.c.b16 %v4574, %v4573
        %v4589 = vpack.c.b16 %v4576, %v4575
        %v4590 = vpack.c.b16 %v4578, %v4577
        %v4591 = vpack.c.b16 %v4580, %v4579
        %v4592 = vpack.c.b16 %v4582, %v4581
        %v4593 = vpack.c.b16 %v4584, %v4583
        %v4594 = vpack.c.b16 %v4586, %v4585
        %4603 = vmatprep.subr.bf16.mxu0 0
        %4604 = vmatpush1.bf16.msra.mxu0 %v4587
        %4605 = vmatprep.subr.bf16.mxu0 0
        %4606 = vmatpush1.bf16.msra.mxu0 %v4588
        %4607 = vmatprep.subr.bf16.mxu0 0
        %4608 = vmatpush1.bf16.msra.mxu0 %v4589
        %4609 = vmatprep.subr.bf16.mxu0 0
        %4610 = vmatpush1.bf16.msra.mxu0 %v4590
        %4611 = vmatprep.subr.bf16.mxu0 0
        %4612 = vmatpush1.bf16.msra.mxu0 %v4591
        %4613 = vmatprep.subr.bf16.mxu0 0
        %4614 = vmatpush1.bf16.msra.mxu0 %v4592
        %4615 = vmatprep.subr.bf16.mxu0 0
        %4616 = vmatpush1.bf16.msra.mxu0 %v4593
        %4617 = vmatprep.subr.bf16.mxu0 0
        %4618 = vmatpush1.bf16.msra.mxu0 %v4594
        %4619 = vmatprep.subr.bf16.mxu0 0
        %4620 = vmatpush1.bf16.msra.mxu0 0
        %4621 = vmatprep.subr.bf16.mxu0 0
        %4622 = vmatpush1.bf16.msra.mxu0 0
        %4623 = vmatprep.subr.bf16.mxu0 0
        %4624 = vmatpush1.bf16.msra.mxu0 0
        %4625 = vmatprep.subr.bf16.mxu0 0
        %4626 = vmatpush1.bf16.msra.mxu0 0
        %4627 = vmatprep.subr.bf16.mxu0 0
        %4628 = vmatpush1.bf16.msra.mxu0 0
        %4629 = vmatprep.subr.bf16.mxu0 0
        %4630 = vmatpush1.bf16.msra.mxu0 0
        %4631 = vmatprep.subr.bf16.mxu0 0
        %4632 = vmatpush1.bf16.msra.mxu0 0
        %4633 = vmatprep.subr.bf16.mxu0 0
        %4634 = vmatpush1.bf16.msra.mxu0 0
        %4635 = vmatprep.mubr.bf16.mxu0 0
        %4636 = vmatmul.mubr.bf16.gmra.mrb[0].mxu0 %v4536
        %v4637 = vpop.f32.mrb[0].mxu0
        %v4638 = vadd.f32 0.0, %v4637
        %v4639 = vpop.f32.mrb[0].mxu0
        %v4640 = vpop.f32.mrb[0].mxu0
        %v4641 = vadd.f32 0.0, %v4640
        %v4642 = vpop.f32.mrb[0].mxu0
        %4643 = vmatprep.mubr.bf16.mxu0 0
        %4644 = vmatmul.mubr.bf16.gmra.mrb[0].mxu0 %v4537
        %v4645 = vpop.f32.mrb[0].mxu0
        %v4646 = vadd.f32 0.0, %v4645
        %v4647 = vpop.f32.mrb[0].mxu0
        %v4648 = vpop.f32.mrb[0].mxu0
        %v4649 = vadd.f32 0.0, %v4648
        %v4650 = vpop.f32.mrb[0].mxu0
        %4651 = vdwg.mxu0
        %v4668 = vunpack.c.l.b16 %v4516
        %v4669 = vunpack.c.l.b16 %v4517
        %v4670 = vunpack.c.l.b16 %v4518
        %v4671 = vunpack.c.l.b16 %v4519
        %v4672 = vunpack.c.l.b16 %v4520
        %v4673 = vunpack.c.l.b16 %v4521
        %v4674 = vunpack.c.l.b16 %v4522
        %v4675 = vunpack.c.l.b16 %v4523
        %v4676 = vunpack.c.l.b16 %v4524
        %v4677 = vunpack.c.l.b16 %v4525
        %v4678 = vunpack.c.l.b16 %v4526
        %v4679 = vunpack.c.l.b16 %v4527
        %v4680 = vunpack.c.l.b16 %v4528
        %v4681 = vunpack.c.l.b16 %v4529
        %v4682 = vunpack.c.l.b16 %v4530
        %v4683 = vunpack.c.l.b16 %v4531
        %v4684 = vpack.c.b16 %v4669, %v4668
        %v4685 = vpack.c.b16 %v4671, %v4670
        %v4686 = vpack.c.b16 %v4673, %v4672
        %v4687 = vpack.c.b16 %v4675, %v4674
        %v4688 = vpack.c.b16 %v4677, %v4676
        %v4689 = vpack.c.b16 %v4679, %v4678
        %v4690 = vpack.c.b16 %v4681, %v4680
        %v4691 = vpack.c.b16 %v4683, %v4682
        %4700 = vmatprep.subr.bf16.mxu0 0
        %4701 = vmatpush1.bf16.msra.mxu0 %v4684
        %4702 = vmatprep.subr.bf16.mxu0 0
        %4703 = vmatpush1.bf16.msra.mxu0 %v4685
        %4704 = vmatprep.subr.bf16.mxu0 0
        %4705 = vmatpush1.bf16.msra.mxu0 %v4686
        %4706 = vmatprep.subr.bf16.mxu0 0
        %4707 = vmatpush1.bf16.msra.mxu0 %v4687
        %4708 = vmatprep.subr.bf16.mxu0 0
        %4709 = vmatpush1.bf16.msra.mxu0 %v4688
        %4710 = vmatprep.subr.bf16.mxu0 0
        %4711 = vmatpush1.bf16.msra.mxu0 %v4689
        %4712 = vmatprep.subr.bf16.mxu0 0
        %4713 = vmatpush1.bf16.msra.mxu0 %v4690
        %4714 = vmatprep.subr.bf16.mxu0 0
        %4715 = vmatpush1.bf16.msra.mxu0 %v4691
        %4716 = vmatprep.subr.bf16.mxu0 0
        %4717 = vmatpush1.bf16.msra.mxu0 0
        %4718 = vmatprep.subr.bf16.mxu0 0
        %4719 = vmatpush1.bf16.msra.mxu0 0
        %4720 = vmatprep.subr.bf16.mxu0 0
        %4721 = vmatpush1.bf16.msra.mxu0 0
        %4722 = vmatprep.subr.bf16.mxu0 0
        %4723 = vmatpush1.bf16.msra.mxu0 0
        %4724 = vmatprep.subr.bf16.mxu0 0
        %4725 = vmatpush1.bf16.msra.mxu0 0
        %4726 = vmatprep.subr.bf16.mxu0 0
        %4727 = vmatpush1.bf16.msra.mxu0 0
        %4728 = vmatprep.subr.bf16.mxu0 0
        %4729 = vmatpush1.bf16.msra.mxu0 0
        %4730 = vmatprep.subr.bf16.mxu0 0
        %4731 = vmatpush1.bf16.msra.mxu0 0
        %4732 = vmatprep.mubr.bf16.mxu0 0
        %4733 = vmatmul.mubr.bf16.gmra.mrb[0].mxu0 %v4514
        %v4734 = vpop.f32.mrb[0].mxu0
        %v4735 = vadd.f32 %v4638, %v4734
        %v4736 = vpop.f32.mrb[0].mxu0
        %v4737 = vpop.f32.mrb[0].mxu0
        %v4738 = vadd.f32 %v4641, %v4737
        %v4739 = vpop.f32.mrb[0].mxu0
        %4740 = vmatprep.mubr.bf16.mxu0 0
        %4741 = vmatmul.mubr.bf16.gmra.mrb[0].mxu0 %v4515
        %v4742 = vpop.f32.mrb[0].mxu0
        %v4743 = vadd.f32 %v4646, %v4742
        %v4744 = vpop.f32.mrb[0].mxu0
        %v4745 = vpop.f32.mrb[0].mxu0
        %v4746 = vadd.f32 %v4649, %v4745
        %v4747 = vpop.f32.mrb[0].mxu0
        %4748 = vdwg.mxu0
        %v4749 = vld [vmem:[#allocation4 + $0x2] sm:$0xff]
        %v4750 = vld [vmem:[#allocation4 + $0xa] sm:$0xff]
        %v4751 = vld [vmem:[#allocation4 + $0x12] sm:$0xff]
        %v4752 = vld [vmem:[#allocation4 + $0x1a] sm:$0x1]
        %v4753 = vpack.c.bf16 %v4750, %v4749
        %v4754 = vpack.c.bf16 %v4752, %v4751
        %s4755 = scalar_lea.vmem %s11, 128
        %v4756 = vld [vmem:[%s4755] sm:$0xf]
        %v4757 = vld [vmem:[%s4755 + $0x4] sm:$0xf]
        %v4758 = vld [vmem:[%s4755 + $0x8] sm:$0xf]
        %v4759 = vld [vmem:[%s4755 + $0xc] sm:$0xf]
        %v4760 = vld [vmem:[%s4755 + $0x10] sm:$0xf]
        %v4761 = vld [vmem:[%s4755 + $0x14] sm:$0xf]
        %v4762 = vld [vmem:[%s4755 + $0x18] sm:$0xf]
        %v4763 = vld [vmem:[%s4755 + $0x1c] sm:$0xf]
        %v4764 = vld [vmem:[%s4755 + $0x20] sm:$0xf]
        %v4765 = vld [vmem:[%s4755 + $0x24] sm:$0xf]
        %v4766 = vld [vmem:[%s4755 + $0x28] sm:$0xf]
        %v4767 = vld [vmem:[%s4755 + $0x2c] sm:$0xf]
        %v4768 = vld [vmem:[%s4755 + $0x30] sm:$0xf]
        %v4769 = vld [vmem:[%s4755 + $0x34] sm:$0xf]
        %v4770 = vld [vmem:[%s4755 + $0x38] sm:$0xf]
        %v4771 = vld [vmem:[%s4755 + $0x3c] sm:$0xf]
        %v4788 = vunpack.c.l.b16 %v4756
        %v4789 = vunpack.c.l.b16 %v4757
        %v4790 = vunpack.c.l.b16 %v4758
        %v4791 = vunpack.c.l.b16 %v4759
        %v4792 = vunpack.c.l.b16 %v4760
        %v4793 = vunpack.c.l.b16 %v4761
        %v4794 = vunpack.c.l.b16 %v4762
        %v4795 = vunpack.c.l.b16 %v4763
        %v4796 = vunpack.c.l.b16 %v4764
        %v4797 = vunpack.c.l.b16 %v4765
        %v4798 = vunpack.c.l.b16 %v4766
        %v4799 = vunpack.c.l.b16 %v4767
        %v4800 = vunpack.c.l.b16 %v4768
        %v4801 = vunpack.c.l.b16 %v4769
        %v4802 = vunpack.c.l.b16 %v4770
        %v4803 = vunpack.c.l.b16 %v4771
        %v4804 = vpack.c.b16 %v4789, %v4788
        %v4805 = vpack.c.b16 %v4791, %v4790
        %v4806 = vpack.c.b16 %v4793, %v4792
        %v4807 = vpack.c.b16 %v4795, %v4794
        %v4808 = vpack.c.b16 %v4797, %v4796
        %v4809 = vpack.c.b16 %v4799, %v4798
        %v4810 = vpack.c.b16 %v4801, %v4800
        %v4811 = vpack.c.b16 %v4803, %v4802
        %4820 = vmatprep.subr.bf16.mxu0 0
        %4821 = vmatpush1.bf16.msra.mxu0 %v4804
        %4822 = vmatprep.subr.bf16.mxu0 0
        %4823 = vmatpush1.bf16.msra.mxu0 %v4805
        %4824 = vmatprep.subr.bf16.mxu0 0
        %4825 = vmatpush1.bf16.msra.mxu0 %v4806
        %4826 = vmatprep.subr.bf16.mxu0 0
        %4827 = vmatpush1.bf16.msra.mxu0 %v4807
        %4828 = vmatprep.subr.bf16.mxu0 0
        %4829 = vmatpush1.bf16.msra.mxu0 %v4808
        %4830 = vmatprep.subr.bf16.mxu0 0
        %4831 = vmatpush1.bf16.msra.mxu0 %v4809
        %4832 = vmatprep.subr.bf16.mxu0 0
        %4833 = vmatpush1.bf16.msra.mxu0 %v4810
        %4834 = vmatprep.subr.bf16.mxu0 0
        %4835 = vmatpush1.bf16.msra.mxu0 %v4811
        %4836 = vmatprep.subr.bf16.mxu0 0
        %4837 = vmatpush1.bf16.msra.mxu0 0
        %4838 = vmatprep.subr.bf16.mxu0 0
        %4839 = vmatpush1.bf16.msra.mxu0 0
        %4840 = vmatprep.subr.bf16.mxu0 0
        %4841 = vmatpush1.bf16.msra.mxu0 0
        %4842 = vmatprep.subr.bf16.mxu0 0
        %4843 = vmatpush1.bf16.msra.mxu0 0
        %4844 = vmatprep.subr.bf16.mxu0 0
        %4845 = vmatpush1.bf16.msra.mxu0 0
        %4846 = vmatprep.subr.bf16.mxu0 0
        %4847 = vmatpush1.bf16.msra.mxu0 0
        %4848 = vmatprep.subr.bf16.mxu0 0
        %4849 = vmatpush1.bf16.msra.mxu0 0
        %4850 = vmatprep.subr.bf16.mxu0 0
        %4851 = vmatpush1.bf16.msra.mxu0 0
        %4852 = vmatprep.mubr.bf16.mxu0 0
        %4853 = vmatmul.mubr.bf16.gmra.mrb[0].mxu0 %v4753
        %v4854 = vpop.f32.mrb[0].mxu0
        %v4855 = vadd.f32 0.0, %v4854
        %v4856 = vpop.f32.mrb[0].mxu0
        %v4857 = vpop.f32.mrb[0].mxu0
        %v4858 = vadd.f32 0.0, %v4857
        %v4859 = vpop.f32.mrb[0].mxu0
        %4860 = vmatprep.mubr.bf16.mxu0 0
        %4861 = vmatmul.mubr.bf16.gmra.mrb[0].mxu0 %v4754
        %v4862 = vpop.f32.mrb[0].mxu0
        %v4863 = vadd.f32 0.0, %v4862
        %v4864 = vpop.f32.mrb[0].mxu0
        %v4865 = vpop.f32.mrb[0].mxu0
        %v4866 = vadd.f32 0.0, %v4865
        %v4867 = vpop.f32.mrb[0].mxu0
        %4868 = vdwg.mxu0
        %v4869 = vadd.f32 %v4735, %v4855
        %v4870 = vadd.f32 %v4738, %v4858
        %v4871 = vadd.f32 %v4743, %v4863
        %v4872 = vadd.f32 %v4746, %v4866
        %v4873 = vld [vmem:[%s12] sm:$0x1]
        %v4875 = vlaneseq
        %v4876 = vshrl.u32 %v4875, 7
        %v4877 = vsub.s32 0, %v4876
        %v4878 = vrot.slane %v4873, %v4877
        %vm4880 = vcmask 203776
        %v4881 = vsel %vm4880, %v2658, 0
        %v4883 = vsel %vm4880, %v2659, 0
        %vm4885 = vcmask 1040384
        %v4887 = vsel %vm4885, %v4872, 0
        %4889 = vmatprep.subr.mxu0 0.0
        %4890 = vmatpush1.msra.mxu0 %v4869
        %4891 = vmatprep.subr.mxu0 0.0
        %4892 = vmatpush1.msra.mxu0 %v4870
        %4893 = vmatprep.subr.mxu0 0.0
        %4894 = vmatpush1.msra.mxu0 %v4871
        %4895 = vmatprep.subr.mxu0 0.0
        %4896 = vmatpush1.msra.mxu0 %v4887
        %4897 = vmatprep.subr.mxu0 0.0
        %4898 = vmatpush1.msra.mxu0 0.0
        %4899 = vmatprep.subr.mxu0 0.0
        %4900 = vmatpush1.msra.mxu0 0.0
        %4901 = vmatprep.subr.mxu0 0.0
        %4902 = vmatpush1.msra.mxu0 0.0
        %4903 = vmatprep.subr.mxu0 0.0
        %4904 = vmatpush1.msra.mxu0 0.0
        %4905 = vmatprep.subr.mxu0 0.0
        %4906 = vmatpush1.msra.mxu0 0.0
        %4907 = vmatprep.subr.mxu0 0.0
        %4908 = vmatpush1.msra.mxu0 0.0
        %4909 = vmatprep.subr.mxu0 0.0
        %4910 = vmatpush1.msra.mxu0 0.0
        %4911 = vmatprep.subr.mxu0 0.0
        %4912 = vmatpush1.msra.mxu0 0.0
        %4913 = vmatprep.subr.mxu0 0.0
        %4914 = vmatpush1.msra.mxu0 0.0
        %4915 = vmatprep.subr.mxu0 0.0
        %4916 = vmatpush1.msra.mxu0 0.0
        %4917 = vmatprep.subr.mxu0 0.0
        %4918 = vmatpush1.msra.mxu0 0.0
        %4919 = vmatprep.subr.mxu0 0.0
        %4920 = vmatpush1.msra.mxu0 0.0
        %4921 = vmatprep.subr.mxu0 0.0
        %4922 = vmatpush1.msra.mxu0 0.0
        %4923 = vmatprep.subr.mxu0 0.0
        %4924 = vmatpush1.msra.mxu0 0.0
        %4925 = vmatprep.subr.mxu0 0.0
        %4926 = vmatpush1.msra.mxu0 0.0
        %4927 = vmatprep.subr.mxu0 0.0
        %4928 = vmatpush1.msra.mxu0 0.0
        %4929 = vmatprep.subr.mxu0 0.0
        %4930 = vmatpush1.msra.mxu0 0.0
        %4931 = vmatprep.subr.mxu0 0.0
        %4932 = vmatpush1.msra.mxu0 0.0
        %4933 = vmatprep.subr.mxu0 0.0
        %4934 = vmatpush1.msra.mxu0 0.0
        %4935 = vmatprep.subr.mxu0 0.0
        %4936 = vmatpush1.msra.mxu0 0.0
        %4937 = vmatprep.subr.mxu0 0.0
        %4938 = vmatpush1.msra.mxu0 0.0
        %4939 = vmatprep.subr.mxu0 0.0
        %4940 = vmatpush1.msra.mxu0 0.0
        %4941 = vmatprep.subr.mxu0 0.0
        %4942 = vmatpush1.msra.mxu0 0.0
        %4943 = vmatprep.subr.mxu0 0.0
        %4944 = vmatpush1.msra.mxu0 0.0
        %4945 = vmatprep.subr.mxu0 0.0
        %4946 = vmatpush1.msra.mxu0 0.0
        %4947 = vmatprep.subr.mxu0 0.0
        %4948 = vmatpush1.msra.mxu0 0.0
        %4949 = vmatprep.subr.mxu0 0.0
        %4950 = vmatpush1.msra.mxu0 0.0
        %4951 = vmatprep.subr.mxu0 0.0
        %4952 = vmatpush1.msra.mxu0 0.0
        %4953 = vmatprep.mubr.f32.mxu0 0.0
        %4954 = vmatmul.mubr.f32.gmra.mrb[0].mxu0 %v4881
        %v4955 = vpop.f32.mrb[0].mxu0
        %v4956 = vadd.f32 %v4878, %v4955
        %v4957 = vpop.f32.mrb[0].mxu0
        %4958 = vmatprep.mubr.f32.mxu0 0.0
        %4959 = vmatmul.mubr.f32.gmra.mrb[0].mxu0 %v4883
        %v4960 = vpop.f32.mrb[0].mxu0
        %v4961 = vadd.f32 %v4878, %v4960
        %v4962 = vpop.f32.mrb[0].mxu0
        %4963 = vdwg.mxu0
        %v4964 = vmax.f32 %v4956, 0.0
        %v4965 = vmax.f32 %v4961, 0.0
        %v4967 = vsel %vm4885, %v4503, 0
        %4969 = vmatprep.subr.mxu0 0.0
        %4970 = vmatpush1.msra.mxu0 %v4500
        %4971 = vmatprep.subr.mxu0 0.0
        %4972 = vmatpush1.msra.mxu0 %v4501
        %4973 = vmatprep.subr.mxu0 0.0
        %4974 = vmatpush1.msra.mxu0 %v4502
        %4975 = vmatprep.subr.mxu0 0.0
        %4976 = vmatpush1.msra.mxu0 %v4967
        %4977 = vmatprep.subr.mxu0 0.0
        %4978 = vmatpush1.msra.mxu0 0.0
        %4979 = vmatprep.subr.mxu0 0.0
        %4980 = vmatpush1.msra.mxu0 0.0
        %4981 = vmatprep.subr.mxu0 0.0
        %4982 = vmatpush1.msra.mxu0 0.0
        %4983 = vmatprep.subr.mxu0 0.0
        %4984 = vmatpush1.msra.mxu0 0.0
        %4985 = vmatprep.subr.mxu0 0.0
        %4986 = vmatpush1.msra.mxu0 0.0
        %4987 = vmatprep.subr.mxu0 0.0
        %4988 = vmatpush1.msra.mxu0 0.0
        %4989 = vmatprep.subr.mxu0 0.0
        %4990 = vmatpush1.msra.mxu0 0.0
        %4991 = vmatprep.subr.mxu0 0.0
        %4992 = vmatpush1.msra.mxu0 0.0
        %4993 = vmatprep.subr.mxu0 0.0
        %4994 = vmatpush1.msra.mxu0 0.0
        %4995 = vmatprep.subr.mxu0 0.0
        %4996 = vmatpush1.msra.mxu0 0.0
        %4997 = vmatprep.subr.mxu0 0.0
        %4998 = vmatpush1.msra.mxu0 0.0
        %4999 = vmatprep.subr.mxu0 0.0
        %5000 = vmatpush1.msra.mxu0 0.0
        %5001 = vmatprep.subr.mxu0 0.0
        %5002 = vmatpush1.msra.mxu0 0.0
        %5003 = vmatprep.subr.mxu0 0.0
        %5004 = vmatpush1.msra.mxu0 0.0
        %5005 = vmatprep.subr.mxu0 0.0
        %5006 = vmatpush1.msra.mxu0 0.0
        %5007 = vmatprep.subr.mxu0 0.0
        %5008 = vmatpush1.msra.mxu0 0.0
        %5009 = vmatprep.subr.mxu0 0.0
        %5010 = vmatpush1.msra.mxu0 0.0
        %5011 = vmatprep.subr.mxu0 0.0
        %5012 = vmatpush1.msra.mxu0 0.0
        %5013 = vmatprep.subr.mxu0 0.0
        %5014 = vmatpush1.msra.mxu0 0.0
        %5015 = vmatprep.subr.mxu0 0.0
        %5016 = vmatpush1.msra.mxu0 0.0
        %5017 = vmatprep.subr.mxu0 0.0
        %5018 = vmatpush1.msra.mxu0 0.0
        %5019 = vmatprep.subr.mxu0 0.0
        %5020 = vmatpush1.msra.mxu0 0.0
        %5021 = vmatprep.subr.mxu0 0.0
        %5022 = vmatpush1.msra.mxu0 0.0
        %5023 = vmatprep.subr.mxu0 0.0
        %5024 = vmatpush1.msra.mxu0 0.0
        %5025 = vmatprep.subr.mxu0 0.0
        %5026 = vmatpush1.msra.mxu0 0.0
        %5027 = vmatprep.subr.mxu0 0.0
        %5028 = vmatpush1.msra.mxu0 0.0
        %5029 = vmatprep.subr.mxu0 0.0
        %5030 = vmatpush1.msra.mxu0 0.0
        %5031 = vmatprep.subr.mxu0 0.0
        %5032 = vmatpush1.msra.mxu0 0.0
        %5033 = vmatprep.mubr.f32.mxu0 0.0
        %5034 = vmatmul.mubr.f32.gmra.mrb[0].mxu0 %v4881
        %v5035 = vpop.f32.mrb[0].mxu0
        %v5036 = vadd.f32 0.0, %v5035
        %v5037 = vpop.f32.mrb[0].mxu0
        %5038 = vmatprep.mubr.f32.mxu0 0.0
        %5039 = vmatmul.mubr.f32.gmra.mrb[0].mxu0 %v4883
        %v5040 = vpop.f32.mrb[0].mxu0
        %v5041 = vadd.f32 0.0, %v5040
        %v5042 = vpop.f32.mrb[0].mxu0
        %5043 = vdwg.mxu0
        %v5044 = vpack.c.bf16 %v5041, %v5036
        %v5045 = vld [vmem:[%s13] sm:$0xf]
        %v5046 = vld [vmem:[%s13 + $0x4] sm:$0xf]
        %v5047 = vld [vmem:[%s13 + $0x8] sm:$0xf]
        %v5048 = vld [vmem:[%s13 + $0xc] sm:$0xf]
        %v5049 = vld [vmem:[%s13 + $0x10] sm:$0xf]
        %v5050 = vld [vmem:[%s13 + $0x14] sm:$0xf]
        %v5051 = vld [vmem:[%s13 + $0x18] sm:$0xf]
        %v5052 = vld [vmem:[%s13 + $0x1c] sm:$0xf]
        %v5053 = vld [vmem:[%s13 + $0x20] sm:$0xf]
        %v5054 = vld [vmem:[%s13 + $0x24] sm:$0xf]
        %v5055 = vld [vmem:[%s13 + $0x28] sm:$0xf]
        %v5056 = vld [vmem:[%s13 + $0x2c] sm:$0xf]
        %v5057 = vld [vmem:[%s13 + $0x30] sm:$0xf]
        %v5058 = vld [vmem:[%s13 + $0x34] sm:$0xf]
        %v5059 = vld [vmem:[%s13 + $0x38] sm:$0xf]
        %v5060 = vld [vmem:[%s13 + $0x3c] sm:$0xf]
        %v5061 = vld [vmem:[%s14] sm:$0x1]
        %v5063 = vlaneseq
        %v5064 = vshrl.u32 %v5063, 7
        %v5065 = vsub.s32 0, %v5064
        %v5066 = vrot.slane %v5061, %v5065
        %v5084 = vunpack.c.l.b16 %v5045
        %v5085 = vunpack.c.l.b16 %v5046
        %v5086 = vunpack.c.l.b16 %v5047
        %v5087 = vunpack.c.l.b16 %v5048
        %v5088 = vunpack.c.l.b16 %v5049
        %v5089 = vunpack.c.l.b16 %v5050
        %v5090 = vunpack.c.l.b16 %v5051
        %v5091 = vunpack.c.l.b16 %v5052
        %v5092 = vunpack.c.l.b16 %v5053
        %v5093 = vunpack.c.l.b16 %v5054
        %v5094 = vunpack.c.l.b16 %v5055
        %v5095 = vunpack.c.l.b16 %v5056
        %v5096 = vunpack.c.l.b16 %v5057
        %v5097 = vunpack.c.l.b16 %v5058
        %v5098 = vunpack.c.l.b16 %v5059
        %v5099 = vunpack.c.l.b16 %v5060
        %v5100 = vpack.c.b16 %v5085, %v5084
        %v5101 = vpack.c.b16 %v5087, %v5086
        %v5102 = vpack.c.b16 %v5089, %v5088
        %v5103 = vpack.c.b16 %v5091, %v5090
        %v5104 = vpack.c.b16 %v5093, %v5092
        %v5105 = vpack.c.b16 %v5095, %v5094
        %v5106 = vpack.c.b16 %v5097, %v5096
        %v5107 = vpack.c.b16 %v5099, %v5098
        %5116 = vmatprep.subr.bf16.mxu0 0
        %5117 = vmatpush1.bf16.msra.mxu0 %v5100
        %5118 = vmatprep.subr.bf16.mxu0 0
        %5119 = vmatpush1.bf16.msra.mxu0 %v5101
        %5120 = vmatprep.subr.bf16.mxu0 0
        %5121 = vmatpush1.bf16.msra.mxu0 %v5102
        %5122 = vmatprep.subr.bf16.mxu0 0
        %5123 = vmatpush1.bf16.msra.mxu0 %v5103
        %5124 = vmatprep.subr.bf16.mxu0 0
        %5125 = vmatpush1.bf16.msra.mxu0 %v5104
        %5126 = vmatprep.subr.bf16.mxu0 0
        %5127 = vmatpush1.bf16.msra.mxu0 %v5105
        %5128 = vmatprep.subr.bf16.mxu0 0
        %5129 = vmatpush1.bf16.msra.mxu0 %v5106
        %5130 = vmatprep.subr.bf16.mxu0 0
        %5131 = vmatpush1.bf16.msra.mxu0 %v5107
        %5132 = vmatprep.subr.bf16.mxu0 0
        %5133 = vmatpush1.bf16.msra.mxu0 0
        %5134 = vmatprep.subr.bf16.mxu0 0
        %5135 = vmatpush1.bf16.msra.mxu0 0
        %5136 = vmatprep.subr.bf16.mxu0 0
        %5137 = vmatpush1.bf16.msra.mxu0 0
        %5138 = vmatprep.subr.bf16.mxu0 0
        %5139 = vmatpush1.bf16.msra.mxu0 0
        %5140 = vmatprep.subr.bf16.mxu0 0
        %5141 = vmatpush1.bf16.msra.mxu0 0
        %5142 = vmatprep.subr.bf16.mxu0 0
        %5143 = vmatpush1.bf16.msra.mxu0 0
        %5144 = vmatprep.subr.bf16.mxu0 0
        %5145 = vmatpush1.bf16.msra.mxu0 0
        %5146 = vmatprep.subr.bf16.mxu0 0
        %5147 = vmatpush1.bf16.msra.mxu0 0
        %5148 = vmatprep.mubr.bf16.mxu0 0
        %5149 = vmatmul.mubr.bf16.gmra.mrb[0].mxu0 %v5044
        %v5150 = vpop.f32.mrb[0].mxu0
        %v5151 = vadd.f32 %v5066, %v5150
        %v5152 = vpop.f32.mrb[0].mxu0
        %v5153 = vpop.f32.mrb[0].mxu0
        %v5154 = vadd.f32 %v5066, %v5153
        %v5155 = vpop.f32.mrb[0].mxu0
        %5156 = vdwg.mxu0
        %5157 = vst [vmem:[#allocation5] sm:$0x1] 0.0
        %5158 = vst [vmem:[#allocation5 + $0xe] sm:$0x1] 0.0
        %5159 = vst [vmem:[#allocation5 + $0x1] sm:$0xff] %v4964
        %5160 = vst [vmem:[#allocation5 + $0x9] sm:$0x1f] %v4965
        %v5161 = vld [vmem:[#allocation5] sm:$0xff]
        %v5162 = vld [vmem:[#allocation5 + $0x8] sm:$0x1f]
        %v5163 = vpack.c.bf16 %v5162, %v5161
        %v5164 = vld [vmem:[%s15] sm:$0xf]
        %v5165 = vld [vmem:[%s15 + $0x4] sm:$0xf]
        %v5166 = vld [vmem:[%s15 + $0x8] sm:$0xf]
        %v5167 = vld [vmem:[%s15 + $0xc] sm:$0xf]
        %v5168 = vld [vmem:[%s15 + $0x10] sm:$0xf]
        %v5169 = vld [vmem:[%s15 + $0x14] sm:$0xf]
        %v5170 = vld [vmem:[%s15 + $0x18] sm:$0xf]
        %v5171 = vld [vmem:[%s15 + $0x1c] sm:$0xf]
        %v5172 = vld [vmem:[%s15 + $0x20] sm:$0xf]
        %v5173 = vld [vmem:[%s15 + $0x24] sm:$0xf]
        %v5174 = vld [vmem:[%s15 + $0x28] sm:$0xf]
        %v5175 = vld [vmem:[%s15 + $0x2c] sm:$0xf]
        %v5176 = vld [vmem:[%s15 + $0x30] sm:$0xf]
        %v5177 = vld [vmem:[%s15 + $0x34] sm:$0xf]
        %v5178 = vld [vmem:[%s15 + $0x38] sm:$0xf]
        %v5179 = vld [vmem:[%s15 + $0x3c] sm:$0xf]
        %v5180 = vld [vmem:[#allocation5 + $0x1] sm:$0xff]
        %v5181 = vld [vmem:[#allocation5 + $0x9] sm:$0x1f]
        %v5182 = vpack.c.bf16 %v5181, %v5180
        %s5183 = scalar_lea.vmem %s15, 64
        %v5184 = vld [vmem:[%s5183] sm:$0xf]
        %v5185 = vld [vmem:[%s5183 + $0x4] sm:$0xf]
        %v5186 = vld [vmem:[%s5183 + $0x8] sm:$0xf]
        %v5187 = vld [vmem:[%s5183 + $0xc] sm:$0xf]
        %v5188 = vld [vmem:[%s5183 + $0x10] sm:$0xf]
        %v5189 = vld [vmem:[%s5183 + $0x14] sm:$0xf]
        %v5190 = vld [vmem:[%s5183 + $0x18] sm:$0xf]
        %v5191 = vld [vmem:[%s5183 + $0x1c] sm:$0xf]
        %v5192 = vld [vmem:[%s5183 + $0x20] sm:$0xf]
        %v5193 = vld [vmem:[%s5183 + $0x24] sm:$0xf]
        %v5194 = vld [vmem:[%s5183 + $0x28] sm:$0xf]
        %v5195 = vld [vmem:[%s5183 + $0x2c] sm:$0xf]
        %v5196 = vld [vmem:[%s5183 + $0x30] sm:$0xf]
        %v5197 = vld [vmem:[%s5183 + $0x34] sm:$0xf]
        %v5198 = vld [vmem:[%s5183 + $0x38] sm:$0xf]
        %v5199 = vld [vmem:[%s5183 + $0x3c] sm:$0xf]
        %v5216 = vunpack.c.l.b16 %v5184
        %v5217 = vunpack.c.l.b16 %v5185
        %v5218 = vunpack.c.l.b16 %v5186
        %v5219 = vunpack.c.l.b16 %v5187
        %v5220 = vunpack.c.l.b16 %v5188
        %v5221 = vunpack.c.l.b16 %v5189
        %v5222 = vunpack.c.l.b16 %v5190
        %v5223 = vunpack.c.l.b16 %v5191
        %v5224 = vunpack.c.l.b16 %v5192
        %v5225 = vunpack.c.l.b16 %v5193
        %v5226 = vunpack.c.l.b16 %v5194
        %v5227 = vunpack.c.l.b16 %v5195
        %v5228 = vunpack.c.l.b16 %v5196
        %v5229 = vunpack.c.l.b16 %v5197
        %v5230 = vunpack.c.l.b16 %v5198
        %v5231 = vunpack.c.l.b16 %v5199
        %v5232 = vpack.c.b16 %v5217, %v5216
        %v5233 = vpack.c.b16 %v5219, %v5218
        %v5234 = vpack.c.b16 %v5221, %v5220
        %v5235 = vpack.c.b16 %v5223, %v5222
        %v5236 = vpack.c.b16 %v5225, %v5224
        %v5237 = vpack.c.b16 %v5227, %v5226
        %v5238 = vpack.c.b16 %v5229, %v5228
        %v5239 = vpack.c.b16 %v5231, %v5230
        %5248 = vmatprep.subr.bf16.mxu0 0
        %5249 = vmatpush1.bf16.msra.mxu0 %v5232
        %5250 = vmatprep.subr.bf16.mxu0 0
        %5251 = vmatpush1.bf16.msra.mxu0 %v5233
        %5252 = vmatprep.subr.bf16.mxu0 0
        %5253 = vmatpush1.bf16.msra.mxu0 %v5234
        %5254 = vmatprep.subr.bf16.mxu0 0
        %5255 = vmatpush1.bf16.msra.mxu0 %v5235
        %5256 = vmatprep.subr.bf16.mxu0 0
        %5257 = vmatpush1.bf16.msra.mxu0 %v5236
        %5258 = vmatprep.subr.bf16.mxu0 0
        %5259 = vmatpush1.bf16.msra.mxu0 %v5237
        %5260 = vmatprep.subr.bf16.mxu0 0
        %5261 = vmatpush1.bf16.msra.mxu0 %v5238
        %5262 = vmatprep.subr.bf16.mxu0 0
        %5263 = vmatpush1.bf16.msra.mxu0 %v5239
        %5264 = vmatprep.subr.bf16.mxu0 0
        %5265 = vmatpush1.bf16.msra.mxu0 0
        %5266 = vmatprep.subr.bf16.mxu0 0
        %5267 = vmatpush1.bf16.msra.mxu0 0
        %5268 = vmatprep.subr.bf16.mxu0 0
        %5269 = vmatpush1.bf16.msra.mxu0 0
        %5270 = vmatprep.subr.bf16.mxu0 0
        %5271 = vmatpush1.bf16.msra.mxu0 0
        %5272 = vmatprep.subr.bf16.mxu0 0
        %5273 = vmatpush1.bf16.msra.mxu0 0
        %5274 = vmatprep.subr.bf16.mxu0 0
        %5275 = vmatpush1.bf16.msra.mxu0 0
        %5276 = vmatprep.subr.bf16.mxu0 0
        %5277 = vmatpush1.bf16.msra.mxu0 0
        %5278 = vmatprep.subr.bf16.mxu0 0
        %5279 = vmatpush1.bf16.msra.mxu0 0
        %5280 = vmatprep.mubr.bf16.mxu0 0
        %5281 = vmatmul.mubr.bf16.gmra.mrb[0].mxu0 %v5182
        %v5282 = vpop.f32.mrb[0].mxu0
        %v5283 = vadd.f32 0.0, %v5282
        %v5284 = vpop.f32.mrb[0].mxu0
        %v5285 = vpop.f32.mrb[0].mxu0
        %v5286 = vadd.f32 0.0, %v5285
        %v5287 = vpop.f32.mrb[0].mxu0
        %5288 = vdwg.mxu0
        %v5305 = vunpack.c.l.b16 %v5164
        %v5306 = vunpack.c.l.b16 %v5165
        %v5307 = vunpack.c.l.b16 %v5166
        %v5308 = vunpack.c.l.b16 %v5167
        %v5309 = vunpack.c.l.b16 %v5168
        %v5310 = vunpack.c.l.b16 %v5169
        %v5311 = vunpack.c.l.b16 %v5170
        %v5312 = vunpack.c.l.b16 %v5171
        %v5313 = vunpack.c.l.b16 %v5172
        %v5314 = vunpack.c.l.b16 %v5173
        %v5315 = vunpack.c.l.b16 %v5174
        %v5316 = vunpack.c.l.b16 %v5175
        %v5317 = vunpack.c.l.b16 %v5176
        %v5318 = vunpack.c.l.b16 %v5177
        %v5319 = vunpack.c.l.b16 %v5178
        %v5320 = vunpack.c.l.b16 %v5179
        %v5321 = vpack.c.b16 %v5306, %v5305
        %v5322 = vpack.c.b16 %v5308, %v5307
        %v5323 = vpack.c.b16 %v5310, %v5309
        %v5324 = vpack.c.b16 %v5312, %v5311
        %v5325 = vpack.c.b16 %v5314, %v5313
        %v5326 = vpack.c.b16 %v5316, %v5315
        %v5327 = vpack.c.b16 %v5318, %v5317
        %v5328 = vpack.c.b16 %v5320, %v5319
        %5337 = vmatprep.subr.bf16.mxu0 0
        %5338 = vmatpush1.bf16.msra.mxu0 %v5321
        %5339 = vmatprep.subr.bf16.mxu0 0
        %5340 = vmatpush1.bf16.msra.mxu0 %v5322
        %5341 = vmatprep.subr.bf16.mxu0 0
        %5342 = vmatpush1.bf16.msra.mxu0 %v5323
        %5343 = vmatprep.subr.bf16.mxu0 0
        %5344 = vmatpush1.bf16.msra.mxu0 %v5324
        %5345 = vmatprep.subr.bf16.mxu0 0
        %5346 = vmatpush1.bf16.msra.mxu0 %v5325
        %5347 = vmatprep.subr.bf16.mxu0 0
        %5348 = vmatpush1.bf16.msra.mxu0 %v5326
        %5349 = vmatprep.subr.bf16.mxu0 0
        %5350 = vmatpush1.bf16.msra.mxu0 %v5327
        %5351 = vmatprep.subr.bf16.mxu0 0
        %5352 = vmatpush1.bf16.msra.mxu0 %v5328
        %5353 = vmatprep.subr.bf16.mxu0 0
        %5354 = vmatpush1.bf16.msra.mxu0 0
        %5355 = vmatprep.subr.bf16.mxu0 0
        %5356 = vmatpush1.bf16.msra.mxu0 0
        %5357 = vmatprep.subr.bf16.mxu0 0
        %5358 = vmatpush1.bf16.msra.mxu0 0
        %5359 = vmatprep.subr.bf16.mxu0 0
        %5360 = vmatpush1.bf16.msra.mxu0 0
        %5361 = vmatprep.subr.bf16.mxu0 0
        %5362 = vmatpush1.bf16.msra.mxu0 0
        %5363 = vmatprep.subr.bf16.mxu0 0
        %5364 = vmatpush1.bf16.msra.mxu0 0
        %5365 = vmatprep.subr.bf16.mxu0 0
        %5366 = vmatpush1.bf16.msra.mxu0 0
        %5367 = vmatprep.subr.bf16.mxu0 0
        %5368 = vmatpush1.bf16.msra.mxu0 0
        %5369 = vmatprep.mubr.bf16.mxu0 0
        %5370 = vmatmul.mubr.bf16.gmra.mrb[0].mxu0 %v5163
        %v5371 = vpop.f32.mrb[0].mxu0
        %v5372 = vadd.f32 %v5283, %v5371
        %v5373 = vpop.f32.mrb[0].mxu0
        %v5374 = vpop.f32.mrb[0].mxu0
        %v5375 = vadd.f32 %v5286, %v5374
        %v5376 = vpop.f32.mrb[0].mxu0
        %5377 = vdwg.mxu0
        %v5378 = vld [vmem:[#allocation5 + $0x2] sm:$0xff]
        %v5379 = vld [vmem:[#allocation5 + $0xa] sm:$0x1f]
        %v5380 = vpack.c.bf16 %v5379, %v5378
        %s5381 = scalar_lea.vmem %s15, 128
        %v5382 = vld [vmem:[%s5381] sm:$0xf]
        %v5383 = vld [vmem:[%s5381 + $0x4] sm:$0xf]
        %v5384 = vld [vmem:[%s5381 + $0x8] sm:$0xf]
        %v5385 = vld [vmem:[%s5381 + $0xc] sm:$0xf]
        %v5386 = vld [vmem:[%s5381 + $0x10] sm:$0xf]
        %v5387 = vld [vmem:[%s5381 + $0x14] sm:$0xf]
        %v5388 = vld [vmem:[%s5381 + $0x18] sm:$0xf]
        %v5389 = vld [vmem:[%s5381 + $0x1c] sm:$0xf]
        %v5390 = vld [vmem:[%s5381 + $0x20] sm:$0xf]
        %v5391 = vld [vmem:[%s5381 + $0x24] sm:$0xf]
        %v5392 = vld [vmem:[%s5381 + $0x28] sm:$0xf]
        %v5393 = vld [vmem:[%s5381 + $0x2c] sm:$0xf]
        %v5394 = vld [vmem:[%s5381 + $0x30] sm:$0xf]
        %v5395 = vld [vmem:[%s5381 + $0x34] sm:$0xf]
        %v5396 = vld [vmem:[%s5381 + $0x38] sm:$0xf]
        %v5397 = vld [vmem:[%s5381 + $0x3c] sm:$0xf]
        %v5414 = vunpack.c.l.b16 %v5382
        %v5415 = vunpack.c.l.b16 %v5383
        %v5416 = vunpack.c.l.b16 %v5384
        %v5417 = vunpack.c.l.b16 %v5385
        %v5418 = vunpack.c.l.b16 %v5386
        %v5419 = vunpack.c.l.b16 %v5387
        %v5420 = vunpack.c.l.b16 %v5388
        %v5421 = vunpack.c.l.b16 %v5389
        %v5422 = vunpack.c.l.b16 %v5390
        %v5423 = vunpack.c.l.b16 %v5391
        %v5424 = vunpack.c.l.b16 %v5392
        %v5425 = vunpack.c.l.b16 %v5393
        %v5426 = vunpack.c.l.b16 %v5394
        %v5427 = vunpack.c.l.b16 %v5395
        %v5428 = vunpack.c.l.b16 %v5396
        %v5429 = vunpack.c.l.b16 %v5397
        %v5430 = vpack.c.b16 %v5415, %v5414
        %v5431 = vpack.c.b16 %v5417, %v5416
        %v5432 = vpack.c.b16 %v5419, %v5418
        %v5433 = vpack.c.b16 %v5421, %v5420
        %v5434 = vpack.c.b16 %v5423, %v5422
        %v5435 = vpack.c.b16 %v5425, %v5424
        %v5436 = vpack.c.b16 %v5427, %v5426
        %v5437 = vpack.c.b16 %v5429, %v5428
        %5446 = vmatprep.subr.bf16.mxu0 0
        %5447 = vmatpush1.bf16.msra.mxu0 %v5430
        %5448 = vmatprep.subr.bf16.mxu0 0
        %5449 = vmatpush1.bf16.msra.mxu0 %v5431
        %5450 = vmatprep.subr.bf16.mxu0 0
        %5451 = vmatpush1.bf16.msra.mxu0 %v5432
        %5452 = vmatprep.subr.bf16.mxu0 0
        %5453 = vmatpush1.bf16.msra.mxu0 %v5433
        %5454 = vmatprep.subr.bf16.mxu0 0
        %5455 = vmatpush1.bf16.msra.mxu0 %v5434
        %5456 = vmatprep.subr.bf16.mxu0 0
        %5457 = vmatpush1.bf16.msra.mxu0 %v5435
        %5458 = vmatprep.subr.bf16.mxu0 0
        %5459 = vmatpush1.bf16.msra.mxu0 %v5436
        %5460 = vmatprep.subr.bf16.mxu0 0
        %5461 = vmatpush1.bf16.msra.mxu0 %v5437
        %5462 = vmatprep.subr.bf16.mxu0 0
        %5463 = vmatpush1.bf16.msra.mxu0 0
        %5464 = vmatprep.subr.bf16.mxu0 0
        %5465 = vmatpush1.bf16.msra.mxu0 0
        %5466 = vmatprep.subr.bf16.mxu0 0
        %5467 = vmatpush1.bf16.msra.mxu0 0
        %5468 = vmatprep.subr.bf16.mxu0 0
        %5469 = vmatpush1.bf16.msra.mxu0 0
        %5470 = vmatprep.subr.bf16.mxu0 0
        %5471 = vmatpush1.bf16.msra.mxu0 0
        %5472 = vmatprep.subr.bf16.mxu0 0
        %5473 = vmatpush1.bf16.msra.mxu0 0
        %5474 = vmatprep.subr.bf16.mxu0 0
        %5475 = vmatpush1.bf16.msra.mxu0 0
        %5476 = vmatprep.subr.bf16.mxu0 0
        %5477 = vmatpush1.bf16.msra.mxu0 0
        %5478 = vmatprep.mubr.bf16.mxu0 0
        %5479 = vmatmul.mubr.bf16.gmra.mrb[0].mxu0 %v5380
        %v5480 = vpop.f32.mrb[0].mxu0
        %v5481 = vadd.f32 0.0, %v5480
        %v5482 = vpop.f32.mrb[0].mxu0
        %v5483 = vpop.f32.mrb[0].mxu0
        %v5484 = vadd.f32 0.0, %v5483
        %v5485 = vpop.f32.mrb[0].mxu0
        %5486 = vdwg.mxu0
        %v5487 = vadd.f32 %v5372, %v5481
        %v5488 = vadd.f32 %v5375, %v5484
        %v5489 = vld [vmem:[%s16] sm:$0x1]
        %v5491 = vlaneseq
        %v5492 = vshrl.u32 %v5491, 7
        %v5493 = vsub.s32 0, %v5492
        %v5494 = vrot.slane %v5489, %v5493
        %v5496 = vadd.f32 %v5487, %v5494
        %v5497 = vadd.f32 %v5488, %v5494
        %v5498 = vadd.f32 %v5496, %v5151
        %v5499 = vadd.f32 %v5497, %v5154
        %v5500 = vmax.f32 %v5498, 0.0
        %v5501 = vmax.f32 %v5499, 0.0
        %5502 = vst [vmem:[#allocation5] sm:$0x1] 0.0
        %5503 = vst [vmem:[#allocation5 + $0xe] sm:$0x1] 0.0
        %5504 = vst [vmem:[#allocation5 + $0x1] sm:$0xff] %v5500
        %5505 = vst [vmem:[#allocation5 + $0x9] sm:$0x1f] %v5501
        %v5506 = vld [vmem:[#allocation5] sm:$0xff]
        %v5507 = vld [vmem:[#allocation5 + $0x8] sm:$0x1f]
        %v5508 = vpack.c.bf16 %v5507, %v5506
        %v5509 = vld [vmem:[%s17] sm:$0xf]
        %v5510 = vld [vmem:[%s17 + $0x4] sm:$0xf]
        %v5511 = vld [vmem:[%s17 + $0x8] sm:$0xf]
        %v5512 = vld [vmem:[%s17 + $0xc] sm:$0xf]
        %v5513 = vld [vmem:[%s17 + $0x10] sm:$0xf]
        %v5514 = vld [vmem:[%s17 + $0x14] sm:$0xf]
        %v5515 = vld [vmem:[%s17 + $0x18] sm:$0xf]
        %v5516 = vld [vmem:[%s17 + $0x1c] sm:$0xf]
        %v5517 = vld [vmem:[%s17 + $0x20] sm:$0xf]
        %v5518 = vld [vmem:[%s17 + $0x24] sm:$0xf]
        %v5519 = vld [vmem:[%s17 + $0x28] sm:$0xf]
        %v5520 = vld [vmem:[%s17 + $0x2c] sm:$0xf]
        %v5521 = vld [vmem:[%s17 + $0x30] sm:$0xf]
        %v5522 = vld [vmem:[%s17 + $0x34] sm:$0xf]
        %v5523 = vld [vmem:[%s17 + $0x38] sm:$0xf]
        %v5524 = vld [vmem:[%s17 + $0x3c] sm:$0xf]
        %v5525 = vld [vmem:[#allocation5 + $0x1] sm:$0xff]
        %v5526 = vld [vmem:[#allocation5 + $0x9] sm:$0x1f]
        %v5527 = vpack.c.bf16 %v5526, %v5525
        %s5528 = scalar_lea.vmem %s17, 64
        %v5529 = vld [vmem:[%s5528] sm:$0xf]
        %v5530 = vld [vmem:[%s5528 + $0x4] sm:$0xf]
        %v5531 = vld [vmem:[%s5528 + $0x8] sm:$0xf]
        %v5532 = vld [vmem:[%s5528 + $0xc] sm:$0xf]
        %v5533 = vld [vmem:[%s5528 + $0x10] sm:$0xf]
        %v5534 = vld [vmem:[%s5528 + $0x14] sm:$0xf]
        %v5535 = vld [vmem:[%s5528 + $0x18] sm:$0xf]
        %v5536 = vld [vmem:[%s5528 + $0x1c] sm:$0xf]
        %v5537 = vld [vmem:[%s5528 + $0x20] sm:$0xf]
        %v5538 = vld [vmem:[%s5528 + $0x24] sm:$0xf]
        %v5539 = vld [vmem:[%s5528 + $0x28] sm:$0xf]
        %v5540 = vld [vmem:[%s5528 + $0x2c] sm:$0xf]
        %v5541 = vld [vmem:[%s5528 + $0x30] sm:$0xf]
        %v5542 = vld [vmem:[%s5528 + $0x34] sm:$0xf]
        %v5543 = vld [vmem:[%s5528 + $0x38] sm:$0xf]
        %v5544 = vld [vmem:[%s5528 + $0x3c] sm:$0xf]
        %v5561 = vunpack.c.l.b16 %v5529
        %v5562 = vunpack.c.l.b16 %v5530
        %v5563 = vunpack.c.l.b16 %v5531
        %v5564 = vunpack.c.l.b16 %v5532
        %v5565 = vunpack.c.l.b16 %v5533
        %v5566 = vunpack.c.l.b16 %v5534
        %v5567 = vunpack.c.l.b16 %v5535
        %v5568 = vunpack.c.l.b16 %v5536
        %v5569 = vunpack.c.l.b16 %v5537
        %v5570 = vunpack.c.l.b16 %v5538
        %v5571 = vunpack.c.l.b16 %v5539
        %v5572 = vunpack.c.l.b16 %v5540
        %v5573 = vunpack.c.l.b16 %v5541
        %v5574 = vunpack.c.l.b16 %v5542
        %v5575 = vunpack.c.l.b16 %v5543
        %v5576 = vunpack.c.l.b16 %v5544
        %v5577 = vpack.c.b16 %v5562, %v5561
        %v5578 = vpack.c.b16 %v5564, %v5563
        %v5579 = vpack.c.b16 %v5566, %v5565
        %v5580 = vpack.c.b16 %v5568, %v5567
        %v5581 = vpack.c.b16 %v5570, %v5569
        %v5582 = vpack.c.b16 %v5572, %v5571
        %v5583 = vpack.c.b16 %v5574, %v5573
        %v5584 = vpack.c.b16 %v5576, %v5575
        %5593 = vmatprep.subr.bf16.mxu0 0
        %5594 = vmatpush1.bf16.msra.mxu0 %v5577
        %5595 = vmatprep.subr.bf16.mxu0 0
        %5596 = vmatpush1.bf16.msra.mxu0 %v5578
        %5597 = vmatprep.subr.bf16.mxu0 0
        %5598 = vmatpush1.bf16.msra.mxu0 %v5579
        %5599 = vmatprep.subr.bf16.mxu0 0
        %5600 = vmatpush1.bf16.msra.mxu0 %v5580
        %5601 = vmatprep.subr.bf16.mxu0 0
        %5602 = vmatpush1.bf16.msra.mxu0 %v5581
        %5603 = vmatprep.subr.bf16.mxu0 0
        %5604 = vmatpush1.bf16.msra.mxu0 %v5582
        %5605 = vmatprep.subr.bf16.mxu0 0
        %5606 = vmatpush1.bf16.msra.mxu0 %v5583
        %5607 = vmatprep.subr.bf16.mxu0 0
        %5608 = vmatpush1.bf16.msra.mxu0 %v5584
        %5609 = vmatprep.subr.bf16.mxu0 0
        %5610 = vmatpush1.bf16.msra.mxu0 0
        %5611 = vmatprep.subr.bf16.mxu0 0
        %5612 = vmatpush1.bf16.msra.mxu0 0
        %5613 = vmatprep.subr.bf16.mxu0 0
        %5614 = vmatpush1.bf16.msra.mxu0 0
        %5615 = vmatprep.subr.bf16.mxu0 0
        %5616 = vmatpush1.bf16.msra.mxu0 0
        %5617 = vmatprep.subr.bf16.mxu0 0
        %5618 = vmatpush1.bf16.msra.mxu0 0
        %5619 = vmatprep.subr.bf16.mxu0 0
        %5620 = vmatpush1.bf16.msra.mxu0 0
        %5621 = vmatprep.subr.bf16.mxu0 0
        %5622 = vmatpush1.bf16.msra.mxu0 0
        %5623 = vmatprep.subr.bf16.mxu0 0
        %5624 = vmatpush1.bf16.msra.mxu0 0
        %5625 = vmatprep.mubr.bf16.mxu0 0
        %5626 = vmatmul.mubr.bf16.gmra.mrb[0].mxu0 %v5527
        %v5627 = vpop.f32.mrb[0].mxu0
        %v5628 = vadd.f32 0.0, %v5627
        %v5629 = vpop.f32.mrb[0].mxu0
        %v5630 = vpop.f32.mrb[0].mxu0
        %v5631 = vadd.f32 0.0, %v5630
        %v5632 = vpop.f32.mrb[0].mxu0
        %5633 = vdwg.mxu0
        %v5650 = vunpack.c.l.b16 %v5509
        %v5651 = vunpack.c.l.b16 %v5510
        %v5652 = vunpack.c.l.b16 %v5511
        %v5653 = vunpack.c.l.b16 %v5512
        %v5654 = vunpack.c.l.b16 %v5513
        %v5655 = vunpack.c.l.b16 %v5514
        %v5656 = vunpack.c.l.b16 %v5515
        %v5657 = vunpack.c.l.b16 %v5516
        %v5658 = vunpack.c.l.b16 %v5517
        %v5659 = vunpack.c.l.b16 %v5518
        %v5660 = vunpack.c.l.b16 %v5519
        %v5661 = vunpack.c.l.b16 %v5520
        %v5662 = vunpack.c.l.b16 %v5521
        %v5663 = vunpack.c.l.b16 %v5522
        %v5664 = vunpack.c.l.b16 %v5523
        %v5665 = vunpack.c.l.b16 %v5524
        %v5666 = vpack.c.b16 %v5651, %v5650
        %v5667 = vpack.c.b16 %v5653, %v5652
        %v5668 = vpack.c.b16 %v5655, %v5654
        %v5669 = vpack.c.b16 %v5657, %v5656
        %v5670 = vpack.c.b16 %v5659, %v5658
        %v5671 = vpack.c.b16 %v5661, %v5660
        %v5672 = vpack.c.b16 %v5663, %v5662
        %v5673 = vpack.c.b16 %v5665, %v5664
        %5682 = vmatprep.subr.bf16.mxu0 0
        %5683 = vmatpush1.bf16.msra.mxu0 %v5666
        %5684 = vmatprep.subr.bf16.mxu0 0
        %5685 = vmatpush1.bf16.msra.mxu0 %v5667
        %5686 = vmatprep.subr.bf16.mxu0 0
        %5687 = vmatpush1.bf16.msra.mxu0 %v5668
        %5688 = vmatprep.subr.bf16.mxu0 0
        %5689 = vmatpush1.bf16.msra.mxu0 %v5669
        %5690 = vmatprep.subr.bf16.mxu0 0
        %5691 = vmatpush1.bf16.msra.mxu0 %v5670
        %5692 = vmatprep.subr.bf16.mxu0 0
        %5693 = vmatpush1.bf16.msra.mxu0 %v5671
        %5694 = vmatprep.subr.bf16.mxu0 0
        %5695 = vmatpush1.bf16.msra.mxu0 %v5672
        %5696 = vmatprep.subr.bf16.mxu0 0
        %5697 = vmatpush1.bf16.msra.mxu0 %v5673
        %5698 = vmatprep.subr.bf16.mxu0 0
        %5699 = vmatpush1.bf16.msra.mxu0 0
        %5700 = vmatprep.subr.bf16.mxu0 0
        %5701 = vmatpush1.bf16.msra.mxu0 0
        %5702 = vmatprep.subr.bf16.mxu0 0
        %5703 = vmatpush1.bf16.msra.mxu0 0
        %5704 = vmatprep.subr.bf16.mxu0 0
        %5705 = vmatpush1.bf16.msra.mxu0 0
        %5706 = vmatprep.subr.bf16.mxu0 0
        %5707 = vmatpush1.bf16.msra.mxu0 0
        %5708 = vmatprep.subr.bf16.mxu0 0
        %5709 = vmatpush1.bf16.msra.mxu0 0
        %5710 = vmatprep.subr.bf16.mxu0 0
        %5711 = vmatpush1.bf16.msra.mxu0 0
        %5712 = vmatprep.subr.bf16.mxu0 0
        %5713 = vmatpush1.bf16.msra.mxu0 0
        %5714 = vmatprep.mubr.bf16.mxu0 0
        %5715 = vmatmul.mubr.bf16.gmra.mrb[0].mxu0 %v5508
        %v5716 = vpop.f32.mrb[0].mxu0
        %v5717 = vadd.f32 %v5628, %v5716
        %v5718 = vpop.f32.mrb[0].mxu0
        %v5719 = vpop.f32.mrb[0].mxu0
        %v5720 = vadd.f32 %v5631, %v5719
        %v5721 = vpop.f32.mrb[0].mxu0
        %5722 = vdwg.mxu0
        %v5723 = vld [vmem:[#allocation5 + $0x2] sm:$0xff]
        %v5724 = vld [vmem:[#allocation5 + $0xa] sm:$0x1f]
        %v5725 = vpack.c.bf16 %v5724, %v5723
        %s5726 = scalar_lea.vmem %s17, 128
        %v5727 = vld [vmem:[%s5726] sm:$0xf]
        %v5728 = vld [vmem:[%s5726 + $0x4] sm:$0xf]
        %v5729 = vld [vmem:[%s5726 + $0x8] sm:$0xf]
        %v5730 = vld [vmem:[%s5726 + $0xc] sm:$0xf]
        %v5731 = vld [vmem:[%s5726 + $0x10] sm:$0xf]
        %v5732 = vld [vmem:[%s5726 + $0x14] sm:$0xf]
        %v5733 = vld [vmem:[%s5726 + $0x18] sm:$0xf]
        %v5734 = vld [vmem:[%s5726 + $0x1c] sm:$0xf]
        %v5735 = vld [vmem:[%s5726 + $0x20] sm:$0xf]
        %v5736 = vld [vmem:[%s5726 + $0x24] sm:$0xf]
        %v5737 = vld [vmem:[%s5726 + $0x28] sm:$0xf]
        %v5738 = vld [vmem:[%s5726 + $0x2c] sm:$0xf]
        %v5739 = vld [vmem:[%s5726 + $0x30] sm:$0xf]
        %v5740 = vld [vmem:[%s5726 + $0x34] sm:$0xf]
        %v5741 = vld [vmem:[%s5726 + $0x38] sm:$0xf]
        %v5742 = vld [vmem:[%s5726 + $0x3c] sm:$0xf]
        %v5759 = vunpack.c.l.b16 %v5727
        %v5760 = vunpack.c.l.b16 %v5728
        %v5761 = vunpack.c.l.b16 %v5729
        %v5762 = vunpack.c.l.b16 %v5730
        %v5763 = vunpack.c.l.b16 %v5731
        %v5764 = vunpack.c.l.b16 %v5732
        %v5765 = vunpack.c.l.b16 %v5733
        %v5766 = vunpack.c.l.b16 %v5734
        %v5767 = vunpack.c.l.b16 %v5735
        %v5768 = vunpack.c.l.b16 %v5736
        %v5769 = vunpack.c.l.b16 %v5737
        %v5770 = vunpack.c.l.b16 %v5738
        %v5771 = vunpack.c.l.b16 %v5739
        %v5772 = vunpack.c.l.b16 %v5740
        %v5773 = vunpack.c.l.b16 %v5741
        %v5774 = vunpack.c.l.b16 %v5742
        %v5775 = vpack.c.b16 %v5760, %v5759
        %v5776 = vpack.c.b16 %v5762, %v5761
        %v5777 = vpack.c.b16 %v5764, %v5763
        %v5778 = vpack.c.b16 %v5766, %v5765
        %v5779 = vpack.c.b16 %v5768, %v5767
        %v5780 = vpack.c.b16 %v5770, %v5769
        %v5781 = vpack.c.b16 %v5772, %v5771
        %v5782 = vpack.c.b16 %v5774, %v5773
        %5791 = vmatprep.subr.bf16.mxu0 0
        %5792 = vmatpush1.bf16.msra.mxu0 %v5775
        %5793 = vmatprep.subr.bf16.mxu0 0
        %5794 = vmatpush1.bf16.msra.mxu0 %v5776
        %5795 = vmatprep.subr.bf16.mxu0 0
        %5796 = vmatpush1.bf16.msra.mxu0 %v5777
        %5797 = vmatprep.subr.bf16.mxu0 0
        %5798 = vmatpush1.bf16.msra.mxu0 %v5778
        %5799 = vmatprep.subr.bf16.mxu0 0
        %5800 = vmatpush1.bf16.msra.mxu0 %v5779
        %5801 = vmatprep.subr.bf16.mxu0 0
        %5802 = vmatpush1.bf16.msra.mxu0 %v5780
        %5803 = vmatprep.subr.bf16.mxu0 0
        %5804 = vmatpush1.bf16.msra.mxu0 %v5781
        %5805 = vmatprep.subr.bf16.mxu0 0
        %5806 = vmatpush1.bf16.msra.mxu0 %v5782
        %5807 = vmatprep.subr.bf16.mxu0 0
        %5808 = vmatpush1.bf16.msra.mxu0 0
        %5809 = vmatprep.subr.bf16.mxu0 0
        %5810 = vmatpush1.bf16.msra.mxu0 0
        %5811 = vmatprep.subr.bf16.mxu0 0
        %5812 = vmatpush1.bf16.msra.mxu0 0
        %5813 = vmatprep.subr.bf16.mxu0 0
        %5814 = vmatpush1.bf16.msra.mxu0 0
        %5815 = vmatprep.subr.bf16.mxu0 0
        %5816 = vmatpush1.bf16.msra.mxu0 0
        %5817 = vmatprep.subr.bf16.mxu0 0
        %5818 = vmatpush1.bf16.msra.mxu0 0
        %5819 = vmatprep.subr.bf16.mxu0 0
        %5820 = vmatpush1.bf16.msra.mxu0 0
        %5821 = vmatprep.subr.bf16.mxu0 0
        %5822 = vmatpush1.bf16.msra.mxu0 0
        %5823 = vmatprep.mubr.bf16.mxu0 0
        %5824 = vmatmul.mubr.bf16.gmra.mrb[0].mxu0 %v5725
        %v5825 = vpop.f32.mrb[0].mxu0
        %v5826 = vadd.f32 0.0, %v5825
        %v5827 = vpop.f32.mrb[0].mxu0
        %v5828 = vpop.f32.mrb[0].mxu0
        %v5829 = vadd.f32 0.0, %v5828
        %v5830 = vpop.f32.mrb[0].mxu0
        %5831 = vdwg.mxu0
        %v5832 = vadd.f32 %v5717, %v5826
        %v5833 = vadd.f32 %v5720, %v5829
        %v5834 = vld [vmem:[%s18] sm:$0x1]
        %v5836 = vlaneseq
        %v5837 = vshrl.u32 %v5836, 7
        %v5838 = vsub.s32 0, %v5837
        %v5839 = vrot.slane %v5834, %v5838
        %v5841 = vadd.f32 %v5832, %v5839
        %v5842 = vadd.f32 %v5833, %v5839
        %v5843 = vmax.f32 %v5841, 0.0
        %v5844 = vmax.f32 %v5842, 0.0
        %5845 = vst [vmem:[#allocation5] sm:$0x1] 0.0
        %5846 = vst [vmem:[#allocation5 + $0xe] sm:$0x1] 0.0
        %5847 = vst [vmem:[#allocation5 + $0x1] sm:$0xff] %v5843
        %5848 = vst [vmem:[#allocation5 + $0x9] sm:$0x1f] %v5844
        %v5849 = vld [vmem:[#allocation5] sm:$0xff]
        %v5850 = vld [vmem:[#allocation5 + $0x8] sm:$0x1f]
        %v5851 = vpack.c.bf16 %v5850, %v5849
        %v5852 = vld [vmem:[%s19] sm:$0xf]
        %v5853 = vld [vmem:[%s19 + $0x4] sm:$0xf]
        %v5854 = vld [vmem:[%s19 + $0x8] sm:$0xf]
        %v5855 = vld [vmem:[%s19 + $0xc] sm:$0xf]
        %v5856 = vld [vmem:[%s19 + $0x10] sm:$0xf]
        %v5857 = vld [vmem:[%s19 + $0x14] sm:$0xf]
        %v5858 = vld [vmem:[%s19 + $0x18] sm:$0xf]
        %v5859 = vld [vmem:[%s19 + $0x1c] sm:$0xf]
        %v5860 = vld [vmem:[%s19 + $0x20] sm:$0xf]
        %v5861 = vld [vmem:[%s19 + $0x24] sm:$0xf]
        %v5862 = vld [vmem:[%s19 + $0x28] sm:$0xf]
        %v5863 = vld [vmem:[%s19 + $0x2c] sm:$0xf]
        %v5864 = vld [vmem:[%s19 + $0x30] sm:$0xf]
        %v5865 = vld [vmem:[%s19 + $0x34] sm:$0xf]
        %v5866 = vld [vmem:[%s19 + $0x38] sm:$0xf]
        %v5867 = vld [vmem:[%s19 + $0x3c] sm:$0xf]
        %v5868 = vld [vmem:[#allocation5 + $0x1] sm:$0xff]
        %v5869 = vld [vmem:[#allocation5 + $0x9] sm:$0x1f]
        %v5870 = vpack.c.bf16 %v5869, %v5868
        %s5871 = scalar_lea.vmem %s19, 64
        %v5872 = vld [vmem:[%s5871] sm:$0xf]
        %v5873 = vld [vmem:[%s5871 + $0x4] sm:$0xf]
        %v5874 = vld [vmem:[%s5871 + $0x8] sm:$0xf]
        %v5875 = vld [vmem:[%s5871 + $0xc] sm:$0xf]
        %v5876 = vld [vmem:[%s5871 + $0x10] sm:$0xf]
        %v5877 = vld [vmem:[%s5871 + $0x14] sm:$0xf]
        %v5878 = vld [vmem:[%s5871 + $0x18] sm:$0xf]
        %v5879 = vld [vmem:[%s5871 + $0x1c] sm:$0xf]
        %v5880 = vld [vmem:[%s5871 + $0x20] sm:$0xf]
        %v5881 = vld [vmem:[%s5871 + $0x24] sm:$0xf]
        %v5882 = vld [vmem:[%s5871 + $0x28] sm:$0xf]
        %v5883 = vld [vmem:[%s5871 + $0x2c] sm:$0xf]
        %v5884 = vld [vmem:[%s5871 + $0x30] sm:$0xf]
        %v5885 = vld [vmem:[%s5871 + $0x34] sm:$0xf]
        %v5886 = vld [vmem:[%s5871 + $0x38] sm:$0xf]
        %v5887 = vld [vmem:[%s5871 + $0x3c] sm:$0xf]
        %v5904 = vunpack.c.l.b16 %v5872
        %v5905 = vunpack.c.l.b16 %v5873
        %v5906 = vunpack.c.l.b16 %v5874
        %v5907 = vunpack.c.l.b16 %v5875
        %v5908 = vunpack.c.l.b16 %v5876
        %v5909 = vunpack.c.l.b16 %v5877
        %v5910 = vunpack.c.l.b16 %v5878
        %v5911 = vunpack.c.l.b16 %v5879
        %v5912 = vunpack.c.l.b16 %v5880
        %v5913 = vunpack.c.l.b16 %v5881
        %v5914 = vunpack.c.l.b16 %v5882
        %v5915 = vunpack.c.l.b16 %v5883
        %v5916 = vunpack.c.l.b16 %v5884
        %v5917 = vunpack.c.l.b16 %v5885
        %v5918 = vunpack.c.l.b16 %v5886
        %v5919 = vunpack.c.l.b16 %v5887
        %v5920 = vpack.c.b16 %v5905, %v5904
        %v5921 = vpack.c.b16 %v5907, %v5906
        %v5922 = vpack.c.b16 %v5909, %v5908
        %v5923 = vpack.c.b16 %v5911, %v5910
        %v5924 = vpack.c.b16 %v5913, %v5912
        %v5925 = vpack.c.b16 %v5915, %v5914
        %v5926 = vpack.c.b16 %v5917, %v5916
        %v5927 = vpack.c.b16 %v5919, %v5918
        %5936 = vmatprep.subr.bf16.mxu0 0
        %5937 = vmatpush1.bf16.msra.mxu0 %v5920
        %5938 = vmatprep.subr.bf16.mxu0 0
        %5939 = vmatpush1.bf16.msra.mxu0 %v5921
        %5940 = vmatprep.subr.bf16.mxu0 0
        %5941 = vmatpush1.bf16.msra.mxu0 %v5922
        %5942 = vmatprep.subr.bf16.mxu0 0
        %5943 = vmatpush1.bf16.msra.mxu0 %v5923
        %5944 = vmatprep.subr.bf16.mxu0 0
        %5945 = vmatpush1.bf16.msra.mxu0 %v5924
        %5946 = vmatprep.subr.bf16.mxu0 0
        %5947 = vmatpush1.bf16.msra.mxu0 %v5925
        %5948 = vmatprep.subr.bf16.mxu0 0
        %5949 = vmatpush1.bf16.msra.mxu0 %v5926
        %5950 = vmatprep.subr.bf16.mxu0 0
        %5951 = vmatpush1.bf16.msra.mxu0 %v5927
        %5952 = vmatprep.subr.bf16.mxu0 0
        %5953 = vmatpush1.bf16.msra.mxu0 0
        %5954 = vmatprep.subr.bf16.mxu0 0
        %5955 = vmatpush1.bf16.msra.mxu0 0
        %5956 = vmatprep.subr.bf16.mxu0 0
        %5957 = vmatpush1.bf16.msra.mxu0 0
        %5958 = vmatprep.subr.bf16.mxu0 0
        %5959 = vmatpush1.bf16.msra.mxu0 0
        %5960 = vmatprep.subr.bf16.mxu0 0
        %5961 = vmatpush1.bf16.msra.mxu0 0
        %5962 = vmatprep.subr.bf16.mxu0 0
        %5963 = vmatpush1.bf16.msra.mxu0 0
        %5964 = vmatprep.subr.bf16.mxu0 0
        %5965 = vmatpush1.bf16.msra.mxu0 0
        %5966 = vmatprep.subr.bf16.mxu0 0
        %5967 = vmatpush1.bf16.msra.mxu0 0
        %5968 = vmatprep.mubr.bf16.mxu0 0
        %5969 = vmatmul.mubr.bf16.gmra.mrb[0].mxu0 %v5870
        %v5970 = vpop.f32.mrb[0].mxu0
        %v5971 = vadd.f32 0.0, %v5970
        %v5972 = vpop.f32.mrb[0].mxu0
        %v5973 = vpop.f32.mrb[0].mxu0
        %v5974 = vadd.f32 0.0, %v5973
        %v5975 = vpop.f32.mrb[0].mxu0
        %5976 = vdwg.mxu0
        %v5993 = vunpack.c.l.b16 %v5852
        %v5994 = vunpack.c.l.b16 %v5853
        %v5995 = vunpack.c.l.b16 %v5854
        %v5996 = vunpack.c.l.b16 %v5855
        %v5997 = vunpack.c.l.b16 %v5856
        %v5998 = vunpack.c.l.b16 %v5857
        %v5999 = vunpack.c.l.b16 %v5858
        %v6000 = vunpack.c.l.b16 %v5859
        %v6001 = vunpack.c.l.b16 %v5860
        %v6002 = vunpack.c.l.b16 %v5861
        %v6003 = vunpack.c.l.b16 %v5862
        %v6004 = vunpack.c.l.b16 %v5863
        %v6005 = vunpack.c.l.b16 %v5864
        %v6006 = vunpack.c.l.b16 %v5865
        %v6007 = vunpack.c.l.b16 %v5866
        %v6008 = vunpack.c.l.b16 %v5867
        %v6009 = vpack.c.b16 %v5994, %v5993
        %v6010 = vpack.c.b16 %v5996, %v5995
        %v6011 = vpack.c.b16 %v5998, %v5997
        %v6012 = vpack.c.b16 %v6000, %v5999
        %v6013 = vpack.c.b16 %v6002, %v6001
        %v6014 = vpack.c.b16 %v6004, %v6003
        %v6015 = vpack.c.b16 %v6006, %v6005
        %v6016 = vpack.c.b16 %v6008, %v6007
        %6025 = vmatprep.subr.bf16.mxu0 0
        %6026 = vmatpush1.bf16.msra.mxu0 %v6009
        %6027 = vmatprep.subr.bf16.mxu0 0
        %6028 = vmatpush1.bf16.msra.mxu0 %v6010
        %6029 = vmatprep.subr.bf16.mxu0 0
        %6030 = vmatpush1.bf16.msra.mxu0 %v6011
        %6031 = vmatprep.subr.bf16.mxu0 0
        %6032 = vmatpush1.bf16.msra.mxu0 %v6012
        %6033 = vmatprep.subr.bf16.mxu0 0
        %6034 = vmatpush1.bf16.msra.mxu0 %v6013
        %6035 = vmatprep.subr.bf16.mxu0 0
        %6036 = vmatpush1.bf16.msra.mxu0 %v6014
        %6037 = vmatprep.subr.bf16.mxu0 0
        %6038 = vmatpush1.bf16.msra.mxu0 %v6015
        %6039 = vmatprep.subr.bf16.mxu0 0
        %6040 = vmatpush1.bf16.msra.mxu0 %v6016
        %6041 = vmatprep.subr.bf16.mxu0 0
        %6042 = vmatpush1.bf16.msra.mxu0 0
        %6043 = vmatprep.subr.bf16.mxu0 0
        %6044 = vmatpush1.bf16.msra.mxu0 0
        %6045 = vmatprep.subr.bf16.mxu0 0
        %6046 = vmatpush1.bf16.msra.mxu0 0
        %6047 = vmatprep.subr.bf16.mxu0 0
        %6048 = vmatpush1.bf16.msra.mxu0 0
        %6049 = vmatprep.subr.bf16.mxu0 0
        %6050 = vmatpush1.bf16.msra.mxu0 0
        %6051 = vmatprep.subr.bf16.mxu0 0
        %6052 = vmatpush1.bf16.msra.mxu0 0
        %6053 = vmatprep.subr.bf16.mxu0 0
        %6054 = vmatpush1.bf16.msra.mxu0 0
        %6055 = vmatprep.subr.bf16.mxu0 0
        %6056 = vmatpush1.bf16.msra.mxu0 0
        %6057 = vmatprep.mubr.bf16.mxu0 0
        %6058 = vmatmul.mubr.bf16.gmra.mrb[0].mxu0 %v5851
        %v6059 = vpop.f32.mrb[0].mxu0
        %v6060 = vadd.f32 %v5971, %v6059
        %v6061 = vpop.f32.mrb[0].mxu0
        %v6062 = vpop.f32.mrb[0].mxu0
        %v6063 = vadd.f32 %v5974, %v6062
        %v6064 = vpop.f32.mrb[0].mxu0
        %6065 = vdwg.mxu0
        %v6066 = vld [vmem:[#allocation5 + $0x2] sm:$0xff]
        %v6067 = vld [vmem:[#allocation5 + $0xa] sm:$0x1f]
        %v6068 = vpack.c.bf16 %v6067, %v6066
        %s6069 = scalar_lea.vmem %s19, 128
        %v6070 = vld [vmem:[%s6069] sm:$0xf]
        %v6071 = vld [vmem:[%s6069 + $0x4] sm:$0xf]
        %v6072 = vld [vmem:[%s6069 + $0x8] sm:$0xf]
        %v6073 = vld [vmem:[%s6069 + $0xc] sm:$0xf]
        %v6074 = vld [vmem:[%s6069 + $0x10] sm:$0xf]
        %v6075 = vld [vmem:[%s6069 + $0x14] sm:$0xf]
        %v6076 = vld [vmem:[%s6069 + $0x18] sm:$0xf]
        %v6077 = vld [vmem:[%s6069 + $0x1c] sm:$0xf]
        %v6078 = vld [vmem:[%s6069 + $0x20] sm:$0xf]
        %v6079 = vld [vmem:[%s6069 + $0x24] sm:$0xf]
        %v6080 = vld [vmem:[%s6069 + $0x28] sm:$0xf]
        %v6081 = vld [vmem:[%s6069 + $0x2c] sm:$0xf]
        %v6082 = vld [vmem:[%s6069 + $0x30] sm:$0xf]
        %v6083 = vld [vmem:[%s6069 + $0x34] sm:$0xf]
        %v6084 = vld [vmem:[%s6069 + $0x38] sm:$0xf]
        %v6085 = vld [vmem:[%s6069 + $0x3c] sm:$0xf]
        %v6102 = vunpack.c.l.b16 %v6070
        %v6103 = vunpack.c.l.b16 %v6071
        %v6104 = vunpack.c.l.b16 %v6072
        %v6105 = vunpack.c.l.b16 %v6073
        %v6106 = vunpack.c.l.b16 %v6074
        %v6107 = vunpack.c.l.b16 %v6075
        %v6108 = vunpack.c.l.b16 %v6076
        %v6109 = vunpack.c.l.b16 %v6077
        %v6110 = vunpack.c.l.b16 %v6078
        %v6111 = vunpack.c.l.b16 %v6079
        %v6112 = vunpack.c.l.b16 %v6080
        %v6113 = vunpack.c.l.b16 %v6081
        %v6114 = vunpack.c.l.b16 %v6082
        %v6115 = vunpack.c.l.b16 %v6083
        %v6116 = vunpack.c.l.b16 %v6084
        %v6117 = vunpack.c.l.b16 %v6085
        %v6118 = vpack.c.b16 %v6103, %v6102
        %v6119 = vpack.c.b16 %v6105, %v6104
        %v6120 = vpack.c.b16 %v6107, %v6106
        %v6121 = vpack.c.b16 %v6109, %v6108
        %v6122 = vpack.c.b16 %v6111, %v6110
        %v6123 = vpack.c.b16 %v6113, %v6112
        %v6124 = vpack.c.b16 %v6115, %v6114
        %v6125 = vpack.c.b16 %v6117, %v6116
        %6134 = vmatprep.subr.bf16.mxu0 0
        %6135 = vmatpush1.bf16.msra.mxu0 %v6118
        %6136 = vmatprep.subr.bf16.mxu0 0
        %6137 = vmatpush1.bf16.msra.mxu0 %v6119
        %6138 = vmatprep.subr.bf16.mxu0 0
        %6139 = vmatpush1.bf16.msra.mxu0 %v6120
        %6140 = vmatprep.subr.bf16.mxu0 0
        %6141 = vmatpush1.bf16.msra.mxu0 %v6121
        %6142 = vmatprep.subr.bf16.mxu0 0
        %6143 = vmatpush1.bf16.msra.mxu0 %v6122
        %6144 = vmatprep.subr.bf16.mxu0 0
        %6145 = vmatpush1.bf16.msra.mxu0 %v6123
        %6146 = vmatprep.subr.bf16.mxu0 0
        %6147 = vmatpush1.bf16.msra.mxu0 %v6124
        %6148 = vmatprep.subr.bf16.mxu0 0
        %6149 = vmatpush1.bf16.msra.mxu0 %v6125
        %6150 = vmatprep.subr.bf16.mxu0 0
        %6151 = vmatpush1.bf16.msra.mxu0 0
        %6152 = vmatprep.subr.bf16.mxu0 0
        %6153 = vmatpush1.bf16.msra.mxu0 0
        %6154 = vmatprep.subr.bf16.mxu0 0
        %6155 = vmatpush1.bf16.msra.mxu0 0
        %6156 = vmatprep.subr.bf16.mxu0 0
        %6157 = vmatpush1.bf16.msra.mxu0 0
        %6158 = vmatprep.subr.bf16.mxu0 0
        %6159 = vmatpush1.bf16.msra.mxu0 0
        %6160 = vmatprep.subr.bf16.mxu0 0
        %6161 = vmatpush1.bf16.msra.mxu0 0
        %6162 = vmatprep.subr.bf16.mxu0 0
        %6163 = vmatpush1.bf16.msra.mxu0 0
        %6164 = vmatprep.subr.bf16.mxu0 0
        %6165 = vmatpush1.bf16.msra.mxu0 0
        %6166 = vmatprep.mubr.bf16.mxu0 0
        %6167 = vmatmul.mubr.bf16.gmra.mrb[0].mxu0 %v6068
        %v6168 = vpop.f32.mrb[0].mxu0
        %v6169 = vadd.f32 0.0, %v6168
        %v6170 = vpop.f32.mrb[0].mxu0
        %v6171 = vpop.f32.mrb[0].mxu0
        %v6172 = vadd.f32 0.0, %v6171
        %v6173 = vpop.f32.mrb[0].mxu0
        %6174 = vdwg.mxu0
        %v6175 = vadd.f32 %v6060, %v6169
        %v6176 = vadd.f32 %v6063, %v6172
        %v6177 = vld [vmem:[%s20] sm:$0x1]
        %v6179 = vlaneseq
        %v6180 = vshrl.u32 %v6179, 7
        %v6181 = vsub.s32 0, %v6180
        %v6182 = vrot.slane %v6177, %v6181
        %v6184 = vadd.f32 %v6175, %v6182
        %v6185 = vadd.f32 %v6176, %v6182
        %v6186 = vadd.f32 %v6184, %v5500
        %v6187 = vadd.f32 %v6185, %v5501
        %v6188 = vmax.f32 %v6186, 0.0
        %v6189 = vmax.f32 %v6187, 0.0
        %6190 = vst [vmem:[#allocation5] sm:$0x1] 0.0
        %6191 = vst [vmem:[#allocation5 + $0xe] sm:$0x1] 0.0
        %6192 = vst [vmem:[#allocation5 + $0x1] sm:$0xff] %v6188
        %6193 = vst [vmem:[#allocation5 + $0x9] sm:$0x1f] %v6189
        %vm6194 = vcmask 1044480
        %v6195 = vsel %vm6194, %v6189, 0.0
        %v6196 = vadd.f32 %v6188, %v6195
        %v6197 = vrot.slane %v6196, 4
        %v6198 = vadd.f32 %v6196, %v6197
        %v6199 = vrot.slane %v6198, 2
        %v6200 = vadd.f32 %v6198, %v6199
        %v6201 = vrot.slane %v6200, 1
        %v6202 = vadd.f32 %v6200, %v6201
        %v6203 = vrcp.pop 13.0
        %v6204 = vmul.f32 %v6202, %v6203
        %v6205 = vld [vmem:[%s21] sm:$0xff]
        %v6206 = vld [vmem:[%s21 + $0x8] sm:$0xff]
        %v6207 = vld [vmem:[%s21 + $0x10] sm:$0xff]
        %v6208 = vld [vmem:[%s21 + $0x18] sm:$0xff]
        %v6209 = vld [vmem:[%s21 + $0x20] sm:$0xff]
        %v6210 = vld [vmem:[%s21 + $0x28] sm:$0xff]
        %v6211 = vld [vmem:[%s21 + $0x30] sm:$0xff]
        %v6212 = vld [vmem:[%s21 + $0x38] sm:$0xff]
        %v6213 = vld [vmem:[%s21 + $0x40] sm:$0xff]
        %v6214 = vld [vmem:[%s21 + $0x48] sm:$0xff]
        %v6215 = vld [vmem:[%s21 + $0x50] sm:$0xff]
        %v6216 = vld [vmem:[%s21 + $0x58] sm:$0xff]
        %v6217 = vld [vmem:[%s21 + $0x60] sm:$0xff]
        %v6218 = vld [vmem:[%s21 + $0x68] sm:$0xff]
        %v6219 = vld [vmem:[%s21 + $0x70] sm:$0xff]
        %v6220 = vld [vmem:[%s21 + $0x78] sm:$0xff]
        %v6221 = vld [vmem:[%s22] sm:$0x1]
        %6222 = vmatprep.subr.mxu0 0.0
        %6223 = vmatpush1.msra.mxu0 %v6205
        %6224 = vmatprep.subr.mxu0 0.0
        %6225 = vmatpush1.msra.mxu0 %v6206
        %6226 = vmatprep.subr.mxu0 0.0
        %6227 = vmatpush1.msra.mxu0 %v6207
        %6228 = vmatprep.subr.mxu0 0.0
        %6229 = vmatpush1.msra.mxu0 %v6208
        %6230 = vmatprep.subr.mxu0 0.0
        %6231 = vmatpush1.msra.mxu0 %v6209
        %6232 = vmatprep.subr.mxu0 0.0
        %6233 = vmatpush1.msra.mxu0 %v6210
        %6234 = vmatprep.subr.mxu0 0.0
        %6235 = vmatpush1.msra.mxu0 %v6211
        %6236 = vmatprep.subr.mxu0 0.0
        %6237 = vmatpush1.msra.mxu0 %v6212
        %6238 = vmatprep.subr.mxu0 0.0
        %6239 = vmatpush1.msra.mxu0 %v6213
        %6240 = vmatprep.subr.mxu0 0.0
        %6241 = vmatpush1.msra.mxu0 %v6214
        %6242 = vmatprep.subr.mxu0 0.0
        %6243 = vmatpush1.msra.mxu0 %v6215
        %6244 = vmatprep.subr.mxu0 0.0
        %6245 = vmatpush1.msra.mxu0 %v6216
        %6246 = vmatprep.subr.mxu0 0.0
        %6247 = vmatpush1.msra.mxu0 %v6217
        %6248 = vmatprep.subr.mxu0 0.0
        %6249 = vmatpush1.msra.mxu0 %v6218
        %6250 = vmatprep.subr.mxu0 0.0
        %6251 = vmatpush1.msra.mxu0 %v6219
        %6252 = vmatprep.subr.mxu0 0.0
        %6253 = vmatpush1.msra.mxu0 %v6220
        %6254 = vmatprep.subr.mxu0 0.0
        %6255 = vmatpush1.msra.mxu0 0.0
        %6256 = vmatprep.subr.mxu0 0.0
        %6257 = vmatpush1.msra.mxu0 0.0
        %6258 = vmatprep.subr.mxu0 0.0
        %6259 = vmatpush1.msra.mxu0 0.0
        %6260 = vmatprep.subr.mxu0 0.0
        %6261 = vmatpush1.msra.mxu0 0.0
        %6262 = vmatprep.subr.mxu0 0.0
        %6263 = vmatpush1.msra.mxu0 0.0
        %6264 = vmatprep.subr.mxu0 0.0
        %6265 = vmatpush1.msra.mxu0 0.0
        %6266 = vmatprep.subr.mxu0 0.0
        %6267 = vmatpush1.msra.mxu0 0.0
        %6268 = vmatprep.subr.mxu0 0.0
        %6269 = vmatpush1.msra.mxu0 0.0
        %6270 = vmatprep.subr.mxu0 0.0
        %6271 = vmatpush1.msra.mxu0 0.0
        %6272 = vmatprep.subr.mxu0 0.0
        %6273 = vmatpush1.msra.mxu0 0.0
        %6274 = vmatprep.subr.mxu0 0.0
        %6275 = vmatpush1.msra.mxu0 0.0
        %6276 = vmatprep.subr.mxu0 0.0
        %6277 = vmatpush1.msra.mxu0 0.0
        %6278 = vmatprep.subr.mxu0 0.0
        %6279 = vmatpush1.msra.mxu0 0.0
        %6280 = vmatprep.subr.mxu0 0.0
        %6281 = vmatpush1.msra.mxu0 0.0
        %6282 = vmatprep.subr.mxu0 0.0
        %6283 = vmatpush1.msra.mxu0 0.0
        %6284 = vmatprep.subr.mxu0 0.0
        %6285 = vmatpush1.msra.mxu0 0.0
        %6286 = vmatprep.mubr.f32.mxu0 0.0
        %6287 = vmatmul.mubr.f32.gmra.mrb[0].mxu0 %v6204
        %v6288 = vpop.f32.mrb[0].mxu0
        %v6289 = vadd.f32 %v6221, %v6288
        %v6290 = vpop.f32.mrb[0].mxu0
        %6291 = vdwg.mxu0
        %6292 = vst [vmem:[%s702] sm:$0x1] %v6289
        %s6293 = sand.u32 %s533, 1
        %s6294 = scalar_lea.sflag [#allocation7], %s6293
        %s6295 = sand.u32 %s533, 1
        %s6296 = scalar_lea.vmem [#allocation6], %s6295
        // Predicated region
        $region113: #{resnet_two_layer_forward.1} parent=111 // pred_check
          %p6297 = pneg %p543
        $region114: #{resnet_two_layer_forward.1} parent=111 // pred_check_branch
          %6299 = sbr.rel (%p6297) target = $region116
        $region115: #{resnet_two_layer_forward.1} parent=111 // pred_region
          %s6301 = ssub.s32 16, 16
          %6302 = vsyncadd %s6294, %s6301
          %s6303 = smul.addr %s37, 16
          %s6304 = scalar_lea.hbm %s23, %s6303
          %s6306 = sshll.u32 %s6296, 4
          %s6307 = int_to_ptr.vmem [resolvable:$true] %s6306
          %6309 = dma.vmem_to_hbm [thread:$0]  %s6307, 16, %s6304, %s6294
        $region116: #{resnet_two_layer_forward.1} parent=111 // pred_fallthru
          _
      $region112: #{resnet_two_layer_forward.1} parent=5 // pred_fallthru
        _
      %p6310 = scmp.le.s32.totalorder 2, %s32
      // Predicated region
      $region117: #{resnet_two_layer_forward.1} parent=5 // pred_check
        %p6311 = pneg %p6310
      $region118: #{resnet_two_layer_forward.1} parent=5 // pred_check_branch
        %6313 = sbr.rel (%p6311) target = $region120
      $region119: #{resnet_two_layer_forward.1} parent=5 // pred_region
        %s6314 = ssub.s32 %s32, 2
        // Predicated region
        $region121: #{resnet_two_layer_forward.1} parent=119 // pred_check
          %p6315 = pneg %p549
        $region122: #{resnet_two_layer_forward.1} parent=119 // pred_check_branch
          %6317 = sbr.rel (%p6315) target = $region124
        $region123: #{resnet_two_layer_forward.1} parent=119 // pred_region
          %s6318 = sand.u32 %s534, 1
          %s6319 = scalar_lea.sflag [#allocation7], %s6318
          %s6320 = sand.u32 %s534, 1
          %s6321 = scalar_lea.vmem [#allocation6], %s6320
          %6322 = dma.done %s6319, 16
        $region124: #{resnet_two_layer_forward.1} parent=119 // pred_fallthru
          _
      $region120: #{resnet_two_layer_forward.1} parent=5 // pred_fallthru
        _
    $region6: #{resnet_two_layer_forward.1} parent=1 // loop_footer
      %s36 = sadd.s32 1, %s32
    $region7: #{resnet_two_layer_forward.1} parent=1 // loop_footer_branch
      %31 = sbr.rel target = $region3
    $region8: #{resnet_two_layer_forward.1} parent=1 // loop_exit
      _
    %6323 = vsyncpa [#allocation7], 1
    %s6324 = scalar_lea.sflag [#allocation7], 1
    %6325 = vsyncpa %s6324, 1

</llo_original>
